<compile_context>
chip_gen: v5e
topology: v5e:2x2
jax: 0.10.0
libtpu: 0.0.40
codegen_flags: <defaults>
</compile_context>

<pallas_src>
import functools

import jax
import jax.numpy as jnp
from jax.experimental import pallas as pl
from jax.experimental.pallas import tpu as pltpu

LN_EPS = 1e-12  # config.layer_norm_eps


def rwkv_time_first_kernel(
    x_ref,
    ln_g_ref, ln_b_ref, tf_ref, coef_ref,
    wk_ref, wv_ref, wr_ref, wo_ref, bo_ref,
    y_ref, ks_ref, vs_ref,
):
    Bb, T, C = x_ref.shape
    M = Bb * T
    x = x_ref[...].reshape(M, C)            # fold batch into the MXU M dimension

    # ---- LayerNorm over C (two-pass variance; biased, like torch) ----------
    mu = jnp.mean(x, axis=-1, keepdims=True)
    xc = x - mu
    var = jnp.mean(xc * xc, axis=-1, keepdims=True)
    x_ln = xc * jax.lax.rsqrt(var + LN_EPS) * ln_g_ref[...] + ln_b_ref[...]

    # ---- time_shift: x_s[b, t] = x_ln[b, t-1], x_s[b, 0] = 0 ---------------
    # Roll by one row on the flattened (M, C) layout; mask the first row of
    # every sequence with a narrow (M, 1) column mask (broadcast along lanes).
    t_col = jax.lax.broadcasted_iota(jnp.int32, (Bb, T, 1), 1).reshape(M, 1)
    x_s = jnp.where(t_col == 0, 0.0, pltpu.roll(x_ln, shift=1, axis=0))

    tf = tf_ref[...]
    mixed = x_ln * tf + x_s * (1.0 - tf)

    # ---- MXU matmuls: (bf16|f32) operands, f32 accumulation ----------------
    cdt = wv_ref.dtype
    v = jnp.dot(x_ln.astype(cdt), wv_ref[...],
                preferred_element_type=jnp.float32)                       # (M, C)
    r = jax.nn.sigmoid(
        jnp.dot(mixed.astype(cdt), wr_ref[...],
                preferred_element_type=jnp.float32))                      # (M, C)

    # ---- stateless "recurrence" closed form (per sequence) -----------------
    # v_mix[t] = sum_s exp(time_decay)^(T-1-s) * v[s]  (identical for every t)
    # with the (T, C) coefficient table precomputed outside the kernel.
    v3 = v.reshape(Bb, T, C)
    v_sum = jnp.sum(coef_ref[...][None, :, :] * v3, axis=1)               # (Bb, C)

    # Output projection only needs the collapsed (Bb, C) v_mix.
    out = jnp.dot(v_sum.astype(cdt), wo_ref[...],
                  preferred_element_type=jnp.float32) + bo_ref[...]       # (Bb, C)
    y_ref[...] = (r.reshape(Bb, T, C) * out[:, None, :]).astype(y_ref.dtype)

    # ---- recurrent state outputs: k / v at the last timestep (static slices)
    mixed_last = mixed.reshape(Bb, T, C)[:, T - 1, :]                     # (Bb, C)
    ks_ref[...] = jnp.dot(mixed_last.astype(cdt), wk_ref[...],
                          preferred_element_type=jnp.float32)
    vs_ref[...] = v3[:, T - 1, :]


def _choose_block_batch(B, T, C, target_block_bytes=2 << 20):
    """How many sequences to fold into one grid step.

    Bb*T is the flattened MXU M dimension and the DMA block row count.  The
    kernel is HBM-bound, so aim for ~2 MiB f32 x-blocks (measured >=85% of
    HBM roofline) while (a) keeping Bb a multiple of 8 (or == B) so the
    (Bb, C) state blocks satisfy the (8, 128) tiling rule and (b) keeping the
    grid length >= 2 so v7x's two TensorCores both get work.
    """
    target_rows = max(256, target_block_bytes // (C * 4))
    divisors = [d for d in range(1, B + 1) if B % d == 0]
    valid = [d for d in divisors if d % 8 == 0 or d == B] or [B]
    multi = [d for d in valid if B // d >= 2] or valid
    under = [d for d in multi if d * T <= target_rows]
    return max(under) if under else min(multi)


def _vmem_budget_bytes():
    """Generation-aware scoped-VMEM cap: ~75% of physical, at most 100 MiB.

    v7x (64 MiB physical) -> ~48 MiB; v5e/v6e (128 MiB) -> ~96 MiB.  Falls
    back to 32 MiB-safe behaviour if the hardware query is unavailable.
    """
    cap = 128 << 20
    try:
        info = pltpu.get_tpu_info()
        cap = int(getattr(info, "vmem_capacity_bytes", cap))
    except Exception:
        pass
    return min((cap * 3) // 4, 100 << 20)


def prepare_params(params, use_bf16=True):
    """Cast the (C, C) weights ONCE at load time (not per call under jit)."""
    wdt = jnp.bfloat16 if use_bf16 else jnp.float32
    out = dict(params)
    for name in ("wk", "wv", "wr", "wo"):
        out[name] = params[name].astype(wdt)
    return out


@functools.partial(jax.jit, static_argnames=("block_batch", "y_dtype"))
def rwkv_time_first(x, params, state=None, block_batch=None, y_dtype=jnp.float32):
    if state is not None:
        # TODO(synk): recurrent input-state / state-compression paths.
        raise NotImplementedError("Only the stateless path (state=None) is implemented.")

    B, T, C = x.shape
    Bb = block_batch if block_batch is not None else _choose_block_batch(B, T, C)
    assert B % Bb == 0
    grid = (B // Bb,)

    # Decay table coef[t] = exp(time_decay)^(T-1-t): identical for every
    # sequence and grid step, so hoist it out of the kernel (tiny (T, C) exp).
    steps = jnp.arange(T - 1, -1, -1, dtype=jnp.float32)[:, None]         # (T, 1)
    coef = jnp.exp(params["t_decay"].reshape(1, C).astype(jnp.float32) * steps)

    vec_spec = pl.BlockSpec((1, C), lambda b: (0, 0))
    mat_spec = pl.BlockSpec((C, C), lambda b: (0, 0))
    in_specs = [
        pl.BlockSpec((Bb, T, C), lambda b: (b, 0, 0)),   # x
        vec_spec, vec_spec, vec_spec,                    # ln_g, ln_b, t_first
        pl.BlockSpec((T, C), lambda b: (0, 0)),          # decay coefficient table
        mat_spec, mat_spec, mat_spec, mat_spec,          # Wk, Wv, Wr, Wo
        vec_spec,                                        # bo
    ]
    out_specs = [
        pl.BlockSpec((Bb, T, C), lambda b: (b, 0, 0)),   # y
        pl.BlockSpec((Bb, C), lambda b: (b, 0)),         # new_k_state
        pl.BlockSpec((Bb, C), lambda b: (b, 0)),         # new_v_state
    ]
    out_shape = [
        jax.ShapeDtypeStruct((B, T, C), y_dtype),
        jax.ShapeDtypeStruct((B, C), jnp.float32),
        jax.ShapeDtypeStruct((B, C), jnp.float32),
    ]

    # Explicit VMEM budget: double-buffered pipelined blocks + live f32 temps,
    # clamped to the generation-aware cap (<= ~75% of physical VMEM).
    w_bytes = jnp.dtype(params["wv"].dtype).itemsize
    act = Bb * T * C * 4
    block_bytes = (
        2 * act                                          # x input, double-buffered
        + 2 * Bb * T * C * jnp.dtype(y_dtype).itemsize   # y output, double-buffered
        + 4 * Bb * C * 4                                 # state outputs
        + 2 * (4 * C * C * w_bytes + (5 + T) * C * 4)    # weights + vectors + coef
        + 6 * act                                        # live f32 temporaries
    )
    vmem_limit = int(min(_vmem_budget_bytes(), max(32 << 20, block_bytes)))

    y, k_state, v_state = pl.pallas_call(
        rwkv_time_first_kernel,
        out_shape=out_shape,
        grid_spec=pltpu.PrefetchScalarGridSpec(
            num_scalar_prefetch=0,
            grid=grid,
            in_specs=in_specs,
            out_specs=out_specs,
        ),
        compiler_params=pltpu.CompilerParams(
            dimension_semantics=("parallel",),
            vmem_limit_bytes=vmem_limit,
        ),
    )(x, params["ln_g"], params["ln_b"], params["t_first"], coef,
      params["wk"], params["wv"], params["wr"], params["wo"], params["bo"])
    return y, (k_state, v_state)


def rwkv_time_first_ref(x, p, matmul_dtype=jnp.float32):
    """Pure-JAX reference mirroring the PyTorch forward literally."""
    def dot(a, b):
        return jnp.dot(a.astype(matmul_dtype), b.astype(matmul_dtype),
                       preferred_element_type=jnp.float32)

    B, T, C = x.shape
    mu = x.mean(-1, keepdims=True)
    var = ((x - mu) ** 2).mean(-1, keepdims=True)
    x_ln = (x - mu) / jnp.sqrt(var + LN_EPS) * p["ln_g"] + p["ln_b"]
    x_s = jnp.concatenate([jnp.zeros_like(x_ln[:, :1]), x_ln[:, :-1]], axis=1)
    tf = p["t_first"]
    mixed = x_ln * tf + x_s * (1.0 - tf)
    k = dot(mixed, p["wk"])
    v = dot(x_ln, p["wv"])
    r = jax.nn.sigmoid(dot(mixed, p["wr"]))
    w = jnp.exp(p["t_decay"])                     # (1, C)
    k_mix = jnp.zeros_like(k)
    v_mix = jnp.zeros_like(v)
    for t in range(T):                            # literal PyTorch recurrence
        k_mix = k_mix * w[None] + k[:, t][:, None, :]
        v_mix = v_mix * w[None] + v[:, t][:, None, :]
    y = r * (dot(v_mix, p["wo"]) + p["bo"])
    return y, k[:, -1, :], v[:, -1, :]


if __name__ == "__main__":
    B, T, C = 128, 16, 128         # lane-dense C; Bb=64 -> 1024-row blocks, grid=2
    TIME_MIX_FACTOR = 0.5          # non-default so the time_shift path is exercised

    key = jax.random.PRNGKey(0)
    ks = jax.random.split(key, 8)
    s = 0.1
    params = {
        "ln_g": 1.0 + s * jax.random.normal(ks[0], (1, C)),
        "ln_b": s * jax.random.normal(ks[1], (1, C)),
        "t_decay": -1.0 * jnp.ones((1, C)),                 # torch.ones(C) * -1.0
        "t_first": TIME_MIX_FACTOR * jnp.ones((1, C)),      # torch.ones(C) * tmf
        "wk": s * jax.random.normal(ks[2], (C, C)),
        "wv": s * jax.random.normal(ks[3], (C, C)),
        "wr": s * jax.random.normal(ks[4], (C, C)),
        "wo": s * jax.random.normal(ks[5], (C, C)),
        "bo": s * jax.random.normal(ks[6], (1, C)),
    }
    params = {k: v.astype(jnp.float32) for k, v in params.items()}
    x = jax.random.normal(ks[7], (B, T, C), dtype=jnp.float32)

    # Strict check: f32 weights / f32 output vs. literal f32 reference.
    p32 = prepare_params(params, use_bf16=False)
    y32, (k32, v32) = jax.block_until_ready(rwkv_time_first(x, p32))
    yr, kr, vr = rwkv_time_first_ref(x, params, matmul_dtype=jnp.float32)
    assert y32.shape == (B, T, C)
    for a, b in ((y32, yr), (k32, kr), (v32, vr)):
        assert jnp.allclose(a, b, rtol=1e-4, atol=1e-4), float(jnp.max(jnp.abs(a - b)))

    # Performance path: bf16 weights (cast once, outside jit), bf16 y output
    # (halves writeback on the mem-bound path), f32 MXU accumulation.
    p16 = prepare_params(params, use_bf16=True)
    y16, (k16, v16) = jax.block_until_ready(
        rwkv_time_first(x, p16, y_dtype=jnp.bfloat16))
    yb, kb, vb = rwkv_time_first_ref(x, params, matmul_dtype=jnp.bfloat16)
    assert y16.dtype == jnp.bfloat16
    assert jnp.allclose(y16.astype(jnp.float32), yb, rtol=5e-2, atol=5e-2), \
        float(jnp.max(jnp.abs(y16.astype(jnp.float32) - yb)))
    for a, b in ((k16, kb), (v16, vb)):
        assert jnp.allclose(a, b, rtol=1e-2, atol=1e-2), float(jnp.max(jnp.abs(a - b)))

    print("KERNEL_OK")
</pallas_src>

<mosaic_0001>
module attributes {stable_mosaic.version = 11 : i64} {
  func.func @rwkv_time_first_kernel(%arg0: i32, %arg1: memref<64x16x128xf32, #tpu.memory_space<vmem>>, %arg2: memref<1x128xf32, #tpu.memory_space<vmem>>, %arg3: memref<1x128xf32, #tpu.memory_space<vmem>>, %arg4: memref<1x128xf32, #tpu.memory_space<vmem>>, %arg5: memref<16x128xf32, #tpu.memory_space<vmem>>, %arg6: memref<128x128xf32, #tpu.memory_space<vmem>>, %arg7: memref<128x128xf32, #tpu.memory_space<vmem>>, %arg8: memref<128x128xf32, #tpu.memory_space<vmem>>, %arg9: memref<128x128xf32, #tpu.memory_space<vmem>>, %arg10: memref<1x128xf32, #tpu.memory_space<vmem>>, %arg11: memref<64x16x128xf32, #tpu.memory_space<vmem>>, %arg12: memref<64x128xf32, #tpu.memory_space<vmem>>, %arg13: memref<64x128xf32, #tpu.memory_space<vmem>>) attributes {dimension_semantics = [#tpu.dimension_semantics<parallel>], iteration_bounds = array<i64: 2>, scalar_prefetch = 0 : i64, scratch_operands = 0 : i64, tpu.core_type = #tpu.core_type<tc>, window_params = [{transform_indices = @transform_0, window_bounds = array<i64: 64, 16, 128>}, {pipeline_mode = #tpu.pipeline_mode<synchronous>, transform_indices = @transform_1, window_bounds = array<i64: 1, 128>}, {pipeline_mode = #tpu.pipeline_mode<synchronous>, transform_indices = @transform_2, window_bounds = array<i64: 1, 128>}, {pipeline_mode = #tpu.pipeline_mode<synchronous>, transform_indices = @transform_3, window_bounds = array<i64: 1, 128>}, {pipeline_mode = #tpu.pipeline_mode<synchronous>, transform_indices = @transform_4, window_bounds = array<i64: 16, 128>}, {pipeline_mode = #tpu.pipeline_mode<synchronous>, transform_indices = @transform_5, window_bounds = array<i64: 128, 128>}, {pipeline_mode = #tpu.pipeline_mode<synchronous>, transform_indices = @transform_6, window_bounds = array<i64: 128, 128>}, {pipeline_mode = #tpu.pipeline_mode<synchronous>, transform_indices = @transform_7, window_bounds = array<i64: 128, 128>}, {pipeline_mode = #tpu.pipeline_mode<synchronous>, transform_indices = @transform_8, window_bounds = array<i64: 128, 128>}, {pipeline_mode = #tpu.pipeline_mode<synchronous>, transform_indices = @transform_9, window_bounds = array<i64: 1, 128>}, {transform_indices = @transform_10, window_bounds = array<i64: 64, 16, 128>}, {transform_indices = @transform_11, window_bounds = array<i64: 64, 128>}, {transform_indices = @transform_12, window_bounds = array<i64: 64, 128>}]} {
    %c0 = arith.constant 0 : index
    %c0_0 = arith.constant 0 : index
    %c0_1 = arith.constant 0 : index
    %0 = vector.load %arg1[%c0, %c0_0, %c0_1] : memref<64x16x128xf32, #tpu.memory_space<vmem>>, vector<64x16x128xf32>
    %1 = vector.shape_cast %0 : vector<64x16x128xf32> to vector<1024x128xf32>
    %cst = arith.constant dense<0.000000e+00> : vector<1024xf32>
    %2 = vector.multi_reduction <add>, %1, %cst [1] : vector<1024x128xf32> to vector<1024xf32>
    %3 = vector.shape_cast %2 : vector<1024xf32> to vector<1024x1xf32>
    %cst_2 = arith.constant 1.280000e+02 : f32
    %4 = vector.broadcast %cst_2 : f32 to vector<1024x1xf32>
    %5 = arith.divf %3, %4 : vector<1024x1xf32>
    %6 = vector.broadcast %5 : vector<1024x1xf32> to vector<1024x128xf32>
    %7 = arith.subf %1, %6 : vector<1024x128xf32>
    %8 = arith.mulf %7, %7 : vector<1024x128xf32>
    %cst_3 = arith.constant dense<0.000000e+00> : vector<1024xf32>
    %9 = vector.multi_reduction <add>, %8, %cst_3 [1] : vector<1024x128xf32> to vector<1024xf32>
    %10 = vector.shape_cast %9 : vector<1024xf32> to vector<1024x1xf32>
    %cst_4 = arith.constant 1.280000e+02 : f32
    %11 = vector.broadcast %cst_4 : f32 to vector<1024x1xf32>
    %12 = arith.divf %10, %11 : vector<1024x1xf32>
    %cst_5 = arith.constant 9.99999996E-13 : f32
    %13 = vector.broadcast %cst_5 : f32 to vector<1024x1xf32>
    %14 = arith.addf %12, %13 : vector<1024x1xf32>
    %15 = math.rsqrt %14 : vector<1024x1xf32>
    %16 = vector.broadcast %15 : vector<1024x1xf32> to vector<1024x128xf32>
    %17 = arith.mulf %7, %16 : vector<1024x128xf32>
    %c0_6 = arith.constant 0 : index
    %c0_7 = arith.constant 0 : index
    %18 = vector.load %arg2[%c0_6, %c0_7] : memref<1x128xf32, #tpu.memory_space<vmem>>, vector<1x128xf32>
    %19 = vector.broadcast %18 : vector<1x128xf32> to vector<1024x128xf32>
    %20 = arith.mulf %17, %19 : vector<1024x128xf32>
    %c0_8 = arith.constant 0 : index
    %c0_9 = arith.constant 0 : index
    %21 = vector.load %arg3[%c0_8, %c0_9] : memref<1x128xf32, #tpu.memory_space<vmem>>, vector<1x128xf32>
    %22 = vector.broadcast %21 : vector<1x128xf32> to vector<1024x128xf32>
    %23 = arith.addf %20, %22 : vector<1024x128xf32>
    %24 = tpu.iota {dimensions = array<i32: 1>} : vector<64x16x1xi32>
    %25 = vector.shape_cast %24 : vector<64x16x1xi32> to vector<1024x1xi32>
    %c0_i32 = arith.constant 0 : i32
    %26 = vector.broadcast %c0_i32 : i32 to vector<1024x1xi32>
    %27 = arith.cmpi eq, %25, %26 : vector<1024x1xi32>
    %c1_i32 = arith.constant 1 : i32
    %28 = tpu.dynamic_rotate %23 by %c1_i32 dim 0 : vector<1024x128xf32>, i32 -> vector<1024x128xf32>
    %cst_10 = arith.constant 0.000000e+00 : f32
    %29 = vector.shape_cast %27 : vector<1024x1xi1> to vector<1024x1xi1>
    %30 = vector.broadcast %29 : vector<1024x1xi1> to vector<1024x128xi1>
    %31 = vector.broadcast %cst_10 : f32 to vector<1024x128xf32>
    %32 = arith.select %30, %31, %28 : vector<1024x128xi1>, vector<1024x128xf32>
    %c0_11 = arith.constant 0 : index
    %c0_12 = arith.constant 0 : index
    %33 = vector.load %arg4[%c0_11, %c0_12] : memref<1x128xf32, #tpu.memory_space<vmem>>, vector<1x128xf32>
    %34 = vector.broadcast %33 : vector<1x128xf32> to vector<1024x128xf32>
    %35 = arith.mulf %23, %34 : vector<1024x128xf32>
    %cst_13 = arith.constant 1.000000e+00 : f32
    %36 = vector.broadcast %cst_13 : f32 to vector<1x128xf32>
    %37 = arith.subf %36, %33 : vector<1x128xf32>
    %38 = vector.broadcast %37 : vector<1x128xf32> to vector<1024x128xf32>
    %39 = arith.mulf %32, %38 : vector<1024x128xf32>
    %40 = arith.addf %35, %39 : vector<1024x128xf32>
    %c0_14 = arith.constant 0 : index
    %c0_15 = arith.constant 0 : index
    %41 = vector.load %arg7[%c0_14, %c0_15] : memref<128x128xf32, #tpu.memory_space<vmem>>, vector<128x128xf32>
    %cst_16 = arith.constant dense<0.000000e+00> : vector<1024x128xf32>
    %42 = tpu.matmul %23, %41, %cst_16 {dimension_numbers = #tpu.dot_dimension_numbers<[1], [0], [0], [1], [0, 0, 1, 1], [], []>} : vector<1024x128xf32>, vector<128x128xf32>, vector<1024x128xf32> -> vector<1024x128xf32>
    %c0_17 = arith.constant 0 : index
    %c0_18 = arith.constant 0 : index
    %43 = vector.load %arg8[%c0_17, %c0_18] : memref<128x128xf32, #tpu.memory_space<vmem>>, vector<128x128xf32>
    %cst_19 = arith.constant dense<0.000000e+00> : vector<1024x128xf32>
    %44 = tpu.matmul %40, %43, %cst_19 {dimension_numbers = #tpu.dot_dimension_numbers<[1], [0], [0], [1], [0, 0, 1, 1], [], []>} : vector<1024x128xf32>, vector<128x128xf32>, vector<1024x128xf32> -> vector<1024x128xf32>
    %45 = arith.negf %44 : vector<1024x128xf32>
    %46 = math.exp %45 : vector<1024x128xf32>
    %cst_20 = arith.constant 1.000000e+00 : f32
    %47 = vector.broadcast %cst_20 : f32 to vector<1024x128xf32>
    %48 = arith.addf %47, %46 : vector<1024x128xf32>
    %49 = arith.divf %47, %48 : vector<1024x128xf32>
    %50 = vector.shape_cast %42 : vector<1024x128xf32> to vector<64x16x128xf32>
    %c0_21 = arith.constant 0 : index
    %c0_22 = arith.constant 0 : index
    %51 = vector.load %arg5[%c0_21, %c0_22] : memref<16x128xf32, #tpu.memory_space<vmem>>, vector<16x128xf32>
    %52 = vector.shape_cast %51 : vector<16x128xf32> to vector<1x16x128xf32>
    %53 = vector.broadcast %52 : vector<1x16x128xf32> to vector<64x16x128xf32>
    %54 = arith.mulf %53, %50 : vector<64x16x128xf32>
    %cst_23 = arith.constant dense<0.000000e+00> : vector<64x128xf32>
    %55 = vector.multi_reduction <add>, %54, %cst_23 [1] : vector<64x16x128xf32> to vector<64x128xf32>
    %c0_24 = arith.constant 0 : index
    %c0_25 = arith.constant 0 : index
    %56 = vector.load %arg9[%c0_24, %c0_25] : memref<128x128xf32, #tpu.memory_space<vmem>>, vector<128x128xf32>
    %cst_26 = arith.constant dense<0.000000e+00> : vector<64x128xf32>
    %57 = tpu.matmul %55, %56, %cst_26 {dimension_numbers = #tpu.dot_dimension_numbers<[1], [0], [0], [1], [0, 0, 1, 1], [], []>} : vector<64x128xf32>, vector<128x128xf32>, vector<64x128xf32> -> vector<64x128xf32>
    %c0_27 = arith.constant 0 : index
    %c0_28 = arith.constant 0 : index
    %58 = vector.load %arg10[%c0_27, %c0_28] : memref<1x128xf32, #tpu.memory_space<vmem>>, vector<1x128xf32>
    %59 = vector.broadcast %58 : vector<1x128xf32> to vector<64x128xf32>
    %60 = arith.addf %57, %59 : vector<64x128xf32>
    %61 = vector.shape_cast %49 : vector<1024x128xf32> to vector<64x16x128xf32>
    %62 = vector.shape_cast %60 : vector<64x128xf32> to vector<64x1x128xf32>
    %63 = vector.broadcast %62 : vector<64x1x128xf32> to vector<64x16x128xf32>
    %64 = arith.mulf %61, %63 : vector<64x16x128xf32>
    %c0_29 = arith.constant 0 : index
    %c0_30 = arith.constant 0 : index
    %c0_31 = arith.constant 0 : index
    %65 = vector.load %arg11[%c0_29, %c0_30, %c0_31] : memref<64x16x128xf32, #tpu.memory_space<vmem>>, vector<64x16x128xf32>
    tpu.vector_store %arg11[%c0_29, %c0_30, %c0_31], %64 {strides = array<i32>} : memref<64x16x128xf32, #tpu.memory_space<vmem>>, vector<64x16x128xf32>,
    %66 = vector.shape_cast %40 : vector<1024x128xf32> to vector<64x16x128xf32>
    %67 = vector.extract_strided_slice %66 {offsets = [0, 15, 0], sizes = [64, 1, 128], strides = [1, 1, 1]} : vector<64x16x128xf32> to vector<64x1x128xf32>
    %68 = vector.shape_cast %67 : vector<64x1x128xf32> to vector<64x128xf32>
    %c0_32 = arith.constant 0 : index
    %c0_33 = arith.constant 0 : index
    %69 = vector.load %arg6[%c0_32, %c0_33] : memref<128x128xf32, #tpu.memory_space<vmem>>, vector<128x128xf32>
    %cst_34 = arith.constant dense<0.000000e+00> : vector<64x128xf32>
    %70 = tpu.matmul %68, %69, %cst_34 {dimension_numbers = #tpu.dot_dimension_numbers<[1], [0], [0], [1], [0, 0, 1, 1], [], []>} : vector<64x128xf32>, vector<128x128xf32>, vector<64x128xf32> -> vector<64x128xf32>
    %c0_35 = arith.constant 0 : index
    %c0_36 = arith.constant 0 : index
    %71 = vector.load %arg12[%c0_35, %c0_36] : memref<64x128xf32, #tpu.memory_space<vmem>>, vector<64x128xf32>
    tpu.vector_store %arg12[%c0_35, %c0_36], %70 {strides = array<i32>} : memref<64x128xf32, #tpu.memory_space<vmem>>, vector<64x128xf32>,
    %72 = vector.extract_strided_slice %50 {offsets = [0, 15, 0], sizes = [64, 1, 128], strides = [1, 1, 1]} : vector<64x16x128xf32> to vector<64x1x128xf32>
    %73 = vector.shape_cast %72 : vector<64x1x128xf32> to vector<64x128xf32>
    %c0_37 = arith.constant 0 : index
    %c0_38 = arith.constant 0 : index
    %74 = vector.load %arg13[%c0_37, %c0_38] : memref<64x128xf32, #tpu.memory_space<vmem>>, vector<64x128xf32>
    tpu.vector_store %arg13[%c0_37, %c0_38], %73 {strides = array<i32>} : memref<64x128xf32, #tpu.memory_space<vmem>>, vector<64x128xf32>,
    return
  }
  func.func @transform_0(%arg0: i32) -> (i32, i32, i32) {
    %c0_i32 = arith.constant 0 : i32
    %c0_i32_0 = arith.constant 0 : i32
    %c0_i32_1 = arith.constant 0 : i32
    return %arg0, %c0_i32, %c0_i32_0 : i32, i32, i32
  }
  func.func @transform_1(%arg0: i32) -> (i32, i32) {
    %c0_i32 = arith.constant 0 : i32
    %c0_i32_0 = arith.constant 0 : i32
    %c0_i32_1 = arith.constant 0 : i32
    return %c0_i32, %c0_i32_0 : i32, i32
  }
  func.func @transform_2(%arg0: i32) -> (i32, i32) {
    %c0_i32 = arith.constant 0 : i32
    %c0_i32_0 = arith.constant 0 : i32
    %c0_i32_1 = arith.constant 0 : i32
    return %c0_i32, %c0_i32_0 : i32, i32
  }
  func.func @transform_3(%arg0: i32) -> (i32, i32) {
    %c0_i32 = arith.constant 0 : i32
    %c0_i32_0 = arith.constant 0 : i32
    %c0_i32_1 = arith.constant 0 : i32
    return %c0_i32, %c0_i32_0 : i32, i32
  }
  func.func @transform_4(%arg0: i32) -> (i32, i32) {
    %c0_i32 = arith.constant 0 : i32
    %c0_i32_0 = arith.constant 0 : i32
    %c0_i32_1 = arith.constant 0 : i32
    return %c0_i32, %c0_i32_0 : i32, i32
  }
  func.func @transform_5(%arg0: i32) -> (i32, i32) {
    %c0_i32 = arith.constant 0 : i32
    %c0_i32_0 = arith.constant 0 : i32
    %c0_i32_1 = arith.constant 0 : i32
    return %c0_i32, %c0_i32_0 : i32, i32
  }
  func.func @transform_6(%arg0: i32) -> (i32, i32) {
    %c0_i32 = arith.constant 0 : i32
    %c0_i32_0 = arith.constant 0 : i32
    %c0_i32_1 = arith.constant 0 : i32
    return %c0_i32, %c0_i32_0 : i32, i32
  }
  func.func @transform_7(%arg0: i32) -> (i32, i32) {
    %c0_i32 = arith.constant 0 : i32
    %c0_i32_0 = arith.constant 0 : i32
    %c0_i32_1 = arith.constant 0 : i32
    return %c0_i32, %c0_i32_0 : i32, i32
  }
  func.func @transform_8(%arg0: i32) -> (i32, i32) {
    %c0_i32 = arith.constant 0 : i32
    %c0_i32_0 = arith.constant 0 : i32
    %c0_i32_1 = arith.constant 0 : i32
    return %c0_i32, %c0_i32_0 : i32, i32
  }
  func.func @transform_9(%arg0: i32) -> (i32, i32) {
    %c0_i32 = arith.constant 0 : i32
    %c0_i32_0 = arith.constant 0 : i32
    %c0_i32_1 = arith.constant 0 : i32
    return %c0_i32, %c0_i32_0 : i32, i32
  }
  func.func @transform_10(%arg0: i32) -> (i32, i32, i32) {
    %c0_i32 = arith.constant 0 : i32
    %c0_i32_0 = arith.constant 0 : i32
    %c0_i32_1 = arith.constant 0 : i32
    return %arg0, %c0_i32, %c0_i32_0 : i32, i32, i32
  }
  func.func @transform_11(%arg0: i32) -> (i32, i32) {
    %c0_i32 = arith.constant 0 : i32
    %c0_i32_0 = arith.constant 0 : i32
    return %arg0, %c0_i32 : i32, i32
  }
  func.func @transform_12(%arg0: i32) -> (i32, i32) {
    %c0_i32 = arith.constant 0 : i32
    %c0_i32_0 = arith.constant 0 : i32
    return %arg0, %c0_i32 : i32, i32
  }
}

</mosaic_0001>

<llo_original>
// kernel: rwkv_time_first.1
$region0: #{rwkv_time_first.1}
  #allocation0 [shape = 'u32[]', space=smem, size = 0x4, offset = 0x4, fixed_abs, tag = 'smem constant byte address 0x4 - core index']
  #allocation1 [shape = 'u32[72,128]{1,0:T(1,128)}', space=vmem, size = 0x9000, scoped, tag = 'internal scratch']
  %s0 = inlined_call_operand.hbm [shape: f32[128,16,128], index: 0, kind: input, shape index: {}]
  %s1 = inlined_call_operand.vmem [shape: f32[1,128], index: 1, kind: input, shape index: {}]
  %s2 = inlined_call_operand.vmem [shape: f32[1,128], index: 2, kind: input, shape index: {}]
  %s3 = inlined_call_operand.vmem [shape: f32[1,128], index: 3, kind: input, shape index: {}]
  %s4 = inlined_call_operand.vmem [shape: f32[16,128], index: 4, kind: input, shape index: {}]
  %s5 = inlined_call_operand.hbm [shape: f32[128,128], index: 5, kind: input, shape index: {}]
  %s6 = inlined_call_operand.hbm [shape: f32[128,128], index: 6, kind: input, shape index: {}]
  %s7 = inlined_call_operand.hbm [shape: f32[128,128], index: 7, kind: input, shape index: {}]
  %s8 = inlined_call_operand.hbm [shape: f32[128,128], index: 8, kind: input, shape index: {}]
  %s9 = inlined_call_operand.vmem [shape: f32[1,128], index: 9, kind: input, shape index: {}]
  %s10 = inlined_call_operand.hbm [shape: f32[128,16,128], index: 10, kind: output, shape index: {0}]
  %s11 = inlined_call_operand.hbm [shape: f32[128,128], index: 11, kind: output, shape index: {1}]
  %s12 = inlined_call_operand.hbm [shape: f32[128,128], index: 12, kind: output, shape index: {2}]
  %13 = xla_tuple %s10, %s11, %s12
  %s14 = sld [smem:[#allocation0]]
  $region109: #{rwkv_time_first.1} parent=0
    _
  %s16 = ssub.s32 1, %s14
  %s17 = scalar_select 0, %s16, %s14
  $region1: #{rwkv_time_first.1} parent=0
    #allocation2 [shape = 'u8[1048576]{0}', space=vmem, size = 0x100000, scoped, tag = 'input window, operand 0']
    #allocation3 [shape = 's32[2]{0}', space=sflag, size = 0x8, scoped, tag = 'scoped memory for rwkv_time_first.1']
    #allocation4 [shape = 's32[2]{0}', space=sflag, size = 0x8, scoped, tag = 'scoped memory for rwkv_time_first.1']
    #allocation5 [shape = 'u8[65536]{0}', space=vmem, size = 0x10000, scoped, tag = 'input window, operand 5, single buffered']
    #allocation6 [shape = 's32[1]{0}', space=sflag, size = 0x4, scoped, tag = 'scoped memory for rwkv_time_first.1']
    #allocation7 [shape = 'u8[65536]{0}', space=vmem, size = 0x10000, scoped, tag = 'input window, operand 6, single buffered']
    #allocation8 [shape = 'u8[65536]{0}', space=vmem, size = 0x10000, scoped, tag = 'input window, operand 7, single buffered']
    #allocation9 [shape = 's32[1]{0}', space=sflag, size = 0x4, scoped, tag = 'scoped memory for rwkv_time_first.1']
    #allocation10 [shape = 'u8[65536]{0}', space=vmem, size = 0x10000, scoped, tag = 'input window, operand 8, single buffered']
    #allocation11 [shape = 'u8[1048576]{0}', space=vmem, size = 0x100000, scoped, tag = 'output window, operand 0']
    #allocation12 [shape = 'u8[65536]{0}', space=vmem, size = 0x10000, scoped, tag = 'output window, operand 1']
    #allocation13 [shape = 's32[2]{0}', space=sflag, size = 0x8, scoped, tag = 'scoped memory for rwkv_time_first.1']
    #allocation14 [shape = 'u8[65536]{0}', space=vmem, size = 0x10000, scoped, tag = 'output window, operand 2']
    %18 = vsyncpa [#allocation3], 0
    %s19 = scalar_lea.sflag [#allocation3], 1
    %20 = vsyncpa %s19, 0
    %21 = vsyncpa [#allocation6], 0
    %22 = vsyncpa [#allocation9], 0
    %23 = vsyncpa [#allocation4], 0
    %s24 = scalar_lea.sflag [#allocation4], 1
    %25 = vsyncpa %s24, 0
    %26 = vsyncpa [#allocation13], 0
    %s27 = scalar_lea.sflag [#allocation13], 1
    %28 = vsyncpa %s27, 0
    loop: start=0, step=1, limit=4
    $region2: #{rwkv_time_first.1} parent=1 // loop_pre_header
      _
    $region3: #{rwkv_time_first.1} parent=1 // loop_header
      %s30 = sphi 0, %s34
      %p31 = scmp.ge.s32.totalorder %s30, 4
      %s40 = sphi 0, %s42
      %s43 = sphi 0, %s40
      %s44 = sphi 0, %s43
      %s60 = sphi 0, %s44
      %s64 = sphi 0, %s64
      %s66 = sphi 0, %s64
      %s67 = sphi 0, %s66
      %s81 = sphi 0, %s67
      %s85 = sphi 0, %s85
      %s87 = sphi 0, %s85
      %s88 = sphi 0, %s87
      %s102 = sphi 0, %s88
      %s106 = sphi 0, %s106
      %s108 = sphi 0, %s106
      %s109 = sphi 0, %s108
      %s123 = sphi 0, %s109
      %s127 = sphi 0, %s127
      %s129 = sphi 0, %s127
      %s130 = sphi 0, %s129
      %s144 = sphi 0, %s130
      %s148 = sphi 0, %s148
      %s150 = sphi 0, %s148
      %s151 = sphi 0, %s150
      %s165 = sphi 0, %s151
      %s169 = sphi 0, %s169
      %s171 = sphi 0, %s169
      %s172 = sphi 0, %s171
      %s186 = sphi 0, %s172
      %s190 = sphi 0, %s190
      %s192 = sphi 0, %s190
      %s193 = sphi 0, %s192
      %s207 = sphi 0, %s193
      %s211 = sphi 0, %s211
      %s213 = sphi 0, %s211
      %s214 = sphi 0, %s213
      %s228 = sphi 0, %s214
      %s232 = sphi 0, %s232
      %s234 = sphi 0, %s232
      %s235 = sphi 0, %s234
      %s249 = sphi 0, %s235
      %s255 = sphi 0, %s257
      %s258 = sphi 0, %s255
      %s259 = sphi 0, %s258
      %s275 = sphi 0, %s259
      %s281 = sphi 0, %s283
      %s284 = sphi 0, %s281
      %s285 = sphi 0, %s284
      %s301 = sphi 0, %s285
      %s307 = sphi 0, %s309
      %s310 = sphi 0, %s307
      %s311 = sphi 0, %s310
      %s327 = sphi 0, %s311
    $region4: #{rwkv_time_first.1} parent=1 // loop_header_branch
      %33 = sbr.rel (%p31) target = $region8
    $region5: #{rwkv_time_first.1} parent=1 // loop_body
      %s35 = ssub.s32 %s30, 1
      %s36 = ssub.s32 %s30, 2
      %s37 = sadd.s32 %s30, 1
      %s38 = ssub.s32 %s30, %s37
      %p39 = scmp.eq.s32.totalorder %s38, 0
      %s41 = sadd.s32 %s40, 1
      %s42 = scalar_select %p39, %s40, %s41
      %p45 = pneg %p39
      %p46 = scmp.eq.s32.totalorder %s30, 1
      %p47 = por %p45, %p46
      %p48 = scmp.ne.s32.totalorder %s40, %s43
      %p49 = scmp.eq.s32.totalorder %s30, 0
      %p50 = por %p48, %p49
      %p51 = scmp.ne.s32.totalorder %s40, %s43
      %p52 = scmp.eq.s32.totalorder %s35, 1
      %p53 = por %p51, %p52
      %p54 = scmp.ne.s32.totalorder %s43, %s44
      %p55 = scmp.eq.s32.totalorder %s35, 0
      %p56 = por %p54, %p55
      %p57 = scmp.ne.s32.totalorder %s43, %s44
      %p58 = scmp.eq.s32.totalorder %s36, 1
      %p59 = por %p57, %p58
      %p61 = scmp.ne.s32.totalorder %s44, %s60
      %p62 = scmp.eq.s32.totalorder %s36, 0
      %p63 = por %p61, %p62
      %s65 = sadd.s32 %s64, 1
      %p68 = scmp.eq.s32.totalorder %s30, 1
      %p69 = scmp.ne.s32.totalorder %s64, %s66
      %p70 = scmp.eq.s32.totalorder %s30, 0
      %p71 = por %p69, %p70
      %p72 = scmp.ne.s32.totalorder %s64, %s66
      %p73 = scmp.eq.s32.totalorder %s35, 1
      %p74 = por %p72, %p73
      %p75 = scmp.ne.s32.totalorder %s66, %s67
      %p76 = scmp.eq.s32.totalorder %s35, 0
      %p77 = por %p75, %p76
      %p78 = scmp.ne.s32.totalorder %s66, %s67
      %p79 = scmp.eq.s32.totalorder %s36, 1
      %p80 = por %p78, %p79
      %p82 = scmp.ne.s32.totalorder %s67, %s81
      %p83 = scmp.eq.s32.totalorder %s36, 0
      %p84 = por %p82, %p83
      %s86 = sadd.s32 %s85, 1
      %p89 = scmp.eq.s32.totalorder %s30, 1
      %p90 = scmp.ne.s32.totalorder %s85, %s87
      %p91 = scmp.eq.s32.totalorder %s30, 0
      %p92 = por %p90, %p91
      %p93 = scmp.ne.s32.totalorder %s85, %s87
      %p94 = scmp.eq.s32.totalorder %s35, 1
      %p95 = por %p93, %p94
      %p96 = scmp.ne.s32.totalorder %s87, %s88
      %p97 = scmp.eq.s32.totalorder %s35, 0
      %p98 = por %p96, %p97
      %p99 = scmp.ne.s32.totalorder %s87, %s88
      %p100 = scmp.eq.s32.totalorder %s36, 1
      %p101 = por %p99, %p100
      %p103 = scmp.ne.s32.totalorder %s88, %s102
      %p104 = scmp.eq.s32.totalorder %s36, 0
      %p105 = por %p103, %p104
      %s107 = sadd.s32 %s106, 1
      %p110 = scmp.eq.s32.totalorder %s30, 1
      %p111 = scmp.ne.s32.totalorder %s106, %s108
      %p112 = scmp.eq.s32.totalorder %s30, 0
      %p113 = por %p111, %p112
      %p114 = scmp.ne.s32.totalorder %s106, %s108
      %p115 = scmp.eq.s32.totalorder %s35, 1
      %p116 = por %p114, %p115
      %p117 = scmp.ne.s32.totalorder %s108, %s109
      %p118 = scmp.eq.s32.totalorder %s35, 0
      %p119 = por %p117, %p118
      %p120 = scmp.ne.s32.totalorder %s108, %s109
      %p121 = scmp.eq.s32.totalorder %s36, 1
      %p122 = por %p120, %p121
      %p124 = scmp.ne.s32.totalorder %s109, %s123
      %p125 = scmp.eq.s32.totalorder %s36, 0
      %p126 = por %p124, %p125
      %s128 = sadd.s32 %s127, 1
      %p131 = scmp.eq.s32.totalorder %s30, 1
      %p132 = scmp.ne.s32.totalorder %s127, %s129
      %p133 = scmp.eq.s32.totalorder %s30, 0
      %p134 = por %p132, %p133
      %p135 = scmp.ne.s32.totalorder %s127, %s129
      %p136 = scmp.eq.s32.totalorder %s35, 1
      %p137 = por %p135, %p136
      %p138 = scmp.ne.s32.totalorder %s129, %s130
      %p139 = scmp.eq.s32.totalorder %s35, 0
      %p140 = por %p138, %p139
      %p141 = scmp.ne.s32.totalorder %s129, %s130
      %p142 = scmp.eq.s32.totalorder %s36, 1
      %p143 = por %p141, %p142
      %p145 = scmp.ne.s32.totalorder %s130, %s144
      %p146 = scmp.eq.s32.totalorder %s36, 0
      %p147 = por %p145, %p146
      %s149 = sadd.s32 %s148, 1
      %p152 = scmp.eq.s32.totalorder %s30, 1
      %p153 = scmp.ne.s32.totalorder %s148, %s150
      %p154 = scmp.eq.s32.totalorder %s30, 0
      %p155 = por %p153, %p154
      %p156 = scmp.ne.s32.totalorder %s148, %s150
      %p157 = scmp.eq.s32.totalorder %s35, 1
      %p158 = por %p156, %p157
      %p159 = scmp.ne.s32.totalorder %s150, %s151
      %p160 = scmp.eq.s32.totalorder %s35, 0
      %p161 = por %p159, %p160
      %p162 = scmp.ne.s32.totalorder %s150, %s151
      %p163 = scmp.eq.s32.totalorder %s36, 1
      %p164 = por %p162, %p163
      %p166 = scmp.ne.s32.totalorder %s151, %s165
      %p167 = scmp.eq.s32.totalorder %s36, 0
      %p168 = por %p166, %p167
      %s170 = sadd.s32 %s169, 1
      %p173 = scmp.eq.s32.totalorder %s30, 1
      %p174 = scmp.ne.s32.totalorder %s169, %s171
      %p175 = scmp.eq.s32.totalorder %s30, 0
      %p176 = por %p174, %p175
      %p177 = scmp.ne.s32.totalorder %s169, %s171
      %p178 = scmp.eq.s32.totalorder %s35, 1
      %p179 = por %p177, %p178
      %p180 = scmp.ne.s32.totalorder %s171, %s172
      %p181 = scmp.eq.s32.totalorder %s35, 0
      %p182 = por %p180, %p181
      %p183 = scmp.ne.s32.totalorder %s171, %s172
      %p184 = scmp.eq.s32.totalorder %s36, 1
      %p185 = por %p183, %p184
      %p187 = scmp.ne.s32.totalorder %s172, %s186
      %p188 = scmp.eq.s32.totalorder %s36, 0
      %p189 = por %p187, %p188
      %s191 = sadd.s32 %s190, 1
      %p194 = scmp.eq.s32.totalorder %s30, 1
      %p195 = scmp.ne.s32.totalorder %s190, %s192
      %p196 = scmp.eq.s32.totalorder %s30, 0
      %p197 = por %p195, %p196
      %p198 = scmp.ne.s32.totalorder %s190, %s192
      %p199 = scmp.eq.s32.totalorder %s35, 1
      %p200 = por %p198, %p199
      %p201 = scmp.ne.s32.totalorder %s192, %s193
      %p202 = scmp.eq.s32.totalorder %s35, 0
      %p203 = por %p201, %p202
      %p204 = scmp.ne.s32.totalorder %s192, %s193
      %p205 = scmp.eq.s32.totalorder %s36, 1
      %p206 = por %p204, %p205
      %p208 = scmp.ne.s32.totalorder %s193, %s207
      %p209 = scmp.eq.s32.totalorder %s36, 0
      %p210 = por %p208, %p209
      %s212 = sadd.s32 %s211, 1
      %p215 = scmp.eq.s32.totalorder %s30, 1
      %p216 = scmp.ne.s32.totalorder %s211, %s213
      %p217 = scmp.eq.s32.totalorder %s30, 0
      %p218 = por %p216, %p217
      %p219 = scmp.ne.s32.totalorder %s211, %s213
      %p220 = scmp.eq.s32.totalorder %s35, 1
      %p221 = por %p219, %p220
      %p222 = scmp.ne.s32.totalorder %s213, %s214
      %p223 = scmp.eq.s32.totalorder %s35, 0
      %p224 = por %p222, %p223
      %p225 = scmp.ne.s32.totalorder %s213, %s214
      %p226 = scmp.eq.s32.totalorder %s36, 1
      %p227 = por %p225, %p226
      %p229 = scmp.ne.s32.totalorder %s214, %s228
      %p230 = scmp.eq.s32.totalorder %s36, 0
      %p231 = por %p229, %p230
      %s233 = sadd.s32 %s232, 1
      %p236 = scmp.eq.s32.totalorder %s30, 1
      %p237 = scmp.ne.s32.totalorder %s232, %s234
      %p238 = scmp.eq.s32.totalorder %s30, 0
      %p239 = por %p237, %p238
      %p240 = scmp.ne.s32.totalorder %s232, %s234
      %p241 = scmp.eq.s32.totalorder %s35, 1
      %p242 = por %p240, %p241
      %p243 = scmp.ne.s32.totalorder %s234, %s235
      %p244 = scmp.eq.s32.totalorder %s35, 0
      %p245 = por %p243, %p244
      %p246 = scmp.ne.s32.totalorder %s234, %s235
      %p247 = scmp.eq.s32.totalorder %s36, 1
      %p248 = por %p246, %p247
      %p250 = scmp.ne.s32.totalorder %s235, %s249
      %p251 = scmp.eq.s32.totalorder %s36, 0
      %p252 = por %p250, %p251
      %s253 = ssub.s32 %s30, %s37
      %p254 = scmp.eq.s32.totalorder %s253, 0
      %s256 = sadd.s32 %s255, 1
      %s257 = scalar_select %p254, %s255, %s256
      %p260 = pneg %p254
      %p261 = scmp.eq.s32.totalorder %s30, 1
      %p262 = por %p260, %p261
      %p263 = scmp.ne.s32.totalorder %s255, %s258
      %p264 = scmp.eq.s32.totalorder %s30, 0
      %p265 = por %p263, %p264
      %p266 = scmp.ne.s32.totalorder %s255, %s258
      %p267 = scmp.eq.s32.totalorder %s35, 1
      %p268 = por %p266, %p267
      %p269 = scmp.ne.s32.totalorder %s258, %s259
      %p270 = scmp.eq.s32.totalorder %s35, 0
      %p271 = por %p269, %p270
      %p272 = scmp.ne.s32.totalorder %s258, %s259
      %p273 = scmp.eq.s32.totalorder %s36, 1
      %p274 = por %p272, %p273
      %p276 = scmp.ne.s32.totalorder %s259, %s275
      %p277 = scmp.eq.s32.totalorder %s36, 0
      %p278 = por %p276, %p277
      %s279 = ssub.s32 %s30, %s37
      %p280 = scmp.eq.s32.totalorder %s279, 0
      %s282 = sadd.s32 %s281, 1
      %s283 = scalar_select %p280, %s281, %s282
      %p286 = pneg %p280
      %p287 = scmp.eq.s32.totalorder %s30, 1
      %p288 = por %p286, %p287
      %p289 = scmp.ne.s32.totalorder %s281, %s284
      %p290 = scmp.eq.s32.totalorder %s30, 0
      %p291 = por %p289, %p290
      %p292 = scmp.ne.s32.totalorder %s281, %s284
      %p293 = scmp.eq.s32.totalorder %s35, 1
      %p294 = por %p292, %p293
      %p295 = scmp.ne.s32.totalorder %s284, %s285
      %p296 = scmp.eq.s32.totalorder %s35, 0
      %p297 = por %p295, %p296
      %p298 = scmp.ne.s32.totalorder %s284, %s285
      %p299 = scmp.eq.s32.totalorder %s36, 1
      %p300 = por %p298, %p299
      %p302 = scmp.ne.s32.totalorder %s285, %s301
      %p303 = scmp.eq.s32.totalorder %s36, 0
      %p304 = por %p302, %p303
      %s305 = ssub.s32 %s30, %s37
      %p306 = scmp.eq.s32.totalorder %s305, 0
      %s308 = sadd.s32 %s307, 1
      %s309 = scalar_select %p306, %s307, %s308
      %p312 = pneg %p306
      %p313 = scmp.eq.s32.totalorder %s30, 1
      %p314 = por %p312, %p313
      %p315 = scmp.ne.s32.totalorder %s307, %s310
      %p316 = scmp.eq.s32.totalorder %s30, 0
      %p317 = por %p315, %p316
      %p318 = scmp.ne.s32.totalorder %s307, %s310
      %p319 = scmp.eq.s32.totalorder %s35, 1
      %p320 = por %p318, %p319
      %p321 = scmp.ne.s32.totalorder %s310, %s311
      %p322 = scmp.eq.s32.totalorder %s35, 0
      %p323 = por %p321, %p322
      %p324 = scmp.ne.s32.totalorder %s310, %s311
      %p325 = scmp.eq.s32.totalorder %s36, 1
      %p326 = por %p324, %p325
      %p328 = scmp.ne.s32.totalorder %s311, %s327
      %p329 = scmp.eq.s32.totalorder %s36, 0
      %p330 = por %p328, %p329
      %p331 = scmp.le.s32.totalorder 1, %s30
      %p332 = scmp.lt.s32.totalorder %s30, 3
      %p333 = pnand %p331, %p332
      %p334 = pneg %p333
      // Predicated region
      $region9: #{rwkv_time_first.1} parent=5 // pred_check
        _
      $region10: #{rwkv_time_first.1} parent=5 // pred_check_branch
        %336 = sbr.rel (%p333) target = $region12
      $region11: #{rwkv_time_first.1} parent=5 // pred_region
        %s337 = ssub.s32 %s30, 1
        // Predicated region
        $region13: #{rwkv_time_first.1} parent=11 // pred_check
          %p338 = pneg %p77
        $region14: #{rwkv_time_first.1} parent=11 // pred_check_branch
          %340 = sbr.rel (%p338) target = $region16
        $region15: #{rwkv_time_first.1} parent=11 // pred_region
          _
        $region16: #{rwkv_time_first.1} parent=11 // pred_fallthru
          _
        // Predicated region
        $region17: #{rwkv_time_first.1} parent=11 // pred_check
          %p341 = pneg %p98
        $region18: #{rwkv_time_first.1} parent=11 // pred_check_branch
          %343 = sbr.rel (%p341) target = $region20
        $region19: #{rwkv_time_first.1} parent=11 // pred_region
          _
        $region20: #{rwkv_time_first.1} parent=11 // pred_fallthru
          _
        // Predicated region
        $region21: #{rwkv_time_first.1} parent=11 // pred_check
          %p344 = pneg %p119
        $region22: #{rwkv_time_first.1} parent=11 // pred_check_branch
          %346 = sbr.rel (%p344) target = $region24
        $region23: #{rwkv_time_first.1} parent=11 // pred_region
          _
        $region24: #{rwkv_time_first.1} parent=11 // pred_fallthru
          _
        // Predicated region
        $region25: #{rwkv_time_first.1} parent=11 // pred_check
          %p347 = pneg %p140
        $region26: #{rwkv_time_first.1} parent=11 // pred_check_branch
          %349 = sbr.rel (%p347) target = $region28
        $region27: #{rwkv_time_first.1} parent=11 // pred_region
          _
        $region28: #{rwkv_time_first.1} parent=11 // pred_fallthru
          _
        // Predicated region
        $region29: #{rwkv_time_first.1} parent=11 // pred_check
          %p350 = pneg %p161
        $region30: #{rwkv_time_first.1} parent=11 // pred_check_branch
          %352 = sbr.rel (%p350) target = $region32
        $region31: #{rwkv_time_first.1} parent=11 // pred_region
          %354 = vsyncadd [#allocation6], 0
          %s355 = sshll.u32 %s5, 4
          %s356 = int_to_ptr.hbm [resolvable:$true] %s355
          %s357 = sshll.u32 [#allocation5], 4
          %s358 = int_to_ptr.vmem [resolvable:$true] %s357
          %363 = dma.hbm_to_vmem [thread:$0]  %s356, 2048, %s358, [#allocation6], 128, 128, 8
        $region32: #{rwkv_time_first.1} parent=11 // pred_fallthru
          _
        // Predicated region
        $region33: #{rwkv_time_first.1} parent=11 // pred_check
          %p364 = pneg %p182
        $region34: #{rwkv_time_first.1} parent=11 // pred_check_branch
          %366 = sbr.rel (%p364) target = $region36
        $region35: #{rwkv_time_first.1} parent=11 // pred_region
          %368 = vsyncadd [#allocation6], 0
          %s369 = sshll.u32 %s6, 4
          %s370 = int_to_ptr.hbm [resolvable:$true] %s369
          %s371 = sshll.u32 [#allocation7], 4
          %s372 = int_to_ptr.vmem [resolvable:$true] %s371
          %377 = dma.hbm_to_vmem [thread:$0]  %s370, 2048, %s372, [#allocation6], 128, 128, 8
        $region36: #{rwkv_time_first.1} parent=11 // pred_fallthru
          _
        // Predicated region
        $region37: #{rwkv_time_first.1} parent=11 // pred_check
          %p378 = pneg %p203
        $region38: #{rwkv_time_first.1} parent=11 // pred_check_branch
          %380 = sbr.rel (%p378) target = $region40
        $region39: #{rwkv_time_first.1} parent=11 // pred_region
          %382 = vsyncadd [#allocation9], 0
          %s383 = sshll.u32 %s7, 4
          %s384 = int_to_ptr.hbm [resolvable:$true] %s383
          %s385 = sshll.u32 [#allocation8], 4
          %s386 = int_to_ptr.vmem [resolvable:$true] %s385
          %391 = dma.hbm_to_vmem [thread:$0]  %s384, 2048, %s386, [#allocation9], 128, 128, 8
        $region40: #{rwkv_time_first.1} parent=11 // pred_fallthru
          _
        // Predicated region
        $region41: #{rwkv_time_first.1} parent=11 // pred_check
          %p392 = pneg %p224
        $region42: #{rwkv_time_first.1} parent=11 // pred_check_branch
          %394 = sbr.rel (%p392) target = $region44
        $region43: #{rwkv_time_first.1} parent=11 // pred_region
          %396 = vsyncadd [#allocation9], 0
          %s397 = sshll.u32 %s8, 4
          %s398 = int_to_ptr.hbm [resolvable:$true] %s397
          %s399 = sshll.u32 [#allocation10], 4
          %s400 = int_to_ptr.vmem [resolvable:$true] %s399
          %405 = dma.hbm_to_vmem [thread:$0]  %s398, 2048, %s400, [#allocation9], 128, 128, 8
        $region44: #{rwkv_time_first.1} parent=11 // pred_fallthru
          _
        // Predicated region
        $region45: #{rwkv_time_first.1} parent=11 // pred_check
          %p406 = pneg %p245
        $region46: #{rwkv_time_first.1} parent=11 // pred_check_branch
          %408 = sbr.rel (%p406) target = $region48
        $region47: #{rwkv_time_first.1} parent=11 // pred_region
          _
        $region48: #{rwkv_time_first.1} parent=11 // pred_fallthru
          _
      $region12: #{rwkv_time_first.1} parent=5 // pred_fallthru
        _
      %p409 = scmp.lt.s32.totalorder %s30, 2
      // Predicated region
      $region49: #{rwkv_time_first.1} parent=5 // pred_check
        %p410 = pneg %p409
      $region50: #{rwkv_time_first.1} parent=5 // pred_check_branch
        %412 = sbr.rel (%p410) target = $region52
      $region51: #{rwkv_time_first.1} parent=5 // pred_region
        // Predicated region
        $region53: #{rwkv_time_first.1} parent=51 // pred_check
          %p413 = pneg %p50
        $region54: #{rwkv_time_first.1} parent=51 // pred_check_branch
          %415 = sbr.rel (%p413) target = $region56
        $region55: #{rwkv_time_first.1} parent=51 // pred_region
          %s416 = sand.u32 %s40, 1
          %s417 = scalar_lea.sflag [#allocation3], %s416
          %s418 = sand.u32 %s40, 1
          %s419 = smul.addr %s418, 1024
          %s420 = scalar_lea.vmem [#allocation2], %s419
          %s421 = smul.u32 64, %s30
          %423 = vsyncadd %s417, 0
          %s424 = smul.addr %s421, 2
          %s425 = smul.addr %s424, 8
          %s426 = scalar_lea.hbm %s0, %s425
          %s427 = sshll.u32 %s426, 4
          %s428 = int_to_ptr.hbm [resolvable:$true] %s427
          %s429 = sshll.u32 %s420, 4
          %s430 = int_to_ptr.vmem [resolvable:$true] %s429
          %435 = dma.hbm_to_vmem [thread:$0]  %s428, 16384, %s430, %s417, 128, 128, 8
        $region56: #{rwkv_time_first.1} parent=51 // pred_fallthru
          _
      $region52: #{rwkv_time_first.1} parent=5 // pred_fallthru
        _
      %p436 = scmp.le.s32.totalorder 1, %s30
      %p437 = scmp.lt.s32.totalorder %s30, 3
      %p438 = pnand %p436, %p437
      %p439 = pneg %p438
      // Predicated region
      $region57: #{rwkv_time_first.1} parent=5 // pred_check
        _
      $region58: #{rwkv_time_first.1} parent=5 // pred_check_branch
        %441 = sbr.rel (%p438) target = $region60
      $region59: #{rwkv_time_first.1} parent=5 // pred_region
        %s442 = ssub.s32 %s30, 1
        %s443 = sand.u32 %s43, 1
        %s444 = scalar_lea.sflag [#allocation3], %s443
        %s445 = sand.u32 %s43, 1
        %s446 = smul.addr %s445, 1024
        %s447 = scalar_lea.vmem [#allocation2], %s446
        // Predicated region
        $region61: #{rwkv_time_first.1} parent=59 // pred_check
          %p448 = pneg %p56
        $region62: #{rwkv_time_first.1} parent=59 // pred_check_branch
          %450 = sbr.rel (%p448) target = $region64
        $region63: #{rwkv_time_first.1} parent=59 // pred_region
          %452 = dma.done %s444, 16384
        $region64: #{rwkv_time_first.1} parent=59 // pred_fallthru
          _
        // Predicated region
        $region65: #{rwkv_time_first.1} parent=59 // pred_check
          %p453 = pneg %p161
        $region66: #{rwkv_time_first.1} parent=59 // pred_check_branch
          %455 = sbr.rel (%p453) target = $region68
        $region67: #{rwkv_time_first.1} parent=59 // pred_region
          %457 = dma.done [#allocation6], 2048
        $region68: #{rwkv_time_first.1} parent=59 // pred_fallthru
          _
        // Predicated region
        $region69: #{rwkv_time_first.1} parent=59 // pred_check
          %p458 = pneg %p182
        $region70: #{rwkv_time_first.1} parent=59 // pred_check_branch
          %460 = sbr.rel (%p458) target = $region72
        $region71: #{rwkv_time_first.1} parent=59 // pred_region
          %462 = dma.done [#allocation6], 2048
        $region72: #{rwkv_time_first.1} parent=59 // pred_fallthru
          _
        // Predicated region
        $region73: #{rwkv_time_first.1} parent=59 // pred_check
          %p463 = pneg %p203
        $region74: #{rwkv_time_first.1} parent=59 // pred_check_branch
          %465 = sbr.rel (%p463) target = $region76
        $region75: #{rwkv_time_first.1} parent=59 // pred_region
          %467 = dma.done [#allocation9], 2048
        $region76: #{rwkv_time_first.1} parent=59 // pred_fallthru
          _
        // Predicated region
        $region77: #{rwkv_time_first.1} parent=59 // pred_check
          %p468 = pneg %p224
        $region78: #{rwkv_time_first.1} parent=59 // pred_check_branch
          %470 = sbr.rel (%p468) target = $region80
        $region79: #{rwkv_time_first.1} parent=59 // pred_region
          %472 = dma.done [#allocation9], 2048
        $region80: #{rwkv_time_first.1} parent=59 // pred_fallthru
          _
        %s473 = sand.u32 %s43, 1
        %s474 = scalar_lea.sflag [#allocation3], %s473
        %s475 = sand.u32 %s43, 1
        %s476 = smul.addr %s475, 1024
        %s477 = scalar_lea.vmem [#allocation2], %s476
        %p478 = pneg %p56
        %p479 = pneg %p53
        %p480 = pneg %p77
        %p481 = pneg %p74
        %p482 = pneg %p98
        %p483 = pneg %p95
        %p484 = pneg %p119
        %p485 = pneg %p116
        %p486 = pneg %p140
        %p487 = pneg %p137
        %p488 = pneg %p161
        %p489 = pneg %p158
        %p490 = pneg %p182
        %p491 = pneg %p179
        %p492 = pneg %p203
        %p493 = pneg %p200
        %p494 = pneg %p224
        %p495 = pneg %p221
        %p496 = pneg %p245
        %p497 = pneg %p242
        %p498 = pneg %p271
        %p499 = pneg %p268
        %s500 = sand.u32 %s258, 1
        %s501 = scalar_lea.sflag [#allocation4], %s500
        %s502 = sand.u32 %s258, 1
        %s503 = smul.addr %s502, 1024
        %s504 = scalar_lea.vmem [#allocation11], %s503
        %p505 = pneg %p297
        %p506 = pneg %p294
        %s507 = sand.u32 %s35, 1
        %s508 = scalar_lea.sflag [#allocation13], %s507
        %s509 = sand.u32 %s284, 1
        %s510 = smul.addr %s509, 64
        %s511 = scalar_lea.vmem [#allocation12], %s510
        %p512 = pneg %p323
        %p513 = pneg %p320
        %s514 = sand.u32 %s35, 1
        %s515 = scalar_lea.sflag [#allocation13], %s514
        %s516 = sand.u32 %s310, 1
        %s517 = smul.addr %s516, 64
        %s518 = scalar_lea.vmem [#allocation14], %s517
        %s519 = smul.u32 64, %s35
        %s520 = smul.u32 64, %s35
        %s521 = smul.u32 8, %s35
        %s522 = smul.u32 8, %s35
        %v523 = vld [vmem:[%s447] sm:$0xff]
        %v524 = vld [vmem:[%s447 + $0x8] sm:$0xff]
        %v525 = vld [vmem:[%s447 + $0x10] sm:$0xff]
        %v526 = vld [vmem:[%s447 + $0x18] sm:$0xff]
        %v527 = vld [vmem:[%s447 + $0x20] sm:$0xff]
        %v528 = vld [vmem:[%s447 + $0x28] sm:$0xff]
        %v529 = vld [vmem:[%s447 + $0x30] sm:$0xff]
        %v530 = vld [vmem:[%s447 + $0x38] sm:$0xff]
        %v531 = vld [vmem:[%s447 + $0x40] sm:$0xff]
        %v532 = vld [vmem:[%s447 + $0x48] sm:$0xff]
        %v533 = vld [vmem:[%s447 + $0x50] sm:$0xff]
        %v534 = vld [vmem:[%s447 + $0x58] sm:$0xff]
        %v535 = vld [vmem:[%s447 + $0x60] sm:$0xff]
        %v536 = vld [vmem:[%s447 + $0x68] sm:$0xff]
        %v537 = vld [vmem:[%s447 + $0x70] sm:$0xff]
        %v538 = vld [vmem:[%s447 + $0x78] sm:$0xff]
        %v539 = vld [vmem:[%s447 + $0x80] sm:$0xff]
        %v540 = vld [vmem:[%s447 + $0x88] sm:$0xff]
        %v541 = vld [vmem:[%s447 + $0x90] sm:$0xff]
        %v542 = vld [vmem:[%s447 + $0x98] sm:$0xff]
        %v543 = vld [vmem:[%s447 + $0xa0] sm:$0xff]
        %v544 = vld [vmem:[%s447 + $0xa8] sm:$0xff]
        %v545 = vld [vmem:[%s447 + $0xb0] sm:$0xff]
        %v546 = vld [vmem:[%s447 + $0xb8] sm:$0xff]
        %v547 = vld [vmem:[%s447 + $0xc0] sm:$0xff]
        %v548 = vld [vmem:[%s447 + $0xc8] sm:$0xff]
        %v549 = vld [vmem:[%s447 + $0xd0] sm:$0xff]
        %v550 = vld [vmem:[%s447 + $0xd8] sm:$0xff]
        %v551 = vld [vmem:[%s447 + $0xe0] sm:$0xff]
        %v552 = vld [vmem:[%s447 + $0xe8] sm:$0xff]
        %v553 = vld [vmem:[%s447 + $0xf0] sm:$0xff]
        %v554 = vld [vmem:[%s447 + $0xf8] sm:$0xff]
        %v555 = vld [vmem:[%s447 + $0x100] sm:$0xff]
        %v556 = vld [vmem:[%s447 + $0x108] sm:$0xff]
        %v557 = vld [vmem:[%s447 + $0x110] sm:$0xff]
        %v558 = vld [vmem:[%s447 + $0x118] sm:$0xff]
        %v559 = vld [vmem:[%s447 + $0x120] sm:$0xff]
        %v560 = vld [vmem:[%s447 + $0x128] sm:$0xff]
        %v561 = vld [vmem:[%s447 + $0x130] sm:$0xff]
        %v562 = vld [vmem:[%s447 + $0x138] sm:$0xff]
        %v563 = vld [vmem:[%s447 + $0x140] sm:$0xff]
        %v564 = vld [vmem:[%s447 + $0x148] sm:$0xff]
        %v565 = vld [vmem:[%s447 + $0x150] sm:$0xff]
        %v566 = vld [vmem:[%s447 + $0x158] sm:$0xff]
        %v567 = vld [vmem:[%s447 + $0x160] sm:$0xff]
        %v568 = vld [vmem:[%s447 + $0x168] sm:$0xff]
        %v569 = vld [vmem:[%s447 + $0x170] sm:$0xff]
        %v570 = vld [vmem:[%s447 + $0x178] sm:$0xff]
        %v571 = vld [vmem:[%s447 + $0x180] sm:$0xff]
        %v572 = vld [vmem:[%s447 + $0x188] sm:$0xff]
        %v573 = vld [vmem:[%s447 + $0x190] sm:$0xff]
        %v574 = vld [vmem:[%s447 + $0x198] sm:$0xff]
        %v575 = vld [vmem:[%s447 + $0x1a0] sm:$0xff]
        %v576 = vld [vmem:[%s447 + $0x1a8] sm:$0xff]
        %v577 = vld [vmem:[%s447 + $0x1b0] sm:$0xff]
        %v578 = vld [vmem:[%s447 + $0x1b8] sm:$0xff]
        %v579 = vld [vmem:[%s447 + $0x1c0] sm:$0xff]
        %v580 = vld [vmem:[%s447 + $0x1c8] sm:$0xff]
        %v581 = vld [vmem:[%s447 + $0x1d0] sm:$0xff]
        %v582 = vld [vmem:[%s447 + $0x1d8] sm:$0xff]
        %v583 = vld [vmem:[%s447 + $0x1e0] sm:$0xff]
        %v584 = vld [vmem:[%s447 + $0x1e8] sm:$0xff]
        %v585 = vld [vmem:[%s447 + $0x1f0] sm:$0xff]
        %v586 = vld [vmem:[%s447 + $0x1f8] sm:$0xff]
        %v587 = vld [vmem:[%s447 + $0x200] sm:$0xff]
        %v588 = vld [vmem:[%s447 + $0x208] sm:$0xff]
        %v589 = vld [vmem:[%s447 + $0x210] sm:$0xff]
        %v590 = vld [vmem:[%s447 + $0x218] sm:$0xff]
        %v591 = vld [vmem:[%s447 + $0x220] sm:$0xff]
        %v592 = vld [vmem:[%s447 + $0x228] sm:$0xff]
        %v593 = vld [vmem:[%s447 + $0x230] sm:$0xff]
        %v594 = vld [vmem:[%s447 + $0x238] sm:$0xff]
        %v595 = vld [vmem:[%s447 + $0x240] sm:$0xff]
        %v596 = vld [vmem:[%s447 + $0x248] sm:$0xff]
        %v597 = vld [vmem:[%s447 + $0x250] sm:$0xff]
        %v598 = vld [vmem:[%s447 + $0x258] sm:$0xff]
        %v599 = vld [vmem:[%s447 + $0x260] sm:$0xff]
        %v600 = vld [vmem:[%s447 + $0x268] sm:$0xff]
        %v601 = vld [vmem:[%s447 + $0x270] sm:$0xff]
        %v602 = vld [vmem:[%s447 + $0x278] sm:$0xff]
        %v603 = vld [vmem:[%s447 + $0x280] sm:$0xff]
        %v604 = vld [vmem:[%s447 + $0x288] sm:$0xff]
        %v605 = vld [vmem:[%s447 + $0x290] sm:$0xff]
        %v606 = vld [vmem:[%s447 + $0x298] sm:$0xff]
        %v607 = vld [vmem:[%s447 + $0x2a0] sm:$0xff]
        %v608 = vld [vmem:[%s447 + $0x2a8] sm:$0xff]
        %v609 = vld [vmem:[%s447 + $0x2b0] sm:$0xff]
        %v610 = vld [vmem:[%s447 + $0x2b8] sm:$0xff]
        %v611 = vld [vmem:[%s447 + $0x2c0] sm:$0xff]
        %v612 = vld [vmem:[%s447 + $0x2c8] sm:$0xff]
        %v613 = vld [vmem:[%s447 + $0x2d0] sm:$0xff]
        %v614 = vld [vmem:[%s447 + $0x2d8] sm:$0xff]
        %v615 = vld [vmem:[%s447 + $0x2e0] sm:$0xff]
        %v616 = vld [vmem:[%s447 + $0x2e8] sm:$0xff]
        %v617 = vld [vmem:[%s447 + $0x2f0] sm:$0xff]
        %v618 = vld [vmem:[%s447 + $0x2f8] sm:$0xff]
        %v619 = vld [vmem:[%s447 + $0x300] sm:$0xff]
        %v620 = vld [vmem:[%s447 + $0x308] sm:$0xff]
        %v621 = vld [vmem:[%s447 + $0x310] sm:$0xff]
        %v622 = vld [vmem:[%s447 + $0x318] sm:$0xff]
        %v623 = vld [vmem:[%s447 + $0x320] sm:$0xff]
        %v624 = vld [vmem:[%s447 + $0x328] sm:$0xff]
        %v625 = vld [vmem:[%s447 + $0x330] sm:$0xff]
        %v626 = vld [vmem:[%s447 + $0x338] sm:$0xff]
        %v627 = vld [vmem:[%s447 + $0x340] sm:$0xff]
        %v628 = vld [vmem:[%s447 + $0x348] sm:$0xff]
        %v629 = vld [vmem:[%s447 + $0x350] sm:$0xff]
        %v630 = vld [vmem:[%s447 + $0x358] sm:$0xff]
        %v631 = vld [vmem:[%s447 + $0x360] sm:$0xff]
        %v632 = vld [vmem:[%s447 + $0x368] sm:$0xff]
        %v633 = vld [vmem:[%s447 + $0x370] sm:$0xff]
        %v634 = vld [vmem:[%s447 + $0x378] sm:$0xff]
        %v635 = vld [vmem:[%s447 + $0x380] sm:$0xff]
        %v636 = vld [vmem:[%s447 + $0x388] sm:$0xff]
        %v637 = vld [vmem:[%s447 + $0x390] sm:$0xff]
        %v638 = vld [vmem:[%s447 + $0x398] sm:$0xff]
        %v639 = vld [vmem:[%s447 + $0x3a0] sm:$0xff]
        %v640 = vld [vmem:[%s447 + $0x3a8] sm:$0xff]
        %v641 = vld [vmem:[%s447 + $0x3b0] sm:$0xff]
        %v642 = vld [vmem:[%s447 + $0x3b8] sm:$0xff]
        %v643 = vld [vmem:[%s447 + $0x3c0] sm:$0xff]
        %v644 = vld [vmem:[%s447 + $0x3c8] sm:$0xff]
        %v645 = vld [vmem:[%s447 + $0x3d0] sm:$0xff]
        %v646 = vld [vmem:[%s447 + $0x3d8] sm:$0xff]
        %v647 = vld [vmem:[%s447 + $0x3e0] sm:$0xff]
        %v648 = vld [vmem:[%s447 + $0x3e8] sm:$0xff]
        %v649 = vld [vmem:[%s447 + $0x3f0] sm:$0xff]
        %v650 = vld [vmem:[%s447 + $0x3f8] sm:$0xff]
        %651 = vadd.xlane.f32.xlu0 %v523
        %v652 = vpop.xlane.xlu0 %651
        %653 = vadd.xlane.f32.xlu0 %v524
        %v654 = vpop.xlane.xlu0 %653
        %655 = vadd.xlane.f32.xlu0 %v525
        %v656 = vpop.xlane.xlu0 %655
        %657 = vadd.xlane.f32.xlu0 %v526
        %v658 = vpop.xlane.xlu0 %657
        %659 = vadd.xlane.f32.xlu0 %v527
        %v660 = vpop.xlane.xlu0 %659
        %661 = vadd.xlane.f32.xlu0 %v528
        %v662 = vpop.xlane.xlu0 %661
        %663 = vadd.xlane.f32.xlu0 %v529
        %v664 = vpop.xlane.xlu0 %663
        %665 = vadd.xlane.f32.xlu0 %v530
        %v666 = vpop.xlane.xlu0 %665
        %667 = vadd.xlane.f32.xlu0 %v531
        %v668 = vpop.xlane.xlu0 %667
        %669 = vadd.xlane.f32.xlu0 %v532
        %v670 = vpop.xlane.xlu0 %669
        %671 = vadd.xlane.f32.xlu0 %v533
        %v672 = vpop.xlane.xlu0 %671
        %673 = vadd.xlane.f32.xlu0 %v534
        %v674 = vpop.xlane.xlu0 %673
        %675 = vadd.xlane.f32.xlu0 %v535
        %v676 = vpop.xlane.xlu0 %675
        %677 = vadd.xlane.f32.xlu0 %v536
        %v678 = vpop.xlane.xlu0 %677
        %679 = vadd.xlane.f32.xlu0 %v537
        %v680 = vpop.xlane.xlu0 %679
        %681 = vadd.xlane.f32.xlu0 %v538
        %v682 = vpop.xlane.xlu0 %681
        %683 = vadd.xlane.f32.xlu0 %v539
        %v684 = vpop.xlane.xlu0 %683
        %685 = vadd.xlane.f32.xlu0 %v540
        %v686 = vpop.xlane.xlu0 %685
        %687 = vadd.xlane.f32.xlu0 %v541
        %v688 = vpop.xlane.xlu0 %687
        %689 = vadd.xlane.f32.xlu0 %v542
        %v690 = vpop.xlane.xlu0 %689
        %691 = vadd.xlane.f32.xlu0 %v543
        %v692 = vpop.xlane.xlu0 %691
        %693 = vadd.xlane.f32.xlu0 %v544
        %v694 = vpop.xlane.xlu0 %693
        %695 = vadd.xlane.f32.xlu0 %v545
        %v696 = vpop.xlane.xlu0 %695
        %697 = vadd.xlane.f32.xlu0 %v546
        %v698 = vpop.xlane.xlu0 %697
        %699 = vadd.xlane.f32.xlu0 %v547
        %v700 = vpop.xlane.xlu0 %699
        %701 = vadd.xlane.f32.xlu0 %v548
        %v702 = vpop.xlane.xlu0 %701
        %703 = vadd.xlane.f32.xlu0 %v549
        %v704 = vpop.xlane.xlu0 %703
        %705 = vadd.xlane.f32.xlu0 %v550
        %v706 = vpop.xlane.xlu0 %705
        %707 = vadd.xlane.f32.xlu0 %v551
        %v708 = vpop.xlane.xlu0 %707
        %709 = vadd.xlane.f32.xlu0 %v552
        %v710 = vpop.xlane.xlu0 %709
        %711 = vadd.xlane.f32.xlu0 %v553
        %v712 = vpop.xlane.xlu0 %711
        %713 = vadd.xlane.f32.xlu0 %v554
        %v714 = vpop.xlane.xlu0 %713
        %715 = vadd.xlane.f32.xlu0 %v555
        %v716 = vpop.xlane.xlu0 %715
        %717 = vadd.xlane.f32.xlu0 %v556
        %v718 = vpop.xlane.xlu0 %717
        %719 = vadd.xlane.f32.xlu0 %v557
        %v720 = vpop.xlane.xlu0 %719
        %721 = vadd.xlane.f32.xlu0 %v558
        %v722 = vpop.xlane.xlu0 %721
        %723 = vadd.xlane.f32.xlu0 %v559
        %v724 = vpop.xlane.xlu0 %723
        %725 = vadd.xlane.f32.xlu0 %v560
        %v726 = vpop.xlane.xlu0 %725
        %727 = vadd.xlane.f32.xlu0 %v561
        %v728 = vpop.xlane.xlu0 %727
        %729 = vadd.xlane.f32.xlu0 %v562
        %v730 = vpop.xlane.xlu0 %729
        %731 = vadd.xlane.f32.xlu0 %v563
        %v732 = vpop.xlane.xlu0 %731
        %733 = vadd.xlane.f32.xlu0 %v564
        %v734 = vpop.xlane.xlu0 %733
        %735 = vadd.xlane.f32.xlu0 %v565
        %v736 = vpop.xlane.xlu0 %735
        %737 = vadd.xlane.f32.xlu0 %v566
        %v738 = vpop.xlane.xlu0 %737
        %739 = vadd.xlane.f32.xlu0 %v567
        %v740 = vpop.xlane.xlu0 %739
        %741 = vadd.xlane.f32.xlu0 %v568
        %v742 = vpop.xlane.xlu0 %741
        %743 = vadd.xlane.f32.xlu0 %v569
        %v744 = vpop.xlane.xlu0 %743
        %745 = vadd.xlane.f32.xlu0 %v570
        %v746 = vpop.xlane.xlu0 %745
        %747 = vadd.xlane.f32.xlu0 %v571
        %v748 = vpop.xlane.xlu0 %747
        %749 = vadd.xlane.f32.xlu0 %v572
        %v750 = vpop.xlane.xlu0 %749
        %751 = vadd.xlane.f32.xlu0 %v573
        %v752 = vpop.xlane.xlu0 %751
        %753 = vadd.xlane.f32.xlu0 %v574
        %v754 = vpop.xlane.xlu0 %753
        %755 = vadd.xlane.f32.xlu0 %v575
        %v756 = vpop.xlane.xlu0 %755
        %757 = vadd.xlane.f32.xlu0 %v576
        %v758 = vpop.xlane.xlu0 %757
        %759 = vadd.xlane.f32.xlu0 %v577
        %v760 = vpop.xlane.xlu0 %759
        %761 = vadd.xlane.f32.xlu0 %v578
        %v762 = vpop.xlane.xlu0 %761
        %763 = vadd.xlane.f32.xlu0 %v579
        %v764 = vpop.xlane.xlu0 %763
        %765 = vadd.xlane.f32.xlu0 %v580
        %v766 = vpop.xlane.xlu0 %765
        %767 = vadd.xlane.f32.xlu0 %v581
        %v768 = vpop.xlane.xlu0 %767
        %769 = vadd.xlane.f32.xlu0 %v582
        %v770 = vpop.xlane.xlu0 %769
        %771 = vadd.xlane.f32.xlu0 %v583
        %v772 = vpop.xlane.xlu0 %771
        %773 = vadd.xlane.f32.xlu0 %v584
        %v774 = vpop.xlane.xlu0 %773
        %775 = vadd.xlane.f32.xlu0 %v585
        %v776 = vpop.xlane.xlu0 %775
        %777 = vadd.xlane.f32.xlu0 %v586
        %v778 = vpop.xlane.xlu0 %777
        %779 = vadd.xlane.f32.xlu0 %v587
        %v780 = vpop.xlane.xlu0 %779
        %781 = vadd.xlane.f32.xlu0 %v588
        %v782 = vpop.xlane.xlu0 %781
        %783 = vadd.xlane.f32.xlu0 %v589
        %v784 = vpop.xlane.xlu0 %783
        %785 = vadd.xlane.f32.xlu0 %v590
        %v786 = vpop.xlane.xlu0 %785
        %787 = vadd.xlane.f32.xlu0 %v591
        %v788 = vpop.xlane.xlu0 %787
        %789 = vadd.xlane.f32.xlu0 %v592
        %v790 = vpop.xlane.xlu0 %789
        %791 = vadd.xlane.f32.xlu0 %v593
        %v792 = vpop.xlane.xlu0 %791
        %793 = vadd.xlane.f32.xlu0 %v594
        %v794 = vpop.xlane.xlu0 %793
        %795 = vadd.xlane.f32.xlu0 %v595
        %v796 = vpop.xlane.xlu0 %795
        %797 = vadd.xlane.f32.xlu0 %v596
        %v798 = vpop.xlane.xlu0 %797
        %799 = vadd.xlane.f32.xlu0 %v597
        %v800 = vpop.xlane.xlu0 %799
        %801 = vadd.xlane.f32.xlu0 %v598
        %v802 = vpop.xlane.xlu0 %801
        %803 = vadd.xlane.f32.xlu0 %v599
        %v804 = vpop.xlane.xlu0 %803
        %805 = vadd.xlane.f32.xlu0 %v600
        %v806 = vpop.xlane.xlu0 %805
        %807 = vadd.xlane.f32.xlu0 %v601
        %v808 = vpop.xlane.xlu0 %807
        %809 = vadd.xlane.f32.xlu0 %v602
        %v810 = vpop.xlane.xlu0 %809
        %811 = vadd.xlane.f32.xlu0 %v603
        %v812 = vpop.xlane.xlu0 %811
        %813 = vadd.xlane.f32.xlu0 %v604
        %v814 = vpop.xlane.xlu0 %813
        %815 = vadd.xlane.f32.xlu0 %v605
        %v816 = vpop.xlane.xlu0 %815
        %817 = vadd.xlane.f32.xlu0 %v606
        %v818 = vpop.xlane.xlu0 %817
        %819 = vadd.xlane.f32.xlu0 %v607
        %v820 = vpop.xlane.xlu0 %819
        %821 = vadd.xlane.f32.xlu0 %v608
        %v822 = vpop.xlane.xlu0 %821
        %823 = vadd.xlane.f32.xlu0 %v609
        %v824 = vpop.xlane.xlu0 %823
        %825 = vadd.xlane.f32.xlu0 %v610
        %v826 = vpop.xlane.xlu0 %825
        %827 = vadd.xlane.f32.xlu0 %v611
        %v828 = vpop.xlane.xlu0 %827
        %829 = vadd.xlane.f32.xlu0 %v612
        %v830 = vpop.xlane.xlu0 %829
        %831 = vadd.xlane.f32.xlu0 %v613
        %v832 = vpop.xlane.xlu0 %831
        %833 = vadd.xlane.f32.xlu0 %v614
        %v834 = vpop.xlane.xlu0 %833
        %835 = vadd.xlane.f32.xlu0 %v615
        %v836 = vpop.xlane.xlu0 %835
        %837 = vadd.xlane.f32.xlu0 %v616
        %v838 = vpop.xlane.xlu0 %837
        %839 = vadd.xlane.f32.xlu0 %v617
        %v840 = vpop.xlane.xlu0 %839
        %841 = vadd.xlane.f32.xlu0 %v618
        %v842 = vpop.xlane.xlu0 %841
        %843 = vadd.xlane.f32.xlu0 %v619
        %v844 = vpop.xlane.xlu0 %843
        %845 = vadd.xlane.f32.xlu0 %v620
        %v846 = vpop.xlane.xlu0 %845
        %847 = vadd.xlane.f32.xlu0 %v621
        %v848 = vpop.xlane.xlu0 %847
        %849 = vadd.xlane.f32.xlu0 %v622
        %v850 = vpop.xlane.xlu0 %849
        %851 = vadd.xlane.f32.xlu0 %v623
        %v852 = vpop.xlane.xlu0 %851
        %853 = vadd.xlane.f32.xlu0 %v624
        %v854 = vpop.xlane.xlu0 %853
        %855 = vadd.xlane.f32.xlu0 %v625
        %v856 = vpop.xlane.xlu0 %855
        %857 = vadd.xlane.f32.xlu0 %v626
        %v858 = vpop.xlane.xlu0 %857
        %859 = vadd.xlane.f32.xlu0 %v627
        %v860 = vpop.xlane.xlu0 %859
        %861 = vadd.xlane.f32.xlu0 %v628
        %v862 = vpop.xlane.xlu0 %861
        %863 = vadd.xlane.f32.xlu0 %v629
        %v864 = vpop.xlane.xlu0 %863
        %865 = vadd.xlane.f32.xlu0 %v630
        %v866 = vpop.xlane.xlu0 %865
        %867 = vadd.xlane.f32.xlu0 %v631
        %v868 = vpop.xlane.xlu0 %867
        %869 = vadd.xlane.f32.xlu0 %v632
        %v870 = vpop.xlane.xlu0 %869
        %871 = vadd.xlane.f32.xlu0 %v633
        %v872 = vpop.xlane.xlu0 %871
        %873 = vadd.xlane.f32.xlu0 %v634
        %v874 = vpop.xlane.xlu0 %873
        %875 = vadd.xlane.f32.xlu0 %v635
        %v876 = vpop.xlane.xlu0 %875
        %877 = vadd.xlane.f32.xlu0 %v636
        %v878 = vpop.xlane.xlu0 %877
        %879 = vadd.xlane.f32.xlu0 %v637
        %v880 = vpop.xlane.xlu0 %879
        %881 = vadd.xlane.f32.xlu0 %v638
        %v882 = vpop.xlane.xlu0 %881
        %883 = vadd.xlane.f32.xlu0 %v639
        %v884 = vpop.xlane.xlu0 %883
        %885 = vadd.xlane.f32.xlu0 %v640
        %v886 = vpop.xlane.xlu0 %885
        %887 = vadd.xlane.f32.xlu0 %v641
        %v888 = vpop.xlane.xlu0 %887
        %889 = vadd.xlane.f32.xlu0 %v642
        %v890 = vpop.xlane.xlu0 %889
        %891 = vadd.xlane.f32.xlu0 %v643
        %v892 = vpop.xlane.xlu0 %891
        %893 = vadd.xlane.f32.xlu0 %v644
        %v894 = vpop.xlane.xlu0 %893
        %895 = vadd.xlane.f32.xlu0 %v645
        %v896 = vpop.xlane.xlu0 %895
        %897 = vadd.xlane.f32.xlu0 %v646
        %v898 = vpop.xlane.xlu0 %897
        %899 = vadd.xlane.f32.xlu0 %v647
        %v900 = vpop.xlane.xlu0 %899
        %901 = vadd.xlane.f32.xlu0 %v648
        %v902 = vpop.xlane.xlu0 %901
        %903 = vadd.xlane.f32.xlu0 %v649
        %v904 = vpop.xlane.xlu0 %903
        %905 = vadd.xlane.f32.xlu0 %v650
        %v906 = vpop.xlane.xlu0 %905
        %v907 = vrcp.pop 128.0
        %v908 = vmul.f32 128.0, %v907
        %v909 = vsub.f32 1.0, %v908
        %v910 = vmul.f32 %v907, %v909
        %v911 = vadd.f32 %v907, %v910
        %vm912 = vweird.f32 %v907
        %v913 = vsel %vm912, %v907, %v911
        %v914 = vmul.f32 %v652, %v913
        %v915 = vmul.f32 %v654, %v913
        %v916 = vmul.f32 %v656, %v913
        %v917 = vmul.f32 %v658, %v913
        %v918 = vmul.f32 %v660, %v913
        %v919 = vmul.f32 %v662, %v913
        %v920 = vmul.f32 %v664, %v913
        %v921 = vmul.f32 %v666, %v913
        %v922 = vmul.f32 %v668, %v913
        %v923 = vmul.f32 %v670, %v913
        %v924 = vmul.f32 %v672, %v913
        %v925 = vmul.f32 %v674, %v913
        %v926 = vmul.f32 %v676, %v913
        %v927 = vmul.f32 %v678, %v913
        %v928 = vmul.f32 %v680, %v913
        %v929 = vmul.f32 %v682, %v913
        %v930 = vmul.f32 %v684, %v913
        %v931 = vmul.f32 %v686, %v913
        %v932 = vmul.f32 %v688, %v913
        %v933 = vmul.f32 %v690, %v913
        %v934 = vmul.f32 %v692, %v913
        %v935 = vmul.f32 %v694, %v913
        %v936 = vmul.f32 %v696, %v913
        %v937 = vmul.f32 %v698, %v913
        %v938 = vmul.f32 %v700, %v913
        %v939 = vmul.f32 %v702, %v913
        %v940 = vmul.f32 %v704, %v913
        %v941 = vmul.f32 %v706, %v913
        %v942 = vmul.f32 %v708, %v913
        %v943 = vmul.f32 %v710, %v913
        %v944 = vmul.f32 %v712, %v913
        %v945 = vmul.f32 %v714, %v913
        %v946 = vmul.f32 %v716, %v913
        %v947 = vmul.f32 %v718, %v913
        %v948 = vmul.f32 %v720, %v913
        %v949 = vmul.f32 %v722, %v913
        %v950 = vmul.f32 %v724, %v913
        %v951 = vmul.f32 %v726, %v913
        %v952 = vmul.f32 %v728, %v913
        %v953 = vmul.f32 %v730, %v913
        %v954 = vmul.f32 %v732, %v913
        %v955 = vmul.f32 %v734, %v913
        %v956 = vmul.f32 %v736, %v913
        %v957 = vmul.f32 %v738, %v913
        %v958 = vmul.f32 %v740, %v913
        %v959 = vmul.f32 %v742, %v913
        %v960 = vmul.f32 %v744, %v913
        %v961 = vmul.f32 %v746, %v913
        %v962 = vmul.f32 %v748, %v913
        %v963 = vmul.f32 %v750, %v913
        %v964 = vmul.f32 %v752, %v913
        %v965 = vmul.f32 %v754, %v913
        %v966 = vmul.f32 %v756, %v913
        %v967 = vmul.f32 %v758, %v913
        %v968 = vmul.f32 %v760, %v913
        %v969 = vmul.f32 %v762, %v913
        %v970 = vmul.f32 %v764, %v913
        %v971 = vmul.f32 %v766, %v913
        %v972 = vmul.f32 %v768, %v913
        %v973 = vmul.f32 %v770, %v913
        %v974 = vmul.f32 %v772, %v913
        %v975 = vmul.f32 %v774, %v913
        %v976 = vmul.f32 %v776, %v913
        %v977 = vmul.f32 %v778, %v913
        %v978 = vmul.f32 %v780, %v913
        %v979 = vmul.f32 %v782, %v913
        %v980 = vmul.f32 %v784, %v913
        %v981 = vmul.f32 %v786, %v913
        %v982 = vmul.f32 %v788, %v913
        %v983 = vmul.f32 %v790, %v913
        %v984 = vmul.f32 %v792, %v913
        %v985 = vmul.f32 %v794, %v913
        %v986 = vmul.f32 %v796, %v913
        %v987 = vmul.f32 %v798, %v913
        %v988 = vmul.f32 %v800, %v913
        %v989 = vmul.f32 %v802, %v913
        %v990 = vmul.f32 %v804, %v913
        %v991 = vmul.f32 %v806, %v913
        %v992 = vmul.f32 %v808, %v913
        %v993 = vmul.f32 %v810, %v913
        %v994 = vmul.f32 %v812, %v913
        %v995 = vmul.f32 %v814, %v913
        %v996 = vmul.f32 %v816, %v913
        %v997 = vmul.f32 %v818, %v913
        %v998 = vmul.f32 %v820, %v913
        %v999 = vmul.f32 %v822, %v913
        %v1000 = vmul.f32 %v824, %v913
        %v1001 = vmul.f32 %v826, %v913
        %v1002 = vmul.f32 %v828, %v913
        %v1003 = vmul.f32 %v830, %v913
        %v1004 = vmul.f32 %v832, %v913
        %v1005 = vmul.f32 %v834, %v913
        %v1006 = vmul.f32 %v836, %v913
        %v1007 = vmul.f32 %v838, %v913
        %v1008 = vmul.f32 %v840, %v913
        %v1009 = vmul.f32 %v842, %v913
        %v1010 = vmul.f32 %v844, %v913
        %v1011 = vmul.f32 %v846, %v913
        %v1012 = vmul.f32 %v848, %v913
        %v1013 = vmul.f32 %v850, %v913
        %v1014 = vmul.f32 %v852, %v913
        %v1015 = vmul.f32 %v854, %v913
        %v1016 = vmul.f32 %v856, %v913
        %v1017 = vmul.f32 %v858, %v913
        %v1018 = vmul.f32 %v860, %v913
        %v1019 = vmul.f32 %v862, %v913
        %v1020 = vmul.f32 %v864, %v913
        %v1021 = vmul.f32 %v866, %v913
        %v1022 = vmul.f32 %v868, %v913
        %v1023 = vmul.f32 %v870, %v913
        %v1024 = vmul.f32 %v872, %v913
        %v1025 = vmul.f32 %v874, %v913
        %v1026 = vmul.f32 %v876, %v913
        %v1027 = vmul.f32 %v878, %v913
        %v1028 = vmul.f32 %v880, %v913
        %v1029 = vmul.f32 %v882, %v913
        %v1030 = vmul.f32 %v884, %v913
        %v1031 = vmul.f32 %v886, %v913
        %v1032 = vmul.f32 %v888, %v913
        %v1033 = vmul.f32 %v890, %v913
        %v1034 = vmul.f32 %v892, %v913
        %v1035 = vmul.f32 %v894, %v913
        %v1036 = vmul.f32 %v896, %v913
        %v1037 = vmul.f32 %v898, %v913
        %v1038 = vmul.f32 %v900, %v913
        %v1039 = vmul.f32 %v902, %v913
        %v1040 = vmul.f32 %v904, %v913
        %v1041 = vmul.f32 %v906, %v913
        %v1042 = vsub.f32 %v523, %v914
        %v1043 = vsub.f32 %v524, %v915
        %v1044 = vsub.f32 %v525, %v916
        %v1045 = vsub.f32 %v526, %v917
        %v1046 = vsub.f32 %v527, %v918
        %v1047 = vsub.f32 %v528, %v919
        %v1048 = vsub.f32 %v529, %v920
        %v1049 = vsub.f32 %v530, %v921
        %v1050 = vsub.f32 %v531, %v922
        %v1051 = vsub.f32 %v532, %v923
        %v1052 = vsub.f32 %v533, %v924
        %v1053 = vsub.f32 %v534, %v925
        %v1054 = vsub.f32 %v535, %v926
        %v1055 = vsub.f32 %v536, %v927
        %v1056 = vsub.f32 %v537, %v928
        %v1057 = vsub.f32 %v538, %v929
        %v1058 = vsub.f32 %v539, %v930
        %v1059 = vsub.f32 %v540, %v931
        %v1060 = vsub.f32 %v541, %v932
        %v1061 = vsub.f32 %v542, %v933
        %v1062 = vsub.f32 %v543, %v934
        %v1063 = vsub.f32 %v544, %v935
        %v1064 = vsub.f32 %v545, %v936
        %v1065 = vsub.f32 %v546, %v937
        %v1066 = vsub.f32 %v547, %v938
        %v1067 = vsub.f32 %v548, %v939
        %v1068 = vsub.f32 %v549, %v940
        %v1069 = vsub.f32 %v550, %v941
        %v1070 = vsub.f32 %v551, %v942
        %v1071 = vsub.f32 %v552, %v943
        %v1072 = vsub.f32 %v553, %v944
        %v1073 = vsub.f32 %v554, %v945
        %v1074 = vsub.f32 %v555, %v946
        %v1075 = vsub.f32 %v556, %v947
        %v1076 = vsub.f32 %v557, %v948
        %v1077 = vsub.f32 %v558, %v949
        %v1078 = vsub.f32 %v559, %v950
        %v1079 = vsub.f32 %v560, %v951
        %v1080 = vsub.f32 %v561, %v952
        %v1081 = vsub.f32 %v562, %v953
        %v1082 = vsub.f32 %v563, %v954
        %v1083 = vsub.f32 %v564, %v955
        %v1084 = vsub.f32 %v565, %v956
        %v1085 = vsub.f32 %v566, %v957
        %v1086 = vsub.f32 %v567, %v958
        %v1087 = vsub.f32 %v568, %v959
        %v1088 = vsub.f32 %v569, %v960
        %v1089 = vsub.f32 %v570, %v961
        %v1090 = vsub.f32 %v571, %v962
        %v1091 = vsub.f32 %v572, %v963
        %v1092 = vsub.f32 %v573, %v964
        %v1093 = vsub.f32 %v574, %v965
        %v1094 = vsub.f32 %v575, %v966
        %v1095 = vsub.f32 %v576, %v967
        %v1096 = vsub.f32 %v577, %v968
        %v1097 = vsub.f32 %v578, %v969
        %v1098 = vsub.f32 %v579, %v970
        %v1099 = vsub.f32 %v580, %v971
        %v1100 = vsub.f32 %v581, %v972
        %v1101 = vsub.f32 %v582, %v973
        %v1102 = vsub.f32 %v583, %v974
        %v1103 = vsub.f32 %v584, %v975
        %v1104 = vsub.f32 %v585, %v976
        %v1105 = vsub.f32 %v586, %v977
        %v1106 = vsub.f32 %v587, %v978
        %v1107 = vsub.f32 %v588, %v979
        %v1108 = vsub.f32 %v589, %v980
        %v1109 = vsub.f32 %v590, %v981
        %v1110 = vsub.f32 %v591, %v982
        %v1111 = vsub.f32 %v592, %v983
        %v1112 = vsub.f32 %v593, %v984
        %v1113 = vsub.f32 %v594, %v985
        %v1114 = vsub.f32 %v595, %v986
        %v1115 = vsub.f32 %v596, %v987
        %v1116 = vsub.f32 %v597, %v988
        %v1117 = vsub.f32 %v598, %v989
        %v1118 = vsub.f32 %v599, %v990
        %v1119 = vsub.f32 %v600, %v991
        %v1120 = vsub.f32 %v601, %v992
        %v1121 = vsub.f32 %v602, %v993
        %v1122 = vsub.f32 %v603, %v994
        %v1123 = vsub.f32 %v604, %v995
        %v1124 = vsub.f32 %v605, %v996
        %v1125 = vsub.f32 %v606, %v997
        %v1126 = vsub.f32 %v607, %v998
        %v1127 = vsub.f32 %v608, %v999
        %v1128 = vsub.f32 %v609, %v1000
        %v1129 = vsub.f32 %v610, %v1001
        %v1130 = vsub.f32 %v611, %v1002
        %v1131 = vsub.f32 %v612, %v1003
        %v1132 = vsub.f32 %v613, %v1004
        %v1133 = vsub.f32 %v614, %v1005
        %v1134 = vsub.f32 %v615, %v1006
        %v1135 = vsub.f32 %v616, %v1007
        %v1136 = vsub.f32 %v617, %v1008
        %v1137 = vsub.f32 %v618, %v1009
        %v1138 = vsub.f32 %v619, %v1010
        %v1139 = vsub.f32 %v620, %v1011
        %v1140 = vsub.f32 %v621, %v1012
        %v1141 = vsub.f32 %v622, %v1013
        %v1142 = vsub.f32 %v623, %v1014
        %v1143 = vsub.f32 %v624, %v1015
        %v1144 = vsub.f32 %v625, %v1016
        %v1145 = vsub.f32 %v626, %v1017
        %v1146 = vsub.f32 %v627, %v1018
        %v1147 = vsub.f32 %v628, %v1019
        %v1148 = vsub.f32 %v629, %v1020
        %v1149 = vsub.f32 %v630, %v1021
        %v1150 = vsub.f32 %v631, %v1022
        %v1151 = vsub.f32 %v632, %v1023
        %v1152 = vsub.f32 %v633, %v1024
        %v1153 = vsub.f32 %v634, %v1025
        %v1154 = vsub.f32 %v635, %v1026
        %v1155 = vsub.f32 %v636, %v1027
        %v1156 = vsub.f32 %v637, %v1028
        %v1157 = vsub.f32 %v638, %v1029
        %v1158 = vsub.f32 %v639, %v1030
        %v1159 = vsub.f32 %v640, %v1031
        %v1160 = vsub.f32 %v641, %v1032
        %v1161 = vsub.f32 %v642, %v1033
        %v1162 = vsub.f32 %v643, %v1034
        %v1163 = vsub.f32 %v644, %v1035
        %v1164 = vsub.f32 %v645, %v1036
        %v1165 = vsub.f32 %v646, %v1037
        %v1166 = vsub.f32 %v647, %v1038
        %v1167 = vsub.f32 %v648, %v1039
        %v1168 = vsub.f32 %v649, %v1040
        %v1169 = vsub.f32 %v650, %v1041
        %v1170 = vmul.f32 %v1042, %v1042
        %v1171 = vmul.f32 %v1043, %v1043
        %v1172 = vmul.f32 %v1044, %v1044
        %v1173 = vmul.f32 %v1045, %v1045
        %v1174 = vmul.f32 %v1046, %v1046
        %v1175 = vmul.f32 %v1047, %v1047
        %v1176 = vmul.f32 %v1048, %v1048
        %v1177 = vmul.f32 %v1049, %v1049
        %v1178 = vmul.f32 %v1050, %v1050
        %v1179 = vmul.f32 %v1051, %v1051
        %v1180 = vmul.f32 %v1052, %v1052
        %v1181 = vmul.f32 %v1053, %v1053
        %v1182 = vmul.f32 %v1054, %v1054
        %v1183 = vmul.f32 %v1055, %v1055
        %v1184 = vmul.f32 %v1056, %v1056
        %v1185 = vmul.f32 %v1057, %v1057
        %v1186 = vmul.f32 %v1058, %v1058
        %v1187 = vmul.f32 %v1059, %v1059
        %v1188 = vmul.f32 %v1060, %v1060
        %v1189 = vmul.f32 %v1061, %v1061
        %v1190 = vmul.f32 %v1062, %v1062
        %v1191 = vmul.f32 %v1063, %v1063
        %v1192 = vmul.f32 %v1064, %v1064
        %v1193 = vmul.f32 %v1065, %v1065
        %v1194 = vmul.f32 %v1066, %v1066
        %v1195 = vmul.f32 %v1067, %v1067
        %v1196 = vmul.f32 %v1068, %v1068
        %v1197 = vmul.f32 %v1069, %v1069
        %v1198 = vmul.f32 %v1070, %v1070
        %v1199 = vmul.f32 %v1071, %v1071
        %v1200 = vmul.f32 %v1072, %v1072
        %v1201 = vmul.f32 %v1073, %v1073
        %v1202 = vmul.f32 %v1074, %v1074
        %v1203 = vmul.f32 %v1075, %v1075
        %v1204 = vmul.f32 %v1076, %v1076
        %v1205 = vmul.f32 %v1077, %v1077
        %v1206 = vmul.f32 %v1078, %v1078
        %v1207 = vmul.f32 %v1079, %v1079
        %v1208 = vmul.f32 %v1080, %v1080
        %v1209 = vmul.f32 %v1081, %v1081
        %v1210 = vmul.f32 %v1082, %v1082
        %v1211 = vmul.f32 %v1083, %v1083
        %v1212 = vmul.f32 %v1084, %v1084
        %v1213 = vmul.f32 %v1085, %v1085
        %v1214 = vmul.f32 %v1086, %v1086
        %v1215 = vmul.f32 %v1087, %v1087
        %v1216 = vmul.f32 %v1088, %v1088
        %v1217 = vmul.f32 %v1089, %v1089
        %v1218 = vmul.f32 %v1090, %v1090
        %v1219 = vmul.f32 %v1091, %v1091
        %v1220 = vmul.f32 %v1092, %v1092
        %v1221 = vmul.f32 %v1093, %v1093
        %v1222 = vmul.f32 %v1094, %v1094
        %v1223 = vmul.f32 %v1095, %v1095
        %v1224 = vmul.f32 %v1096, %v1096
        %v1225 = vmul.f32 %v1097, %v1097
        %v1226 = vmul.f32 %v1098, %v1098
        %v1227 = vmul.f32 %v1099, %v1099
        %v1228 = vmul.f32 %v1100, %v1100
        %v1229 = vmul.f32 %v1101, %v1101
        %v1230 = vmul.f32 %v1102, %v1102
        %v1231 = vmul.f32 %v1103, %v1103
        %v1232 = vmul.f32 %v1104, %v1104
        %v1233 = vmul.f32 %v1105, %v1105
        %v1234 = vmul.f32 %v1106, %v1106
        %v1235 = vmul.f32 %v1107, %v1107
        %v1236 = vmul.f32 %v1108, %v1108
        %v1237 = vmul.f32 %v1109, %v1109
        %v1238 = vmul.f32 %v1110, %v1110
        %v1239 = vmul.f32 %v1111, %v1111
        %v1240 = vmul.f32 %v1112, %v1112
        %v1241 = vmul.f32 %v1113, %v1113
        %v1242 = vmul.f32 %v1114, %v1114
        %v1243 = vmul.f32 %v1115, %v1115
        %v1244 = vmul.f32 %v1116, %v1116
        %v1245 = vmul.f32 %v1117, %v1117
        %v1246 = vmul.f32 %v1118, %v1118
        %v1247 = vmul.f32 %v1119, %v1119
        %v1248 = vmul.f32 %v1120, %v1120
        %v1249 = vmul.f32 %v1121, %v1121
        %v1250 = vmul.f32 %v1122, %v1122
        %v1251 = vmul.f32 %v1123, %v1123
        %v1252 = vmul.f32 %v1124, %v1124
        %v1253 = vmul.f32 %v1125, %v1125
        %v1254 = vmul.f32 %v1126, %v1126
        %v1255 = vmul.f32 %v1127, %v1127
        %v1256 = vmul.f32 %v1128, %v1128
        %v1257 = vmul.f32 %v1129, %v1129
        %v1258 = vmul.f32 %v1130, %v1130
        %v1259 = vmul.f32 %v1131, %v1131
        %v1260 = vmul.f32 %v1132, %v1132
        %v1261 = vmul.f32 %v1133, %v1133
        %v1262 = vmul.f32 %v1134, %v1134
        %v1263 = vmul.f32 %v1135, %v1135
        %v1264 = vmul.f32 %v1136, %v1136
        %v1265 = vmul.f32 %v1137, %v1137
        %v1266 = vmul.f32 %v1138, %v1138
        %v1267 = vmul.f32 %v1139, %v1139
        %v1268 = vmul.f32 %v1140, %v1140
        %v1269 = vmul.f32 %v1141, %v1141
        %v1270 = vmul.f32 %v1142, %v1142
        %v1271 = vmul.f32 %v1143, %v1143
        %v1272 = vmul.f32 %v1144, %v1144
        %v1273 = vmul.f32 %v1145, %v1145
        %v1274 = vmul.f32 %v1146, %v1146
        %v1275 = vmul.f32 %v1147, %v1147
        %v1276 = vmul.f32 %v1148, %v1148
        %v1277 = vmul.f32 %v1149, %v1149
        %v1278 = vmul.f32 %v1150, %v1150
        %v1279 = vmul.f32 %v1151, %v1151
        %v1280 = vmul.f32 %v1152, %v1152
        %v1281 = vmul.f32 %v1153, %v1153
        %v1282 = vmul.f32 %v1154, %v1154
        %v1283 = vmul.f32 %v1155, %v1155
        %v1284 = vmul.f32 %v1156, %v1156
        %v1285 = vmul.f32 %v1157, %v1157
        %v1286 = vmul.f32 %v1158, %v1158
        %v1287 = vmul.f32 %v1159, %v1159
        %v1288 = vmul.f32 %v1160, %v1160
        %v1289 = vmul.f32 %v1161, %v1161
        %v1290 = vmul.f32 %v1162, %v1162
        %v1291 = vmul.f32 %v1163, %v1163
        %v1292 = vmul.f32 %v1164, %v1164
        %v1293 = vmul.f32 %v1165, %v1165
        %v1294 = vmul.f32 %v1166, %v1166
        %v1295 = vmul.f32 %v1167, %v1167
        %v1296 = vmul.f32 %v1168, %v1168
        %v1297 = vmul.f32 %v1169, %v1169
        %1298 = vadd.xlane.f32.xlu0 %v1170
        %v1299 = vpop.xlane.xlu0 %1298
        %1300 = vadd.xlane.f32.xlu0 %v1171
        %v1301 = vpop.xlane.xlu0 %1300
        %1302 = vadd.xlane.f32.xlu0 %v1172
        %v1303 = vpop.xlane.xlu0 %1302
        %1304 = vadd.xlane.f32.xlu0 %v1173
        %v1305 = vpop.xlane.xlu0 %1304
        %1306 = vadd.xlane.f32.xlu0 %v1174
        %v1307 = vpop.xlane.xlu0 %1306
        %1308 = vadd.xlane.f32.xlu0 %v1175
        %v1309 = vpop.xlane.xlu0 %1308
        %1310 = vadd.xlane.f32.xlu0 %v1176
        %v1311 = vpop.xlane.xlu0 %1310
        %1312 = vadd.xlane.f32.xlu0 %v1177
        %v1313 = vpop.xlane.xlu0 %1312
        %1314 = vadd.xlane.f32.xlu0 %v1178
        %v1315 = vpop.xlane.xlu0 %1314
        %1316 = vadd.xlane.f32.xlu0 %v1179
        %v1317 = vpop.xlane.xlu0 %1316
        %1318 = vadd.xlane.f32.xlu0 %v1180
        %v1319 = vpop.xlane.xlu0 %1318
        %1320 = vadd.xlane.f32.xlu0 %v1181
        %v1321 = vpop.xlane.xlu0 %1320
        %1322 = vadd.xlane.f32.xlu0 %v1182
        %v1323 = vpop.xlane.xlu0 %1322
        %1324 = vadd.xlane.f32.xlu0 %v1183
        %v1325 = vpop.xlane.xlu0 %1324
        %1326 = vadd.xlane.f32.xlu0 %v1184
        %v1327 = vpop.xlane.xlu0 %1326
        %1328 = vadd.xlane.f32.xlu0 %v1185
        %v1329 = vpop.xlane.xlu0 %1328
        %1330 = vadd.xlane.f32.xlu0 %v1186
        %v1331 = vpop.xlane.xlu0 %1330
        %1332 = vadd.xlane.f32.xlu0 %v1187
        %v1333 = vpop.xlane.xlu0 %1332
        %1334 = vadd.xlane.f32.xlu0 %v1188
        %v1335 = vpop.xlane.xlu0 %1334
        %1336 = vadd.xlane.f32.xlu0 %v1189
        %v1337 = vpop.xlane.xlu0 %1336
        %1338 = vadd.xlane.f32.xlu0 %v1190
        %v1339 = vpop.xlane.xlu0 %1338
        %1340 = vadd.xlane.f32.xlu0 %v1191
        %v1341 = vpop.xlane.xlu0 %1340
        %1342 = vadd.xlane.f32.xlu0 %v1192
        %v1343 = vpop.xlane.xlu0 %1342
        %1344 = vadd.xlane.f32.xlu0 %v1193
        %v1345 = vpop.xlane.xlu0 %1344
        %1346 = vadd.xlane.f32.xlu0 %v1194
        %v1347 = vpop.xlane.xlu0 %1346
        %1348 = vadd.xlane.f32.xlu0 %v1195
        %v1349 = vpop.xlane.xlu0 %1348
        %1350 = vadd.xlane.f32.xlu0 %v1196
        %v1351 = vpop.xlane.xlu0 %1350
        %1352 = vadd.xlane.f32.xlu0 %v1197
        %v1353 = vpop.xlane.xlu0 %1352
        %1354 = vadd.xlane.f32.xlu0 %v1198
        %v1355 = vpop.xlane.xlu0 %1354
        %1356 = vadd.xlane.f32.xlu0 %v1199
        %v1357 = vpop.xlane.xlu0 %1356
        %1358 = vadd.xlane.f32.xlu0 %v1200
        %v1359 = vpop.xlane.xlu0 %1358
        %1360 = vadd.xlane.f32.xlu0 %v1201
        %v1361 = vpop.xlane.xlu0 %1360
        %1362 = vadd.xlane.f32.xlu0 %v1202
        %v1363 = vpop.xlane.xlu0 %1362
        %1364 = vadd.xlane.f32.xlu0 %v1203
        %v1365 = vpop.xlane.xlu0 %1364
        %1366 = vadd.xlane.f32.xlu0 %v1204
        %v1367 = vpop.xlane.xlu0 %1366
        %1368 = vadd.xlane.f32.xlu0 %v1205
        %v1369 = vpop.xlane.xlu0 %1368
        %1370 = vadd.xlane.f32.xlu0 %v1206
        %v1371 = vpop.xlane.xlu0 %1370
        %1372 = vadd.xlane.f32.xlu0 %v1207
        %v1373 = vpop.xlane.xlu0 %1372
        %1374 = vadd.xlane.f32.xlu0 %v1208
        %v1375 = vpop.xlane.xlu0 %1374
        %1376 = vadd.xlane.f32.xlu0 %v1209
        %v1377 = vpop.xlane.xlu0 %1376
        %1378 = vadd.xlane.f32.xlu0 %v1210
        %v1379 = vpop.xlane.xlu0 %1378
        %1380 = vadd.xlane.f32.xlu0 %v1211
        %v1381 = vpop.xlane.xlu0 %1380
        %1382 = vadd.xlane.f32.xlu0 %v1212
        %v1383 = vpop.xlane.xlu0 %1382
        %1384 = vadd.xlane.f32.xlu0 %v1213
        %v1385 = vpop.xlane.xlu0 %1384
        %1386 = vadd.xlane.f32.xlu0 %v1214
        %v1387 = vpop.xlane.xlu0 %1386
        %1388 = vadd.xlane.f32.xlu0 %v1215
        %v1389 = vpop.xlane.xlu0 %1388
        %1390 = vadd.xlane.f32.xlu0 %v1216
        %v1391 = vpop.xlane.xlu0 %1390
        %1392 = vadd.xlane.f32.xlu0 %v1217
        %v1393 = vpop.xlane.xlu0 %1392
        %1394 = vadd.xlane.f32.xlu0 %v1218
        %v1395 = vpop.xlane.xlu0 %1394
        %1396 = vadd.xlane.f32.xlu0 %v1219
        %v1397 = vpop.xlane.xlu0 %1396
        %1398 = vadd.xlane.f32.xlu0 %v1220
        %v1399 = vpop.xlane.xlu0 %1398
        %1400 = vadd.xlane.f32.xlu0 %v1221
        %v1401 = vpop.xlane.xlu0 %1400
        %1402 = vadd.xlane.f32.xlu0 %v1222
        %v1403 = vpop.xlane.xlu0 %1402
        %1404 = vadd.xlane.f32.xlu0 %v1223
        %v1405 = vpop.xlane.xlu0 %1404
        %1406 = vadd.xlane.f32.xlu0 %v1224
        %v1407 = vpop.xlane.xlu0 %1406
        %1408 = vadd.xlane.f32.xlu0 %v1225
        %v1409 = vpop.xlane.xlu0 %1408
        %1410 = vadd.xlane.f32.xlu0 %v1226
        %v1411 = vpop.xlane.xlu0 %1410
        %1412 = vadd.xlane.f32.xlu0 %v1227
        %v1413 = vpop.xlane.xlu0 %1412
        %1414 = vadd.xlane.f32.xlu0 %v1228
        %v1415 = vpop.xlane.xlu0 %1414
        %1416 = vadd.xlane.f32.xlu0 %v1229
        %v1417 = vpop.xlane.xlu0 %1416
        %1418 = vadd.xlane.f32.xlu0 %v1230
        %v1419 = vpop.xlane.xlu0 %1418
        %1420 = vadd.xlane.f32.xlu0 %v1231
        %v1421 = vpop.xlane.xlu0 %1420
        %1422 = vadd.xlane.f32.xlu0 %v1232
        %v1423 = vpop.xlane.xlu0 %1422
        %1424 = vadd.xlane.f32.xlu0 %v1233
        %v1425 = vpop.xlane.xlu0 %1424
        %1426 = vadd.xlane.f32.xlu0 %v1234
        %v1427 = vpop.xlane.xlu0 %1426
        %1428 = vadd.xlane.f32.xlu0 %v1235
        %v1429 = vpop.xlane.xlu0 %1428
        %1430 = vadd.xlane.f32.xlu0 %v1236
        %v1431 = vpop.xlane.xlu0 %1430
        %1432 = vadd.xlane.f32.xlu0 %v1237
        %v1433 = vpop.xlane.xlu0 %1432
        %1434 = vadd.xlane.f32.xlu0 %v1238
        %v1435 = vpop.xlane.xlu0 %1434
        %1436 = vadd.xlane.f32.xlu0 %v1239
        %v1437 = vpop.xlane.xlu0 %1436
        %1438 = vadd.xlane.f32.xlu0 %v1240
        %v1439 = vpop.xlane.xlu0 %1438
        %1440 = vadd.xlane.f32.xlu0 %v1241
        %v1441 = vpop.xlane.xlu0 %1440
        %1442 = vadd.xlane.f32.xlu0 %v1242
        %v1443 = vpop.xlane.xlu0 %1442
        %1444 = vadd.xlane.f32.xlu0 %v1243
        %v1445 = vpop.xlane.xlu0 %1444
        %1446 = vadd.xlane.f32.xlu0 %v1244
        %v1447 = vpop.xlane.xlu0 %1446
        %1448 = vadd.xlane.f32.xlu0 %v1245
        %v1449 = vpop.xlane.xlu0 %1448
        %1450 = vadd.xlane.f32.xlu0 %v1246
        %v1451 = vpop.xlane.xlu0 %1450
        %1452 = vadd.xlane.f32.xlu0 %v1247
        %v1453 = vpop.xlane.xlu0 %1452
        %1454 = vadd.xlane.f32.xlu0 %v1248
        %v1455 = vpop.xlane.xlu0 %1454
        %1456 = vadd.xlane.f32.xlu0 %v1249
        %v1457 = vpop.xlane.xlu0 %1456
        %1458 = vadd.xlane.f32.xlu0 %v1250
        %v1459 = vpop.xlane.xlu0 %1458
        %1460 = vadd.xlane.f32.xlu0 %v1251
        %v1461 = vpop.xlane.xlu0 %1460
        %1462 = vadd.xlane.f32.xlu0 %v1252
        %v1463 = vpop.xlane.xlu0 %1462
        %1464 = vadd.xlane.f32.xlu0 %v1253
        %v1465 = vpop.xlane.xlu0 %1464
        %1466 = vadd.xlane.f32.xlu0 %v1254
        %v1467 = vpop.xlane.xlu0 %1466
        %1468 = vadd.xlane.f32.xlu0 %v1255
        %v1469 = vpop.xlane.xlu0 %1468
        %1470 = vadd.xlane.f32.xlu0 %v1256
        %v1471 = vpop.xlane.xlu0 %1470
        %1472 = vadd.xlane.f32.xlu0 %v1257
        %v1473 = vpop.xlane.xlu0 %1472
        %1474 = vadd.xlane.f32.xlu0 %v1258
        %v1475 = vpop.xlane.xlu0 %1474
        %1476 = vadd.xlane.f32.xlu0 %v1259
        %v1477 = vpop.xlane.xlu0 %1476
        %1478 = vadd.xlane.f32.xlu0 %v1260
        %v1479 = vpop.xlane.xlu0 %1478
        %1480 = vadd.xlane.f32.xlu0 %v1261
        %v1481 = vpop.xlane.xlu0 %1480
        %1482 = vadd.xlane.f32.xlu0 %v1262
        %v1483 = vpop.xlane.xlu0 %1482
        %1484 = vadd.xlane.f32.xlu0 %v1263
        %v1485 = vpop.xlane.xlu0 %1484
        %1486 = vadd.xlane.f32.xlu0 %v1264
        %v1487 = vpop.xlane.xlu0 %1486
        %1488 = vadd.xlane.f32.xlu0 %v1265
        %v1489 = vpop.xlane.xlu0 %1488
        %1490 = vadd.xlane.f32.xlu0 %v1266
        %v1491 = vpop.xlane.xlu0 %1490
        %1492 = vadd.xlane.f32.xlu0 %v1267
        %v1493 = vpop.xlane.xlu0 %1492
        %1494 = vadd.xlane.f32.xlu0 %v1268
        %v1495 = vpop.xlane.xlu0 %1494
        %1496 = vadd.xlane.f32.xlu0 %v1269
        %v1497 = vpop.xlane.xlu0 %1496
        %1498 = vadd.xlane.f32.xlu0 %v1270
        %v1499 = vpop.xlane.xlu0 %1498
        %1500 = vadd.xlane.f32.xlu0 %v1271
        %v1501 = vpop.xlane.xlu0 %1500
        %1502 = vadd.xlane.f32.xlu0 %v1272
        %v1503 = vpop.xlane.xlu0 %1502
        %1504 = vadd.xlane.f32.xlu0 %v1273
        %v1505 = vpop.xlane.xlu0 %1504
        %1506 = vadd.xlane.f32.xlu0 %v1274
        %v1507 = vpop.xlane.xlu0 %1506
        %1508 = vadd.xlane.f32.xlu0 %v1275
        %v1509 = vpop.xlane.xlu0 %1508
        %1510 = vadd.xlane.f32.xlu0 %v1276
        %v1511 = vpop.xlane.xlu0 %1510
        %1512 = vadd.xlane.f32.xlu0 %v1277
        %v1513 = vpop.xlane.xlu0 %1512
        %1514 = vadd.xlane.f32.xlu0 %v1278
        %v1515 = vpop.xlane.xlu0 %1514
        %1516 = vadd.xlane.f32.xlu0 %v1279
        %v1517 = vpop.xlane.xlu0 %1516
        %1518 = vadd.xlane.f32.xlu0 %v1280
        %v1519 = vpop.xlane.xlu0 %1518
        %1520 = vadd.xlane.f32.xlu0 %v1281
        %v1521 = vpop.xlane.xlu0 %1520
        %1522 = vadd.xlane.f32.xlu0 %v1282
        %v1523 = vpop.xlane.xlu0 %1522
        %1524 = vadd.xlane.f32.xlu0 %v1283
        %v1525 = vpop.xlane.xlu0 %1524
        %1526 = vadd.xlane.f32.xlu0 %v1284
        %v1527 = vpop.xlane.xlu0 %1526
        %1528 = vadd.xlane.f32.xlu0 %v1285
        %v1529 = vpop.xlane.xlu0 %1528
        %1530 = vadd.xlane.f32.xlu0 %v1286
        %v1531 = vpop.xlane.xlu0 %1530
        %1532 = vadd.xlane.f32.xlu0 %v1287
        %v1533 = vpop.xlane.xlu0 %1532
        %1534 = vadd.xlane.f32.xlu0 %v1288
        %v1535 = vpop.xlane.xlu0 %1534
        %1536 = vadd.xlane.f32.xlu0 %v1289
        %v1537 = vpop.xlane.xlu0 %1536
        %1538 = vadd.xlane.f32.xlu0 %v1290
        %v1539 = vpop.xlane.xlu0 %1538
        %1540 = vadd.xlane.f32.xlu0 %v1291
        %v1541 = vpop.xlane.xlu0 %1540
        %1542 = vadd.xlane.f32.xlu0 %v1292
        %v1543 = vpop.xlane.xlu0 %1542
        %1544 = vadd.xlane.f32.xlu0 %v1293
        %v1545 = vpop.xlane.xlu0 %1544
        %1546 = vadd.xlane.f32.xlu0 %v1294
        %v1547 = vpop.xlane.xlu0 %1546
        %1548 = vadd.xlane.f32.xlu0 %v1295
        %v1549 = vpop.xlane.xlu0 %1548
        %1550 = vadd.xlane.f32.xlu0 %v1296
        %v1551 = vpop.xlane.xlu0 %1550
        %1552 = vadd.xlane.f32.xlu0 %v1297
        %v1553 = vpop.xlane.xlu0 %1552
        %v1554 = vmul.f32 %v1299, %v913
        %v1555 = vmul.f32 %v1301, %v913
        %v1556 = vmul.f32 %v1303, %v913
        %v1557 = vmul.f32 %v1305, %v913
        %v1558 = vmul.f32 %v1307, %v913
        %v1559 = vmul.f32 %v1309, %v913
        %v1560 = vmul.f32 %v1311, %v913
        %v1561 = vmul.f32 %v1313, %v913
        %v1562 = vmul.f32 %v1315, %v913
        %v1563 = vmul.f32 %v1317, %v913
        %v1564 = vmul.f32 %v1319, %v913
        %v1565 = vmul.f32 %v1321, %v913
        %v1566 = vmul.f32 %v1323, %v913
        %v1567 = vmul.f32 %v1325, %v913
        %v1568 = vmul.f32 %v1327, %v913
        %v1569 = vmul.f32 %v1329, %v913
        %v1570 = vmul.f32 %v1331, %v913
        %v1571 = vmul.f32 %v1333, %v913
        %v1572 = vmul.f32 %v1335, %v913
        %v1573 = vmul.f32 %v1337, %v913
        %v1574 = vmul.f32 %v1339, %v913
        %v1575 = vmul.f32 %v1341, %v913
        %v1576 = vmul.f32 %v1343, %v913
        %v1577 = vmul.f32 %v1345, %v913
        %v1578 = vmul.f32 %v1347, %v913
        %v1579 = vmul.f32 %v1349, %v913
        %v1580 = vmul.f32 %v1351, %v913
        %v1581 = vmul.f32 %v1353, %v913
        %v1582 = vmul.f32 %v1355, %v913
        %v1583 = vmul.f32 %v1357, %v913
        %v1584 = vmul.f32 %v1359, %v913
        %v1585 = vmul.f32 %v1361, %v913
        %v1586 = vmul.f32 %v1363, %v913
        %v1587 = vmul.f32 %v1365, %v913
        %v1588 = vmul.f32 %v1367, %v913
        %v1589 = vmul.f32 %v1369, %v913
        %v1590 = vmul.f32 %v1371, %v913
        %v1591 = vmul.f32 %v1373, %v913
        %v1592 = vmul.f32 %v1375, %v913
        %v1593 = vmul.f32 %v1377, %v913
        %v1594 = vmul.f32 %v1379, %v913
        %v1595 = vmul.f32 %v1381, %v913
        %v1596 = vmul.f32 %v1383, %v913
        %v1597 = vmul.f32 %v1385, %v913
        %v1598 = vmul.f32 %v1387, %v913
        %v1599 = vmul.f32 %v1389, %v913
        %v1600 = vmul.f32 %v1391, %v913
        %v1601 = vmul.f32 %v1393, %v913
        %v1602 = vmul.f32 %v1395, %v913
        %v1603 = vmul.f32 %v1397, %v913
        %v1604 = vmul.f32 %v1399, %v913
        %v1605 = vmul.f32 %v1401, %v913
        %v1606 = vmul.f32 %v1403, %v913
        %v1607 = vmul.f32 %v1405, %v913
        %v1608 = vmul.f32 %v1407, %v913
        %v1609 = vmul.f32 %v1409, %v913
        %v1610 = vmul.f32 %v1411, %v913
        %v1611 = vmul.f32 %v1413, %v913
        %v1612 = vmul.f32 %v1415, %v913
        %v1613 = vmul.f32 %v1417, %v913
        %v1614 = vmul.f32 %v1419, %v913
        %v1615 = vmul.f32 %v1421, %v913
        %v1616 = vmul.f32 %v1423, %v913
        %v1617 = vmul.f32 %v1425, %v913
        %v1618 = vmul.f32 %v1427, %v913
        %v1619 = vmul.f32 %v1429, %v913
        %v1620 = vmul.f32 %v1431, %v913
        %v1621 = vmul.f32 %v1433, %v913
        %v1622 = vmul.f32 %v1435, %v913
        %v1623 = vmul.f32 %v1437, %v913
        %v1624 = vmul.f32 %v1439, %v913
        %v1625 = vmul.f32 %v1441, %v913
        %v1626 = vmul.f32 %v1443, %v913
        %v1627 = vmul.f32 %v1445, %v913
        %v1628 = vmul.f32 %v1447, %v913
        %v1629 = vmul.f32 %v1449, %v913
        %v1630 = vmul.f32 %v1451, %v913
        %v1631 = vmul.f32 %v1453, %v913
        %v1632 = vmul.f32 %v1455, %v913
        %v1633 = vmul.f32 %v1457, %v913
        %v1634 = vmul.f32 %v1459, %v913
        %v1635 = vmul.f32 %v1461, %v913
        %v1636 = vmul.f32 %v1463, %v913
        %v1637 = vmul.f32 %v1465, %v913
        %v1638 = vmul.f32 %v1467, %v913
        %v1639 = vmul.f32 %v1469, %v913
        %v1640 = vmul.f32 %v1471, %v913
        %v1641 = vmul.f32 %v1473, %v913
        %v1642 = vmul.f32 %v1475, %v913
        %v1643 = vmul.f32 %v1477, %v913
        %v1644 = vmul.f32 %v1479, %v913
        %v1645 = vmul.f32 %v1481, %v913
        %v1646 = vmul.f32 %v1483, %v913
        %v1647 = vmul.f32 %v1485, %v913
        %v1648 = vmul.f32 %v1487, %v913
        %v1649 = vmul.f32 %v1489, %v913
        %v1650 = vmul.f32 %v1491, %v913
        %v1651 = vmul.f32 %v1493, %v913
        %v1652 = vmul.f32 %v1495, %v913
        %v1653 = vmul.f32 %v1497, %v913
        %v1654 = vmul.f32 %v1499, %v913
        %v1655 = vmul.f32 %v1501, %v913
        %v1656 = vmul.f32 %v1503, %v913
        %v1657 = vmul.f32 %v1505, %v913
        %v1658 = vmul.f32 %v1507, %v913
        %v1659 = vmul.f32 %v1509, %v913
        %v1660 = vmul.f32 %v1511, %v913
        %v1661 = vmul.f32 %v1513, %v913
        %v1662 = vmul.f32 %v1515, %v913
        %v1663 = vmul.f32 %v1517, %v913
        %v1664 = vmul.f32 %v1519, %v913
        %v1665 = vmul.f32 %v1521, %v913
        %v1666 = vmul.f32 %v1523, %v913
        %v1667 = vmul.f32 %v1525, %v913
        %v1668 = vmul.f32 %v1527, %v913
        %v1669 = vmul.f32 %v1529, %v913
        %v1670 = vmul.f32 %v1531, %v913
        %v1671 = vmul.f32 %v1533, %v913
        %v1672 = vmul.f32 %v1535, %v913
        %v1673 = vmul.f32 %v1537, %v913
        %v1674 = vmul.f32 %v1539, %v913
        %v1675 = vmul.f32 %v1541, %v913
        %v1676 = vmul.f32 %v1543, %v913
        %v1677 = vmul.f32 %v1545, %v913
        %v1678 = vmul.f32 %v1547, %v913
        %v1679 = vmul.f32 %v1549, %v913
        %v1680 = vmul.f32 %v1551, %v913
        %v1681 = vmul.f32 %v1553, %v913
        %v1682 = vadd.f32 %v1554, 1e-12
        %v1683 = vadd.f32 %v1555, 1e-12
        %v1684 = vadd.f32 %v1556, 1e-12
        %v1685 = vadd.f32 %v1557, 1e-12
        %v1686 = vadd.f32 %v1558, 1e-12
        %v1687 = vadd.f32 %v1559, 1e-12
        %v1688 = vadd.f32 %v1560, 1e-12
        %v1689 = vadd.f32 %v1561, 1e-12
        %v1690 = vadd.f32 %v1562, 1e-12
        %v1691 = vadd.f32 %v1563, 1e-12
        %v1692 = vadd.f32 %v1564, 1e-12
        %v1693 = vadd.f32 %v1565, 1e-12
        %v1694 = vadd.f32 %v1566, 1e-12
        %v1695 = vadd.f32 %v1567, 1e-12
        %v1696 = vadd.f32 %v1568, 1e-12
        %v1697 = vadd.f32 %v1569, 1e-12
        %v1698 = vadd.f32 %v1570, 1e-12
        %v1699 = vadd.f32 %v1571, 1e-12
        %v1700 = vadd.f32 %v1572, 1e-12
        %v1701 = vadd.f32 %v1573, 1e-12
        %v1702 = vadd.f32 %v1574, 1e-12
        %v1703 = vadd.f32 %v1575, 1e-12
        %v1704 = vadd.f32 %v1576, 1e-12
        %v1705 = vadd.f32 %v1577, 1e-12
        %v1706 = vadd.f32 %v1578, 1e-12
        %v1707 = vadd.f32 %v1579, 1e-12
        %v1708 = vadd.f32 %v1580, 1e-12
        %v1709 = vadd.f32 %v1581, 1e-12
        %v1710 = vadd.f32 %v1582, 1e-12
        %v1711 = vadd.f32 %v1583, 1e-12
        %v1712 = vadd.f32 %v1584, 1e-12
        %v1713 = vadd.f32 %v1585, 1e-12
        %v1714 = vadd.f32 %v1586, 1e-12
        %v1715 = vadd.f32 %v1587, 1e-12
        %v1716 = vadd.f32 %v1588, 1e-12
        %v1717 = vadd.f32 %v1589, 1e-12
        %v1718 = vadd.f32 %v1590, 1e-12
        %v1719 = vadd.f32 %v1591, 1e-12
        %v1720 = vadd.f32 %v1592, 1e-12
        %v1721 = vadd.f32 %v1593, 1e-12
        %v1722 = vadd.f32 %v1594, 1e-12
        %v1723 = vadd.f32 %v1595, 1e-12
        %v1724 = vadd.f32 %v1596, 1e-12
        %v1725 = vadd.f32 %v1597, 1e-12
        %v1726 = vadd.f32 %v1598, 1e-12
        %v1727 = vadd.f32 %v1599, 1e-12
        %v1728 = vadd.f32 %v1600, 1e-12
        %v1729 = vadd.f32 %v1601, 1e-12
        %v1730 = vadd.f32 %v1602, 1e-12
        %v1731 = vadd.f32 %v1603, 1e-12
        %v1732 = vadd.f32 %v1604, 1e-12
        %v1733 = vadd.f32 %v1605, 1e-12
        %v1734 = vadd.f32 %v1606, 1e-12
        %v1735 = vadd.f32 %v1607, 1e-12
        %v1736 = vadd.f32 %v1608, 1e-12
        %v1737 = vadd.f32 %v1609, 1e-12
        %v1738 = vadd.f32 %v1610, 1e-12
        %v1739 = vadd.f32 %v1611, 1e-12
        %v1740 = vadd.f32 %v1612, 1e-12
        %v1741 = vadd.f32 %v1613, 1e-12
        %v1742 = vadd.f32 %v1614, 1e-12
        %v1743 = vadd.f32 %v1615, 1e-12
        %v1744 = vadd.f32 %v1616, 1e-12
        %v1745 = vadd.f32 %v1617, 1e-12
        %v1746 = vadd.f32 %v1618, 1e-12
        %v1747 = vadd.f32 %v1619, 1e-12
        %v1748 = vadd.f32 %v1620, 1e-12
        %v1749 = vadd.f32 %v1621, 1e-12
        %v1750 = vadd.f32 %v1622, 1e-12
        %v1751 = vadd.f32 %v1623, 1e-12
        %v1752 = vadd.f32 %v1624, 1e-12
        %v1753 = vadd.f32 %v1625, 1e-12
        %v1754 = vadd.f32 %v1626, 1e-12
        %v1755 = vadd.f32 %v1627, 1e-12
        %v1756 = vadd.f32 %v1628, 1e-12
        %v1757 = vadd.f32 %v1629, 1e-12
        %v1758 = vadd.f32 %v1630, 1e-12
        %v1759 = vadd.f32 %v1631, 1e-12
        %v1760 = vadd.f32 %v1632, 1e-12
        %v1761 = vadd.f32 %v1633, 1e-12
        %v1762 = vadd.f32 %v1634, 1e-12
        %v1763 = vadd.f32 %v1635, 1e-12
        %v1764 = vadd.f32 %v1636, 1e-12
        %v1765 = vadd.f32 %v1637, 1e-12
        %v1766 = vadd.f32 %v1638, 1e-12
        %v1767 = vadd.f32 %v1639, 1e-12
        %v1768 = vadd.f32 %v1640, 1e-12
        %v1769 = vadd.f32 %v1641, 1e-12
        %v1770 = vadd.f32 %v1642, 1e-12
        %v1771 = vadd.f32 %v1643, 1e-12
        %v1772 = vadd.f32 %v1644, 1e-12
        %v1773 = vadd.f32 %v1645, 1e-12
        %v1774 = vadd.f32 %v1646, 1e-12
        %v1775 = vadd.f32 %v1647, 1e-12
        %v1776 = vadd.f32 %v1648, 1e-12
        %v1777 = vadd.f32 %v1649, 1e-12
        %v1778 = vadd.f32 %v1650, 1e-12
        %v1779 = vadd.f32 %v1651, 1e-12
        %v1780 = vadd.f32 %v1652, 1e-12
        %v1781 = vadd.f32 %v1653, 1e-12
        %v1782 = vadd.f32 %v1654, 1e-12
        %v1783 = vadd.f32 %v1655, 1e-12
        %v1784 = vadd.f32 %v1656, 1e-12
        %v1785 = vadd.f32 %v1657, 1e-12
        %v1786 = vadd.f32 %v1658, 1e-12
        %v1787 = vadd.f32 %v1659, 1e-12
        %v1788 = vadd.f32 %v1660, 1e-12
        %v1789 = vadd.f32 %v1661, 1e-12
        %v1790 = vadd.f32 %v1662, 1e-12
        %v1791 = vadd.f32 %v1663, 1e-12
        %v1792 = vadd.f32 %v1664, 1e-12
        %v1793 = vadd.f32 %v1665, 1e-12
        %v1794 = vadd.f32 %v1666, 1e-12
        %v1795 = vadd.f32 %v1667, 1e-12
        %v1796 = vadd.f32 %v1668, 1e-12
        %v1797 = vadd.f32 %v1669, 1e-12
        %v1798 = vadd.f32 %v1670, 1e-12
        %v1799 = vadd.f32 %v1671, 1e-12
        %v1800 = vadd.f32 %v1672, 1e-12
        %v1801 = vadd.f32 %v1673, 1e-12
        %v1802 = vadd.f32 %v1674, 1e-12
        %v1803 = vadd.f32 %v1675, 1e-12
        %v1804 = vadd.f32 %v1676, 1e-12
        %v1805 = vadd.f32 %v1677, 1e-12
        %v1806 = vadd.f32 %v1678, 1e-12
        %v1807 = vadd.f32 %v1679, 1e-12
        %v1808 = vadd.f32 %v1680, 1e-12
        %v1809 = vadd.f32 %v1681, 1e-12
        %v1810 = vrsqrt.pop %v1682
        %v1811 = vmul.f32 %v1810, %v1682
        %v1812 = vmul.f32 %v1811, %v1810
        %v1813 = vmul.f32 0.5, %v1812
        %v1814 = vsub.f32 1.5, %v1813
        %v1815 = vmul.f32 %v1810, %v1814
        %vm1816 = vweird.f32 %v1682
        %vm1817 = vweird.f32 %v1810
        %vm1818 = vmor %vm1816, %vm1817
        %v1819 = vsel %vm1818, %v1810, %v1815
        %v1820 = vrsqrt.pop %v1683
        %v1821 = vmul.f32 %v1820, %v1683
        %v1822 = vmul.f32 %v1821, %v1820
        %v1823 = vmul.f32 0.5, %v1822
        %v1824 = vsub.f32 1.5, %v1823
        %v1825 = vmul.f32 %v1820, %v1824
        %vm1826 = vweird.f32 %v1683
        %vm1827 = vweird.f32 %v1820
        %vm1828 = vmor %vm1826, %vm1827
        %v1829 = vsel %vm1828, %v1820, %v1825
        %v1830 = vrsqrt.pop %v1684
        %v1831 = vmul.f32 %v1830, %v1684
        %v1832 = vmul.f32 %v1831, %v1830
        %v1833 = vmul.f32 0.5, %v1832
        %v1834 = vsub.f32 1.5, %v1833
        %v1835 = vmul.f32 %v1830, %v1834
        %vm1836 = vweird.f32 %v1684
        %vm1837 = vweird.f32 %v1830
        %vm1838 = vmor %vm1836, %vm1837
        %v1839 = vsel %vm1838, %v1830, %v1835
        %v1840 = vrsqrt.pop %v1685
        %v1841 = vmul.f32 %v1840, %v1685
        %v1842 = vmul.f32 %v1841, %v1840
        %v1843 = vmul.f32 0.5, %v1842
        %v1844 = vsub.f32 1.5, %v1843
        %v1845 = vmul.f32 %v1840, %v1844
        %vm1846 = vweird.f32 %v1685
        %vm1847 = vweird.f32 %v1840
        %vm1848 = vmor %vm1846, %vm1847
        %v1849 = vsel %vm1848, %v1840, %v1845
        %v1850 = vrsqrt.pop %v1686
        %v1851 = vmul.f32 %v1850, %v1686
        %v1852 = vmul.f32 %v1851, %v1850
        %v1853 = vmul.f32 0.5, %v1852
        %v1854 = vsub.f32 1.5, %v1853
        %v1855 = vmul.f32 %v1850, %v1854
        %vm1856 = vweird.f32 %v1686
        %vm1857 = vweird.f32 %v1850
        %vm1858 = vmor %vm1856, %vm1857
        %v1859 = vsel %vm1858, %v1850, %v1855
        %v1860 = vrsqrt.pop %v1687
        %v1861 = vmul.f32 %v1860, %v1687
        %v1862 = vmul.f32 %v1861, %v1860
        %v1863 = vmul.f32 0.5, %v1862
        %v1864 = vsub.f32 1.5, %v1863
        %v1865 = vmul.f32 %v1860, %v1864
        %vm1866 = vweird.f32 %v1687
        %vm1867 = vweird.f32 %v1860
        %vm1868 = vmor %vm1866, %vm1867
        %v1869 = vsel %vm1868, %v1860, %v1865
        %v1870 = vrsqrt.pop %v1688
        %v1871 = vmul.f32 %v1870, %v1688
        %v1872 = vmul.f32 %v1871, %v1870
        %v1873 = vmul.f32 0.5, %v1872
        %v1874 = vsub.f32 1.5, %v1873
        %v1875 = vmul.f32 %v1870, %v1874
        %vm1876 = vweird.f32 %v1688
        %vm1877 = vweird.f32 %v1870
        %vm1878 = vmor %vm1876, %vm1877
        %v1879 = vsel %vm1878, %v1870, %v1875
        %v1880 = vrsqrt.pop %v1689
        %v1881 = vmul.f32 %v1880, %v1689
        %v1882 = vmul.f32 %v1881, %v1880
        %v1883 = vmul.f32 0.5, %v1882
        %v1884 = vsub.f32 1.5, %v1883
        %v1885 = vmul.f32 %v1880, %v1884
        %vm1886 = vweird.f32 %v1689
        %vm1887 = vweird.f32 %v1880
        %vm1888 = vmor %vm1886, %vm1887
        %v1889 = vsel %vm1888, %v1880, %v1885
        %v1890 = vrsqrt.pop %v1690
        %v1891 = vmul.f32 %v1890, %v1690
        %v1892 = vmul.f32 %v1891, %v1890
        %v1893 = vmul.f32 0.5, %v1892
        %v1894 = vsub.f32 1.5, %v1893
        %v1895 = vmul.f32 %v1890, %v1894
        %vm1896 = vweird.f32 %v1690
        %vm1897 = vweird.f32 %v1890
        %vm1898 = vmor %vm1896, %vm1897
        %v1899 = vsel %vm1898, %v1890, %v1895
        %v1900 = vrsqrt.pop %v1691
        %v1901 = vmul.f32 %v1900, %v1691
        %v1902 = vmul.f32 %v1901, %v1900
        %v1903 = vmul.f32 0.5, %v1902
        %v1904 = vsub.f32 1.5, %v1903
        %v1905 = vmul.f32 %v1900, %v1904
        %vm1906 = vweird.f32 %v1691
        %vm1907 = vweird.f32 %v1900
        %vm1908 = vmor %vm1906, %vm1907
        %v1909 = vsel %vm1908, %v1900, %v1905
        %v1910 = vrsqrt.pop %v1692
        %v1911 = vmul.f32 %v1910, %v1692
        %v1912 = vmul.f32 %v1911, %v1910
        %v1913 = vmul.f32 0.5, %v1912
        %v1914 = vsub.f32 1.5, %v1913
        %v1915 = vmul.f32 %v1910, %v1914
        %vm1916 = vweird.f32 %v1692
        %vm1917 = vweird.f32 %v1910
        %vm1918 = vmor %vm1916, %vm1917
        %v1919 = vsel %vm1918, %v1910, %v1915
        %v1920 = vrsqrt.pop %v1693
        %v1921 = vmul.f32 %v1920, %v1693
        %v1922 = vmul.f32 %v1921, %v1920
        %v1923 = vmul.f32 0.5, %v1922
        %v1924 = vsub.f32 1.5, %v1923
        %v1925 = vmul.f32 %v1920, %v1924
        %vm1926 = vweird.f32 %v1693
        %vm1927 = vweird.f32 %v1920
        %vm1928 = vmor %vm1926, %vm1927
        %v1929 = vsel %vm1928, %v1920, %v1925
        %v1930 = vrsqrt.pop %v1694
        %v1931 = vmul.f32 %v1930, %v1694
        %v1932 = vmul.f32 %v1931, %v1930
        %v1933 = vmul.f32 0.5, %v1932
        %v1934 = vsub.f32 1.5, %v1933
        %v1935 = vmul.f32 %v1930, %v1934
        %vm1936 = vweird.f32 %v1694
        %vm1937 = vweird.f32 %v1930
        %vm1938 = vmor %vm1936, %vm1937
        %v1939 = vsel %vm1938, %v1930, %v1935
        %v1940 = vrsqrt.pop %v1695
        %v1941 = vmul.f32 %v1940, %v1695
        %v1942 = vmul.f32 %v1941, %v1940
        %v1943 = vmul.f32 0.5, %v1942
        %v1944 = vsub.f32 1.5, %v1943
        %v1945 = vmul.f32 %v1940, %v1944
        %vm1946 = vweird.f32 %v1695
        %vm1947 = vweird.f32 %v1940
        %vm1948 = vmor %vm1946, %vm1947
        %v1949 = vsel %vm1948, %v1940, %v1945
        %v1950 = vrsqrt.pop %v1696
        %v1951 = vmul.f32 %v1950, %v1696
        %v1952 = vmul.f32 %v1951, %v1950
        %v1953 = vmul.f32 0.5, %v1952
        %v1954 = vsub.f32 1.5, %v1953
        %v1955 = vmul.f32 %v1950, %v1954
        %vm1956 = vweird.f32 %v1696
        %vm1957 = vweird.f32 %v1950
        %vm1958 = vmor %vm1956, %vm1957
        %v1959 = vsel %vm1958, %v1950, %v1955
        %v1960 = vrsqrt.pop %v1697
        %v1961 = vmul.f32 %v1960, %v1697
        %v1962 = vmul.f32 %v1961, %v1960
        %v1963 = vmul.f32 0.5, %v1962
        %v1964 = vsub.f32 1.5, %v1963
        %v1965 = vmul.f32 %v1960, %v1964
        %vm1966 = vweird.f32 %v1697
        %vm1967 = vweird.f32 %v1960
        %vm1968 = vmor %vm1966, %vm1967
        %v1969 = vsel %vm1968, %v1960, %v1965
        %v1970 = vrsqrt.pop %v1698
        %v1971 = vmul.f32 %v1970, %v1698
        %v1972 = vmul.f32 %v1971, %v1970
        %v1973 = vmul.f32 0.5, %v1972
        %v1974 = vsub.f32 1.5, %v1973
        %v1975 = vmul.f32 %v1970, %v1974
        %vm1976 = vweird.f32 %v1698
        %vm1977 = vweird.f32 %v1970
        %vm1978 = vmor %vm1976, %vm1977
        %v1979 = vsel %vm1978, %v1970, %v1975
        %v1980 = vrsqrt.pop %v1699
        %v1981 = vmul.f32 %v1980, %v1699
        %v1982 = vmul.f32 %v1981, %v1980
        %v1983 = vmul.f32 0.5, %v1982
        %v1984 = vsub.f32 1.5, %v1983
        %v1985 = vmul.f32 %v1980, %v1984
        %vm1986 = vweird.f32 %v1699
        %vm1987 = vweird.f32 %v1980
        %vm1988 = vmor %vm1986, %vm1987
        %v1989 = vsel %vm1988, %v1980, %v1985
        %v1990 = vrsqrt.pop %v1700
        %v1991 = vmul.f32 %v1990, %v1700
        %v1992 = vmul.f32 %v1991, %v1990
        %v1993 = vmul.f32 0.5, %v1992
        %v1994 = vsub.f32 1.5, %v1993
        %v1995 = vmul.f32 %v1990, %v1994
        %vm1996 = vweird.f32 %v1700
        %vm1997 = vweird.f32 %v1990
        %vm1998 = vmor %vm1996, %vm1997
        %v1999 = vsel %vm1998, %v1990, %v1995
        %v2000 = vrsqrt.pop %v1701
        %v2001 = vmul.f32 %v2000, %v1701
        %v2002 = vmul.f32 %v2001, %v2000
        %v2003 = vmul.f32 0.5, %v2002
        %v2004 = vsub.f32 1.5, %v2003
        %v2005 = vmul.f32 %v2000, %v2004
        %vm2006 = vweird.f32 %v1701
        %vm2007 = vweird.f32 %v2000
        %vm2008 = vmor %vm2006, %vm2007
        %v2009 = vsel %vm2008, %v2000, %v2005
        %v2010 = vrsqrt.pop %v1702
        %v2011 = vmul.f32 %v2010, %v1702
        %v2012 = vmul.f32 %v2011, %v2010
        %v2013 = vmul.f32 0.5, %v2012
        %v2014 = vsub.f32 1.5, %v2013
        %v2015 = vmul.f32 %v2010, %v2014
        %vm2016 = vweird.f32 %v1702
        %vm2017 = vweird.f32 %v2010
        %vm2018 = vmor %vm2016, %vm2017
        %v2019 = vsel %vm2018, %v2010, %v2015
        %v2020 = vrsqrt.pop %v1703
        %v2021 = vmul.f32 %v2020, %v1703
        %v2022 = vmul.f32 %v2021, %v2020
        %v2023 = vmul.f32 0.5, %v2022
        %v2024 = vsub.f32 1.5, %v2023
        %v2025 = vmul.f32 %v2020, %v2024
        %vm2026 = vweird.f32 %v1703
        %vm2027 = vweird.f32 %v2020
        %vm2028 = vmor %vm2026, %vm2027
        %v2029 = vsel %vm2028, %v2020, %v2025
        %v2030 = vrsqrt.pop %v1704
        %v2031 = vmul.f32 %v2030, %v1704
        %v2032 = vmul.f32 %v2031, %v2030
        %v2033 = vmul.f32 0.5, %v2032
        %v2034 = vsub.f32 1.5, %v2033
        %v2035 = vmul.f32 %v2030, %v2034
        %vm2036 = vweird.f32 %v1704
        %vm2037 = vweird.f32 %v2030
        %vm2038 = vmor %vm2036, %vm2037
        %v2039 = vsel %vm2038, %v2030, %v2035
        %v2040 = vrsqrt.pop %v1705
        %v2041 = vmul.f32 %v2040, %v1705
        %v2042 = vmul.f32 %v2041, %v2040
        %v2043 = vmul.f32 0.5, %v2042
        %v2044 = vsub.f32 1.5, %v2043
        %v2045 = vmul.f32 %v2040, %v2044
        %vm2046 = vweird.f32 %v1705
        %vm2047 = vweird.f32 %v2040
        %vm2048 = vmor %vm2046, %vm2047
        %v2049 = vsel %vm2048, %v2040, %v2045
        %v2050 = vrsqrt.pop %v1706
        %v2051 = vmul.f32 %v2050, %v1706
        %v2052 = vmul.f32 %v2051, %v2050
        %v2053 = vmul.f32 0.5, %v2052
        %v2054 = vsub.f32 1.5, %v2053
        %v2055 = vmul.f32 %v2050, %v2054
        %vm2056 = vweird.f32 %v1706
        %vm2057 = vweird.f32 %v2050
        %vm2058 = vmor %vm2056, %vm2057
        %v2059 = vsel %vm2058, %v2050, %v2055
        %v2060 = vrsqrt.pop %v1707
        %v2061 = vmul.f32 %v2060, %v1707
        %v2062 = vmul.f32 %v2061, %v2060
        %v2063 = vmul.f32 0.5, %v2062
        %v2064 = vsub.f32 1.5, %v2063
        %v2065 = vmul.f32 %v2060, %v2064
        %vm2066 = vweird.f32 %v1707
        %vm2067 = vweird.f32 %v2060
        %vm2068 = vmor %vm2066, %vm2067
        %v2069 = vsel %vm2068, %v2060, %v2065
        %v2070 = vrsqrt.pop %v1708
        %v2071 = vmul.f32 %v2070, %v1708
        %v2072 = vmul.f32 %v2071, %v2070
        %v2073 = vmul.f32 0.5, %v2072
        %v2074 = vsub.f32 1.5, %v2073
        %v2075 = vmul.f32 %v2070, %v2074
        %vm2076 = vweird.f32 %v1708
        %vm2077 = vweird.f32 %v2070
        %vm2078 = vmor %vm2076, %vm2077
        %v2079 = vsel %vm2078, %v2070, %v2075
        %v2080 = vrsqrt.pop %v1709
        %v2081 = vmul.f32 %v2080, %v1709
        %v2082 = vmul.f32 %v2081, %v2080
        %v2083 = vmul.f32 0.5, %v2082
        %v2084 = vsub.f32 1.5, %v2083
        %v2085 = vmul.f32 %v2080, %v2084
        %vm2086 = vweird.f32 %v1709
        %vm2087 = vweird.f32 %v2080
        %vm2088 = vmor %vm2086, %vm2087
        %v2089 = vsel %vm2088, %v2080, %v2085
        %v2090 = vrsqrt.pop %v1710
        %v2091 = vmul.f32 %v2090, %v1710
        %v2092 = vmul.f32 %v2091, %v2090
        %v2093 = vmul.f32 0.5, %v2092
        %v2094 = vsub.f32 1.5, %v2093
        %v2095 = vmul.f32 %v2090, %v2094
        %vm2096 = vweird.f32 %v1710
        %vm2097 = vweird.f32 %v2090
        %vm2098 = vmor %vm2096, %vm2097
        %v2099 = vsel %vm2098, %v2090, %v2095
        %v2100 = vrsqrt.pop %v1711
        %v2101 = vmul.f32 %v2100, %v1711
        %v2102 = vmul.f32 %v2101, %v2100
        %v2103 = vmul.f32 0.5, %v2102
        %v2104 = vsub.f32 1.5, %v2103
        %v2105 = vmul.f32 %v2100, %v2104
        %vm2106 = vweird.f32 %v1711
        %vm2107 = vweird.f32 %v2100
        %vm2108 = vmor %vm2106, %vm2107
        %v2109 = vsel %vm2108, %v2100, %v2105
        %v2110 = vrsqrt.pop %v1712
        %v2111 = vmul.f32 %v2110, %v1712
        %v2112 = vmul.f32 %v2111, %v2110
        %v2113 = vmul.f32 0.5, %v2112
        %v2114 = vsub.f32 1.5, %v2113
        %v2115 = vmul.f32 %v2110, %v2114
        %vm2116 = vweird.f32 %v1712
        %vm2117 = vweird.f32 %v2110
        %vm2118 = vmor %vm2116, %vm2117
        %v2119 = vsel %vm2118, %v2110, %v2115
        %v2120 = vrsqrt.pop %v1713
        %v2121 = vmul.f32 %v2120, %v1713
        %v2122 = vmul.f32 %v2121, %v2120
        %v2123 = vmul.f32 0.5, %v2122
        %v2124 = vsub.f32 1.5, %v2123
        %v2125 = vmul.f32 %v2120, %v2124
        %vm2126 = vweird.f32 %v1713
        %vm2127 = vweird.f32 %v2120
        %vm2128 = vmor %vm2126, %vm2127
        %v2129 = vsel %vm2128, %v2120, %v2125
        %v2130 = vrsqrt.pop %v1714
        %v2131 = vmul.f32 %v2130, %v1714
        %v2132 = vmul.f32 %v2131, %v2130
        %v2133 = vmul.f32 0.5, %v2132
        %v2134 = vsub.f32 1.5, %v2133
        %v2135 = vmul.f32 %v2130, %v2134
        %vm2136 = vweird.f32 %v1714
        %vm2137 = vweird.f32 %v2130
        %vm2138 = vmor %vm2136, %vm2137
        %v2139 = vsel %vm2138, %v2130, %v2135
        %v2140 = vrsqrt.pop %v1715
        %v2141 = vmul.f32 %v2140, %v1715
        %v2142 = vmul.f32 %v2141, %v2140
        %v2143 = vmul.f32 0.5, %v2142
        %v2144 = vsub.f32 1.5, %v2143
        %v2145 = vmul.f32 %v2140, %v2144
        %vm2146 = vweird.f32 %v1715
        %vm2147 = vweird.f32 %v2140
        %vm2148 = vmor %vm2146, %vm2147
        %v2149 = vsel %vm2148, %v2140, %v2145
        %v2150 = vrsqrt.pop %v1716
        %v2151 = vmul.f32 %v2150, %v1716
        %v2152 = vmul.f32 %v2151, %v2150
        %v2153 = vmul.f32 0.5, %v2152
        %v2154 = vsub.f32 1.5, %v2153
        %v2155 = vmul.f32 %v2150, %v2154
        %vm2156 = vweird.f32 %v1716
        %vm2157 = vweird.f32 %v2150
        %vm2158 = vmor %vm2156, %vm2157
        %v2159 = vsel %vm2158, %v2150, %v2155
        %v2160 = vrsqrt.pop %v1717
        %v2161 = vmul.f32 %v2160, %v1717
        %v2162 = vmul.f32 %v2161, %v2160
        %v2163 = vmul.f32 0.5, %v2162
        %v2164 = vsub.f32 1.5, %v2163
        %v2165 = vmul.f32 %v2160, %v2164
        %vm2166 = vweird.f32 %v1717
        %vm2167 = vweird.f32 %v2160
        %vm2168 = vmor %vm2166, %vm2167
        %v2169 = vsel %vm2168, %v2160, %v2165
        %v2170 = vrsqrt.pop %v1718
        %v2171 = vmul.f32 %v2170, %v1718
        %v2172 = vmul.f32 %v2171, %v2170
        %v2173 = vmul.f32 0.5, %v2172
        %v2174 = vsub.f32 1.5, %v2173
        %v2175 = vmul.f32 %v2170, %v2174
        %vm2176 = vweird.f32 %v1718
        %vm2177 = vweird.f32 %v2170
        %vm2178 = vmor %vm2176, %vm2177
        %v2179 = vsel %vm2178, %v2170, %v2175
        %v2180 = vrsqrt.pop %v1719
        %v2181 = vmul.f32 %v2180, %v1719
        %v2182 = vmul.f32 %v2181, %v2180
        %v2183 = vmul.f32 0.5, %v2182
        %v2184 = vsub.f32 1.5, %v2183
        %v2185 = vmul.f32 %v2180, %v2184
        %vm2186 = vweird.f32 %v1719
        %vm2187 = vweird.f32 %v2180
        %vm2188 = vmor %vm2186, %vm2187
        %v2189 = vsel %vm2188, %v2180, %v2185
        %v2190 = vrsqrt.pop %v1720
        %v2191 = vmul.f32 %v2190, %v1720
        %v2192 = vmul.f32 %v2191, %v2190
        %v2193 = vmul.f32 0.5, %v2192
        %v2194 = vsub.f32 1.5, %v2193
        %v2195 = vmul.f32 %v2190, %v2194
        %vm2196 = vweird.f32 %v1720
        %vm2197 = vweird.f32 %v2190
        %vm2198 = vmor %vm2196, %vm2197
        %v2199 = vsel %vm2198, %v2190, %v2195
        %v2200 = vrsqrt.pop %v1721
        %v2201 = vmul.f32 %v2200, %v1721
        %v2202 = vmul.f32 %v2201, %v2200
        %v2203 = vmul.f32 0.5, %v2202
        %v2204 = vsub.f32 1.5, %v2203
        %v2205 = vmul.f32 %v2200, %v2204
        %vm2206 = vweird.f32 %v1721
        %vm2207 = vweird.f32 %v2200
        %vm2208 = vmor %vm2206, %vm2207
        %v2209 = vsel %vm2208, %v2200, %v2205
        %v2210 = vrsqrt.pop %v1722
        %v2211 = vmul.f32 %v2210, %v1722
        %v2212 = vmul.f32 %v2211, %v2210
        %v2213 = vmul.f32 0.5, %v2212
        %v2214 = vsub.f32 1.5, %v2213
        %v2215 = vmul.f32 %v2210, %v2214
        %vm2216 = vweird.f32 %v1722
        %vm2217 = vweird.f32 %v2210
        %vm2218 = vmor %vm2216, %vm2217
        %v2219 = vsel %vm2218, %v2210, %v2215
        %v2220 = vrsqrt.pop %v1723
        %v2221 = vmul.f32 %v2220, %v1723
        %v2222 = vmul.f32 %v2221, %v2220
        %v2223 = vmul.f32 0.5, %v2222
        %v2224 = vsub.f32 1.5, %v2223
        %v2225 = vmul.f32 %v2220, %v2224
        %vm2226 = vweird.f32 %v1723
        %vm2227 = vweird.f32 %v2220
        %vm2228 = vmor %vm2226, %vm2227
        %v2229 = vsel %vm2228, %v2220, %v2225
        %v2230 = vrsqrt.pop %v1724
        %v2231 = vmul.f32 %v2230, %v1724
        %v2232 = vmul.f32 %v2231, %v2230
        %v2233 = vmul.f32 0.5, %v2232
        %v2234 = vsub.f32 1.5, %v2233
        %v2235 = vmul.f32 %v2230, %v2234
        %vm2236 = vweird.f32 %v1724
        %vm2237 = vweird.f32 %v2230
        %vm2238 = vmor %vm2236, %vm2237
        %v2239 = vsel %vm2238, %v2230, %v2235
        %v2240 = vrsqrt.pop %v1725
        %v2241 = vmul.f32 %v2240, %v1725
        %v2242 = vmul.f32 %v2241, %v2240
        %v2243 = vmul.f32 0.5, %v2242
        %v2244 = vsub.f32 1.5, %v2243
        %v2245 = vmul.f32 %v2240, %v2244
        %vm2246 = vweird.f32 %v1725
        %vm2247 = vweird.f32 %v2240
        %vm2248 = vmor %vm2246, %vm2247
        %v2249 = vsel %vm2248, %v2240, %v2245
        %v2250 = vrsqrt.pop %v1726
        %v2251 = vmul.f32 %v2250, %v1726
        %v2252 = vmul.f32 %v2251, %v2250
        %v2253 = vmul.f32 0.5, %v2252
        %v2254 = vsub.f32 1.5, %v2253
        %v2255 = vmul.f32 %v2250, %v2254
        %vm2256 = vweird.f32 %v1726
        %vm2257 = vweird.f32 %v2250
        %vm2258 = vmor %vm2256, %vm2257
        %v2259 = vsel %vm2258, %v2250, %v2255
        %v2260 = vrsqrt.pop %v1727
        %v2261 = vmul.f32 %v2260, %v1727
        %v2262 = vmul.f32 %v2261, %v2260
        %v2263 = vmul.f32 0.5, %v2262
        %v2264 = vsub.f32 1.5, %v2263
        %v2265 = vmul.f32 %v2260, %v2264
        %vm2266 = vweird.f32 %v1727
        %vm2267 = vweird.f32 %v2260
        %vm2268 = vmor %vm2266, %vm2267
        %v2269 = vsel %vm2268, %v2260, %v2265
        %v2270 = vrsqrt.pop %v1728
        %v2271 = vmul.f32 %v2270, %v1728
        %v2272 = vmul.f32 %v2271, %v2270
        %v2273 = vmul.f32 0.5, %v2272
        %v2274 = vsub.f32 1.5, %v2273
        %v2275 = vmul.f32 %v2270, %v2274
        %vm2276 = vweird.f32 %v1728
        %vm2277 = vweird.f32 %v2270
        %vm2278 = vmor %vm2276, %vm2277
        %v2279 = vsel %vm2278, %v2270, %v2275
        %v2280 = vrsqrt.pop %v1729
        %v2281 = vmul.f32 %v2280, %v1729
        %v2282 = vmul.f32 %v2281, %v2280
        %v2283 = vmul.f32 0.5, %v2282
        %v2284 = vsub.f32 1.5, %v2283
        %v2285 = vmul.f32 %v2280, %v2284
        %vm2286 = vweird.f32 %v1729
        %vm2287 = vweird.f32 %v2280
        %vm2288 = vmor %vm2286, %vm2287
        %v2289 = vsel %vm2288, %v2280, %v2285
        %v2290 = vrsqrt.pop %v1730
        %v2291 = vmul.f32 %v2290, %v1730
        %v2292 = vmul.f32 %v2291, %v2290
        %v2293 = vmul.f32 0.5, %v2292
        %v2294 = vsub.f32 1.5, %v2293
        %v2295 = vmul.f32 %v2290, %v2294
        %vm2296 = vweird.f32 %v1730
        %vm2297 = vweird.f32 %v2290
        %vm2298 = vmor %vm2296, %vm2297
        %v2299 = vsel %vm2298, %v2290, %v2295
        %v2300 = vrsqrt.pop %v1731
        %v2301 = vmul.f32 %v2300, %v1731
        %v2302 = vmul.f32 %v2301, %v2300
        %v2303 = vmul.f32 0.5, %v2302
        %v2304 = vsub.f32 1.5, %v2303
        %v2305 = vmul.f32 %v2300, %v2304
        %vm2306 = vweird.f32 %v1731
        %vm2307 = vweird.f32 %v2300
        %vm2308 = vmor %vm2306, %vm2307
        %v2309 = vsel %vm2308, %v2300, %v2305
        %v2310 = vrsqrt.pop %v1732
        %v2311 = vmul.f32 %v2310, %v1732
        %v2312 = vmul.f32 %v2311, %v2310
        %v2313 = vmul.f32 0.5, %v2312
        %v2314 = vsub.f32 1.5, %v2313
        %v2315 = vmul.f32 %v2310, %v2314
        %vm2316 = vweird.f32 %v1732
        %vm2317 = vweird.f32 %v2310
        %vm2318 = vmor %vm2316, %vm2317
        %v2319 = vsel %vm2318, %v2310, %v2315
        %v2320 = vrsqrt.pop %v1733
        %v2321 = vmul.f32 %v2320, %v1733
        %v2322 = vmul.f32 %v2321, %v2320
        %v2323 = vmul.f32 0.5, %v2322
        %v2324 = vsub.f32 1.5, %v2323
        %v2325 = vmul.f32 %v2320, %v2324
        %vm2326 = vweird.f32 %v1733
        %vm2327 = vweird.f32 %v2320
        %vm2328 = vmor %vm2326, %vm2327
        %v2329 = vsel %vm2328, %v2320, %v2325
        %v2330 = vrsqrt.pop %v1734
        %v2331 = vmul.f32 %v2330, %v1734
        %v2332 = vmul.f32 %v2331, %v2330
        %v2333 = vmul.f32 0.5, %v2332
        %v2334 = vsub.f32 1.5, %v2333
        %v2335 = vmul.f32 %v2330, %v2334
        %vm2336 = vweird.f32 %v1734
        %vm2337 = vweird.f32 %v2330
        %vm2338 = vmor %vm2336, %vm2337
        %v2339 = vsel %vm2338, %v2330, %v2335
        %v2340 = vrsqrt.pop %v1735
        %v2341 = vmul.f32 %v2340, %v1735
        %v2342 = vmul.f32 %v2341, %v2340
        %v2343 = vmul.f32 0.5, %v2342
        %v2344 = vsub.f32 1.5, %v2343
        %v2345 = vmul.f32 %v2340, %v2344
        %vm2346 = vweird.f32 %v1735
        %vm2347 = vweird.f32 %v2340
        %vm2348 = vmor %vm2346, %vm2347
        %v2349 = vsel %vm2348, %v2340, %v2345
        %v2350 = vrsqrt.pop %v1736
        %v2351 = vmul.f32 %v2350, %v1736
        %v2352 = vmul.f32 %v2351, %v2350
        %v2353 = vmul.f32 0.5, %v2352
        %v2354 = vsub.f32 1.5, %v2353
        %v2355 = vmul.f32 %v2350, %v2354
        %vm2356 = vweird.f32 %v1736
        %vm2357 = vweird.f32 %v2350
        %vm2358 = vmor %vm2356, %vm2357
        %v2359 = vsel %vm2358, %v2350, %v2355
        %v2360 = vrsqrt.pop %v1737
        %v2361 = vmul.f32 %v2360, %v1737
        %v2362 = vmul.f32 %v2361, %v2360
        %v2363 = vmul.f32 0.5, %v2362
        %v2364 = vsub.f32 1.5, %v2363
        %v2365 = vmul.f32 %v2360, %v2364
        %vm2366 = vweird.f32 %v1737
        %vm2367 = vweird.f32 %v2360
        %vm2368 = vmor %vm2366, %vm2367
        %v2369 = vsel %vm2368, %v2360, %v2365
        %v2370 = vrsqrt.pop %v1738
        %v2371 = vmul.f32 %v2370, %v1738
        %v2372 = vmul.f32 %v2371, %v2370
        %v2373 = vmul.f32 0.5, %v2372
        %v2374 = vsub.f32 1.5, %v2373
        %v2375 = vmul.f32 %v2370, %v2374
        %vm2376 = vweird.f32 %v1738
        %vm2377 = vweird.f32 %v2370
        %vm2378 = vmor %vm2376, %vm2377
        %v2379 = vsel %vm2378, %v2370, %v2375
        %v2380 = vrsqrt.pop %v1739
        %v2381 = vmul.f32 %v2380, %v1739
        %v2382 = vmul.f32 %v2381, %v2380
        %v2383 = vmul.f32 0.5, %v2382
        %v2384 = vsub.f32 1.5, %v2383
        %v2385 = vmul.f32 %v2380, %v2384
        %vm2386 = vweird.f32 %v1739
        %vm2387 = vweird.f32 %v2380
        %vm2388 = vmor %vm2386, %vm2387
        %v2389 = vsel %vm2388, %v2380, %v2385
        %v2390 = vrsqrt.pop %v1740
        %v2391 = vmul.f32 %v2390, %v1740
        %v2392 = vmul.f32 %v2391, %v2390
        %v2393 = vmul.f32 0.5, %v2392
        %v2394 = vsub.f32 1.5, %v2393
        %v2395 = vmul.f32 %v2390, %v2394
        %vm2396 = vweird.f32 %v1740
        %vm2397 = vweird.f32 %v2390
        %vm2398 = vmor %vm2396, %vm2397
        %v2399 = vsel %vm2398, %v2390, %v2395
        %v2400 = vrsqrt.pop %v1741
        %v2401 = vmul.f32 %v2400, %v1741
        %v2402 = vmul.f32 %v2401, %v2400
        %v2403 = vmul.f32 0.5, %v2402
        %v2404 = vsub.f32 1.5, %v2403
        %v2405 = vmul.f32 %v2400, %v2404
        %vm2406 = vweird.f32 %v1741
        %vm2407 = vweird.f32 %v2400
        %vm2408 = vmor %vm2406, %vm2407
        %v2409 = vsel %vm2408, %v2400, %v2405
        %v2410 = vrsqrt.pop %v1742
        %v2411 = vmul.f32 %v2410, %v1742
        %v2412 = vmul.f32 %v2411, %v2410
        %v2413 = vmul.f32 0.5, %v2412
        %v2414 = vsub.f32 1.5, %v2413
        %v2415 = vmul.f32 %v2410, %v2414
        %vm2416 = vweird.f32 %v1742
        %vm2417 = vweird.f32 %v2410
        %vm2418 = vmor %vm2416, %vm2417
        %v2419 = vsel %vm2418, %v2410, %v2415
        %v2420 = vrsqrt.pop %v1743
        %v2421 = vmul.f32 %v2420, %v1743
        %v2422 = vmul.f32 %v2421, %v2420
        %v2423 = vmul.f32 0.5, %v2422
        %v2424 = vsub.f32 1.5, %v2423
        %v2425 = vmul.f32 %v2420, %v2424
        %vm2426 = vweird.f32 %v1743
        %vm2427 = vweird.f32 %v2420
        %vm2428 = vmor %vm2426, %vm2427
        %v2429 = vsel %vm2428, %v2420, %v2425
        %v2430 = vrsqrt.pop %v1744
        %v2431 = vmul.f32 %v2430, %v1744
        %v2432 = vmul.f32 %v2431, %v2430
        %v2433 = vmul.f32 0.5, %v2432
        %v2434 = vsub.f32 1.5, %v2433
        %v2435 = vmul.f32 %v2430, %v2434
        %vm2436 = vweird.f32 %v1744
        %vm2437 = vweird.f32 %v2430
        %vm2438 = vmor %vm2436, %vm2437
        %v2439 = vsel %vm2438, %v2430, %v2435
        %v2440 = vrsqrt.pop %v1745
        %v2441 = vmul.f32 %v2440, %v1745
        %v2442 = vmul.f32 %v2441, %v2440
        %v2443 = vmul.f32 0.5, %v2442
        %v2444 = vsub.f32 1.5, %v2443
        %v2445 = vmul.f32 %v2440, %v2444
        %vm2446 = vweird.f32 %v1745
        %vm2447 = vweird.f32 %v2440
        %vm2448 = vmor %vm2446, %vm2447
        %v2449 = vsel %vm2448, %v2440, %v2445
        %v2450 = vrsqrt.pop %v1746
        %v2451 = vmul.f32 %v2450, %v1746
        %v2452 = vmul.f32 %v2451, %v2450
        %v2453 = vmul.f32 0.5, %v2452
        %v2454 = vsub.f32 1.5, %v2453
        %v2455 = vmul.f32 %v2450, %v2454
        %vm2456 = vweird.f32 %v1746
        %vm2457 = vweird.f32 %v2450
        %vm2458 = vmor %vm2456, %vm2457
        %v2459 = vsel %vm2458, %v2450, %v2455
        %v2460 = vrsqrt.pop %v1747
        %v2461 = vmul.f32 %v2460, %v1747
        %v2462 = vmul.f32 %v2461, %v2460
        %v2463 = vmul.f32 0.5, %v2462
        %v2464 = vsub.f32 1.5, %v2463
        %v2465 = vmul.f32 %v2460, %v2464
        %vm2466 = vweird.f32 %v1747
        %vm2467 = vweird.f32 %v2460
        %vm2468 = vmor %vm2466, %vm2467
        %v2469 = vsel %vm2468, %v2460, %v2465
        %v2470 = vrsqrt.pop %v1748
        %v2471 = vmul.f32 %v2470, %v1748
        %v2472 = vmul.f32 %v2471, %v2470
        %v2473 = vmul.f32 0.5, %v2472
        %v2474 = vsub.f32 1.5, %v2473
        %v2475 = vmul.f32 %v2470, %v2474
        %vm2476 = vweird.f32 %v1748
        %vm2477 = vweird.f32 %v2470
        %vm2478 = vmor %vm2476, %vm2477
        %v2479 = vsel %vm2478, %v2470, %v2475
        %v2480 = vrsqrt.pop %v1749
        %v2481 = vmul.f32 %v2480, %v1749
        %v2482 = vmul.f32 %v2481, %v2480
        %v2483 = vmul.f32 0.5, %v2482
        %v2484 = vsub.f32 1.5, %v2483
        %v2485 = vmul.f32 %v2480, %v2484
        %vm2486 = vweird.f32 %v1749
        %vm2487 = vweird.f32 %v2480
        %vm2488 = vmor %vm2486, %vm2487
        %v2489 = vsel %vm2488, %v2480, %v2485
        %v2490 = vrsqrt.pop %v1750
        %v2491 = vmul.f32 %v2490, %v1750
        %v2492 = vmul.f32 %v2491, %v2490
        %v2493 = vmul.f32 0.5, %v2492
        %v2494 = vsub.f32 1.5, %v2493
        %v2495 = vmul.f32 %v2490, %v2494
        %vm2496 = vweird.f32 %v1750
        %vm2497 = vweird.f32 %v2490
        %vm2498 = vmor %vm2496, %vm2497
        %v2499 = vsel %vm2498, %v2490, %v2495
        %v2500 = vrsqrt.pop %v1751
        %v2501 = vmul.f32 %v2500, %v1751
        %v2502 = vmul.f32 %v2501, %v2500
        %v2503 = vmul.f32 0.5, %v2502
        %v2504 = vsub.f32 1.5, %v2503
        %v2505 = vmul.f32 %v2500, %v2504
        %vm2506 = vweird.f32 %v1751
        %vm2507 = vweird.f32 %v2500
        %vm2508 = vmor %vm2506, %vm2507
        %v2509 = vsel %vm2508, %v2500, %v2505
        %v2510 = vrsqrt.pop %v1752
        %v2511 = vmul.f32 %v2510, %v1752
        %v2512 = vmul.f32 %v2511, %v2510
        %v2513 = vmul.f32 0.5, %v2512
        %v2514 = vsub.f32 1.5, %v2513
        %v2515 = vmul.f32 %v2510, %v2514
        %vm2516 = vweird.f32 %v1752
        %vm2517 = vweird.f32 %v2510
        %vm2518 = vmor %vm2516, %vm2517
        %v2519 = vsel %vm2518, %v2510, %v2515
        %v2520 = vrsqrt.pop %v1753
        %v2521 = vmul.f32 %v2520, %v1753
        %v2522 = vmul.f32 %v2521, %v2520
        %v2523 = vmul.f32 0.5, %v2522
        %v2524 = vsub.f32 1.5, %v2523
        %v2525 = vmul.f32 %v2520, %v2524
        %vm2526 = vweird.f32 %v1753
        %vm2527 = vweird.f32 %v2520
        %vm2528 = vmor %vm2526, %vm2527
        %v2529 = vsel %vm2528, %v2520, %v2525
        %v2530 = vrsqrt.pop %v1754
        %v2531 = vmul.f32 %v2530, %v1754
        %v2532 = vmul.f32 %v2531, %v2530
        %v2533 = vmul.f32 0.5, %v2532
        %v2534 = vsub.f32 1.5, %v2533
        %v2535 = vmul.f32 %v2530, %v2534
        %vm2536 = vweird.f32 %v1754
        %vm2537 = vweird.f32 %v2530
        %vm2538 = vmor %vm2536, %vm2537
        %v2539 = vsel %vm2538, %v2530, %v2535
        %v2540 = vrsqrt.pop %v1755
        %v2541 = vmul.f32 %v2540, %v1755
        %v2542 = vmul.f32 %v2541, %v2540
        %v2543 = vmul.f32 0.5, %v2542
        %v2544 = vsub.f32 1.5, %v2543
        %v2545 = vmul.f32 %v2540, %v2544
        %vm2546 = vweird.f32 %v1755
        %vm2547 = vweird.f32 %v2540
        %vm2548 = vmor %vm2546, %vm2547
        %v2549 = vsel %vm2548, %v2540, %v2545
        %v2550 = vrsqrt.pop %v1756
        %v2551 = vmul.f32 %v2550, %v1756
        %v2552 = vmul.f32 %v2551, %v2550
        %v2553 = vmul.f32 0.5, %v2552
        %v2554 = vsub.f32 1.5, %v2553
        %v2555 = vmul.f32 %v2550, %v2554
        %vm2556 = vweird.f32 %v1756
        %vm2557 = vweird.f32 %v2550
        %vm2558 = vmor %vm2556, %vm2557
        %v2559 = vsel %vm2558, %v2550, %v2555
        %v2560 = vrsqrt.pop %v1757
        %v2561 = vmul.f32 %v2560, %v1757
        %v2562 = vmul.f32 %v2561, %v2560
        %v2563 = vmul.f32 0.5, %v2562
        %v2564 = vsub.f32 1.5, %v2563
        %v2565 = vmul.f32 %v2560, %v2564
        %vm2566 = vweird.f32 %v1757
        %vm2567 = vweird.f32 %v2560
        %vm2568 = vmor %vm2566, %vm2567
        %v2569 = vsel %vm2568, %v2560, %v2565
        %v2570 = vrsqrt.pop %v1758
        %v2571 = vmul.f32 %v2570, %v1758
        %v2572 = vmul.f32 %v2571, %v2570
        %v2573 = vmul.f32 0.5, %v2572
        %v2574 = vsub.f32 1.5, %v2573
        %v2575 = vmul.f32 %v2570, %v2574
        %vm2576 = vweird.f32 %v1758
        %vm2577 = vweird.f32 %v2570
        %vm2578 = vmor %vm2576, %vm2577
        %v2579 = vsel %vm2578, %v2570, %v2575
        %v2580 = vrsqrt.pop %v1759
        %v2581 = vmul.f32 %v2580, %v1759
        %v2582 = vmul.f32 %v2581, %v2580
        %v2583 = vmul.f32 0.5, %v2582
        %v2584 = vsub.f32 1.5, %v2583
        %v2585 = vmul.f32 %v2580, %v2584
        %vm2586 = vweird.f32 %v1759
        %vm2587 = vweird.f32 %v2580
        %vm2588 = vmor %vm2586, %vm2587
        %v2589 = vsel %vm2588, %v2580, %v2585
        %v2590 = vrsqrt.pop %v1760
        %v2591 = vmul.f32 %v2590, %v1760
        %v2592 = vmul.f32 %v2591, %v2590
        %v2593 = vmul.f32 0.5, %v2592
        %v2594 = vsub.f32 1.5, %v2593
        %v2595 = vmul.f32 %v2590, %v2594
        %vm2596 = vweird.f32 %v1760
        %vm2597 = vweird.f32 %v2590
        %vm2598 = vmor %vm2596, %vm2597
        %v2599 = vsel %vm2598, %v2590, %v2595
        %v2600 = vrsqrt.pop %v1761
        %v2601 = vmul.f32 %v2600, %v1761
        %v2602 = vmul.f32 %v2601, %v2600
        %v2603 = vmul.f32 0.5, %v2602
        %v2604 = vsub.f32 1.5, %v2603
        %v2605 = vmul.f32 %v2600, %v2604
        %vm2606 = vweird.f32 %v1761
        %vm2607 = vweird.f32 %v2600
        %vm2608 = vmor %vm2606, %vm2607
        %v2609 = vsel %vm2608, %v2600, %v2605
        %v2610 = vrsqrt.pop %v1762
        %v2611 = vmul.f32 %v2610, %v1762
        %v2612 = vmul.f32 %v2611, %v2610
        %v2613 = vmul.f32 0.5, %v2612
        %v2614 = vsub.f32 1.5, %v2613
        %v2615 = vmul.f32 %v2610, %v2614
        %vm2616 = vweird.f32 %v1762
        %vm2617 = vweird.f32 %v2610
        %vm2618 = vmor %vm2616, %vm2617
        %v2619 = vsel %vm2618, %v2610, %v2615
        %v2620 = vrsqrt.pop %v1763
        %v2621 = vmul.f32 %v2620, %v1763
        %v2622 = vmul.f32 %v2621, %v2620
        %v2623 = vmul.f32 0.5, %v2622
        %v2624 = vsub.f32 1.5, %v2623
        %v2625 = vmul.f32 %v2620, %v2624
        %vm2626 = vweird.f32 %v1763
        %vm2627 = vweird.f32 %v2620
        %vm2628 = vmor %vm2626, %vm2627
        %v2629 = vsel %vm2628, %v2620, %v2625
        %v2630 = vrsqrt.pop %v1764
        %v2631 = vmul.f32 %v2630, %v1764
        %v2632 = vmul.f32 %v2631, %v2630
        %v2633 = vmul.f32 0.5, %v2632
        %v2634 = vsub.f32 1.5, %v2633
        %v2635 = vmul.f32 %v2630, %v2634
        %vm2636 = vweird.f32 %v1764
        %vm2637 = vweird.f32 %v2630
        %vm2638 = vmor %vm2636, %vm2637
        %v2639 = vsel %vm2638, %v2630, %v2635
        %v2640 = vrsqrt.pop %v1765
        %v2641 = vmul.f32 %v2640, %v1765
        %v2642 = vmul.f32 %v2641, %v2640
        %v2643 = vmul.f32 0.5, %v2642
        %v2644 = vsub.f32 1.5, %v2643
        %v2645 = vmul.f32 %v2640, %v2644
        %vm2646 = vweird.f32 %v1765
        %vm2647 = vweird.f32 %v2640
        %vm2648 = vmor %vm2646, %vm2647
        %v2649 = vsel %vm2648, %v2640, %v2645
        %v2650 = vrsqrt.pop %v1766
        %v2651 = vmul.f32 %v2650, %v1766
        %v2652 = vmul.f32 %v2651, %v2650
        %v2653 = vmul.f32 0.5, %v2652
        %v2654 = vsub.f32 1.5, %v2653
        %v2655 = vmul.f32 %v2650, %v2654
        %vm2656 = vweird.f32 %v1766
        %vm2657 = vweird.f32 %v2650
        %vm2658 = vmor %vm2656, %vm2657
        %v2659 = vsel %vm2658, %v2650, %v2655
        %v2660 = vrsqrt.pop %v1767
        %v2661 = vmul.f32 %v2660, %v1767
        %v2662 = vmul.f32 %v2661, %v2660
        %v2663 = vmul.f32 0.5, %v2662
        %v2664 = vsub.f32 1.5, %v2663
        %v2665 = vmul.f32 %v2660, %v2664
        %vm2666 = vweird.f32 %v1767
        %vm2667 = vweird.f32 %v2660
        %vm2668 = vmor %vm2666, %vm2667
        %v2669 = vsel %vm2668, %v2660, %v2665
        %v2670 = vrsqrt.pop %v1768
        %v2671 = vmul.f32 %v2670, %v1768
        %v2672 = vmul.f32 %v2671, %v2670
        %v2673 = vmul.f32 0.5, %v2672
        %v2674 = vsub.f32 1.5, %v2673
        %v2675 = vmul.f32 %v2670, %v2674
        %vm2676 = vweird.f32 %v1768
        %vm2677 = vweird.f32 %v2670
        %vm2678 = vmor %vm2676, %vm2677
        %v2679 = vsel %vm2678, %v2670, %v2675
        %v2680 = vrsqrt.pop %v1769
        %v2681 = vmul.f32 %v2680, %v1769
        %v2682 = vmul.f32 %v2681, %v2680
        %v2683 = vmul.f32 0.5, %v2682
        %v2684 = vsub.f32 1.5, %v2683
        %v2685 = vmul.f32 %v2680, %v2684
        %vm2686 = vweird.f32 %v1769
        %vm2687 = vweird.f32 %v2680
        %vm2688 = vmor %vm2686, %vm2687
        %v2689 = vsel %vm2688, %v2680, %v2685
        %v2690 = vrsqrt.pop %v1770
        %v2691 = vmul.f32 %v2690, %v1770
        %v2692 = vmul.f32 %v2691, %v2690
        %v2693 = vmul.f32 0.5, %v2692
        %v2694 = vsub.f32 1.5, %v2693
        %v2695 = vmul.f32 %v2690, %v2694
        %vm2696 = vweird.f32 %v1770
        %vm2697 = vweird.f32 %v2690
        %vm2698 = vmor %vm2696, %vm2697
        %v2699 = vsel %vm2698, %v2690, %v2695
        %v2700 = vrsqrt.pop %v1771
        %v2701 = vmul.f32 %v2700, %v1771
        %v2702 = vmul.f32 %v2701, %v2700
        %v2703 = vmul.f32 0.5, %v2702
        %v2704 = vsub.f32 1.5, %v2703
        %v2705 = vmul.f32 %v2700, %v2704
        %vm2706 = vweird.f32 %v1771
        %vm2707 = vweird.f32 %v2700
        %vm2708 = vmor %vm2706, %vm2707
        %v2709 = vsel %vm2708, %v2700, %v2705
        %v2710 = vrsqrt.pop %v1772
        %v2711 = vmul.f32 %v2710, %v1772
        %v2712 = vmul.f32 %v2711, %v2710
        %v2713 = vmul.f32 0.5, %v2712
        %v2714 = vsub.f32 1.5, %v2713
        %v2715 = vmul.f32 %v2710, %v2714
        %vm2716 = vweird.f32 %v1772
        %vm2717 = vweird.f32 %v2710
        %vm2718 = vmor %vm2716, %vm2717
        %v2719 = vsel %vm2718, %v2710, %v2715
        %v2720 = vrsqrt.pop %v1773
        %v2721 = vmul.f32 %v2720, %v1773
        %v2722 = vmul.f32 %v2721, %v2720
        %v2723 = vmul.f32 0.5, %v2722
        %v2724 = vsub.f32 1.5, %v2723
        %v2725 = vmul.f32 %v2720, %v2724
        %vm2726 = vweird.f32 %v1773
        %vm2727 = vweird.f32 %v2720
        %vm2728 = vmor %vm2726, %vm2727
        %v2729 = vsel %vm2728, %v2720, %v2725
        %v2730 = vrsqrt.pop %v1774
        %v2731 = vmul.f32 %v2730, %v1774
        %v2732 = vmul.f32 %v2731, %v2730
        %v2733 = vmul.f32 0.5, %v2732
        %v2734 = vsub.f32 1.5, %v2733
        %v2735 = vmul.f32 %v2730, %v2734
        %vm2736 = vweird.f32 %v1774
        %vm2737 = vweird.f32 %v2730
        %vm2738 = vmor %vm2736, %vm2737
        %v2739 = vsel %vm2738, %v2730, %v2735
        %v2740 = vrsqrt.pop %v1775
        %v2741 = vmul.f32 %v2740, %v1775
        %v2742 = vmul.f32 %v2741, %v2740
        %v2743 = vmul.f32 0.5, %v2742
        %v2744 = vsub.f32 1.5, %v2743
        %v2745 = vmul.f32 %v2740, %v2744
        %vm2746 = vweird.f32 %v1775
        %vm2747 = vweird.f32 %v2740
        %vm2748 = vmor %vm2746, %vm2747
        %v2749 = vsel %vm2748, %v2740, %v2745
        %v2750 = vrsqrt.pop %v1776
        %v2751 = vmul.f32 %v2750, %v1776
        %v2752 = vmul.f32 %v2751, %v2750
        %v2753 = vmul.f32 0.5, %v2752
        %v2754 = vsub.f32 1.5, %v2753
        %v2755 = vmul.f32 %v2750, %v2754
        %vm2756 = vweird.f32 %v1776
        %vm2757 = vweird.f32 %v2750
        %vm2758 = vmor %vm2756, %vm2757
        %v2759 = vsel %vm2758, %v2750, %v2755
        %v2760 = vrsqrt.pop %v1777
        %v2761 = vmul.f32 %v2760, %v1777
        %v2762 = vmul.f32 %v2761, %v2760
        %v2763 = vmul.f32 0.5, %v2762
        %v2764 = vsub.f32 1.5, %v2763
        %v2765 = vmul.f32 %v2760, %v2764
        %vm2766 = vweird.f32 %v1777
        %vm2767 = vweird.f32 %v2760
        %vm2768 = vmor %vm2766, %vm2767
        %v2769 = vsel %vm2768, %v2760, %v2765
        %v2770 = vrsqrt.pop %v1778
        %v2771 = vmul.f32 %v2770, %v1778
        %v2772 = vmul.f32 %v2771, %v2770
        %v2773 = vmul.f32 0.5, %v2772
        %v2774 = vsub.f32 1.5, %v2773
        %v2775 = vmul.f32 %v2770, %v2774
        %vm2776 = vweird.f32 %v1778
        %vm2777 = vweird.f32 %v2770
        %vm2778 = vmor %vm2776, %vm2777
        %v2779 = vsel %vm2778, %v2770, %v2775
        %v2780 = vrsqrt.pop %v1779
        %v2781 = vmul.f32 %v2780, %v1779
        %v2782 = vmul.f32 %v2781, %v2780
        %v2783 = vmul.f32 0.5, %v2782
        %v2784 = vsub.f32 1.5, %v2783
        %v2785 = vmul.f32 %v2780, %v2784
        %vm2786 = vweird.f32 %v1779
        %vm2787 = vweird.f32 %v2780
        %vm2788 = vmor %vm2786, %vm2787
        %v2789 = vsel %vm2788, %v2780, %v2785
        %v2790 = vrsqrt.pop %v1780
        %v2791 = vmul.f32 %v2790, %v1780
        %v2792 = vmul.f32 %v2791, %v2790
        %v2793 = vmul.f32 0.5, %v2792
        %v2794 = vsub.f32 1.5, %v2793
        %v2795 = vmul.f32 %v2790, %v2794
        %vm2796 = vweird.f32 %v1780
        %vm2797 = vweird.f32 %v2790
        %vm2798 = vmor %vm2796, %vm2797
        %v2799 = vsel %vm2798, %v2790, %v2795
        %v2800 = vrsqrt.pop %v1781
        %v2801 = vmul.f32 %v2800, %v1781
        %v2802 = vmul.f32 %v2801, %v2800
        %v2803 = vmul.f32 0.5, %v2802
        %v2804 = vsub.f32 1.5, %v2803
        %v2805 = vmul.f32 %v2800, %v2804
        %vm2806 = vweird.f32 %v1781
        %vm2807 = vweird.f32 %v2800
        %vm2808 = vmor %vm2806, %vm2807
        %v2809 = vsel %vm2808, %v2800, %v2805
        %v2810 = vrsqrt.pop %v1782
        %v2811 = vmul.f32 %v2810, %v1782
        %v2812 = vmul.f32 %v2811, %v2810
        %v2813 = vmul.f32 0.5, %v2812
        %v2814 = vsub.f32 1.5, %v2813
        %v2815 = vmul.f32 %v2810, %v2814
        %vm2816 = vweird.f32 %v1782
        %vm2817 = vweird.f32 %v2810
        %vm2818 = vmor %vm2816, %vm2817
        %v2819 = vsel %vm2818, %v2810, %v2815
        %v2820 = vrsqrt.pop %v1783
        %v2821 = vmul.f32 %v2820, %v1783
        %v2822 = vmul.f32 %v2821, %v2820
        %v2823 = vmul.f32 0.5, %v2822
        %v2824 = vsub.f32 1.5, %v2823
        %v2825 = vmul.f32 %v2820, %v2824
        %vm2826 = vweird.f32 %v1783
        %vm2827 = vweird.f32 %v2820
        %vm2828 = vmor %vm2826, %vm2827
        %v2829 = vsel %vm2828, %v2820, %v2825
        %v2830 = vrsqrt.pop %v1784
        %v2831 = vmul.f32 %v2830, %v1784
        %v2832 = vmul.f32 %v2831, %v2830
        %v2833 = vmul.f32 0.5, %v2832
        %v2834 = vsub.f32 1.5, %v2833
        %v2835 = vmul.f32 %v2830, %v2834
        %vm2836 = vweird.f32 %v1784
        %vm2837 = vweird.f32 %v2830
        %vm2838 = vmor %vm2836, %vm2837
        %v2839 = vsel %vm2838, %v2830, %v2835
        %v2840 = vrsqrt.pop %v1785
        %v2841 = vmul.f32 %v2840, %v1785
        %v2842 = vmul.f32 %v2841, %v2840
        %v2843 = vmul.f32 0.5, %v2842
        %v2844 = vsub.f32 1.5, %v2843
        %v2845 = vmul.f32 %v2840, %v2844
        %vm2846 = vweird.f32 %v1785
        %vm2847 = vweird.f32 %v2840
        %vm2848 = vmor %vm2846, %vm2847
        %v2849 = vsel %vm2848, %v2840, %v2845
        %v2850 = vrsqrt.pop %v1786
        %v2851 = vmul.f32 %v2850, %v1786
        %v2852 = vmul.f32 %v2851, %v2850
        %v2853 = vmul.f32 0.5, %v2852
        %v2854 = vsub.f32 1.5, %v2853
        %v2855 = vmul.f32 %v2850, %v2854
        %vm2856 = vweird.f32 %v1786
        %vm2857 = vweird.f32 %v2850
        %vm2858 = vmor %vm2856, %vm2857
        %v2859 = vsel %vm2858, %v2850, %v2855
        %v2860 = vrsqrt.pop %v1787
        %v2861 = vmul.f32 %v2860, %v1787
        %v2862 = vmul.f32 %v2861, %v2860
        %v2863 = vmul.f32 0.5, %v2862
        %v2864 = vsub.f32 1.5, %v2863
        %v2865 = vmul.f32 %v2860, %v2864
        %vm2866 = vweird.f32 %v1787
        %vm2867 = vweird.f32 %v2860
        %vm2868 = vmor %vm2866, %vm2867
        %v2869 = vsel %vm2868, %v2860, %v2865
        %v2870 = vrsqrt.pop %v1788
        %v2871 = vmul.f32 %v2870, %v1788
        %v2872 = vmul.f32 %v2871, %v2870
        %v2873 = vmul.f32 0.5, %v2872
        %v2874 = vsub.f32 1.5, %v2873
        %v2875 = vmul.f32 %v2870, %v2874
        %vm2876 = vweird.f32 %v1788
        %vm2877 = vweird.f32 %v2870
        %vm2878 = vmor %vm2876, %vm2877
        %v2879 = vsel %vm2878, %v2870, %v2875
        %v2880 = vrsqrt.pop %v1789
        %v2881 = vmul.f32 %v2880, %v1789
        %v2882 = vmul.f32 %v2881, %v2880
        %v2883 = vmul.f32 0.5, %v2882
        %v2884 = vsub.f32 1.5, %v2883
        %v2885 = vmul.f32 %v2880, %v2884
        %vm2886 = vweird.f32 %v1789
        %vm2887 = vweird.f32 %v2880
        %vm2888 = vmor %vm2886, %vm2887
        %v2889 = vsel %vm2888, %v2880, %v2885
        %v2890 = vrsqrt.pop %v1790
        %v2891 = vmul.f32 %v2890, %v1790
        %v2892 = vmul.f32 %v2891, %v2890
        %v2893 = vmul.f32 0.5, %v2892
        %v2894 = vsub.f32 1.5, %v2893
        %v2895 = vmul.f32 %v2890, %v2894
        %vm2896 = vweird.f32 %v1790
        %vm2897 = vweird.f32 %v2890
        %vm2898 = vmor %vm2896, %vm2897
        %v2899 = vsel %vm2898, %v2890, %v2895
        %v2900 = vrsqrt.pop %v1791
        %v2901 = vmul.f32 %v2900, %v1791
        %v2902 = vmul.f32 %v2901, %v2900
        %v2903 = vmul.f32 0.5, %v2902
        %v2904 = vsub.f32 1.5, %v2903
        %v2905 = vmul.f32 %v2900, %v2904
        %vm2906 = vweird.f32 %v1791
        %vm2907 = vweird.f32 %v2900
        %vm2908 = vmor %vm2906, %vm2907
        %v2909 = vsel %vm2908, %v2900, %v2905
        %v2910 = vrsqrt.pop %v1792
        %v2911 = vmul.f32 %v2910, %v1792
        %v2912 = vmul.f32 %v2911, %v2910
        %v2913 = vmul.f32 0.5, %v2912
        %v2914 = vsub.f32 1.5, %v2913
        %v2915 = vmul.f32 %v2910, %v2914
        %vm2916 = vweird.f32 %v1792
        %vm2917 = vweird.f32 %v2910
        %vm2918 = vmor %vm2916, %vm2917
        %v2919 = vsel %vm2918, %v2910, %v2915
        %v2920 = vrsqrt.pop %v1793
        %v2921 = vmul.f32 %v2920, %v1793
        %v2922 = vmul.f32 %v2921, %v2920
        %v2923 = vmul.f32 0.5, %v2922
        %v2924 = vsub.f32 1.5, %v2923
        %v2925 = vmul.f32 %v2920, %v2924
        %vm2926 = vweird.f32 %v1793
        %vm2927 = vweird.f32 %v2920
        %vm2928 = vmor %vm2926, %vm2927
        %v2929 = vsel %vm2928, %v2920, %v2925
        %v2930 = vrsqrt.pop %v1794
        %v2931 = vmul.f32 %v2930, %v1794
        %v2932 = vmul.f32 %v2931, %v2930
        %v2933 = vmul.f32 0.5, %v2932
        %v2934 = vsub.f32 1.5, %v2933
        %v2935 = vmul.f32 %v2930, %v2934
        %vm2936 = vweird.f32 %v1794
        %vm2937 = vweird.f32 %v2930
        %vm2938 = vmor %vm2936, %vm2937
        %v2939 = vsel %vm2938, %v2930, %v2935
        %v2940 = vrsqrt.pop %v1795
        %v2941 = vmul.f32 %v2940, %v1795
        %v2942 = vmul.f32 %v2941, %v2940
        %v2943 = vmul.f32 0.5, %v2942
        %v2944 = vsub.f32 1.5, %v2943
        %v2945 = vmul.f32 %v2940, %v2944
        %vm2946 = vweird.f32 %v1795
        %vm2947 = vweird.f32 %v2940
        %vm2948 = vmor %vm2946, %vm2947
        %v2949 = vsel %vm2948, %v2940, %v2945
        %v2950 = vrsqrt.pop %v1796
        %v2951 = vmul.f32 %v2950, %v1796
        %v2952 = vmul.f32 %v2951, %v2950
        %v2953 = vmul.f32 0.5, %v2952
        %v2954 = vsub.f32 1.5, %v2953
        %v2955 = vmul.f32 %v2950, %v2954
        %vm2956 = vweird.f32 %v1796
        %vm2957 = vweird.f32 %v2950
        %vm2958 = vmor %vm2956, %vm2957
        %v2959 = vsel %vm2958, %v2950, %v2955
        %v2960 = vrsqrt.pop %v1797
        %v2961 = vmul.f32 %v2960, %v1797
        %v2962 = vmul.f32 %v2961, %v2960
        %v2963 = vmul.f32 0.5, %v2962
        %v2964 = vsub.f32 1.5, %v2963
        %v2965 = vmul.f32 %v2960, %v2964
        %vm2966 = vweird.f32 %v1797
        %vm2967 = vweird.f32 %v2960
        %vm2968 = vmor %vm2966, %vm2967
        %v2969 = vsel %vm2968, %v2960, %v2965
        %v2970 = vrsqrt.pop %v1798
        %v2971 = vmul.f32 %v2970, %v1798
        %v2972 = vmul.f32 %v2971, %v2970
        %v2973 = vmul.f32 0.5, %v2972
        %v2974 = vsub.f32 1.5, %v2973
        %v2975 = vmul.f32 %v2970, %v2974
        %vm2976 = vweird.f32 %v1798
        %vm2977 = vweird.f32 %v2970
        %vm2978 = vmor %vm2976, %vm2977
        %v2979 = vsel %vm2978, %v2970, %v2975
        %v2980 = vrsqrt.pop %v1799
        %v2981 = vmul.f32 %v2980, %v1799
        %v2982 = vmul.f32 %v2981, %v2980
        %v2983 = vmul.f32 0.5, %v2982
        %v2984 = vsub.f32 1.5, %v2983
        %v2985 = vmul.f32 %v2980, %v2984
        %vm2986 = vweird.f32 %v1799
        %vm2987 = vweird.f32 %v2980
        %vm2988 = vmor %vm2986, %vm2987
        %v2989 = vsel %vm2988, %v2980, %v2985
        %v2990 = vrsqrt.pop %v1800
        %v2991 = vmul.f32 %v2990, %v1800
        %v2992 = vmul.f32 %v2991, %v2990
        %v2993 = vmul.f32 0.5, %v2992
        %v2994 = vsub.f32 1.5, %v2993
        %v2995 = vmul.f32 %v2990, %v2994
        %vm2996 = vweird.f32 %v1800
        %vm2997 = vweird.f32 %v2990
        %vm2998 = vmor %vm2996, %vm2997
        %v2999 = vsel %vm2998, %v2990, %v2995
        %v3000 = vrsqrt.pop %v1801
        %v3001 = vmul.f32 %v3000, %v1801
        %v3002 = vmul.f32 %v3001, %v3000
        %v3003 = vmul.f32 0.5, %v3002
        %v3004 = vsub.f32 1.5, %v3003
        %v3005 = vmul.f32 %v3000, %v3004
        %vm3006 = vweird.f32 %v1801
        %vm3007 = vweird.f32 %v3000
        %vm3008 = vmor %vm3006, %vm3007
        %v3009 = vsel %vm3008, %v3000, %v3005
        %v3010 = vrsqrt.pop %v1802
        %v3011 = vmul.f32 %v3010, %v1802
        %v3012 = vmul.f32 %v3011, %v3010
        %v3013 = vmul.f32 0.5, %v3012
        %v3014 = vsub.f32 1.5, %v3013
        %v3015 = vmul.f32 %v3010, %v3014
        %vm3016 = vweird.f32 %v1802
        %vm3017 = vweird.f32 %v3010
        %vm3018 = vmor %vm3016, %vm3017
        %v3019 = vsel %vm3018, %v3010, %v3015
        %v3020 = vrsqrt.pop %v1803
        %v3021 = vmul.f32 %v3020, %v1803
        %v3022 = vmul.f32 %v3021, %v3020
        %v3023 = vmul.f32 0.5, %v3022
        %v3024 = vsub.f32 1.5, %v3023
        %v3025 = vmul.f32 %v3020, %v3024
        %vm3026 = vweird.f32 %v1803
        %vm3027 = vweird.f32 %v3020
        %vm3028 = vmor %vm3026, %vm3027
        %v3029 = vsel %vm3028, %v3020, %v3025
        %v3030 = vrsqrt.pop %v1804
        %v3031 = vmul.f32 %v3030, %v1804
        %v3032 = vmul.f32 %v3031, %v3030
        %v3033 = vmul.f32 0.5, %v3032
        %v3034 = vsub.f32 1.5, %v3033
        %v3035 = vmul.f32 %v3030, %v3034
        %vm3036 = vweird.f32 %v1804
        %vm3037 = vweird.f32 %v3030
        %vm3038 = vmor %vm3036, %vm3037
        %v3039 = vsel %vm3038, %v3030, %v3035
        %v3040 = vrsqrt.pop %v1805
        %v3041 = vmul.f32 %v3040, %v1805
        %v3042 = vmul.f32 %v3041, %v3040
        %v3043 = vmul.f32 0.5, %v3042
        %v3044 = vsub.f32 1.5, %v3043
        %v3045 = vmul.f32 %v3040, %v3044
        %vm3046 = vweird.f32 %v1805
        %vm3047 = vweird.f32 %v3040
        %vm3048 = vmor %vm3046, %vm3047
        %v3049 = vsel %vm3048, %v3040, %v3045
        %v3050 = vrsqrt.pop %v1806
        %v3051 = vmul.f32 %v3050, %v1806
        %v3052 = vmul.f32 %v3051, %v3050
        %v3053 = vmul.f32 0.5, %v3052
        %v3054 = vsub.f32 1.5, %v3053
        %v3055 = vmul.f32 %v3050, %v3054
        %vm3056 = vweird.f32 %v1806
        %vm3057 = vweird.f32 %v3050
        %vm3058 = vmor %vm3056, %vm3057
        %v3059 = vsel %vm3058, %v3050, %v3055
        %v3060 = vrsqrt.pop %v1807
        %v3061 = vmul.f32 %v3060, %v1807
        %v3062 = vmul.f32 %v3061, %v3060
        %v3063 = vmul.f32 0.5, %v3062
        %v3064 = vsub.f32 1.5, %v3063
        %v3065 = vmul.f32 %v3060, %v3064
        %vm3066 = vweird.f32 %v1807
        %vm3067 = vweird.f32 %v3060
        %vm3068 = vmor %vm3066, %vm3067
        %v3069 = vsel %vm3068, %v3060, %v3065
        %v3070 = vrsqrt.pop %v1808
        %v3071 = vmul.f32 %v3070, %v1808
        %v3072 = vmul.f32 %v3071, %v3070
        %v3073 = vmul.f32 0.5, %v3072
        %v3074 = vsub.f32 1.5, %v3073
        %v3075 = vmul.f32 %v3070, %v3074
        %vm3076 = vweird.f32 %v1808
        %vm3077 = vweird.f32 %v3070
        %vm3078 = vmor %vm3076, %vm3077
        %v3079 = vsel %vm3078, %v3070, %v3075
        %v3080 = vrsqrt.pop %v1809
        %v3081 = vmul.f32 %v3080, %v1809
        %v3082 = vmul.f32 %v3081, %v3080
        %v3083 = vmul.f32 0.5, %v3082
        %v3084 = vsub.f32 1.5, %v3083
        %v3085 = vmul.f32 %v3080, %v3084
        %vm3086 = vweird.f32 %v1809
        %vm3087 = vweird.f32 %v3080
        %vm3088 = vmor %vm3086, %vm3087
        %v3089 = vsel %vm3088, %v3080, %v3085
        %v3090 = vmul.f32 %v1042, %v1819
        %v3091 = vmul.f32 %v1043, %v1829
        %v3092 = vmul.f32 %v1044, %v1839
        %v3093 = vmul.f32 %v1045, %v1849
        %v3094 = vmul.f32 %v1046, %v1859
        %v3095 = vmul.f32 %v1047, %v1869
        %v3096 = vmul.f32 %v1048, %v1879
        %v3097 = vmul.f32 %v1049, %v1889
        %v3098 = vmul.f32 %v1050, %v1899
        %v3099 = vmul.f32 %v1051, %v1909
        %v3100 = vmul.f32 %v1052, %v1919
        %v3101 = vmul.f32 %v1053, %v1929
        %v3102 = vmul.f32 %v1054, %v1939
        %v3103 = vmul.f32 %v1055, %v1949
        %v3104 = vmul.f32 %v1056, %v1959
        %v3105 = vmul.f32 %v1057, %v1969
        %v3106 = vmul.f32 %v1058, %v1979
        %v3107 = vmul.f32 %v1059, %v1989
        %v3108 = vmul.f32 %v1060, %v1999
        %v3109 = vmul.f32 %v1061, %v2009
        %v3110 = vmul.f32 %v1062, %v2019
        %v3111 = vmul.f32 %v1063, %v2029
        %v3112 = vmul.f32 %v1064, %v2039
        %v3113 = vmul.f32 %v1065, %v2049
        %v3114 = vmul.f32 %v1066, %v2059
        %v3115 = vmul.f32 %v1067, %v2069
        %v3116 = vmul.f32 %v1068, %v2079
        %v3117 = vmul.f32 %v1069, %v2089
        %v3118 = vmul.f32 %v1070, %v2099
        %v3119 = vmul.f32 %v1071, %v2109
        %v3120 = vmul.f32 %v1072, %v2119
        %v3121 = vmul.f32 %v1073, %v2129
        %v3122 = vmul.f32 %v1074, %v2139
        %v3123 = vmul.f32 %v1075, %v2149
        %v3124 = vmul.f32 %v1076, %v2159
        %v3125 = vmul.f32 %v1077, %v2169
        %v3126 = vmul.f32 %v1078, %v2179
        %v3127 = vmul.f32 %v1079, %v2189
        %v3128 = vmul.f32 %v1080, %v2199
        %v3129 = vmul.f32 %v1081, %v2209
        %v3130 = vmul.f32 %v1082, %v2219
        %v3131 = vmul.f32 %v1083, %v2229
        %v3132 = vmul.f32 %v1084, %v2239
        %v3133 = vmul.f32 %v1085, %v2249
        %v3134 = vmul.f32 %v1086, %v2259
        %v3135 = vmul.f32 %v1087, %v2269
        %v3136 = vmul.f32 %v1088, %v2279
        %v3137 = vmul.f32 %v1089, %v2289
        %v3138 = vmul.f32 %v1090, %v2299
        %v3139 = vmul.f32 %v1091, %v2309
        %v3140 = vmul.f32 %v1092, %v2319
        %v3141 = vmul.f32 %v1093, %v2329
        %v3142 = vmul.f32 %v1094, %v2339
        %v3143 = vmul.f32 %v1095, %v2349
        %v3144 = vmul.f32 %v1096, %v2359
        %v3145 = vmul.f32 %v1097, %v2369
        %v3146 = vmul.f32 %v1098, %v2379
        %v3147 = vmul.f32 %v1099, %v2389
        %v3148 = vmul.f32 %v1100, %v2399
        %v3149 = vmul.f32 %v1101, %v2409
        %v3150 = vmul.f32 %v1102, %v2419
        %v3151 = vmul.f32 %v1103, %v2429
        %v3152 = vmul.f32 %v1104, %v2439
        %v3153 = vmul.f32 %v1105, %v2449
        %v3154 = vmul.f32 %v1106, %v2459
        %v3155 = vmul.f32 %v1107, %v2469
        %v3156 = vmul.f32 %v1108, %v2479
        %v3157 = vmul.f32 %v1109, %v2489
        %v3158 = vmul.f32 %v1110, %v2499
        %v3159 = vmul.f32 %v1111, %v2509
        %v3160 = vmul.f32 %v1112, %v2519
        %v3161 = vmul.f32 %v1113, %v2529
        %v3162 = vmul.f32 %v1114, %v2539
        %v3163 = vmul.f32 %v1115, %v2549
        %v3164 = vmul.f32 %v1116, %v2559
        %v3165 = vmul.f32 %v1117, %v2569
        %v3166 = vmul.f32 %v1118, %v2579
        %v3167 = vmul.f32 %v1119, %v2589
        %v3168 = vmul.f32 %v1120, %v2599
        %v3169 = vmul.f32 %v1121, %v2609
        %v3170 = vmul.f32 %v1122, %v2619
        %v3171 = vmul.f32 %v1123, %v2629
        %v3172 = vmul.f32 %v1124, %v2639
        %v3173 = vmul.f32 %v1125, %v2649
        %v3174 = vmul.f32 %v1126, %v2659
        %v3175 = vmul.f32 %v1127, %v2669
        %v3176 = vmul.f32 %v1128, %v2679
        %v3177 = vmul.f32 %v1129, %v2689
        %v3178 = vmul.f32 %v1130, %v2699
        %v3179 = vmul.f32 %v1131, %v2709
        %v3180 = vmul.f32 %v1132, %v2719
        %v3181 = vmul.f32 %v1133, %v2729
        %v3182 = vmul.f32 %v1134, %v2739
        %v3183 = vmul.f32 %v1135, %v2749
        %v3184 = vmul.f32 %v1136, %v2759
        %v3185 = vmul.f32 %v1137, %v2769
        %v3186 = vmul.f32 %v1138, %v2779
        %v3187 = vmul.f32 %v1139, %v2789
        %v3188 = vmul.f32 %v1140, %v2799
        %v3189 = vmul.f32 %v1141, %v2809
        %v3190 = vmul.f32 %v1142, %v2819
        %v3191 = vmul.f32 %v1143, %v2829
        %v3192 = vmul.f32 %v1144, %v2839
        %v3193 = vmul.f32 %v1145, %v2849
        %v3194 = vmul.f32 %v1146, %v2859
        %v3195 = vmul.f32 %v1147, %v2869
        %v3196 = vmul.f32 %v1148, %v2879
        %v3197 = vmul.f32 %v1149, %v2889
        %v3198 = vmul.f32 %v1150, %v2899
        %v3199 = vmul.f32 %v1151, %v2909
        %v3200 = vmul.f32 %v1152, %v2919
        %v3201 = vmul.f32 %v1153, %v2929
        %v3202 = vmul.f32 %v1154, %v2939
        %v3203 = vmul.f32 %v1155, %v2949
        %v3204 = vmul.f32 %v1156, %v2959
        %v3205 = vmul.f32 %v1157, %v2969
        %v3206 = vmul.f32 %v1158, %v2979
        %v3207 = vmul.f32 %v1159, %v2989
        %v3208 = vmul.f32 %v1160, %v2999
        %v3209 = vmul.f32 %v1161, %v3009
        %v3210 = vmul.f32 %v1162, %v3019
        %v3211 = vmul.f32 %v1163, %v3029
        %v3212 = vmul.f32 %v1164, %v3039
        %v3213 = vmul.f32 %v1165, %v3049
        %v3214 = vmul.f32 %v1166, %v3059
        %v3215 = vmul.f32 %v1167, %v3069
        %v3216 = vmul.f32 %v1168, %v3079
        %v3217 = vmul.f32 %v1169, %v3089
        %v3218 = vld [vmem:[%s1] sm:$0x1]
        %v3220 = vperm.slane %v3218, 0
        %v3222 = vmul.f32 %v3090, %v3220
        %v3223 = vmul.f32 %v3091, %v3220
        %v3224 = vmul.f32 %v3092, %v3220
        %v3225 = vmul.f32 %v3093, %v3220
        %v3226 = vmul.f32 %v3094, %v3220
        %v3227 = vmul.f32 %v3095, %v3220
        %v3228 = vmul.f32 %v3096, %v3220
        %v3229 = vmul.f32 %v3097, %v3220
        %v3230 = vmul.f32 %v3098, %v3220
        %v3231 = vmul.f32 %v3099, %v3220
        %v3232 = vmul.f32 %v3100, %v3220
        %v3233 = vmul.f32 %v3101, %v3220
        %v3234 = vmul.f32 %v3102, %v3220
        %v3235 = vmul.f32 %v3103, %v3220
        %v3236 = vmul.f32 %v3104, %v3220
        %v3237 = vmul.f32 %v3105, %v3220
        %v3238 = vmul.f32 %v3106, %v3220
        %v3239 = vmul.f32 %v3107, %v3220
        %v3240 = vmul.f32 %v3108, %v3220
        %v3241 = vmul.f32 %v3109, %v3220
        %v3242 = vmul.f32 %v3110, %v3220
        %v3243 = vmul.f32 %v3111, %v3220
        %v3244 = vmul.f32 %v3112, %v3220
        %v3245 = vmul.f32 %v3113, %v3220
        %v3246 = vmul.f32 %v3114, %v3220
        %v3247 = vmul.f32 %v3115, %v3220
        %v3248 = vmul.f32 %v3116, %v3220
        %v3249 = vmul.f32 %v3117, %v3220
        %v3250 = vmul.f32 %v3118, %v3220
        %v3251 = vmul.f32 %v3119, %v3220
        %v3252 = vmul.f32 %v3120, %v3220
        %v3253 = vmul.f32 %v3121, %v3220
        %v3254 = vmul.f32 %v3122, %v3220
        %v3255 = vmul.f32 %v3123, %v3220
        %v3256 = vmul.f32 %v3124, %v3220
        %v3257 = vmul.f32 %v3125, %v3220
        %v3258 = vmul.f32 %v3126, %v3220
        %v3259 = vmul.f32 %v3127, %v3220
        %v3260 = vmul.f32 %v3128, %v3220
        %v3261 = vmul.f32 %v3129, %v3220
        %v3262 = vmul.f32 %v3130, %v3220
        %v3263 = vmul.f32 %v3131, %v3220
        %v3264 = vmul.f32 %v3132, %v3220
        %v3265 = vmul.f32 %v3133, %v3220
        %v3266 = vmul.f32 %v3134, %v3220
        %v3267 = vmul.f32 %v3135, %v3220
        %v3268 = vmul.f32 %v3136, %v3220
        %v3269 = vmul.f32 %v3137, %v3220
        %v3270 = vmul.f32 %v3138, %v3220
        %v3271 = vmul.f32 %v3139, %v3220
        %v3272 = vmul.f32 %v3140, %v3220
        %v3273 = vmul.f32 %v3141, %v3220
        %v3274 = vmul.f32 %v3142, %v3220
        %v3275 = vmul.f32 %v3143, %v3220
        %v3276 = vmul.f32 %v3144, %v3220
        %v3277 = vmul.f32 %v3145, %v3220
        %v3278 = vmul.f32 %v3146, %v3220
        %v3279 = vmul.f32 %v3147, %v3220
        %v3280 = vmul.f32 %v3148, %v3220
        %v3281 = vmul.f32 %v3149, %v3220
        %v3282 = vmul.f32 %v3150, %v3220
        %v3283 = vmul.f32 %v3151, %v3220
        %v3284 = vmul.f32 %v3152, %v3220
        %v3285 = vmul.f32 %v3153, %v3220
        %v3286 = vmul.f32 %v3154, %v3220
        %v3287 = vmul.f32 %v3155, %v3220
        %v3288 = vmul.f32 %v3156, %v3220
        %v3289 = vmul.f32 %v3157, %v3220
        %v3290 = vmul.f32 %v3158, %v3220
        %v3291 = vmul.f32 %v3159, %v3220
        %v3292 = vmul.f32 %v3160, %v3220
        %v3293 = vmul.f32 %v3161, %v3220
        %v3294 = vmul.f32 %v3162, %v3220
        %v3295 = vmul.f32 %v3163, %v3220
        %v3296 = vmul.f32 %v3164, %v3220
        %v3297 = vmul.f32 %v3165, %v3220
        %v3298 = vmul.f32 %v3166, %v3220
        %v3299 = vmul.f32 %v3167, %v3220
        %v3300 = vmul.f32 %v3168, %v3220
        %v3301 = vmul.f32 %v3169, %v3220
        %v3302 = vmul.f32 %v3170, %v3220
        %v3303 = vmul.f32 %v3171, %v3220
        %v3304 = vmul.f32 %v3172, %v3220
        %v3305 = vmul.f32 %v3173, %v3220
        %v3306 = vmul.f32 %v3174, %v3220
        %v3307 = vmul.f32 %v3175, %v3220
        %v3308 = vmul.f32 %v3176, %v3220
        %v3309 = vmul.f32 %v3177, %v3220
        %v3310 = vmul.f32 %v3178, %v3220
        %v3311 = vmul.f32 %v3179, %v3220
        %v3312 = vmul.f32 %v3180, %v3220
        %v3313 = vmul.f32 %v3181, %v3220
        %v3314 = vmul.f32 %v3182, %v3220
        %v3315 = vmul.f32 %v3183, %v3220
        %v3316 = vmul.f32 %v3184, %v3220
        %v3317 = vmul.f32 %v3185, %v3220
        %v3318 = vmul.f32 %v3186, %v3220
        %v3319 = vmul.f32 %v3187, %v3220
        %v3320 = vmul.f32 %v3188, %v3220
        %v3321 = vmul.f32 %v3189, %v3220
        %v3322 = vmul.f32 %v3190, %v3220
        %v3323 = vmul.f32 %v3191, %v3220
        %v3324 = vmul.f32 %v3192, %v3220
        %v3325 = vmul.f32 %v3193, %v3220
        %v3326 = vmul.f32 %v3194, %v3220
        %v3327 = vmul.f32 %v3195, %v3220
        %v3328 = vmul.f32 %v3196, %v3220
        %v3329 = vmul.f32 %v3197, %v3220
        %v3330 = vmul.f32 %v3198, %v3220
        %v3331 = vmul.f32 %v3199, %v3220
        %v3332 = vmul.f32 %v3200, %v3220
        %v3333 = vmul.f32 %v3201, %v3220
        %v3334 = vmul.f32 %v3202, %v3220
        %v3335 = vmul.f32 %v3203, %v3220
        %v3336 = vmul.f32 %v3204, %v3220
        %v3337 = vmul.f32 %v3205, %v3220
        %v3338 = vmul.f32 %v3206, %v3220
        %v3339 = vmul.f32 %v3207, %v3220
        %v3340 = vmul.f32 %v3208, %v3220
        %v3341 = vmul.f32 %v3209, %v3220
        %v3342 = vmul.f32 %v3210, %v3220
        %v3343 = vmul.f32 %v3211, %v3220
        %v3344 = vmul.f32 %v3212, %v3220
        %v3345 = vmul.f32 %v3213, %v3220
        %v3346 = vmul.f32 %v3214, %v3220
        %v3347 = vmul.f32 %v3215, %v3220
        %v3348 = vmul.f32 %v3216, %v3220
        %v3349 = vmul.f32 %v3217, %v3220
        %v3350 = vld [vmem:[%s2] sm:$0x1]
        %v3352 = vperm.slane %v3350, 0
        %v3354 = vadd.f32 %v3222, %v3352
        %v3355 = vadd.f32 %v3223, %v3352
        %v3356 = vadd.f32 %v3224, %v3352
        %v3357 = vadd.f32 %v3225, %v3352
        %v3358 = vadd.f32 %v3226, %v3352
        %v3359 = vadd.f32 %v3227, %v3352
        %v3360 = vadd.f32 %v3228, %v3352
        %v3361 = vadd.f32 %v3229, %v3352
        %v3362 = vadd.f32 %v3230, %v3352
        %v3363 = vadd.f32 %v3231, %v3352
        %v3364 = vadd.f32 %v3232, %v3352
        %v3365 = vadd.f32 %v3233, %v3352
        %v3366 = vadd.f32 %v3234, %v3352
        %v3367 = vadd.f32 %v3235, %v3352
        %v3368 = vadd.f32 %v3236, %v3352
        %v3369 = vadd.f32 %v3237, %v3352
        %v3370 = vadd.f32 %v3238, %v3352
        %v3371 = vadd.f32 %v3239, %v3352
        %v3372 = vadd.f32 %v3240, %v3352
        %v3373 = vadd.f32 %v3241, %v3352
        %v3374 = vadd.f32 %v3242, %v3352
        %v3375 = vadd.f32 %v3243, %v3352
        %v3376 = vadd.f32 %v3244, %v3352
        %v3377 = vadd.f32 %v3245, %v3352
        %v3378 = vadd.f32 %v3246, %v3352
        %v3379 = vadd.f32 %v3247, %v3352
        %v3380 = vadd.f32 %v3248, %v3352
        %v3381 = vadd.f32 %v3249, %v3352
        %v3382 = vadd.f32 %v3250, %v3352
        %v3383 = vadd.f32 %v3251, %v3352
        %v3384 = vadd.f32 %v3252, %v3352
        %v3385 = vadd.f32 %v3253, %v3352
        %v3386 = vadd.f32 %v3254, %v3352
        %v3387 = vadd.f32 %v3255, %v3352
        %v3388 = vadd.f32 %v3256, %v3352
        %v3389 = vadd.f32 %v3257, %v3352
        %v3390 = vadd.f32 %v3258, %v3352
        %v3391 = vadd.f32 %v3259, %v3352
        %v3392 = vadd.f32 %v3260, %v3352
        %v3393 = vadd.f32 %v3261, %v3352
        %v3394 = vadd.f32 %v3262, %v3352
        %v3395 = vadd.f32 %v3263, %v3352
        %v3396 = vadd.f32 %v3264, %v3352
        %v3397 = vadd.f32 %v3265, %v3352
        %v3398 = vadd.f32 %v3266, %v3352
        %v3399 = vadd.f32 %v3267, %v3352
        %v3400 = vadd.f32 %v3268, %v3352
        %v3401 = vadd.f32 %v3269, %v3352
        %v3402 = vadd.f32 %v3270, %v3352
        %v3403 = vadd.f32 %v3271, %v3352
        %v3404 = vadd.f32 %v3272, %v3352
        %v3405 = vadd.f32 %v3273, %v3352
        %v3406 = vadd.f32 %v3274, %v3352
        %v3407 = vadd.f32 %v3275, %v3352
        %v3408 = vadd.f32 %v3276, %v3352
        %v3409 = vadd.f32 %v3277, %v3352
        %v3410 = vadd.f32 %v3278, %v3352
        %v3411 = vadd.f32 %v3279, %v3352
        %v3412 = vadd.f32 %v3280, %v3352
        %v3413 = vadd.f32 %v3281, %v3352
        %v3414 = vadd.f32 %v3282, %v3352
        %v3415 = vadd.f32 %v3283, %v3352
        %v3416 = vadd.f32 %v3284, %v3352
        %v3417 = vadd.f32 %v3285, %v3352
        %v3418 = vadd.f32 %v3286, %v3352
        %v3419 = vadd.f32 %v3287, %v3352
        %v3420 = vadd.f32 %v3288, %v3352
        %v3421 = vadd.f32 %v3289, %v3352
        %v3422 = vadd.f32 %v3290, %v3352
        %v3423 = vadd.f32 %v3291, %v3352
        %v3424 = vadd.f32 %v3292, %v3352
        %v3425 = vadd.f32 %v3293, %v3352
        %v3426 = vadd.f32 %v3294, %v3352
        %v3427 = vadd.f32 %v3295, %v3352
        %v3428 = vadd.f32 %v3296, %v3352
        %v3429 = vadd.f32 %v3297, %v3352
        %v3430 = vadd.f32 %v3298, %v3352
        %v3431 = vadd.f32 %v3299, %v3352
        %v3432 = vadd.f32 %v3300, %v3352
        %v3433 = vadd.f32 %v3301, %v3352
        %v3434 = vadd.f32 %v3302, %v3352
        %v3435 = vadd.f32 %v3303, %v3352
        %v3436 = vadd.f32 %v3304, %v3352
        %v3437 = vadd.f32 %v3305, %v3352
        %v3438 = vadd.f32 %v3306, %v3352
        %v3439 = vadd.f32 %v3307, %v3352
        %v3440 = vadd.f32 %v3308, %v3352
        %v3441 = vadd.f32 %v3309, %v3352
        %v3442 = vadd.f32 %v3310, %v3352
        %v3443 = vadd.f32 %v3311, %v3352
        %v3444 = vadd.f32 %v3312, %v3352
        %v3445 = vadd.f32 %v3313, %v3352
        %v3446 = vadd.f32 %v3314, %v3352
        %v3447 = vadd.f32 %v3315, %v3352
        %v3448 = vadd.f32 %v3316, %v3352
        %v3449 = vadd.f32 %v3317, %v3352
        %v3450 = vadd.f32 %v3318, %v3352
        %v3451 = vadd.f32 %v3319, %v3352
        %v3452 = vadd.f32 %v3320, %v3352
        %v3453 = vadd.f32 %v3321, %v3352
        %v3454 = vadd.f32 %v3322, %v3352
        %v3455 = vadd.f32 %v3323, %v3352
        %v3456 = vadd.f32 %v3324, %v3352
        %v3457 = vadd.f32 %v3325, %v3352
        %v3458 = vadd.f32 %v3326, %v3352
        %v3459 = vadd.f32 %v3327, %v3352
        %v3460 = vadd.f32 %v3328, %v3352
        %v3461 = vadd.f32 %v3329, %v3352
        %v3462 = vadd.f32 %v3330, %v3352
        %v3463 = vadd.f32 %v3331, %v3352
        %v3464 = vadd.f32 %v3332, %v3352
        %v3465 = vadd.f32 %v3333, %v3352
        %v3466 = vadd.f32 %v3334, %v3352
        %v3467 = vadd.f32 %v3335, %v3352
        %v3468 = vadd.f32 %v3336, %v3352
        %v3469 = vadd.f32 %v3337, %v3352
        %v3470 = vadd.f32 %v3338, %v3352
        %v3471 = vadd.f32 %v3339, %v3352
        %v3472 = vadd.f32 %v3340, %v3352
        %v3473 = vadd.f32 %v3341, %v3352
        %v3474 = vadd.f32 %v3342, %v3352
        %v3475 = vadd.f32 %v3343, %v3352
        %v3476 = vadd.f32 %v3344, %v3352
        %v3477 = vadd.f32 %v3345, %v3352
        %v3478 = vadd.f32 %v3346, %v3352
        %v3479 = vadd.f32 %v3347, %v3352
        %v3480 = vadd.f32 %v3348, %v3352
        %v3481 = vadd.f32 %v3349, %v3352
        %v3482 = vlaneseq
        %v3483 = vshrl.u32 %v3482, 7
        %v3484 = vadd.s32 %v3483, 8
        %vm3485 = vcmp.eq.s32.totalorder %v3483, 0
        %vm3486 = vcmp.eq.s32.totalorder %v3484, 0
        %v3487 = vrot.slane %v3354, 7
        %v3488 = vrot.slane %v3355, 7
        %v3489 = vrot.slane %v3356, 7
        %v3490 = vrot.slane %v3357, 7
        %v3491 = vrot.slane %v3358, 7
        %v3492 = vrot.slane %v3359, 7
        %v3493 = vrot.slane %v3360, 7
        %v3494 = vrot.slane %v3361, 7
        %v3495 = vrot.slane %v3362, 7
        %v3496 = vrot.slane %v3363, 7
        %v3497 = vrot.slane %v3364, 7
        %v3498 = vrot.slane %v3365, 7
        %v3499 = vrot.slane %v3366, 7
        %v3500 = vrot.slane %v3367, 7
        %v3501 = vrot.slane %v3368, 7
        %v3502 = vrot.slane %v3369, 7
        %v3503 = vrot.slane %v3370, 7
        %v3504 = vrot.slane %v3371, 7
        %v3505 = vrot.slane %v3372, 7
        %v3506 = vrot.slane %v3373, 7
        %v3507 = vrot.slane %v3374, 7
        %v3508 = vrot.slane %v3375, 7
        %v3509 = vrot.slane %v3376, 7
        %v3510 = vrot.slane %v3377, 7
        %v3511 = vrot.slane %v3378, 7
        %v3512 = vrot.slane %v3379, 7
        %v3513 = vrot.slane %v3380, 7
        %v3514 = vrot.slane %v3381, 7
        %v3515 = vrot.slane %v3382, 7
        %v3516 = vrot.slane %v3383, 7
        %v3517 = vrot.slane %v3384, 7
        %v3518 = vrot.slane %v3385, 7
        %v3519 = vrot.slane %v3386, 7
        %v3520 = vrot.slane %v3387, 7
        %v3521 = vrot.slane %v3388, 7
        %v3522 = vrot.slane %v3389, 7
        %v3523 = vrot.slane %v3390, 7
        %v3524 = vrot.slane %v3391, 7
        %v3525 = vrot.slane %v3392, 7
        %v3526 = vrot.slane %v3393, 7
        %v3527 = vrot.slane %v3394, 7
        %v3528 = vrot.slane %v3395, 7
        %v3529 = vrot.slane %v3396, 7
        %v3530 = vrot.slane %v3397, 7
        %v3531 = vrot.slane %v3398, 7
        %v3532 = vrot.slane %v3399, 7
        %v3533 = vrot.slane %v3400, 7
        %v3534 = vrot.slane %v3401, 7
        %v3535 = vrot.slane %v3402, 7
        %v3536 = vrot.slane %v3403, 7
        %v3537 = vrot.slane %v3404, 7
        %v3538 = vrot.slane %v3405, 7
        %v3539 = vrot.slane %v3406, 7
        %v3540 = vrot.slane %v3407, 7
        %v3541 = vrot.slane %v3408, 7
        %v3542 = vrot.slane %v3409, 7
        %v3543 = vrot.slane %v3410, 7
        %v3544 = vrot.slane %v3411, 7
        %v3545 = vrot.slane %v3412, 7
        %v3546 = vrot.slane %v3413, 7
        %v3547 = vrot.slane %v3414, 7
        %v3548 = vrot.slane %v3415, 7
        %v3549 = vrot.slane %v3416, 7
        %v3550 = vrot.slane %v3417, 7
        %v3551 = vrot.slane %v3418, 7
        %v3552 = vrot.slane %v3419, 7
        %v3553 = vrot.slane %v3420, 7
        %v3554 = vrot.slane %v3421, 7
        %v3555 = vrot.slane %v3422, 7
        %v3556 = vrot.slane %v3423, 7
        %v3557 = vrot.slane %v3424, 7
        %v3558 = vrot.slane %v3425, 7
        %v3559 = vrot.slane %v3426, 7
        %v3560 = vrot.slane %v3427, 7
        %v3561 = vrot.slane %v3428, 7
        %v3562 = vrot.slane %v3429, 7
        %v3563 = vrot.slane %v3430, 7
        %v3564 = vrot.slane %v3431, 7
        %v3565 = vrot.slane %v3432, 7
        %v3566 = vrot.slane %v3433, 7
        %v3567 = vrot.slane %v3434, 7
        %v3568 = vrot.slane %v3435, 7
        %v3569 = vrot.slane %v3436, 7
        %v3570 = vrot.slane %v3437, 7
        %v3571 = vrot.slane %v3438, 7
        %v3572 = vrot.slane %v3439, 7
        %v3573 = vrot.slane %v3440, 7
        %v3574 = vrot.slane %v3441, 7
        %v3575 = vrot.slane %v3442, 7
        %v3576 = vrot.slane %v3443, 7
        %v3577 = vrot.slane %v3444, 7
        %v3578 = vrot.slane %v3445, 7
        %v3579 = vrot.slane %v3446, 7
        %v3580 = vrot.slane %v3447, 7
        %v3581 = vrot.slane %v3448, 7
        %v3582 = vrot.slane %v3449, 7
        %v3583 = vrot.slane %v3450, 7
        %v3584 = vrot.slane %v3451, 7
        %v3585 = vrot.slane %v3452, 7
        %v3586 = vrot.slane %v3453, 7
        %v3587 = vrot.slane %v3454, 7
        %v3588 = vrot.slane %v3455, 7
        %v3589 = vrot.slane %v3456, 7
        %v3590 = vrot.slane %v3457, 7
        %v3591 = vrot.slane %v3458, 7
        %v3592 = vrot.slane %v3459, 7
        %v3593 = vrot.slane %v3460, 7
        %v3594 = vrot.slane %v3461, 7
        %v3595 = vrot.slane %v3462, 7
        %v3596 = vrot.slane %v3463, 7
        %v3597 = vrot.slane %v3464, 7
        %v3598 = vrot.slane %v3465, 7
        %v3599 = vrot.slane %v3466, 7
        %v3600 = vrot.slane %v3467, 7
        %v3601 = vrot.slane %v3468, 7
        %v3602 = vrot.slane %v3469, 7
        %v3603 = vrot.slane %v3470, 7
        %v3604 = vrot.slane %v3471, 7
        %v3605 = vrot.slane %v3472, 7
        %v3606 = vrot.slane %v3473, 7
        %v3607 = vrot.slane %v3474, 7
        %v3608 = vrot.slane %v3475, 7
        %v3609 = vrot.slane %v3476, 7
        %v3610 = vrot.slane %v3477, 7
        %v3611 = vrot.slane %v3478, 7
        %v3612 = vrot.slane %v3479, 7
        %v3613 = vrot.slane %v3480, 7
        %v3614 = vrot.slane %v3481, 7
        %vm3615 = vcmp.lt.s32.totalorder %v3483, 1
        %v3616 = vsel %vm3615, %v3613, %v3614
        %v3617 = vsel %vm3615, %v3612, %v3613
        %v3618 = vsel %vm3615, %v3611, %v3612
        %v3619 = vsel %vm3615, %v3610, %v3611
        %v3620 = vsel %vm3615, %v3609, %v3610
        %v3621 = vsel %vm3615, %v3608, %v3609
        %v3622 = vsel %vm3615, %v3607, %v3608
        %v3623 = vsel %vm3615, %v3606, %v3607
        %v3624 = vsel %vm3615, %v3605, %v3606
        %v3625 = vsel %vm3615, %v3604, %v3605
        %v3626 = vsel %vm3615, %v3603, %v3604
        %v3627 = vsel %vm3615, %v3602, %v3603
        %v3628 = vsel %vm3615, %v3601, %v3602
        %v3629 = vsel %vm3615, %v3600, %v3601
        %v3630 = vsel %vm3615, %v3599, %v3600
        %v3631 = vsel %vm3615, %v3598, %v3599
        %v3632 = vsel %vm3615, %v3597, %v3598
        %v3633 = vsel %vm3615, %v3596, %v3597
        %v3634 = vsel %vm3615, %v3595, %v3596
        %v3635 = vsel %vm3615, %v3594, %v3595
        %v3636 = vsel %vm3615, %v3593, %v3594
        %v3637 = vsel %vm3615, %v3592, %v3593
        %v3638 = vsel %vm3615, %v3591, %v3592
        %v3639 = vsel %vm3615, %v3590, %v3591
        %v3640 = vsel %vm3615, %v3589, %v3590
        %v3641 = vsel %vm3615, %v3588, %v3589
        %v3642 = vsel %vm3615, %v3587, %v3588
        %v3643 = vsel %vm3615, %v3586, %v3587
        %v3644 = vsel %vm3615, %v3585, %v3586
        %v3645 = vsel %vm3615, %v3584, %v3585
        %v3646 = vsel %vm3615, %v3583, %v3584
        %v3647 = vsel %vm3615, %v3582, %v3583
        %v3648 = vsel %vm3615, %v3581, %v3582
        %v3649 = vsel %vm3615, %v3580, %v3581
        %v3650 = vsel %vm3615, %v3579, %v3580
        %v3651 = vsel %vm3615, %v3578, %v3579
        %v3652 = vsel %vm3615, %v3577, %v3578
        %v3653 = vsel %vm3615, %v3576, %v3577
        %v3654 = vsel %vm3615, %v3575, %v3576
        %v3655 = vsel %vm3615, %v3574, %v3575
        %v3656 = vsel %vm3615, %v3573, %v3574
        %v3657 = vsel %vm3615, %v3572, %v3573
        %v3658 = vsel %vm3615, %v3571, %v3572
        %v3659 = vsel %vm3615, %v3570, %v3571
        %v3660 = vsel %vm3615, %v3569, %v3570
        %v3661 = vsel %vm3615, %v3568, %v3569
        %v3662 = vsel %vm3615, %v3567, %v3568
        %v3663 = vsel %vm3615, %v3566, %v3567
        %v3664 = vsel %vm3615, %v3565, %v3566
        %v3665 = vsel %vm3615, %v3564, %v3565
        %v3666 = vsel %vm3615, %v3563, %v3564
        %v3667 = vsel %vm3615, %v3562, %v3563
        %v3668 = vsel %vm3615, %v3561, %v3562
        %v3669 = vsel %vm3615, %v3560, %v3561
        %v3670 = vsel %vm3615, %v3559, %v3560
        %v3671 = vsel %vm3615, %v3558, %v3559
        %v3672 = vsel %vm3615, %v3557, %v3558
        %v3673 = vsel %vm3615, %v3556, %v3557
        %v3674 = vsel %vm3615, %v3555, %v3556
        %v3675 = vsel %vm3615, %v3554, %v3555
        %v3676 = vsel %vm3615, %v3553, %v3554
        %v3677 = vsel %vm3615, %v3552, %v3553
        %v3678 = vsel %vm3615, %v3551, %v3552
        %v3679 = vsel %vm3615, %v3550, %v3551
        %v3680 = vsel %vm3615, %v3549, %v3550
        %v3681 = vsel %vm3615, %v3548, %v3549
        %v3682 = vsel %vm3615, %v3547, %v3548
        %v3683 = vsel %vm3615, %v3546, %v3547
        %v3684 = vsel %vm3615, %v3545, %v3546
        %v3685 = vsel %vm3615, %v3544, %v3545
        %v3686 = vsel %vm3615, %v3543, %v3544
        %v3687 = vsel %vm3615, %v3542, %v3543
        %v3688 = vsel %vm3615, %v3541, %v3542
        %v3689 = vsel %vm3615, %v3540, %v3541
        %v3690 = vsel %vm3615, %v3539, %v3540
        %v3691 = vsel %vm3615, %v3538, %v3539
        %v3692 = vsel %vm3615, %v3537, %v3538
        %v3693 = vsel %vm3615, %v3536, %v3537
        %v3694 = vsel %vm3615, %v3535, %v3536
        %v3695 = vsel %vm3615, %v3534, %v3535
        %v3696 = vsel %vm3615, %v3533, %v3534
        %v3697 = vsel %vm3615, %v3532, %v3533
        %v3698 = vsel %vm3615, %v3531, %v3532
        %v3699 = vsel %vm3615, %v3530, %v3531
        %v3700 = vsel %vm3615, %v3529, %v3530
        %v3701 = vsel %vm3615, %v3528, %v3529
        %v3702 = vsel %vm3615, %v3527, %v3528
        %v3703 = vsel %vm3615, %v3526, %v3527
        %v3704 = vsel %vm3615, %v3525, %v3526
        %v3705 = vsel %vm3615, %v3524, %v3525
        %v3706 = vsel %vm3615, %v3523, %v3524
        %v3707 = vsel %vm3615, %v3522, %v3523
        %v3708 = vsel %vm3615, %v3521, %v3522
        %v3709 = vsel %vm3615, %v3520, %v3521
        %v3710 = vsel %vm3615, %v3519, %v3520
        %v3711 = vsel %vm3615, %v3518, %v3519
        %v3712 = vsel %vm3615, %v3517, %v3518
        %v3713 = vsel %vm3615, %v3516, %v3517
        %v3714 = vsel %vm3615, %v3515, %v3516
        %v3715 = vsel %vm3615, %v3514, %v3515
        %v3716 = vsel %vm3615, %v3513, %v3514
        %v3717 = vsel %vm3615, %v3512, %v3513
        %v3718 = vsel %vm3615, %v3511, %v3512
        %v3719 = vsel %vm3615, %v3510, %v3511
        %v3720 = vsel %vm3615, %v3509, %v3510
        %v3721 = vsel %vm3615, %v3508, %v3509
        %v3722 = vsel %vm3615, %v3507, %v3508
        %v3723 = vsel %vm3615, %v3506, %v3507
        %v3724 = vsel %vm3615, %v3505, %v3506
        %v3725 = vsel %vm3615, %v3504, %v3505
        %v3726 = vsel %vm3615, %v3503, %v3504
        %v3727 = vsel %vm3615, %v3502, %v3503
        %v3728 = vsel %vm3615, %v3501, %v3502
        %v3729 = vsel %vm3615, %v3500, %v3501
        %v3730 = vsel %vm3615, %v3499, %v3500
        %v3731 = vsel %vm3615, %v3498, %v3499
        %v3732 = vsel %vm3615, %v3497, %v3498
        %v3733 = vsel %vm3615, %v3496, %v3497
        %v3734 = vsel %vm3615, %v3495, %v3496
        %v3735 = vsel %vm3615, %v3494, %v3495
        %v3736 = vsel %vm3615, %v3493, %v3494
        %v3737 = vsel %vm3615, %v3492, %v3493
        %v3738 = vsel %vm3615, %v3491, %v3492
        %v3739 = vsel %vm3615, %v3490, %v3491
        %v3740 = vsel %vm3615, %v3489, %v3490
        %v3741 = vsel %vm3615, %v3488, %v3489
        %v3742 = vsel %vm3615, %v3487, %v3488
        %v3743 = vsel %vm3615, %v3614, %v3487
        %v3744 = vsel %vm3485, 1, 0
        %v3745 = vsel %vm3486, 1, 0
        %vm3746 = vcmp.eq.s32.totalorder %v3744, 1
        %vm3747 = vcmp.eq.s32.totalorder %v3745, 1
        %v3748 = vsel %vm3746, 0.0, %v3743
        %v3749 = vsel %vm3747, 0.0, %v3742
        %v3750 = vsel %vm3746, 0.0, %v3741
        %v3751 = vsel %vm3747, 0.0, %v3740
        %v3752 = vsel %vm3746, 0.0, %v3739
        %v3753 = vsel %vm3747, 0.0, %v3738
        %v3754 = vsel %vm3746, 0.0, %v3737
        %v3755 = vsel %vm3747, 0.0, %v3736
        %v3756 = vsel %vm3746, 0.0, %v3735
        %v3757 = vsel %vm3747, 0.0, %v3734
        %v3758 = vsel %vm3746, 0.0, %v3733
        %v3759 = vsel %vm3747, 0.0, %v3732
        %v3760 = vsel %vm3746, 0.0, %v3731
        %v3761 = vsel %vm3747, 0.0, %v3730
        %v3762 = vsel %vm3746, 0.0, %v3729
        %v3763 = vsel %vm3747, 0.0, %v3728
        %v3764 = vsel %vm3746, 0.0, %v3727
        %v3765 = vsel %vm3747, 0.0, %v3726
        %v3766 = vsel %vm3746, 0.0, %v3725
        %v3767 = vsel %vm3747, 0.0, %v3724
        %v3768 = vsel %vm3746, 0.0, %v3723
        %v3769 = vsel %vm3747, 0.0, %v3722
        %v3770 = vsel %vm3746, 0.0, %v3721
        %v3771 = vsel %vm3747, 0.0, %v3720
        %v3772 = vsel %vm3746, 0.0, %v3719
        %v3773 = vsel %vm3747, 0.0, %v3718
        %v3774 = vsel %vm3746, 0.0, %v3717
        %v3775 = vsel %vm3747, 0.0, %v3716
        %v3776 = vsel %vm3746, 0.0, %v3715
        %v3777 = vsel %vm3747, 0.0, %v3714
        %v3778 = vsel %vm3746, 0.0, %v3713
        %v3779 = vsel %vm3747, 0.0, %v3712
        %v3780 = vsel %vm3746, 0.0, %v3711
        %v3781 = vsel %vm3747, 0.0, %v3710
        %v3782 = vsel %vm3746, 0.0, %v3709
        %v3783 = vsel %vm3747, 0.0, %v3708
        %v3784 = vsel %vm3746, 0.0, %v3707
        %v3785 = vsel %vm3747, 0.0, %v3706
        %v3786 = vsel %vm3746, 0.0, %v3705
        %v3787 = vsel %vm3747, 0.0, %v3704
        %v3788 = vsel %vm3746, 0.0, %v3703
        %v3789 = vsel %vm3747, 0.0, %v3702
        %v3790 = vsel %vm3746, 0.0, %v3701
        %v3791 = vsel %vm3747, 0.0, %v3700
        %v3792 = vsel %vm3746, 0.0, %v3699
        %v3793 = vsel %vm3747, 0.0, %v3698
        %v3794 = vsel %vm3746, 0.0, %v3697
        %v3795 = vsel %vm3747, 0.0, %v3696
        %v3796 = vsel %vm3746, 0.0, %v3695
        %v3797 = vsel %vm3747, 0.0, %v3694
        %v3798 = vsel %vm3746, 0.0, %v3693
        %v3799 = vsel %vm3747, 0.0, %v3692
        %v3800 = vsel %vm3746, 0.0, %v3691
        %v3801 = vsel %vm3747, 0.0, %v3690
        %v3802 = vsel %vm3746, 0.0, %v3689
        %v3803 = vsel %vm3747, 0.0, %v3688
        %v3804 = vsel %vm3746, 0.0, %v3687
        %v3805 = vsel %vm3747, 0.0, %v3686
        %v3806 = vsel %vm3746, 0.0, %v3685
        %v3807 = vsel %vm3747, 0.0, %v3684
        %v3808 = vsel %vm3746, 0.0, %v3683
        %v3809 = vsel %vm3747, 0.0, %v3682
        %v3810 = vsel %vm3746, 0.0, %v3681
        %v3811 = vsel %vm3747, 0.0, %v3680
        %v3812 = vsel %vm3746, 0.0, %v3679
        %v3813 = vsel %vm3747, 0.0, %v3678
        %v3814 = vsel %vm3746, 0.0, %v3677
        %v3815 = vsel %vm3747, 0.0, %v3676
        %v3816 = vsel %vm3746, 0.0, %v3675
        %v3817 = vsel %vm3747, 0.0, %v3674
        %v3818 = vsel %vm3746, 0.0, %v3673
        %v3819 = vsel %vm3747, 0.0, %v3672
        %v3820 = vsel %vm3746, 0.0, %v3671
        %v3821 = vsel %vm3747, 0.0, %v3670
        %v3822 = vsel %vm3746, 0.0, %v3669
        %v3823 = vsel %vm3747, 0.0, %v3668
        %v3824 = vsel %vm3746, 0.0, %v3667
        %v3825 = vsel %vm3747, 0.0, %v3666
        %v3826 = vsel %vm3746, 0.0, %v3665
        %v3827 = vsel %vm3747, 0.0, %v3664
        %v3828 = vsel %vm3746, 0.0, %v3663
        %v3829 = vsel %vm3747, 0.0, %v3662
        %v3830 = vsel %vm3746, 0.0, %v3661
        %v3831 = vsel %vm3747, 0.0, %v3660
        %v3832 = vsel %vm3746, 0.0, %v3659
        %v3833 = vsel %vm3747, 0.0, %v3658
        %v3834 = vsel %vm3746, 0.0, %v3657
        %v3835 = vsel %vm3747, 0.0, %v3656
        %v3836 = vsel %vm3746, 0.0, %v3655
        %v3837 = vsel %vm3747, 0.0, %v3654
        %v3838 = vsel %vm3746, 0.0, %v3653
        %v3839 = vsel %vm3747, 0.0, %v3652
        %v3840 = vsel %vm3746, 0.0, %v3651
        %v3841 = vsel %vm3747, 0.0, %v3650
        %v3842 = vsel %vm3746, 0.0, %v3649
        %v3843 = vsel %vm3747, 0.0, %v3648
        %v3844 = vsel %vm3746, 0.0, %v3647
        %v3845 = vsel %vm3747, 0.0, %v3646
        %v3846 = vsel %vm3746, 0.0, %v3645
        %v3847 = vsel %vm3747, 0.0, %v3644
        %v3848 = vsel %vm3746, 0.0, %v3643
        %v3849 = vsel %vm3747, 0.0, %v3642
        %v3850 = vsel %vm3746, 0.0, %v3641
        %v3851 = vsel %vm3747, 0.0, %v3640
        %v3852 = vsel %vm3746, 0.0, %v3639
        %v3853 = vsel %vm3747, 0.0, %v3638
        %v3854 = vsel %vm3746, 0.0, %v3637
        %v3855 = vsel %vm3747, 0.0, %v3636
        %v3856 = vsel %vm3746, 0.0, %v3635
        %v3857 = vsel %vm3747, 0.0, %v3634
        %v3858 = vsel %vm3746, 0.0, %v3633
        %v3859 = vsel %vm3747, 0.0, %v3632
        %v3860 = vsel %vm3746, 0.0, %v3631
        %v3861 = vsel %vm3747, 0.0, %v3630
        %v3862 = vsel %vm3746, 0.0, %v3629
        %v3863 = vsel %vm3747, 0.0, %v3628
        %v3864 = vsel %vm3746, 0.0, %v3627
        %v3865 = vsel %vm3747, 0.0, %v3626
        %v3866 = vsel %vm3746, 0.0, %v3625
        %v3867 = vsel %vm3747, 0.0, %v3624
        %v3868 = vsel %vm3746, 0.0, %v3623
        %v3869 = vsel %vm3747, 0.0, %v3622
        %v3870 = vsel %vm3746, 0.0, %v3621
        %v3871 = vsel %vm3747, 0.0, %v3620
        %v3872 = vsel %vm3746, 0.0, %v3619
        %v3873 = vsel %vm3747, 0.0, %v3618
        %v3874 = vsel %vm3746, 0.0, %v3617
        %v3875 = vsel %vm3747, 0.0, %v3616
        %v3876 = vld [vmem:[%s3] sm:$0x1]
        %v3878 = vperm.slane %v3876, 0
        %v3880 = vmul.f32 %v3354, %v3878
        %v3881 = vmul.f32 %v3355, %v3878
        %v3882 = vmul.f32 %v3356, %v3878
        %v3883 = vmul.f32 %v3357, %v3878
        %v3884 = vmul.f32 %v3358, %v3878
        %v3885 = vmul.f32 %v3359, %v3878
        %v3886 = vmul.f32 %v3360, %v3878
        %v3887 = vmul.f32 %v3361, %v3878
        %v3888 = vmul.f32 %v3362, %v3878
        %v3889 = vmul.f32 %v3363, %v3878
        %v3890 = vmul.f32 %v3364, %v3878
        %v3891 = vmul.f32 %v3365, %v3878
        %v3892 = vmul.f32 %v3366, %v3878
        %v3893 = vmul.f32 %v3367, %v3878
        %v3894 = vmul.f32 %v3368, %v3878
        %v3895 = vmul.f32 %v3369, %v3878
        %v3896 = vmul.f32 %v3370, %v3878
        %v3897 = vmul.f32 %v3371, %v3878
        %v3898 = vmul.f32 %v3372, %v3878
        %v3899 = vmul.f32 %v3373, %v3878
        %v3900 = vmul.f32 %v3374, %v3878
        %v3901 = vmul.f32 %v3375, %v3878
        %v3902 = vmul.f32 %v3376, %v3878
        %v3903 = vmul.f32 %v3377, %v3878
        %v3904 = vmul.f32 %v3378, %v3878
        %v3905 = vmul.f32 %v3379, %v3878
        %v3906 = vmul.f32 %v3380, %v3878
        %v3907 = vmul.f32 %v3381, %v3878
        %v3908 = vmul.f32 %v3382, %v3878
        %v3909 = vmul.f32 %v3383, %v3878
        %v3910 = vmul.f32 %v3384, %v3878
        %v3911 = vmul.f32 %v3385, %v3878
        %v3912 = vmul.f32 %v3386, %v3878
        %v3913 = vmul.f32 %v3387, %v3878
        %v3914 = vmul.f32 %v3388, %v3878
        %v3915 = vmul.f32 %v3389, %v3878
        %v3916 = vmul.f32 %v3390, %v3878
        %v3917 = vmul.f32 %v3391, %v3878
        %v3918 = vmul.f32 %v3392, %v3878
        %v3919 = vmul.f32 %v3393, %v3878
        %v3920 = vmul.f32 %v3394, %v3878
        %v3921 = vmul.f32 %v3395, %v3878
        %v3922 = vmul.f32 %v3396, %v3878
        %v3923 = vmul.f32 %v3397, %v3878
        %v3924 = vmul.f32 %v3398, %v3878
        %v3925 = vmul.f32 %v3399, %v3878
        %v3926 = vmul.f32 %v3400, %v3878
        %v3927 = vmul.f32 %v3401, %v3878
        %v3928 = vmul.f32 %v3402, %v3878
        %v3929 = vmul.f32 %v3403, %v3878
        %v3930 = vmul.f32 %v3404, %v3878
        %v3931 = vmul.f32 %v3405, %v3878
        %v3932 = vmul.f32 %v3406, %v3878
        %v3933 = vmul.f32 %v3407, %v3878
        %v3934 = vmul.f32 %v3408, %v3878
        %v3935 = vmul.f32 %v3409, %v3878
        %v3936 = vmul.f32 %v3410, %v3878
        %v3937 = vmul.f32 %v3411, %v3878
        %v3938 = vmul.f32 %v3412, %v3878
        %v3939 = vmul.f32 %v3413, %v3878
        %v3940 = vmul.f32 %v3414, %v3878
        %v3941 = vmul.f32 %v3415, %v3878
        %v3942 = vmul.f32 %v3416, %v3878
        %v3943 = vmul.f32 %v3417, %v3878
        %v3944 = vmul.f32 %v3418, %v3878
        %v3945 = vmul.f32 %v3419, %v3878
        %v3946 = vmul.f32 %v3420, %v3878
        %v3947 = vmul.f32 %v3421, %v3878
        %v3948 = vmul.f32 %v3422, %v3878
        %v3949 = vmul.f32 %v3423, %v3878
        %v3950 = vmul.f32 %v3424, %v3878
        %v3951 = vmul.f32 %v3425, %v3878
        %v3952 = vmul.f32 %v3426, %v3878
        %v3953 = vmul.f32 %v3427, %v3878
        %v3954 = vmul.f32 %v3428, %v3878
        %v3955 = vmul.f32 %v3429, %v3878
        %v3956 = vmul.f32 %v3430, %v3878
        %v3957 = vmul.f32 %v3431, %v3878
        %v3958 = vmul.f32 %v3432, %v3878
        %v3959 = vmul.f32 %v3433, %v3878
        %v3960 = vmul.f32 %v3434, %v3878
        %v3961 = vmul.f32 %v3435, %v3878
        %v3962 = vmul.f32 %v3436, %v3878
        %v3963 = vmul.f32 %v3437, %v3878
        %v3964 = vmul.f32 %v3438, %v3878
        %v3965 = vmul.f32 %v3439, %v3878
        %v3966 = vmul.f32 %v3440, %v3878
        %v3967 = vmul.f32 %v3441, %v3878
        %v3968 = vmul.f32 %v3442, %v3878
        %v3969 = vmul.f32 %v3443, %v3878
        %v3970 = vmul.f32 %v3444, %v3878
        %v3971 = vmul.f32 %v3445, %v3878
        %v3972 = vmul.f32 %v3446, %v3878
        %v3973 = vmul.f32 %v3447, %v3878
        %v3974 = vmul.f32 %v3448, %v3878
        %v3975 = vmul.f32 %v3449, %v3878
        %v3976 = vmul.f32 %v3450, %v3878
        %v3977 = vmul.f32 %v3451, %v3878
        %v3978 = vmul.f32 %v3452, %v3878
        %v3979 = vmul.f32 %v3453, %v3878
        %v3980 = vmul.f32 %v3454, %v3878
        %v3981 = vmul.f32 %v3455, %v3878
        %v3982 = vmul.f32 %v3456, %v3878
        %v3983 = vmul.f32 %v3457, %v3878
        %v3984 = vmul.f32 %v3458, %v3878
        %v3985 = vmul.f32 %v3459, %v3878
        %v3986 = vmul.f32 %v3460, %v3878
        %v3987 = vmul.f32 %v3461, %v3878
        %v3988 = vmul.f32 %v3462, %v3878
        %v3989 = vmul.f32 %v3463, %v3878
        %v3990 = vmul.f32 %v3464, %v3878
        %v3991 = vmul.f32 %v3465, %v3878
        %v3992 = vmul.f32 %v3466, %v3878
        %v3993 = vmul.f32 %v3467, %v3878
        %v3994 = vmul.f32 %v3468, %v3878
        %v3995 = vmul.f32 %v3469, %v3878
        %v3996 = vmul.f32 %v3470, %v3878
        %v3997 = vmul.f32 %v3471, %v3878
        %v3998 = vmul.f32 %v3472, %v3878
        %v3999 = vmul.f32 %v3473, %v3878
        %v4000 = vmul.f32 %v3474, %v3878
        %v4001 = vmul.f32 %v3475, %v3878
        %v4002 = vmul.f32 %v3476, %v3878
        %v4003 = vmul.f32 %v3477, %v3878
        %v4004 = vmul.f32 %v3478, %v3878
        %v4005 = vmul.f32 %v3479, %v3878
        %v4006 = vmul.f32 %v3480, %v3878
        %v4007 = vmul.f32 %v3481, %v3878
        %v4008 = vsub.f32 1.0, %v3876
        %v4010 = vperm.slane %v4008, 0
        %v4012 = vmul.f32 %v3748, %v4010
        %v4013 = vmul.f32 %v3749, %v4010
        %v4014 = vmul.f32 %v3750, %v4010
        %v4015 = vmul.f32 %v3751, %v4010
        %v4016 = vmul.f32 %v3752, %v4010
        %v4017 = vmul.f32 %v3753, %v4010
        %v4018 = vmul.f32 %v3754, %v4010
        %v4019 = vmul.f32 %v3755, %v4010
        %v4020 = vmul.f32 %v3756, %v4010
        %v4021 = vmul.f32 %v3757, %v4010
        %v4022 = vmul.f32 %v3758, %v4010
        %v4023 = vmul.f32 %v3759, %v4010
        %v4024 = vmul.f32 %v3760, %v4010
        %v4025 = vmul.f32 %v3761, %v4010
        %v4026 = vmul.f32 %v3762, %v4010
        %v4027 = vmul.f32 %v3763, %v4010
        %v4028 = vmul.f32 %v3764, %v4010
        %v4029 = vmul.f32 %v3765, %v4010
        %v4030 = vmul.f32 %v3766, %v4010
        %v4031 = vmul.f32 %v3767, %v4010
        %v4032 = vmul.f32 %v3768, %v4010
        %v4033 = vmul.f32 %v3769, %v4010
        %v4034 = vmul.f32 %v3770, %v4010
        %v4035 = vmul.f32 %v3771, %v4010
        %v4036 = vmul.f32 %v3772, %v4010
        %v4037 = vmul.f32 %v3773, %v4010
        %v4038 = vmul.f32 %v3774, %v4010
        %v4039 = vmul.f32 %v3775, %v4010
        %v4040 = vmul.f32 %v3776, %v4010
        %v4041 = vmul.f32 %v3777, %v4010
        %v4042 = vmul.f32 %v3778, %v4010
        %v4043 = vmul.f32 %v3779, %v4010
        %v4044 = vmul.f32 %v3780, %v4010
        %v4045 = vmul.f32 %v3781, %v4010
        %v4046 = vmul.f32 %v3782, %v4010
        %v4047 = vmul.f32 %v3783, %v4010
        %v4048 = vmul.f32 %v3784, %v4010
        %v4049 = vmul.f32 %v3785, %v4010
        %v4050 = vmul.f32 %v3786, %v4010
        %v4051 = vmul.f32 %v3787, %v4010
        %v4052 = vmul.f32 %v3788, %v4010
        %v4053 = vmul.f32 %v3789, %v4010
        %v4054 = vmul.f32 %v3790, %v4010
        %v4055 = vmul.f32 %v3791, %v4010
        %v4056 = vmul.f32 %v3792, %v4010
        %v4057 = vmul.f32 %v3793, %v4010
        %v4058 = vmul.f32 %v3794, %v4010
        %v4059 = vmul.f32 %v3795, %v4010
        %v4060 = vmul.f32 %v3796, %v4010
        %v4061 = vmul.f32 %v3797, %v4010
        %v4062 = vmul.f32 %v3798, %v4010
        %v4063 = vmul.f32 %v3799, %v4010
        %v4064 = vmul.f32 %v3800, %v4010
        %v4065 = vmul.f32 %v3801, %v4010
        %v4066 = vmul.f32 %v3802, %v4010
        %v4067 = vmul.f32 %v3803, %v4010
        %v4068 = vmul.f32 %v3804, %v4010
        %v4069 = vmul.f32 %v3805, %v4010
        %v4070 = vmul.f32 %v3806, %v4010
        %v4071 = vmul.f32 %v3807, %v4010
        %v4072 = vmul.f32 %v3808, %v4010
        %v4073 = vmul.f32 %v3809, %v4010
        %v4074 = vmul.f32 %v3810, %v4010
        %v4075 = vmul.f32 %v3811, %v4010
        %v4076 = vmul.f32 %v3812, %v4010
        %v4077 = vmul.f32 %v3813, %v4010
        %v4078 = vmul.f32 %v3814, %v4010
        %v4079 = vmul.f32 %v3815, %v4010
        %v4080 = vmul.f32 %v3816, %v4010
        %v4081 = vmul.f32 %v3817, %v4010
        %v4082 = vmul.f32 %v3818, %v4010
        %v4083 = vmul.f32 %v3819, %v4010
        %v4084 = vmul.f32 %v3820, %v4010
        %v4085 = vmul.f32 %v3821, %v4010
        %v4086 = vmul.f32 %v3822, %v4010
        %v4087 = vmul.f32 %v3823, %v4010
        %v4088 = vmul.f32 %v3824, %v4010
        %v4089 = vmul.f32 %v3825, %v4010
        %v4090 = vmul.f32 %v3826, %v4010
        %v4091 = vmul.f32 %v3827, %v4010
        %v4092 = vmul.f32 %v3828, %v4010
        %v4093 = vmul.f32 %v3829, %v4010
        %v4094 = vmul.f32 %v3830, %v4010
        %v4095 = vmul.f32 %v3831, %v4010
        %v4096 = vmul.f32 %v3832, %v4010
        %v4097 = vmul.f32 %v3833, %v4010
        %v4098 = vmul.f32 %v3834, %v4010
        %v4099 = vmul.f32 %v3835, %v4010
        %v4100 = vmul.f32 %v3836, %v4010
        %v4101 = vmul.f32 %v3837, %v4010
        %v4102 = vmul.f32 %v3838, %v4010
        %v4103 = vmul.f32 %v3839, %v4010
        %v4104 = vmul.f32 %v3840, %v4010
        %v4105 = vmul.f32 %v3841, %v4010
        %v4106 = vmul.f32 %v3842, %v4010
        %v4107 = vmul.f32 %v3843, %v4010
        %v4108 = vmul.f32 %v3844, %v4010
        %v4109 = vmul.f32 %v3845, %v4010
        %v4110 = vmul.f32 %v3846, %v4010
        %v4111 = vmul.f32 %v3847, %v4010
        %v4112 = vmul.f32 %v3848, %v4010
        %v4113 = vmul.f32 %v3849, %v4010
        %v4114 = vmul.f32 %v3850, %v4010
        %v4115 = vmul.f32 %v3851, %v4010
        %v4116 = vmul.f32 %v3852, %v4010
        %v4117 = vmul.f32 %v3853, %v4010
        %v4118 = vmul.f32 %v3854, %v4010
        %v4119 = vmul.f32 %v3855, %v4010
        %v4120 = vmul.f32 %v3856, %v4010
        %v4121 = vmul.f32 %v3857, %v4010
        %v4122 = vmul.f32 %v3858, %v4010
        %v4123 = vmul.f32 %v3859, %v4010
        %v4124 = vmul.f32 %v3860, %v4010
        %v4125 = vmul.f32 %v3861, %v4010
        %v4126 = vmul.f32 %v3862, %v4010
        %v4127 = vmul.f32 %v3863, %v4010
        %v4128 = vmul.f32 %v3864, %v4010
        %v4129 = vmul.f32 %v3865, %v4010
        %v4130 = vmul.f32 %v3866, %v4010
        %v4131 = vmul.f32 %v3867, %v4010
        %v4132 = vmul.f32 %v3868, %v4010
        %v4133 = vmul.f32 %v3869, %v4010
        %v4134 = vmul.f32 %v3870, %v4010
        %v4135 = vmul.f32 %v3871, %v4010
        %v4136 = vmul.f32 %v3872, %v4010
        %v4137 = vmul.f32 %v3873, %v4010
        %v4138 = vmul.f32 %v3874, %v4010
        %v4139 = vmul.f32 %v3875, %v4010
        %v4140 = vadd.f32 %v3880, %v4012
        %v4141 = vadd.f32 %v3881, %v4013
        %v4142 = vadd.f32 %v3882, %v4014
        %v4143 = vadd.f32 %v3883, %v4015
        %v4144 = vadd.f32 %v3884, %v4016
        %v4145 = vadd.f32 %v3885, %v4017
        %v4146 = vadd.f32 %v3886, %v4018
        %v4147 = vadd.f32 %v3887, %v4019
        %v4148 = vadd.f32 %v3888, %v4020
        %v4149 = vadd.f32 %v3889, %v4021
        %v4150 = vadd.f32 %v3890, %v4022
        %v4151 = vadd.f32 %v3891, %v4023
        %v4152 = vadd.f32 %v3892, %v4024
        %v4153 = vadd.f32 %v3893, %v4025
        %v4154 = vadd.f32 %v3894, %v4026
        %v4155 = vadd.f32 %v3895, %v4027
        %v4156 = vadd.f32 %v3896, %v4028
        %v4157 = vadd.f32 %v3897, %v4029
        %v4158 = vadd.f32 %v3898, %v4030
        %v4159 = vadd.f32 %v3899, %v4031
        %v4160 = vadd.f32 %v3900, %v4032
        %v4161 = vadd.f32 %v3901, %v4033
        %v4162 = vadd.f32 %v3902, %v4034
        %v4163 = vadd.f32 %v3903, %v4035
        %v4164 = vadd.f32 %v3904, %v4036
        %v4165 = vadd.f32 %v3905, %v4037
        %v4166 = vadd.f32 %v3906, %v4038
        %v4167 = vadd.f32 %v3907, %v4039
        %v4168 = vadd.f32 %v3908, %v4040
        %v4169 = vadd.f32 %v3909, %v4041
        %v4170 = vadd.f32 %v3910, %v4042
        %v4171 = vadd.f32 %v3911, %v4043
        %v4172 = vadd.f32 %v3912, %v4044
        %v4173 = vadd.f32 %v3913, %v4045
        %v4174 = vadd.f32 %v3914, %v4046
        %v4175 = vadd.f32 %v3915, %v4047
        %v4176 = vadd.f32 %v3916, %v4048
        %v4177 = vadd.f32 %v3917, %v4049
        %v4178 = vadd.f32 %v3918, %v4050
        %v4179 = vadd.f32 %v3919, %v4051
        %v4180 = vadd.f32 %v3920, %v4052
        %v4181 = vadd.f32 %v3921, %v4053
        %v4182 = vadd.f32 %v3922, %v4054
        %v4183 = vadd.f32 %v3923, %v4055
        %v4184 = vadd.f32 %v3924, %v4056
        %v4185 = vadd.f32 %v3925, %v4057
        %v4186 = vadd.f32 %v3926, %v4058
        %v4187 = vadd.f32 %v3927, %v4059
        %v4188 = vadd.f32 %v3928, %v4060
        %v4189 = vadd.f32 %v3929, %v4061
        %v4190 = vadd.f32 %v3930, %v4062
        %v4191 = vadd.f32 %v3931, %v4063
        %v4192 = vadd.f32 %v3932, %v4064
        %v4193 = vadd.f32 %v3933, %v4065
        %v4194 = vadd.f32 %v3934, %v4066
        %v4195 = vadd.f32 %v3935, %v4067
        %v4196 = vadd.f32 %v3936, %v4068
        %v4197 = vadd.f32 %v3937, %v4069
        %v4198 = vadd.f32 %v3938, %v4070
        %v4199 = vadd.f32 %v3939, %v4071
        %v4200 = vadd.f32 %v3940, %v4072
        %v4201 = vadd.f32 %v3941, %v4073
        %v4202 = vadd.f32 %v3942, %v4074
        %v4203 = vadd.f32 %v3943, %v4075
        %v4204 = vadd.f32 %v3944, %v4076
        %v4205 = vadd.f32 %v3945, %v4077
        %v4206 = vadd.f32 %v3946, %v4078
        %v4207 = vadd.f32 %v3947, %v4079
        %v4208 = vadd.f32 %v3948, %v4080
        %v4209 = vadd.f32 %v3949, %v4081
        %v4210 = vadd.f32 %v3950, %v4082
        %v4211 = vadd.f32 %v3951, %v4083
        %v4212 = vadd.f32 %v3952, %v4084
        %v4213 = vadd.f32 %v3953, %v4085
        %v4214 = vadd.f32 %v3954, %v4086
        %v4215 = vadd.f32 %v3955, %v4087
        %v4216 = vadd.f32 %v3956, %v4088
        %v4217 = vadd.f32 %v3957, %v4089
        %v4218 = vadd.f32 %v3958, %v4090
        %v4219 = vadd.f32 %v3959, %v4091
        %v4220 = vadd.f32 %v3960, %v4092
        %v4221 = vadd.f32 %v3961, %v4093
        %v4222 = vadd.f32 %v3962, %v4094
        %v4223 = vadd.f32 %v3963, %v4095
        %v4224 = vadd.f32 %v3964, %v4096
        %v4225 = vadd.f32 %v3965, %v4097
        %v4226 = vadd.f32 %v3966, %v4098
        %v4227 = vadd.f32 %v3967, %v4099
        %v4228 = vadd.f32 %v3968, %v4100
        %v4229 = vadd.f32 %v3969, %v4101
        %v4230 = vadd.f32 %v3970, %v4102
        %v4231 = vadd.f32 %v3971, %v4103
        %v4232 = vadd.f32 %v3972, %v4104
        %v4233 = vadd.f32 %v3973, %v4105
        %v4234 = vadd.f32 %v3974, %v4106
        %v4235 = vadd.f32 %v3975, %v4107
        %v4236 = vadd.f32 %v3976, %v4108
        %v4237 = vadd.f32 %v3977, %v4109
        %v4238 = vadd.f32 %v3978, %v4110
        %v4239 = vadd.f32 %v3979, %v4111
        %v4240 = vadd.f32 %v3980, %v4112
        %v4241 = vadd.f32 %v3981, %v4113
        %v4242 = vadd.f32 %v3982, %v4114
        %v4243 = vadd.f32 %v3983, %v4115
        %v4244 = vadd.f32 %v3984, %v4116
        %v4245 = vadd.f32 %v3985, %v4117
        %v4246 = vadd.f32 %v3986, %v4118
        %v4247 = vadd.f32 %v3987, %v4119
        %v4248 = vadd.f32 %v3988, %v4120
        %v4249 = vadd.f32 %v3989, %v4121
        %v4250 = vadd.f32 %v3990, %v4122
        %v4251 = vadd.f32 %v3991, %v4123
        %v4252 = vadd.f32 %v3992, %v4124
        %v4253 = vadd.f32 %v3993, %v4125
        %v4254 = vadd.f32 %v3994, %v4126
        %v4255 = vadd.f32 %v3995, %v4127
        %v4256 = vadd.f32 %v3996, %v4128
        %v4257 = vadd.f32 %v3997, %v4129
        %v4258 = vadd.f32 %v3998, %v4130
        %v4259 = vadd.f32 %v3999, %v4131
        %v4260 = vadd.f32 %v4000, %v4132
        %v4261 = vadd.f32 %v4001, %v4133
        %v4262 = vadd.f32 %v4002, %v4134
        %v4263 = vadd.f32 %v4003, %v4135
        %v4264 = vadd.f32 %v4004, %v4136
        %v4265 = vadd.f32 %v4005, %v4137
        %v4266 = vadd.f32 %v4006, %v4138
        %v4267 = vadd.f32 %v4007, %v4139
        %v4268 = vld [vmem:[#allocation7] sm:$0xff]
        %v4269 = vld [vmem:[#allocation7 + $0x8] sm:$0xff]
        %v4270 = vld [vmem:[#allocation7 + $0x10] sm:$0xff]
        %v4271 = vld [vmem:[#allocation7 + $0x18] sm:$0xff]
        %v4272 = vld [vmem:[#allocation7 + $0x20] sm:$0xff]
        %v4273 = vld [vmem:[#allocation7 + $0x28] sm:$0xff]
        %v4274 = vld [vmem:[#allocation7 + $0x30] sm:$0xff]
        %v4275 = vld [vmem:[#allocation7 + $0x38] sm:$0xff]
        %v4276 = vld [vmem:[#allocation7 + $0x40] sm:$0xff]
        %v4277 = vld [vmem:[#allocation7 + $0x48] sm:$0xff]
        %v4278 = vld [vmem:[#allocation7 + $0x50] sm:$0xff]
        %v4279 = vld [vmem:[#allocation7 + $0x58] sm:$0xff]
        %v4280 = vld [vmem:[#allocation7 + $0x60] sm:$0xff]
        %v4281 = vld [vmem:[#allocation7 + $0x68] sm:$0xff]
        %v4282 = vld [vmem:[#allocation7 + $0x70] sm:$0xff]
        %v4283 = vld [vmem:[#allocation7 + $0x78] sm:$0xff]
        %4284 = vmatpush.msra.mxu0 %v4283
        %4285 = vmatpush.msra.mxu0 %v4282
        %4286 = vmatpush.msra.mxu0 %v4281
        %4287 = vmatpush.msra.mxu0 %v4280
        %4288 = vmatpush.msra.mxu0 %v4279
        %4289 = vmatpush.msra.mxu0 %v4278
        %4290 = vmatpush.msra.mxu0 %v4277
        %4291 = vmatpush.msra.mxu0 %v4276
        %4292 = vmatpush.msra.mxu0 %v4275
        %4293 = vmatpush.msra.mxu0 %v4274
        %4294 = vmatpush.msra.mxu0 %v4273
        %4295 = vmatpush.msra.mxu0 %v4272
        %4296 = vmatpush.msra.mxu0 %v4271
        %4297 = vmatpush.msra.mxu0 %v4270
        %4298 = vmatpush.msra.mxu0 %v4269
        %4299 = vmatpush.msra.mxu0 %v4268
        %4300 = vmatmul.f32.gmra.mxu0 %v3354
        %v4301 = vpop.f32.mrf.mxu0
        %v4302 = vadd.f32 0.0, %v4301
        %4303 = vmatmul.f32.gmra.mxu0 %v3355
        %v4304 = vpop.f32.mrf.mxu0
        %v4305 = vadd.f32 0.0, %v4304
        %4306 = vmatmul.f32.gmra.mxu0 %v3356
        %v4307 = vpop.f32.mrf.mxu0
        %v4308 = vadd.f32 0.0, %v4307
        %4309 = vmatmul.f32.gmra.mxu0 %v3357
        %v4310 = vpop.f32.mrf.mxu0
        %v4311 = vadd.f32 0.0, %v4310
        %4312 = vmatmul.f32.gmra.mxu0 %v3358
        %v4313 = vpop.f32.mrf.mxu0
        %v4314 = vadd.f32 0.0, %v4313
        %4315 = vmatmul.f32.gmra.mxu0 %v3359
        %v4316 = vpop.f32.mrf.mxu0
        %v4317 = vadd.f32 0.0, %v4316
        %4318 = vmatmul.f32.gmra.mxu0 %v3360
        %v4319 = vpop.f32.mrf.mxu0
        %v4320 = vadd.f32 0.0, %v4319
        %4321 = vmatmul.f32.gmra.mxu0 %v3361
        %v4322 = vpop.f32.mrf.mxu0
        %v4323 = vadd.f32 0.0, %v4322
        %4324 = vmatmul.f32.gmra.mxu0 %v3362
        %v4325 = vpop.f32.mrf.mxu0
        %v4326 = vadd.f32 0.0, %v4325
        %4327 = vmatmul.f32.gmra.mxu0 %v3363
        %v4328 = vpop.f32.mrf.mxu0
        %v4329 = vadd.f32 0.0, %v4328
        %4330 = vmatmul.f32.gmra.mxu0 %v3364
        %v4331 = vpop.f32.mrf.mxu0
        %v4332 = vadd.f32 0.0, %v4331
        %4333 = vmatmul.f32.gmra.mxu0 %v3365
        %v4334 = vpop.f32.mrf.mxu0
        %v4335 = vadd.f32 0.0, %v4334
        %4336 = vmatmul.f32.gmra.mxu0 %v3366
        %v4337 = vpop.f32.mrf.mxu0
        %v4338 = vadd.f32 0.0, %v4337
        %4339 = vmatmul.f32.gmra.mxu0 %v3367
        %v4340 = vpop.f32.mrf.mxu0
        %v4341 = vadd.f32 0.0, %v4340
        %4342 = vmatmul.f32.gmra.mxu0 %v3368
        %v4343 = vpop.f32.mrf.mxu0
        %v4344 = vadd.f32 0.0, %v4343
        %4345 = vmatmul.f32.gmra.mxu0 %v3369
        %v4346 = vpop.f32.mrf.mxu0
        %v4347 = vadd.f32 0.0, %v4346
        %4348 = vmatmul.f32.gmra.mxu0 %v3370
        %v4349 = vpop.f32.mrf.mxu0
        %v4350 = vadd.f32 0.0, %v4349
        %4351 = vmatmul.f32.gmra.mxu0 %v3371
        %v4352 = vpop.f32.mrf.mxu0
        %v4353 = vadd.f32 0.0, %v4352
        %4354 = vmatmul.f32.gmra.mxu0 %v3372
        %v4355 = vpop.f32.mrf.mxu0
        %v4356 = vadd.f32 0.0, %v4355
        %4357 = vmatmul.f32.gmra.mxu0 %v3373
        %v4358 = vpop.f32.mrf.mxu0
        %v4359 = vadd.f32 0.0, %v4358
        %4360 = vmatmul.f32.gmra.mxu0 %v3374
        %v4361 = vpop.f32.mrf.mxu0
        %v4362 = vadd.f32 0.0, %v4361
        %4363 = vmatmul.f32.gmra.mxu0 %v3375
        %v4364 = vpop.f32.mrf.mxu0
        %v4365 = vadd.f32 0.0, %v4364
        %4366 = vmatmul.f32.gmra.mxu0 %v3376
        %v4367 = vpop.f32.mrf.mxu0
        %v4368 = vadd.f32 0.0, %v4367
        %4369 = vmatmul.f32.gmra.mxu0 %v3377
        %v4370 = vpop.f32.mrf.mxu0
        %v4371 = vadd.f32 0.0, %v4370
        %4372 = vmatmul.f32.gmra.mxu0 %v3378
        %v4373 = vpop.f32.mrf.mxu0
        %v4374 = vadd.f32 0.0, %v4373
        %4375 = vmatmul.f32.gmra.mxu0 %v3379
        %v4376 = vpop.f32.mrf.mxu0
        %v4377 = vadd.f32 0.0, %v4376
        %4378 = vmatmul.f32.gmra.mxu0 %v3380
        %v4379 = vpop.f32.mrf.mxu0
        %v4380 = vadd.f32 0.0, %v4379
        %4381 = vmatmul.f32.gmra.mxu0 %v3381
        %v4382 = vpop.f32.mrf.mxu0
        %v4383 = vadd.f32 0.0, %v4382
        %4384 = vmatmul.f32.gmra.mxu0 %v3382
        %v4385 = vpop.f32.mrf.mxu0
        %v4386 = vadd.f32 0.0, %v4385
        %4387 = vmatmul.f32.gmra.mxu0 %v3383
        %v4388 = vpop.f32.mrf.mxu0
        %v4389 = vadd.f32 0.0, %v4388
        %4390 = vmatmul.f32.gmra.mxu0 %v3384
        %v4391 = vpop.f32.mrf.mxu0
        %v4392 = vadd.f32 0.0, %v4391
        %4393 = vmatmul.f32.gmra.mxu0 %v3385
        %v4394 = vpop.f32.mrf.mxu0
        %v4395 = vadd.f32 0.0, %v4394
        %4396 = vmatmul.f32.gmra.mxu0 %v3386
        %v4397 = vpop.f32.mrf.mxu0
        %v4398 = vadd.f32 0.0, %v4397
        %4399 = vmatmul.f32.gmra.mxu0 %v3387
        %v4400 = vpop.f32.mrf.mxu0
        %v4401 = vadd.f32 0.0, %v4400
        %4402 = vmatmul.f32.gmra.mxu0 %v3388
        %v4403 = vpop.f32.mrf.mxu0
        %v4404 = vadd.f32 0.0, %v4403
        %4405 = vmatmul.f32.gmra.mxu0 %v3389
        %v4406 = vpop.f32.mrf.mxu0
        %v4407 = vadd.f32 0.0, %v4406
        %4408 = vmatmul.f32.gmra.mxu0 %v3390
        %v4409 = vpop.f32.mrf.mxu0
        %v4410 = vadd.f32 0.0, %v4409
        %4411 = vmatmul.f32.gmra.mxu0 %v3391
        %v4412 = vpop.f32.mrf.mxu0
        %v4413 = vadd.f32 0.0, %v4412
        %4414 = vmatmul.f32.gmra.mxu0 %v3392
        %v4415 = vpop.f32.mrf.mxu0
        %v4416 = vadd.f32 0.0, %v4415
        %4417 = vmatmul.f32.gmra.mxu0 %v3393
        %v4418 = vpop.f32.mrf.mxu0
        %v4419 = vadd.f32 0.0, %v4418
        %4420 = vmatmul.f32.gmra.mxu0 %v3394
        %v4421 = vpop.f32.mrf.mxu0
        %v4422 = vadd.f32 0.0, %v4421
        %4423 = vmatmul.f32.gmra.mxu0 %v3395
        %v4424 = vpop.f32.mrf.mxu0
        %v4425 = vadd.f32 0.0, %v4424
        %4426 = vmatmul.f32.gmra.mxu0 %v3396
        %v4427 = vpop.f32.mrf.mxu0
        %v4428 = vadd.f32 0.0, %v4427
        %4429 = vmatmul.f32.gmra.mxu0 %v3397
        %v4430 = vpop.f32.mrf.mxu0
        %v4431 = vadd.f32 0.0, %v4430
        %4432 = vmatmul.f32.gmra.mxu0 %v3398
        %v4433 = vpop.f32.mrf.mxu0
        %v4434 = vadd.f32 0.0, %v4433
        %4435 = vmatmul.f32.gmra.mxu0 %v3399
        %v4436 = vpop.f32.mrf.mxu0
        %v4437 = vadd.f32 0.0, %v4436
        %4438 = vmatmul.f32.gmra.mxu0 %v3400
        %v4439 = vpop.f32.mrf.mxu0
        %v4440 = vadd.f32 0.0, %v4439
        %4441 = vmatmul.f32.gmra.mxu0 %v3401
        %v4442 = vpop.f32.mrf.mxu0
        %v4443 = vadd.f32 0.0, %v4442
        %4444 = vmatmul.f32.gmra.mxu0 %v3402
        %v4445 = vpop.f32.mrf.mxu0
        %v4446 = vadd.f32 0.0, %v4445
        %4447 = vmatmul.f32.gmra.mxu0 %v3403
        %v4448 = vpop.f32.mrf.mxu0
        %v4449 = vadd.f32 0.0, %v4448
        %4450 = vmatmul.f32.gmra.mxu0 %v3404
        %v4451 = vpop.f32.mrf.mxu0
        %v4452 = vadd.f32 0.0, %v4451
        %4453 = vmatmul.f32.gmra.mxu0 %v3405
        %v4454 = vpop.f32.mrf.mxu0
        %v4455 = vadd.f32 0.0, %v4454
        %4456 = vmatmul.f32.gmra.mxu0 %v3406
        %v4457 = vpop.f32.mrf.mxu0
        %v4458 = vadd.f32 0.0, %v4457
        %4459 = vmatmul.f32.gmra.mxu0 %v3407
        %v4460 = vpop.f32.mrf.mxu0
        %v4461 = vadd.f32 0.0, %v4460
        %4462 = vmatmul.f32.gmra.mxu0 %v3408
        %v4463 = vpop.f32.mrf.mxu0
        %v4464 = vadd.f32 0.0, %v4463
        %4465 = vmatmul.f32.gmra.mxu0 %v3409
        %v4466 = vpop.f32.mrf.mxu0
        %v4467 = vadd.f32 0.0, %v4466
        %4468 = vmatmul.f32.gmra.mxu0 %v3410
        %v4469 = vpop.f32.mrf.mxu0
        %v4470 = vadd.f32 0.0, %v4469
        %4471 = vmatmul.f32.gmra.mxu0 %v3411
        %v4472 = vpop.f32.mrf.mxu0
        %v4473 = vadd.f32 0.0, %v4472
        %4474 = vmatmul.f32.gmra.mxu0 %v3412
        %v4475 = vpop.f32.mrf.mxu0
        %v4476 = vadd.f32 0.0, %v4475
        %4477 = vmatmul.f32.gmra.mxu0 %v3413
        %v4478 = vpop.f32.mrf.mxu0
        %v4479 = vadd.f32 0.0, %v4478
        %4480 = vmatmul.f32.gmra.mxu0 %v3414
        %v4481 = vpop.f32.mrf.mxu0
        %v4482 = vadd.f32 0.0, %v4481
        %4483 = vmatmul.f32.gmra.mxu0 %v3415
        %v4484 = vpop.f32.mrf.mxu0
        %v4485 = vadd.f32 0.0, %v4484
        %4486 = vmatmul.f32.gmra.mxu0 %v3416
        %v4487 = vpop.f32.mrf.mxu0
        %v4488 = vadd.f32 0.0, %v4487
        %4489 = vmatmul.f32.gmra.mxu0 %v3417
        %v4490 = vpop.f32.mrf.mxu0
        %v4491 = vadd.f32 0.0, %v4490
        %4492 = vmatmul.f32.gmra.mxu0 %v3418
        %v4493 = vpop.f32.mrf.mxu0
        %v4494 = vadd.f32 0.0, %v4493
        %4495 = vmatmul.f32.gmra.mxu0 %v3419
        %v4496 = vpop.f32.mrf.mxu0
        %v4497 = vadd.f32 0.0, %v4496
        %4498 = vmatmul.f32.gmra.mxu0 %v3420
        %v4499 = vpop.f32.mrf.mxu0
        %v4500 = vadd.f32 0.0, %v4499
        %4501 = vmatmul.f32.gmra.mxu0 %v3421
        %v4502 = vpop.f32.mrf.mxu0
        %v4503 = vadd.f32 0.0, %v4502
        %4504 = vmatmul.f32.gmra.mxu0 %v3422
        %v4505 = vpop.f32.mrf.mxu0
        %v4506 = vadd.f32 0.0, %v4505
        %4507 = vmatmul.f32.gmra.mxu0 %v3423
        %v4508 = vpop.f32.mrf.mxu0
        %v4509 = vadd.f32 0.0, %v4508
        %4510 = vmatmul.f32.gmra.mxu0 %v3424
        %v4511 = vpop.f32.mrf.mxu0
        %v4512 = vadd.f32 0.0, %v4511
        %4513 = vmatmul.f32.gmra.mxu0 %v3425
        %v4514 = vpop.f32.mrf.mxu0
        %v4515 = vadd.f32 0.0, %v4514
        %4516 = vmatmul.f32.gmra.mxu0 %v3426
        %v4517 = vpop.f32.mrf.mxu0
        %v4518 = vadd.f32 0.0, %v4517
        %4519 = vmatmul.f32.gmra.mxu0 %v3427
        %v4520 = vpop.f32.mrf.mxu0
        %v4521 = vadd.f32 0.0, %v4520
        %4522 = vmatmul.f32.gmra.mxu0 %v3428
        %v4523 = vpop.f32.mrf.mxu0
        %v4524 = vadd.f32 0.0, %v4523
        %4525 = vmatmul.f32.gmra.mxu0 %v3429
        %v4526 = vpop.f32.mrf.mxu0
        %v4527 = vadd.f32 0.0, %v4526
        %4528 = vmatmul.f32.gmra.mxu0 %v3430
        %v4529 = vpop.f32.mrf.mxu0
        %v4530 = vadd.f32 0.0, %v4529
        %4531 = vmatmul.f32.gmra.mxu0 %v3431
        %v4532 = vpop.f32.mrf.mxu0
        %v4533 = vadd.f32 0.0, %v4532
        %4534 = vmatmul.f32.gmra.mxu0 %v3432
        %v4535 = vpop.f32.mrf.mxu0
        %v4536 = vadd.f32 0.0, %v4535
        %4537 = vmatmul.f32.gmra.mxu0 %v3433
        %v4538 = vpop.f32.mrf.mxu0
        %v4539 = vadd.f32 0.0, %v4538
        %4540 = vmatmul.f32.gmra.mxu0 %v3434
        %v4541 = vpop.f32.mrf.mxu0
        %v4542 = vadd.f32 0.0, %v4541
        %4543 = vmatmul.f32.gmra.mxu0 %v3435
        %v4544 = vpop.f32.mrf.mxu0
        %v4545 = vadd.f32 0.0, %v4544
        %4546 = vmatmul.f32.gmra.mxu0 %v3436
        %v4547 = vpop.f32.mrf.mxu0
        %v4548 = vadd.f32 0.0, %v4547
        %4549 = vmatmul.f32.gmra.mxu0 %v3437
        %v4550 = vpop.f32.mrf.mxu0
        %v4551 = vadd.f32 0.0, %v4550
        %4552 = vmatmul.f32.gmra.mxu0 %v3438
        %v4553 = vpop.f32.mrf.mxu0
        %v4554 = vadd.f32 0.0, %v4553
        %4555 = vmatmul.f32.gmra.mxu0 %v3439
        %v4556 = vpop.f32.mrf.mxu0
        %v4557 = vadd.f32 0.0, %v4556
        %4558 = vmatmul.f32.gmra.mxu0 %v3440
        %v4559 = vpop.f32.mrf.mxu0
        %v4560 = vadd.f32 0.0, %v4559
        %4561 = vmatmul.f32.gmra.mxu0 %v3441
        %v4562 = vpop.f32.mrf.mxu0
        %v4563 = vadd.f32 0.0, %v4562
        %4564 = vmatmul.f32.gmra.mxu0 %v3442
        %v4565 = vpop.f32.mrf.mxu0
        %v4566 = vadd.f32 0.0, %v4565
        %4567 = vmatmul.f32.gmra.mxu0 %v3443
        %v4568 = vpop.f32.mrf.mxu0
        %v4569 = vadd.f32 0.0, %v4568
        %4570 = vmatmul.f32.gmra.mxu0 %v3444
        %v4571 = vpop.f32.mrf.mxu0
        %v4572 = vadd.f32 0.0, %v4571
        %4573 = vmatmul.f32.gmra.mxu0 %v3445
        %v4574 = vpop.f32.mrf.mxu0
        %v4575 = vadd.f32 0.0, %v4574
        %4576 = vmatmul.f32.gmra.mxu0 %v3446
        %v4577 = vpop.f32.mrf.mxu0
        %v4578 = vadd.f32 0.0, %v4577
        %4579 = vmatmul.f32.gmra.mxu0 %v3447
        %v4580 = vpop.f32.mrf.mxu0
        %v4581 = vadd.f32 0.0, %v4580
        %4582 = vmatmul.f32.gmra.mxu0 %v3448
        %v4583 = vpop.f32.mrf.mxu0
        %v4584 = vadd.f32 0.0, %v4583
        %4585 = vmatmul.f32.gmra.mxu0 %v3449
        %v4586 = vpop.f32.mrf.mxu0
        %v4587 = vadd.f32 0.0, %v4586
        %4588 = vmatmul.f32.gmra.mxu0 %v3450
        %v4589 = vpop.f32.mrf.mxu0
        %v4590 = vadd.f32 0.0, %v4589
        %4591 = vmatmul.f32.gmra.mxu0 %v3451
        %v4592 = vpop.f32.mrf.mxu0
        %v4593 = vadd.f32 0.0, %v4592
        %4594 = vmatmul.f32.gmra.mxu0 %v3452
        %v4595 = vpop.f32.mrf.mxu0
        %v4596 = vadd.f32 0.0, %v4595
        %4597 = vmatmul.f32.gmra.mxu0 %v3453
        %v4598 = vpop.f32.mrf.mxu0
        %v4599 = vadd.f32 0.0, %v4598
        %4600 = vmatmul.f32.gmra.mxu0 %v3454
        %v4601 = vpop.f32.mrf.mxu0
        %v4602 = vadd.f32 0.0, %v4601
        %4603 = vmatmul.f32.gmra.mxu0 %v3455
        %v4604 = vpop.f32.mrf.mxu0
        %v4605 = vadd.f32 0.0, %v4604
        %4606 = vmatmul.f32.gmra.mxu0 %v3456
        %v4607 = vpop.f32.mrf.mxu0
        %v4608 = vadd.f32 0.0, %v4607
        %4609 = vmatmul.f32.gmra.mxu0 %v3457
        %v4610 = vpop.f32.mrf.mxu0
        %v4611 = vadd.f32 0.0, %v4610
        %4612 = vmatmul.f32.gmra.mxu0 %v3458
        %v4613 = vpop.f32.mrf.mxu0
        %v4614 = vadd.f32 0.0, %v4613
        %4615 = vmatmul.f32.gmra.mxu0 %v3459
        %v4616 = vpop.f32.mrf.mxu0
        %v4617 = vadd.f32 0.0, %v4616
        %4618 = vmatmul.f32.gmra.mxu0 %v3460
        %v4619 = vpop.f32.mrf.mxu0
        %v4620 = vadd.f32 0.0, %v4619
        %4621 = vmatmul.f32.gmra.mxu0 %v3461
        %v4622 = vpop.f32.mrf.mxu0
        %v4623 = vadd.f32 0.0, %v4622
        %4624 = vmatmul.f32.gmra.mxu0 %v3462
        %v4625 = vpop.f32.mrf.mxu0
        %v4626 = vadd.f32 0.0, %v4625
        %4627 = vmatmul.f32.gmra.mxu0 %v3463
        %v4628 = vpop.f32.mrf.mxu0
        %v4629 = vadd.f32 0.0, %v4628
        %4630 = vmatmul.f32.gmra.mxu0 %v3464
        %v4631 = vpop.f32.mrf.mxu0
        %v4632 = vadd.f32 0.0, %v4631
        %4633 = vmatmul.f32.gmra.mxu0 %v3465
        %v4634 = vpop.f32.mrf.mxu0
        %v4635 = vadd.f32 0.0, %v4634
        %4636 = vmatmul.f32.gmra.mxu0 %v3466
        %v4637 = vpop.f32.mrf.mxu0
        %v4638 = vadd.f32 0.0, %v4637
        %4639 = vmatmul.f32.gmra.mxu0 %v3467
        %v4640 = vpop.f32.mrf.mxu0
        %v4641 = vadd.f32 0.0, %v4640
        %4642 = vmatmul.f32.gmra.mxu0 %v3468
        %v4643 = vpop.f32.mrf.mxu0
        %v4644 = vadd.f32 0.0, %v4643
        %4645 = vmatmul.f32.gmra.mxu0 %v3469
        %v4646 = vpop.f32.mrf.mxu0
        %v4647 = vadd.f32 0.0, %v4646
        %4648 = vmatmul.f32.gmra.mxu0 %v3470
        %v4649 = vpop.f32.mrf.mxu0
        %v4650 = vadd.f32 0.0, %v4649
        %4651 = vmatmul.f32.gmra.mxu0 %v3471
        %v4652 = vpop.f32.mrf.mxu0
        %v4653 = vadd.f32 0.0, %v4652
        %4654 = vmatmul.f32.gmra.mxu0 %v3472
        %v4655 = vpop.f32.mrf.mxu0
        %v4656 = vadd.f32 0.0, %v4655
        %4657 = vmatmul.f32.gmra.mxu0 %v3473
        %v4658 = vpop.f32.mrf.mxu0
        %v4659 = vadd.f32 0.0, %v4658
        %4660 = vmatmul.f32.gmra.mxu0 %v3474
        %v4661 = vpop.f32.mrf.mxu0
        %v4662 = vadd.f32 0.0, %v4661
        %4663 = vmatmul.f32.gmra.mxu0 %v3475
        %v4664 = vpop.f32.mrf.mxu0
        %v4665 = vadd.f32 0.0, %v4664
        %4666 = vmatmul.f32.gmra.mxu0 %v3476
        %v4667 = vpop.f32.mrf.mxu0
        %v4668 = vadd.f32 0.0, %v4667
        %4669 = vmatmul.f32.gmra.mxu0 %v3477
        %v4670 = vpop.f32.mrf.mxu0
        %v4671 = vadd.f32 0.0, %v4670
        %4672 = vmatmul.f32.gmra.mxu0 %v3478
        %v4673 = vpop.f32.mrf.mxu0
        %v4674 = vadd.f32 0.0, %v4673
        %4675 = vmatmul.f32.gmra.mxu0 %v3479
        %v4676 = vpop.f32.mrf.mxu0
        %v4677 = vadd.f32 0.0, %v4676
        %4678 = vmatmul.f32.gmra.mxu0 %v3480
        %v4679 = vpop.f32.mrf.mxu0
        %v4680 = vadd.f32 0.0, %v4679
        %4681 = vmatmul.f32.gmra.mxu0 %v3481
        %v4682 = vpop.f32.mrf.mxu0
        %v4683 = vadd.f32 0.0, %v4682
        %4684 = vdwg.mxu0
        %v4685 = vld [vmem:[#allocation8] sm:$0xff]
        %v4686 = vld [vmem:[#allocation8 + $0x8] sm:$0xff]
        %v4687 = vld [vmem:[#allocation8 + $0x10] sm:$0xff]
        %v4688 = vld [vmem:[#allocation8 + $0x18] sm:$0xff]
        %v4689 = vld [vmem:[#allocation8 + $0x20] sm:$0xff]
        %v4690 = vld [vmem:[#allocation8 + $0x28] sm:$0xff]
        %v4691 = vld [vmem:[#allocation8 + $0x30] sm:$0xff]
        %v4692 = vld [vmem:[#allocation8 + $0x38] sm:$0xff]
        %v4693 = vld [vmem:[#allocation8 + $0x40] sm:$0xff]
        %v4694 = vld [vmem:[#allocation8 + $0x48] sm:$0xff]
        %v4695 = vld [vmem:[#allocation8 + $0x50] sm:$0xff]
        %v4696 = vld [vmem:[#allocation8 + $0x58] sm:$0xff]
        %v4697 = vld [vmem:[#allocation8 + $0x60] sm:$0xff]
        %v4698 = vld [vmem:[#allocation8 + $0x68] sm:$0xff]
        %v4699 = vld [vmem:[#allocation8 + $0x70] sm:$0xff]
        %v4700 = vld [vmem:[#allocation8 + $0x78] sm:$0xff]
        %4701 = vmatpush.msra.mxu0 %v4700
        %4702 = vmatpush.msra.mxu0 %v4699
        %4703 = vmatpush.msra.mxu0 %v4698
        %4704 = vmatpush.msra.mxu0 %v4697
        %4705 = vmatpush.msra.mxu0 %v4696
        %4706 = vmatpush.msra.mxu0 %v4695
        %4707 = vmatpush.msra.mxu0 %v4694
        %4708 = vmatpush.msra.mxu0 %v4693
        %4709 = vmatpush.msra.mxu0 %v4692
        %4710 = vmatpush.msra.mxu0 %v4691
        %4711 = vmatpush.msra.mxu0 %v4690
        %4712 = vmatpush.msra.mxu0 %v4689
        %4713 = vmatpush.msra.mxu0 %v4688
        %4714 = vmatpush.msra.mxu0 %v4687
        %4715 = vmatpush.msra.mxu0 %v4686
        %4716 = vmatpush.msra.mxu0 %v4685
        %4717 = vmatmul.f32.gmra.mxu0 %v4140
        %v4718 = vpop.f32.mrf.mxu0
        %v4719 = vadd.f32 0.0, %v4718
        %4720 = vmatmul.f32.gmra.mxu0 %v4141
        %v4721 = vpop.f32.mrf.mxu0
        %v4722 = vadd.f32 0.0, %v4721
        %4723 = vmatmul.f32.gmra.mxu0 %v4142
        %v4724 = vpop.f32.mrf.mxu0
        %v4725 = vadd.f32 0.0, %v4724
        %4726 = vmatmul.f32.gmra.mxu0 %v4143
        %v4727 = vpop.f32.mrf.mxu0
        %v4728 = vadd.f32 0.0, %v4727
        %4729 = vmatmul.f32.gmra.mxu0 %v4144
        %v4730 = vpop.f32.mrf.mxu0
        %v4731 = vadd.f32 0.0, %v4730
        %4732 = vmatmul.f32.gmra.mxu0 %v4145
        %v4733 = vpop.f32.mrf.mxu0
        %v4734 = vadd.f32 0.0, %v4733
        %4735 = vmatmul.f32.gmra.mxu0 %v4146
        %v4736 = vpop.f32.mrf.mxu0
        %v4737 = vadd.f32 0.0, %v4736
        %4738 = vmatmul.f32.gmra.mxu0 %v4147
        %v4739 = vpop.f32.mrf.mxu0
        %v4740 = vadd.f32 0.0, %v4739
        %4741 = vmatmul.f32.gmra.mxu0 %v4148
        %v4742 = vpop.f32.mrf.mxu0
        %v4743 = vadd.f32 0.0, %v4742
        %4744 = vmatmul.f32.gmra.mxu0 %v4149
        %v4745 = vpop.f32.mrf.mxu0
        %v4746 = vadd.f32 0.0, %v4745
        %4747 = vmatmul.f32.gmra.mxu0 %v4150
        %v4748 = vpop.f32.mrf.mxu0
        %v4749 = vadd.f32 0.0, %v4748
        %4750 = vmatmul.f32.gmra.mxu0 %v4151
        %v4751 = vpop.f32.mrf.mxu0
        %v4752 = vadd.f32 0.0, %v4751
        %4753 = vmatmul.f32.gmra.mxu0 %v4152
        %v4754 = vpop.f32.mrf.mxu0
        %v4755 = vadd.f32 0.0, %v4754
        %4756 = vmatmul.f32.gmra.mxu0 %v4153
        %v4757 = vpop.f32.mrf.mxu0
        %v4758 = vadd.f32 0.0, %v4757
        %4759 = vmatmul.f32.gmra.mxu0 %v4154
        %v4760 = vpop.f32.mrf.mxu0
        %v4761 = vadd.f32 0.0, %v4760
        %4762 = vmatmul.f32.gmra.mxu0 %v4155
        %v4763 = vpop.f32.mrf.mxu0
        %v4764 = vadd.f32 0.0, %v4763
        %4765 = vmatmul.f32.gmra.mxu0 %v4156
        %v4766 = vpop.f32.mrf.mxu0
        %v4767 = vadd.f32 0.0, %v4766
        %4768 = vmatmul.f32.gmra.mxu0 %v4157
        %v4769 = vpop.f32.mrf.mxu0
        %v4770 = vadd.f32 0.0, %v4769
        %4771 = vmatmul.f32.gmra.mxu0 %v4158
        %v4772 = vpop.f32.mrf.mxu0
        %v4773 = vadd.f32 0.0, %v4772
        %4774 = vmatmul.f32.gmra.mxu0 %v4159
        %v4775 = vpop.f32.mrf.mxu0
        %v4776 = vadd.f32 0.0, %v4775
        %4777 = vmatmul.f32.gmra.mxu0 %v4160
        %v4778 = vpop.f32.mrf.mxu0
        %v4779 = vadd.f32 0.0, %v4778
        %4780 = vmatmul.f32.gmra.mxu0 %v4161
        %v4781 = vpop.f32.mrf.mxu0
        %v4782 = vadd.f32 0.0, %v4781
        %4783 = vmatmul.f32.gmra.mxu0 %v4162
        %v4784 = vpop.f32.mrf.mxu0
        %v4785 = vadd.f32 0.0, %v4784
        %4786 = vmatmul.f32.gmra.mxu0 %v4163
        %v4787 = vpop.f32.mrf.mxu0
        %v4788 = vadd.f32 0.0, %v4787
        %4789 = vmatmul.f32.gmra.mxu0 %v4164
        %v4790 = vpop.f32.mrf.mxu0
        %v4791 = vadd.f32 0.0, %v4790
        %4792 = vmatmul.f32.gmra.mxu0 %v4165
        %v4793 = vpop.f32.mrf.mxu0
        %v4794 = vadd.f32 0.0, %v4793
        %4795 = vmatmul.f32.gmra.mxu0 %v4166
        %v4796 = vpop.f32.mrf.mxu0
        %v4797 = vadd.f32 0.0, %v4796
        %4798 = vmatmul.f32.gmra.mxu0 %v4167
        %v4799 = vpop.f32.mrf.mxu0
        %v4800 = vadd.f32 0.0, %v4799
        %4801 = vmatmul.f32.gmra.mxu0 %v4168
        %v4802 = vpop.f32.mrf.mxu0
        %v4803 = vadd.f32 0.0, %v4802
        %4804 = vmatmul.f32.gmra.mxu0 %v4169
        %v4805 = vpop.f32.mrf.mxu0
        %v4806 = vadd.f32 0.0, %v4805
        %4807 = vmatmul.f32.gmra.mxu0 %v4170
        %v4808 = vpop.f32.mrf.mxu0
        %v4809 = vadd.f32 0.0, %v4808
        %4810 = vmatmul.f32.gmra.mxu0 %v4171
        %v4811 = vpop.f32.mrf.mxu0
        %v4812 = vadd.f32 0.0, %v4811
        %4813 = vmatmul.f32.gmra.mxu0 %v4172
        %v4814 = vpop.f32.mrf.mxu0
        %v4815 = vadd.f32 0.0, %v4814
        %4816 = vmatmul.f32.gmra.mxu0 %v4173
        %v4817 = vpop.f32.mrf.mxu0
        %v4818 = vadd.f32 0.0, %v4817
        %4819 = vmatmul.f32.gmra.mxu0 %v4174
        %v4820 = vpop.f32.mrf.mxu0
        %v4821 = vadd.f32 0.0, %v4820
        %4822 = vmatmul.f32.gmra.mxu0 %v4175
        %v4823 = vpop.f32.mrf.mxu0
        %v4824 = vadd.f32 0.0, %v4823
        %4825 = vmatmul.f32.gmra.mxu0 %v4176
        %v4826 = vpop.f32.mrf.mxu0
        %v4827 = vadd.f32 0.0, %v4826
        %4828 = vmatmul.f32.gmra.mxu0 %v4177
        %v4829 = vpop.f32.mrf.mxu0
        %v4830 = vadd.f32 0.0, %v4829
        %4831 = vmatmul.f32.gmra.mxu0 %v4178
        %v4832 = vpop.f32.mrf.mxu0
        %v4833 = vadd.f32 0.0, %v4832
        %4834 = vmatmul.f32.gmra.mxu0 %v4179
        %v4835 = vpop.f32.mrf.mxu0
        %v4836 = vadd.f32 0.0, %v4835
        %4837 = vmatmul.f32.gmra.mxu0 %v4180
        %v4838 = vpop.f32.mrf.mxu0
        %v4839 = vadd.f32 0.0, %v4838
        %4840 = vmatmul.f32.gmra.mxu0 %v4181
        %v4841 = vpop.f32.mrf.mxu0
        %v4842 = vadd.f32 0.0, %v4841
        %4843 = vmatmul.f32.gmra.mxu0 %v4182
        %v4844 = vpop.f32.mrf.mxu0
        %v4845 = vadd.f32 0.0, %v4844
        %4846 = vmatmul.f32.gmra.mxu0 %v4183
        %v4847 = vpop.f32.mrf.mxu0
        %v4848 = vadd.f32 0.0, %v4847
        %4849 = vmatmul.f32.gmra.mxu0 %v4184
        %v4850 = vpop.f32.mrf.mxu0
        %v4851 = vadd.f32 0.0, %v4850
        %4852 = vmatmul.f32.gmra.mxu0 %v4185
        %v4853 = vpop.f32.mrf.mxu0
        %v4854 = vadd.f32 0.0, %v4853
        %4855 = vmatmul.f32.gmra.mxu0 %v4186
        %v4856 = vpop.f32.mrf.mxu0
        %v4857 = vadd.f32 0.0, %v4856
        %4858 = vmatmul.f32.gmra.mxu0 %v4187
        %v4859 = vpop.f32.mrf.mxu0
        %v4860 = vadd.f32 0.0, %v4859
        %4861 = vmatmul.f32.gmra.mxu0 %v4188
        %v4862 = vpop.f32.mrf.mxu0
        %v4863 = vadd.f32 0.0, %v4862
        %4864 = vmatmul.f32.gmra.mxu0 %v4189
        %v4865 = vpop.f32.mrf.mxu0
        %v4866 = vadd.f32 0.0, %v4865
        %4867 = vmatmul.f32.gmra.mxu0 %v4190
        %v4868 = vpop.f32.mrf.mxu0
        %v4869 = vadd.f32 0.0, %v4868
        %4870 = vmatmul.f32.gmra.mxu0 %v4191
        %v4871 = vpop.f32.mrf.mxu0
        %v4872 = vadd.f32 0.0, %v4871
        %4873 = vmatmul.f32.gmra.mxu0 %v4192
        %v4874 = vpop.f32.mrf.mxu0
        %v4875 = vadd.f32 0.0, %v4874
        %4876 = vmatmul.f32.gmra.mxu0 %v4193
        %v4877 = vpop.f32.mrf.mxu0
        %v4878 = vadd.f32 0.0, %v4877
        %4879 = vmatmul.f32.gmra.mxu0 %v4194
        %v4880 = vpop.f32.mrf.mxu0
        %v4881 = vadd.f32 0.0, %v4880
        %4882 = vmatmul.f32.gmra.mxu0 %v4195
        %v4883 = vpop.f32.mrf.mxu0
        %v4884 = vadd.f32 0.0, %v4883
        %4885 = vmatmul.f32.gmra.mxu0 %v4196
        %v4886 = vpop.f32.mrf.mxu0
        %v4887 = vadd.f32 0.0, %v4886
        %4888 = vmatmul.f32.gmra.mxu0 %v4197
        %v4889 = vpop.f32.mrf.mxu0
        %v4890 = vadd.f32 0.0, %v4889
        %4891 = vmatmul.f32.gmra.mxu0 %v4198
        %v4892 = vpop.f32.mrf.mxu0
        %v4893 = vadd.f32 0.0, %v4892
        %4894 = vmatmul.f32.gmra.mxu0 %v4199
        %v4895 = vpop.f32.mrf.mxu0
        %v4896 = vadd.f32 0.0, %v4895
        %4897 = vmatmul.f32.gmra.mxu0 %v4200
        %v4898 = vpop.f32.mrf.mxu0
        %v4899 = vadd.f32 0.0, %v4898
        %4900 = vmatmul.f32.gmra.mxu0 %v4201
        %v4901 = vpop.f32.mrf.mxu0
        %v4902 = vadd.f32 0.0, %v4901
        %4903 = vmatmul.f32.gmra.mxu0 %v4202
        %v4904 = vpop.f32.mrf.mxu0
        %v4905 = vadd.f32 0.0, %v4904
        %4906 = vmatmul.f32.gmra.mxu0 %v4203
        %v4907 = vpop.f32.mrf.mxu0
        %v4908 = vadd.f32 0.0, %v4907
        %4909 = vmatmul.f32.gmra.mxu0 %v4204
        %v4910 = vpop.f32.mrf.mxu0
        %v4911 = vadd.f32 0.0, %v4910
        %4912 = vmatmul.f32.gmra.mxu0 %v4205
        %v4913 = vpop.f32.mrf.mxu0
        %v4914 = vadd.f32 0.0, %v4913
        %4915 = vmatmul.f32.gmra.mxu0 %v4206
        %v4916 = vpop.f32.mrf.mxu0
        %v4917 = vadd.f32 0.0, %v4916
        %4918 = vmatmul.f32.gmra.mxu0 %v4207
        %v4919 = vpop.f32.mrf.mxu0
        %v4920 = vadd.f32 0.0, %v4919
        %4921 = vmatmul.f32.gmra.mxu0 %v4208
        %v4922 = vpop.f32.mrf.mxu0
        %v4923 = vadd.f32 0.0, %v4922
        %4924 = vmatmul.f32.gmra.mxu0 %v4209
        %v4925 = vpop.f32.mrf.mxu0
        %v4926 = vadd.f32 0.0, %v4925
        %4927 = vmatmul.f32.gmra.mxu0 %v4210
        %v4928 = vpop.f32.mrf.mxu0
        %v4929 = vadd.f32 0.0, %v4928
        %4930 = vmatmul.f32.gmra.mxu0 %v4211
        %v4931 = vpop.f32.mrf.mxu0
        %v4932 = vadd.f32 0.0, %v4931
        %4933 = vmatmul.f32.gmra.mxu0 %v4212
        %v4934 = vpop.f32.mrf.mxu0
        %v4935 = vadd.f32 0.0, %v4934
        %4936 = vmatmul.f32.gmra.mxu0 %v4213
        %v4937 = vpop.f32.mrf.mxu0
        %v4938 = vadd.f32 0.0, %v4937
        %4939 = vmatmul.f32.gmra.mxu0 %v4214
        %v4940 = vpop.f32.mrf.mxu0
        %v4941 = vadd.f32 0.0, %v4940
        %4942 = vmatmul.f32.gmra.mxu0 %v4215
        %v4943 = vpop.f32.mrf.mxu0
        %v4944 = vadd.f32 0.0, %v4943
        %4945 = vmatmul.f32.gmra.mxu0 %v4216
        %v4946 = vpop.f32.mrf.mxu0
        %v4947 = vadd.f32 0.0, %v4946
        %4948 = vmatmul.f32.gmra.mxu0 %v4217
        %v4949 = vpop.f32.mrf.mxu0
        %v4950 = vadd.f32 0.0, %v4949
        %4951 = vmatmul.f32.gmra.mxu0 %v4218
        %v4952 = vpop.f32.mrf.mxu0
        %v4953 = vadd.f32 0.0, %v4952
        %4954 = vmatmul.f32.gmra.mxu0 %v4219
        %v4955 = vpop.f32.mrf.mxu0
        %v4956 = vadd.f32 0.0, %v4955
        %4957 = vmatmul.f32.gmra.mxu0 %v4220
        %v4958 = vpop.f32.mrf.mxu0
        %v4959 = vadd.f32 0.0, %v4958
        %4960 = vmatmul.f32.gmra.mxu0 %v4221
        %v4961 = vpop.f32.mrf.mxu0
        %v4962 = vadd.f32 0.0, %v4961
        %4963 = vmatmul.f32.gmra.mxu0 %v4222
        %v4964 = vpop.f32.mrf.mxu0
        %v4965 = vadd.f32 0.0, %v4964
        %4966 = vmatmul.f32.gmra.mxu0 %v4223
        %v4967 = vpop.f32.mrf.mxu0
        %v4968 = vadd.f32 0.0, %v4967
        %4969 = vmatmul.f32.gmra.mxu0 %v4224
        %v4970 = vpop.f32.mrf.mxu0
        %v4971 = vadd.f32 0.0, %v4970
        %4972 = vmatmul.f32.gmra.mxu0 %v4225
        %v4973 = vpop.f32.mrf.mxu0
        %v4974 = vadd.f32 0.0, %v4973
        %4975 = vmatmul.f32.gmra.mxu0 %v4226
        %v4976 = vpop.f32.mrf.mxu0
        %v4977 = vadd.f32 0.0, %v4976
        %4978 = vmatmul.f32.gmra.mxu0 %v4227
        %v4979 = vpop.f32.mrf.mxu0
        %v4980 = vadd.f32 0.0, %v4979
        %4981 = vmatmul.f32.gmra.mxu0 %v4228
        %v4982 = vpop.f32.mrf.mxu0
        %v4983 = vadd.f32 0.0, %v4982
        %4984 = vmatmul.f32.gmra.mxu0 %v4229
        %v4985 = vpop.f32.mrf.mxu0
        %v4986 = vadd.f32 0.0, %v4985
        %4987 = vmatmul.f32.gmra.mxu0 %v4230
        %v4988 = vpop.f32.mrf.mxu0
        %v4989 = vadd.f32 0.0, %v4988
        %4990 = vmatmul.f32.gmra.mxu0 %v4231
        %v4991 = vpop.f32.mrf.mxu0
        %v4992 = vadd.f32 0.0, %v4991
        %4993 = vmatmul.f32.gmra.mxu0 %v4232
        %v4994 = vpop.f32.mrf.mxu0
        %v4995 = vadd.f32 0.0, %v4994
        %4996 = vmatmul.f32.gmra.mxu0 %v4233
        %v4997 = vpop.f32.mrf.mxu0
        %v4998 = vadd.f32 0.0, %v4997
        %4999 = vmatmul.f32.gmra.mxu0 %v4234
        %v5000 = vpop.f32.mrf.mxu0
        %v5001 = vadd.f32 0.0, %v5000
        %5002 = vmatmul.f32.gmra.mxu0 %v4235
        %v5003 = vpop.f32.mrf.mxu0
        %v5004 = vadd.f32 0.0, %v5003
        %5005 = vmatmul.f32.gmra.mxu0 %v4236
        %v5006 = vpop.f32.mrf.mxu0
        %v5007 = vadd.f32 0.0, %v5006
        %5008 = vmatmul.f32.gmra.mxu0 %v4237
        %v5009 = vpop.f32.mrf.mxu0
        %v5010 = vadd.f32 0.0, %v5009
        %5011 = vmatmul.f32.gmra.mxu0 %v4238
        %v5012 = vpop.f32.mrf.mxu0
        %v5013 = vadd.f32 0.0, %v5012
        %5014 = vmatmul.f32.gmra.mxu0 %v4239
        %v5015 = vpop.f32.mrf.mxu0
        %v5016 = vadd.f32 0.0, %v5015
        %5017 = vmatmul.f32.gmra.mxu0 %v4240
        %v5018 = vpop.f32.mrf.mxu0
        %v5019 = vadd.f32 0.0, %v5018
        %5020 = vmatmul.f32.gmra.mxu0 %v4241
        %v5021 = vpop.f32.mrf.mxu0
        %v5022 = vadd.f32 0.0, %v5021
        %5023 = vmatmul.f32.gmra.mxu0 %v4242
        %v5024 = vpop.f32.mrf.mxu0
        %v5025 = vadd.f32 0.0, %v5024
        %5026 = vmatmul.f32.gmra.mxu0 %v4243
        %v5027 = vpop.f32.mrf.mxu0
        %v5028 = vadd.f32 0.0, %v5027
        %5029 = vmatmul.f32.gmra.mxu0 %v4244
        %v5030 = vpop.f32.mrf.mxu0
        %v5031 = vadd.f32 0.0, %v5030
        %5032 = vmatmul.f32.gmra.mxu0 %v4245
        %v5033 = vpop.f32.mrf.mxu0
        %v5034 = vadd.f32 0.0, %v5033
        %5035 = vmatmul.f32.gmra.mxu0 %v4246
        %v5036 = vpop.f32.mrf.mxu0
        %v5037 = vadd.f32 0.0, %v5036
        %5038 = vmatmul.f32.gmra.mxu0 %v4247
        %v5039 = vpop.f32.mrf.mxu0
        %v5040 = vadd.f32 0.0, %v5039
        %5041 = vmatmul.f32.gmra.mxu0 %v4248
        %v5042 = vpop.f32.mrf.mxu0
        %v5043 = vadd.f32 0.0, %v5042
        %5044 = vmatmul.f32.gmra.mxu0 %v4249
        %v5045 = vpop.f32.mrf.mxu0
        %v5046 = vadd.f32 0.0, %v5045
        %5047 = vmatmul.f32.gmra.mxu0 %v4250
        %v5048 = vpop.f32.mrf.mxu0
        %v5049 = vadd.f32 0.0, %v5048
        %5050 = vmatmul.f32.gmra.mxu0 %v4251
        %v5051 = vpop.f32.mrf.mxu0
        %v5052 = vadd.f32 0.0, %v5051
        %5053 = vmatmul.f32.gmra.mxu0 %v4252
        %v5054 = vpop.f32.mrf.mxu0
        %v5055 = vadd.f32 0.0, %v5054
        %5056 = vmatmul.f32.gmra.mxu0 %v4253
        %v5057 = vpop.f32.mrf.mxu0
        %v5058 = vadd.f32 0.0, %v5057
        %5059 = vmatmul.f32.gmra.mxu0 %v4254
        %v5060 = vpop.f32.mrf.mxu0
        %v5061 = vadd.f32 0.0, %v5060
        %5062 = vmatmul.f32.gmra.mxu0 %v4255
        %v5063 = vpop.f32.mrf.mxu0
        %v5064 = vadd.f32 0.0, %v5063
        %5065 = vmatmul.f32.gmra.mxu0 %v4256
        %v5066 = vpop.f32.mrf.mxu0
        %v5067 = vadd.f32 0.0, %v5066
        %5068 = vmatmul.f32.gmra.mxu0 %v4257
        %v5069 = vpop.f32.mrf.mxu0
        %v5070 = vadd.f32 0.0, %v5069
        %5071 = vmatmul.f32.gmra.mxu0 %v4258
        %v5072 = vpop.f32.mrf.mxu0
        %v5073 = vadd.f32 0.0, %v5072
        %5074 = vmatmul.f32.gmra.mxu0 %v4259
        %v5075 = vpop.f32.mrf.mxu0
        %v5076 = vadd.f32 0.0, %v5075
        %5077 = vmatmul.f32.gmra.mxu0 %v4260
        %v5078 = vpop.f32.mrf.mxu0
        %v5079 = vadd.f32 0.0, %v5078
        %5080 = vmatmul.f32.gmra.mxu0 %v4261
        %v5081 = vpop.f32.mrf.mxu0
        %v5082 = vadd.f32 0.0, %v5081
        %5083 = vmatmul.f32.gmra.mxu0 %v4262
        %v5084 = vpop.f32.mrf.mxu0
        %v5085 = vadd.f32 0.0, %v5084
        %5086 = vmatmul.f32.gmra.mxu0 %v4263
        %v5087 = vpop.f32.mrf.mxu0
        %v5088 = vadd.f32 0.0, %v5087
        %5089 = vmatmul.f32.gmra.mxu0 %v4264
        %v5090 = vpop.f32.mrf.mxu0
        %v5091 = vadd.f32 0.0, %v5090
        %5092 = vmatmul.f32.gmra.mxu0 %v4265
        %v5093 = vpop.f32.mrf.mxu0
        %v5094 = vadd.f32 0.0, %v5093
        %5095 = vmatmul.f32.gmra.mxu0 %v4266
        %v5096 = vpop.f32.mrf.mxu0
        %v5097 = vadd.f32 0.0, %v5096
        %5098 = vmatmul.f32.gmra.mxu0 %v4267
        %v5099 = vpop.f32.mrf.mxu0
        %v5100 = vadd.f32 0.0, %v5099
        %5101 = vdwg.mxu0
        %v5102 = vxor.u32 %v4719, 2147483648
        %v5103 = vxor.u32 %v4722, 2147483648
        %v5104 = vxor.u32 %v4725, 2147483648
        %v5105 = vxor.u32 %v4728, 2147483648
        %v5106 = vxor.u32 %v4731, 2147483648
        %v5107 = vxor.u32 %v4734, 2147483648
        %v5108 = vxor.u32 %v4737, 2147483648
        %v5109 = vxor.u32 %v4740, 2147483648
        %v5110 = vxor.u32 %v4743, 2147483648
        %v5111 = vxor.u32 %v4746, 2147483648
        %v5112 = vxor.u32 %v4749, 2147483648
        %v5113 = vxor.u32 %v4752, 2147483648
        %v5114 = vxor.u32 %v4755, 2147483648
        %v5115 = vxor.u32 %v4758, 2147483648
        %v5116 = vxor.u32 %v4761, 2147483648
        %v5117 = vxor.u32 %v4764, 2147483648
        %v5118 = vxor.u32 %v4767, 2147483648
        %v5119 = vxor.u32 %v4770, 2147483648
        %v5120 = vxor.u32 %v4773, 2147483648
        %v5121 = vxor.u32 %v4776, 2147483648
        %v5122 = vxor.u32 %v4779, 2147483648
        %v5123 = vxor.u32 %v4782, 2147483648
        %v5124 = vxor.u32 %v4785, 2147483648
        %v5125 = vxor.u32 %v4788, 2147483648
        %v5126 = vxor.u32 %v4791, 2147483648
        %v5127 = vxor.u32 %v4794, 2147483648
        %v5128 = vxor.u32 %v4797, 2147483648
        %v5129 = vxor.u32 %v4800, 2147483648
        %v5130 = vxor.u32 %v4803, 2147483648
        %v5131 = vxor.u32 %v4806, 2147483648
        %v5132 = vxor.u32 %v4809, 2147483648
        %v5133 = vxor.u32 %v4812, 2147483648
        %v5134 = vxor.u32 %v4815, 2147483648
        %v5135 = vxor.u32 %v4818, 2147483648
        %v5136 = vxor.u32 %v4821, 2147483648
        %v5137 = vxor.u32 %v4824, 2147483648
        %v5138 = vxor.u32 %v4827, 2147483648
        %v5139 = vxor.u32 %v4830, 2147483648
        %v5140 = vxor.u32 %v4833, 2147483648
        %v5141 = vxor.u32 %v4836, 2147483648
        %v5142 = vxor.u32 %v4839, 2147483648
        %v5143 = vxor.u32 %v4842, 2147483648
        %v5144 = vxor.u32 %v4845, 2147483648
        %v5145 = vxor.u32 %v4848, 2147483648
        %v5146 = vxor.u32 %v4851, 2147483648
        %v5147 = vxor.u32 %v4854, 2147483648
        %v5148 = vxor.u32 %v4857, 2147483648
        %v5149 = vxor.u32 %v4860, 2147483648
        %v5150 = vxor.u32 %v4863, 2147483648
        %v5151 = vxor.u32 %v4866, 2147483648
        %v5152 = vxor.u32 %v4869, 2147483648
        %v5153 = vxor.u32 %v4872, 2147483648
        %v5154 = vxor.u32 %v4875, 2147483648
        %v5155 = vxor.u32 %v4878, 2147483648
        %v5156 = vxor.u32 %v4881, 2147483648
        %v5157 = vxor.u32 %v4884, 2147483648
        %v5158 = vxor.u32 %v4887, 2147483648
        %v5159 = vxor.u32 %v4890, 2147483648
        %v5160 = vxor.u32 %v4893, 2147483648
        %v5161 = vxor.u32 %v4896, 2147483648
        %v5162 = vxor.u32 %v4899, 2147483648
        %v5163 = vxor.u32 %v4902, 2147483648
        %v5164 = vxor.u32 %v4905, 2147483648
        %v5165 = vxor.u32 %v4908, 2147483648
        %v5166 = vxor.u32 %v4911, 2147483648
        %v5167 = vxor.u32 %v4914, 2147483648
        %v5168 = vxor.u32 %v4917, 2147483648
        %v5169 = vxor.u32 %v4920, 2147483648
        %v5170 = vxor.u32 %v4923, 2147483648
        %v5171 = vxor.u32 %v4926, 2147483648
        %v5172 = vxor.u32 %v4929, 2147483648
        %v5173 = vxor.u32 %v4932, 2147483648
        %v5174 = vxor.u32 %v4935, 2147483648
        %v5175 = vxor.u32 %v4938, 2147483648
        %v5176 = vxor.u32 %v4941, 2147483648
        %v5177 = vxor.u32 %v4944, 2147483648
        %v5178 = vxor.u32 %v4947, 2147483648
        %v5179 = vxor.u32 %v4950, 2147483648
        %v5180 = vxor.u32 %v4953, 2147483648
        %v5181 = vxor.u32 %v4956, 2147483648
        %v5182 = vxor.u32 %v4959, 2147483648
        %v5183 = vxor.u32 %v4962, 2147483648
        %v5184 = vxor.u32 %v4965, 2147483648
        %v5185 = vxor.u32 %v4968, 2147483648
        %v5186 = vxor.u32 %v4971, 2147483648
        %v5187 = vxor.u32 %v4974, 2147483648
        %v5188 = vxor.u32 %v4977, 2147483648
        %v5189 = vxor.u32 %v4980, 2147483648
        %v5190 = vxor.u32 %v4983, 2147483648
        %v5191 = vxor.u32 %v4986, 2147483648
        %v5192 = vxor.u32 %v4989, 2147483648
        %v5193 = vxor.u32 %v4992, 2147483648
        %v5194 = vxor.u32 %v4995, 2147483648
        %v5195 = vxor.u32 %v4998, 2147483648
        %v5196 = vxor.u32 %v5001, 2147483648
        %v5197 = vxor.u32 %v5004, 2147483648
        %v5198 = vxor.u32 %v5007, 2147483648
        %v5199 = vxor.u32 %v5010, 2147483648
        %v5200 = vxor.u32 %v5013, 2147483648
        %v5201 = vxor.u32 %v5016, 2147483648
        %v5202 = vxor.u32 %v5019, 2147483648
        %v5203 = vxor.u32 %v5022, 2147483648
        %v5204 = vxor.u32 %v5025, 2147483648
        %v5205 = vxor.u32 %v5028, 2147483648
        %v5206 = vxor.u32 %v5031, 2147483648
        %v5207 = vxor.u32 %v5034, 2147483648
        %v5208 = vxor.u32 %v5037, 2147483648
        %v5209 = vxor.u32 %v5040, 2147483648
        %v5210 = vxor.u32 %v5043, 2147483648
        %v5211 = vxor.u32 %v5046, 2147483648
        %v5212 = vxor.u32 %v5049, 2147483648
        %v5213 = vxor.u32 %v5052, 2147483648
        %v5214 = vxor.u32 %v5055, 2147483648
        %v5215 = vxor.u32 %v5058, 2147483648
        %v5216 = vxor.u32 %v5061, 2147483648
        %v5217 = vxor.u32 %v5064, 2147483648
        %v5218 = vxor.u32 %v5067, 2147483648
        %v5219 = vxor.u32 %v5070, 2147483648
        %v5220 = vxor.u32 %v5073, 2147483648
        %v5221 = vxor.u32 %v5076, 2147483648
        %v5222 = vxor.u32 %v5079, 2147483648
        %v5223 = vxor.u32 %v5082, 2147483648
        %v5224 = vxor.u32 %v5085, 2147483648
        %v5225 = vxor.u32 %v5088, 2147483648
        %v5226 = vxor.u32 %v5091, 2147483648
        %v5227 = vxor.u32 %v5094, 2147483648
        %v5228 = vxor.u32 %v5097, 2147483648
        %v5229 = vxor.u32 %v5100, 2147483648
        %v5230 = vmul.f32 %v5102, 1.442695
        %v5231 = vpow.pop %v5230
        %v5232 = vmul.f32 %v5103, 1.442695
        %v5233 = vpow.pop %v5232
        %v5234 = vmul.f32 %v5104, 1.442695
        %v5235 = vpow.pop %v5234
        %v5236 = vmul.f32 %v5105, 1.442695
        %v5237 = vpow.pop %v5236
        %v5238 = vmul.f32 %v5106, 1.442695
        %v5239 = vpow.pop %v5238
        %v5240 = vmul.f32 %v5107, 1.442695
        %v5241 = vpow.pop %v5240
        %v5242 = vmul.f32 %v5108, 1.442695
        %v5243 = vpow.pop %v5242
        %v5244 = vmul.f32 %v5109, 1.442695
        %v5245 = vpow.pop %v5244
        %v5246 = vmul.f32 %v5110, 1.442695
        %v5247 = vpow.pop %v5246
        %v5248 = vmul.f32 %v5111, 1.442695
        %v5249 = vpow.pop %v5248
        %v5250 = vmul.f32 %v5112, 1.442695
        %v5251 = vpow.pop %v5250
        %v5252 = vmul.f32 %v5113, 1.442695
        %v5253 = vpow.pop %v5252
        %v5254 = vmul.f32 %v5114, 1.442695
        %v5255 = vpow.pop %v5254
        %v5256 = vmul.f32 %v5115, 1.442695
        %v5257 = vpow.pop %v5256
        %v5258 = vmul.f32 %v5116, 1.442695
        %v5259 = vpow.pop %v5258
        %v5260 = vmul.f32 %v5117, 1.442695
        %v5261 = vpow.pop %v5260
        %v5262 = vmul.f32 %v5118, 1.442695
        %v5263 = vpow.pop %v5262
        %v5264 = vmul.f32 %v5119, 1.442695
        %v5265 = vpow.pop %v5264
        %v5266 = vmul.f32 %v5120, 1.442695
        %v5267 = vpow.pop %v5266
        %v5268 = vmul.f32 %v5121, 1.442695
        %v5269 = vpow.pop %v5268
        %v5270 = vmul.f32 %v5122, 1.442695
        %v5271 = vpow.pop %v5270
        %v5272 = vmul.f32 %v5123, 1.442695
        %v5273 = vpow.pop %v5272
        %v5274 = vmul.f32 %v5124, 1.442695
        %v5275 = vpow.pop %v5274
        %v5276 = vmul.f32 %v5125, 1.442695
        %v5277 = vpow.pop %v5276
        %v5278 = vmul.f32 %v5126, 1.442695
        %v5279 = vpow.pop %v5278
        %v5280 = vmul.f32 %v5127, 1.442695
        %v5281 = vpow.pop %v5280
        %v5282 = vmul.f32 %v5128, 1.442695
        %v5283 = vpow.pop %v5282
        %v5284 = vmul.f32 %v5129, 1.442695
        %v5285 = vpow.pop %v5284
        %v5286 = vmul.f32 %v5130, 1.442695
        %v5287 = vpow.pop %v5286
        %v5288 = vmul.f32 %v5131, 1.442695
        %v5289 = vpow.pop %v5288
        %v5290 = vmul.f32 %v5132, 1.442695
        %v5291 = vpow.pop %v5290
        %v5292 = vmul.f32 %v5133, 1.442695
        %v5293 = vpow.pop %v5292
        %v5294 = vmul.f32 %v5134, 1.442695
        %v5295 = vpow.pop %v5294
        %v5296 = vmul.f32 %v5135, 1.442695
        %v5297 = vpow.pop %v5296
        %v5298 = vmul.f32 %v5136, 1.442695
        %v5299 = vpow.pop %v5298
        %v5300 = vmul.f32 %v5137, 1.442695
        %v5301 = vpow.pop %v5300
        %v5302 = vmul.f32 %v5138, 1.442695
        %v5303 = vpow.pop %v5302
        %v5304 = vmul.f32 %v5139, 1.442695
        %v5305 = vpow.pop %v5304
        %v5306 = vmul.f32 %v5140, 1.442695
        %v5307 = vpow.pop %v5306
        %v5308 = vmul.f32 %v5141, 1.442695
        %v5309 = vpow.pop %v5308
        %v5310 = vmul.f32 %v5142, 1.442695
        %v5311 = vpow.pop %v5310
        %v5312 = vmul.f32 %v5143, 1.442695
        %v5313 = vpow.pop %v5312
        %v5314 = vmul.f32 %v5144, 1.442695
        %v5315 = vpow.pop %v5314
        %v5316 = vmul.f32 %v5145, 1.442695
        %v5317 = vpow.pop %v5316
        %v5318 = vmul.f32 %v5146, 1.442695
        %v5319 = vpow.pop %v5318
        %v5320 = vmul.f32 %v5147, 1.442695
        %v5321 = vpow.pop %v5320
        %v5322 = vmul.f32 %v5148, 1.442695
        %v5323 = vpow.pop %v5322
        %v5324 = vmul.f32 %v5149, 1.442695
        %v5325 = vpow.pop %v5324
        %v5326 = vmul.f32 %v5150, 1.442695
        %v5327 = vpow.pop %v5326
        %v5328 = vmul.f32 %v5151, 1.442695
        %v5329 = vpow.pop %v5328
        %v5330 = vmul.f32 %v5152, 1.442695
        %v5331 = vpow.pop %v5330
        %v5332 = vmul.f32 %v5153, 1.442695
        %v5333 = vpow.pop %v5332
        %v5334 = vmul.f32 %v5154, 1.442695
        %v5335 = vpow.pop %v5334
        %v5336 = vmul.f32 %v5155, 1.442695
        %v5337 = vpow.pop %v5336
        %v5338 = vmul.f32 %v5156, 1.442695
        %v5339 = vpow.pop %v5338
        %v5340 = vmul.f32 %v5157, 1.442695
        %v5341 = vpow.pop %v5340
        %v5342 = vmul.f32 %v5158, 1.442695
        %v5343 = vpow.pop %v5342
        %v5344 = vmul.f32 %v5159, 1.442695
        %v5345 = vpow.pop %v5344
        %v5346 = vmul.f32 %v5160, 1.442695
        %v5347 = vpow.pop %v5346
        %v5348 = vmul.f32 %v5161, 1.442695
        %v5349 = vpow.pop %v5348
        %v5350 = vmul.f32 %v5162, 1.442695
        %v5351 = vpow.pop %v5350
        %v5352 = vmul.f32 %v5163, 1.442695
        %v5353 = vpow.pop %v5352
        %v5354 = vmul.f32 %v5164, 1.442695
        %v5355 = vpow.pop %v5354
        %v5356 = vmul.f32 %v5165, 1.442695
        %v5357 = vpow.pop %v5356
        %v5358 = vmul.f32 %v5166, 1.442695
        %v5359 = vpow.pop %v5358
        %v5360 = vmul.f32 %v5167, 1.442695
        %v5361 = vpow.pop %v5360
        %v5362 = vmul.f32 %v5168, 1.442695
        %v5363 = vpow.pop %v5362
        %v5364 = vmul.f32 %v5169, 1.442695
        %v5365 = vpow.pop %v5364
        %v5366 = vmul.f32 %v5170, 1.442695
        %v5367 = vpow.pop %v5366
        %v5368 = vmul.f32 %v5171, 1.442695
        %v5369 = vpow.pop %v5368
        %v5370 = vmul.f32 %v5172, 1.442695
        %v5371 = vpow.pop %v5370
        %v5372 = vmul.f32 %v5173, 1.442695
        %v5373 = vpow.pop %v5372
        %v5374 = vmul.f32 %v5174, 1.442695
        %v5375 = vpow.pop %v5374
        %v5376 = vmul.f32 %v5175, 1.442695
        %v5377 = vpow.pop %v5376
        %v5378 = vmul.f32 %v5176, 1.442695
        %v5379 = vpow.pop %v5378
        %v5380 = vmul.f32 %v5177, 1.442695
        %v5381 = vpow.pop %v5380
        %v5382 = vmul.f32 %v5178, 1.442695
        %v5383 = vpow.pop %v5382
        %v5384 = vmul.f32 %v5179, 1.442695
        %v5385 = vpow.pop %v5384
        %v5386 = vmul.f32 %v5180, 1.442695
        %v5387 = vpow.pop %v5386
        %v5388 = vmul.f32 %v5181, 1.442695
        %v5389 = vpow.pop %v5388
        %v5390 = vmul.f32 %v5182, 1.442695
        %v5391 = vpow.pop %v5390
        %v5392 = vmul.f32 %v5183, 1.442695
        %v5393 = vpow.pop %v5392
        %v5394 = vmul.f32 %v5184, 1.442695
        %v5395 = vpow.pop %v5394
        %v5396 = vmul.f32 %v5185, 1.442695
        %v5397 = vpow.pop %v5396
        %v5398 = vmul.f32 %v5186, 1.442695
        %v5399 = vpow.pop %v5398
        %v5400 = vmul.f32 %v5187, 1.442695
        %v5401 = vpow.pop %v5400
        %v5402 = vmul.f32 %v5188, 1.442695
        %v5403 = vpow.pop %v5402
        %v5404 = vmul.f32 %v5189, 1.442695
        %v5405 = vpow.pop %v5404
        %v5406 = vmul.f32 %v5190, 1.442695
        %v5407 = vpow.pop %v5406
        %v5408 = vmul.f32 %v5191, 1.442695
        %v5409 = vpow.pop %v5408
        %v5410 = vmul.f32 %v5192, 1.442695
        %v5411 = vpow.pop %v5410
        %v5412 = vmul.f32 %v5193, 1.442695
        %v5413 = vpow.pop %v5412
        %v5414 = vmul.f32 %v5194, 1.442695
        %v5415 = vpow.pop %v5414
        %v5416 = vmul.f32 %v5195, 1.442695
        %v5417 = vpow.pop %v5416
        %v5418 = vmul.f32 %v5196, 1.442695
        %v5419 = vpow.pop %v5418
        %v5420 = vmul.f32 %v5197, 1.442695
        %v5421 = vpow.pop %v5420
        %v5422 = vmul.f32 %v5198, 1.442695
        %v5423 = vpow.pop %v5422
        %v5424 = vmul.f32 %v5199, 1.442695
        %v5425 = vpow.pop %v5424
        %v5426 = vmul.f32 %v5200, 1.442695
        %v5427 = vpow.pop %v5426
        %v5428 = vmul.f32 %v5201, 1.442695
        %v5429 = vpow.pop %v5428
        %v5430 = vmul.f32 %v5202, 1.442695
        %v5431 = vpow.pop %v5430
        %v5432 = vmul.f32 %v5203, 1.442695
        %v5433 = vpow.pop %v5432
        %v5434 = vmul.f32 %v5204, 1.442695
        %v5435 = vpow.pop %v5434
        %v5436 = vmul.f32 %v5205, 1.442695
        %v5437 = vpow.pop %v5436
        %v5438 = vmul.f32 %v5206, 1.442695
        %v5439 = vpow.pop %v5438
        %v5440 = vmul.f32 %v5207, 1.442695
        %v5441 = vpow.pop %v5440
        %v5442 = vmul.f32 %v5208, 1.442695
        %v5443 = vpow.pop %v5442
        %v5444 = vmul.f32 %v5209, 1.442695
        %v5445 = vpow.pop %v5444
        %v5446 = vmul.f32 %v5210, 1.442695
        %v5447 = vpow.pop %v5446
        %v5448 = vmul.f32 %v5211, 1.442695
        %v5449 = vpow.pop %v5448
        %v5450 = vmul.f32 %v5212, 1.442695
        %v5451 = vpow.pop %v5450
        %v5452 = vmul.f32 %v5213, 1.442695
        %v5453 = vpow.pop %v5452
        %v5454 = vmul.f32 %v5214, 1.442695
        %v5455 = vpow.pop %v5454
        %v5456 = vmul.f32 %v5215, 1.442695
        %v5457 = vpow.pop %v5456
        %v5458 = vmul.f32 %v5216, 1.442695
        %v5459 = vpow.pop %v5458
        %v5460 = vmul.f32 %v5217, 1.442695
        %v5461 = vpow.pop %v5460
        %v5462 = vmul.f32 %v5218, 1.442695
        %v5463 = vpow.pop %v5462
        %v5464 = vmul.f32 %v5219, 1.442695
        %v5465 = vpow.pop %v5464
        %v5466 = vmul.f32 %v5220, 1.442695
        %v5467 = vpow.pop %v5466
        %v5468 = vmul.f32 %v5221, 1.442695
        %v5469 = vpow.pop %v5468
        %v5470 = vmul.f32 %v5222, 1.442695
        %v5471 = vpow.pop %v5470
        %v5472 = vmul.f32 %v5223, 1.442695
        %v5473 = vpow.pop %v5472
        %v5474 = vmul.f32 %v5224, 1.442695
        %v5475 = vpow.pop %v5474
        %v5476 = vmul.f32 %v5225, 1.442695
        %v5477 = vpow.pop %v5476
        %v5478 = vmul.f32 %v5226, 1.442695
        %v5479 = vpow.pop %v5478
        %v5480 = vmul.f32 %v5227, 1.442695
        %v5481 = vpow.pop %v5480
        %v5482 = vmul.f32 %v5228, 1.442695
        %v5483 = vpow.pop %v5482
        %v5484 = vmul.f32 %v5229, 1.442695
        %v5485 = vpow.pop %v5484
        %v5486 = vadd.f32 %v5231, 1.0
        %v5487 = vadd.f32 %v5233, 1.0
        %v5488 = vadd.f32 %v5235, 1.0
        %v5489 = vadd.f32 %v5237, 1.0
        %v5490 = vadd.f32 %v5239, 1.0
        %v5491 = vadd.f32 %v5241, 1.0
        %v5492 = vadd.f32 %v5243, 1.0
        %v5493 = vadd.f32 %v5245, 1.0
        %v5494 = vadd.f32 %v5247, 1.0
        %v5495 = vadd.f32 %v5249, 1.0
        %v5496 = vadd.f32 %v5251, 1.0
        %v5497 = vadd.f32 %v5253, 1.0
        %v5498 = vadd.f32 %v5255, 1.0
        %v5499 = vadd.f32 %v5257, 1.0
        %v5500 = vadd.f32 %v5259, 1.0
        %v5501 = vadd.f32 %v5261, 1.0
        %v5502 = vadd.f32 %v5263, 1.0
        %v5503 = vadd.f32 %v5265, 1.0
        %v5504 = vadd.f32 %v5267, 1.0
        %v5505 = vadd.f32 %v5269, 1.0
        %v5506 = vadd.f32 %v5271, 1.0
        %v5507 = vadd.f32 %v5273, 1.0
        %v5508 = vadd.f32 %v5275, 1.0
        %v5509 = vadd.f32 %v5277, 1.0
        %v5510 = vadd.f32 %v5279, 1.0
        %v5511 = vadd.f32 %v5281, 1.0
        %v5512 = vadd.f32 %v5283, 1.0
        %v5513 = vadd.f32 %v5285, 1.0
        %v5514 = vadd.f32 %v5287, 1.0
        %v5515 = vadd.f32 %v5289, 1.0
        %v5516 = vadd.f32 %v5291, 1.0
        %v5517 = vadd.f32 %v5293, 1.0
        %v5518 = vadd.f32 %v5295, 1.0
        %v5519 = vadd.f32 %v5297, 1.0
        %v5520 = vadd.f32 %v5299, 1.0
        %v5521 = vadd.f32 %v5301, 1.0
        %v5522 = vadd.f32 %v5303, 1.0
        %v5523 = vadd.f32 %v5305, 1.0
        %v5524 = vadd.f32 %v5307, 1.0
        %v5525 = vadd.f32 %v5309, 1.0
        %v5526 = vadd.f32 %v5311, 1.0
        %v5527 = vadd.f32 %v5313, 1.0
        %v5528 = vadd.f32 %v5315, 1.0
        %v5529 = vadd.f32 %v5317, 1.0
        %v5530 = vadd.f32 %v5319, 1.0
        %v5531 = vadd.f32 %v5321, 1.0
        %v5532 = vadd.f32 %v5323, 1.0
        %v5533 = vadd.f32 %v5325, 1.0
        %v5534 = vadd.f32 %v5327, 1.0
        %v5535 = vadd.f32 %v5329, 1.0
        %v5536 = vadd.f32 %v5331, 1.0
        %v5537 = vadd.f32 %v5333, 1.0
        %v5538 = vadd.f32 %v5335, 1.0
        %v5539 = vadd.f32 %v5337, 1.0
        %v5540 = vadd.f32 %v5339, 1.0
        %v5541 = vadd.f32 %v5341, 1.0
        %v5542 = vadd.f32 %v5343, 1.0
        %v5543 = vadd.f32 %v5345, 1.0
        %v5544 = vadd.f32 %v5347, 1.0
        %v5545 = vadd.f32 %v5349, 1.0
        %v5546 = vadd.f32 %v5351, 1.0
        %v5547 = vadd.f32 %v5353, 1.0
        %v5548 = vadd.f32 %v5355, 1.0
        %v5549 = vadd.f32 %v5357, 1.0
        %v5550 = vadd.f32 %v5359, 1.0
        %v5551 = vadd.f32 %v5361, 1.0
        %v5552 = vadd.f32 %v5363, 1.0
        %v5553 = vadd.f32 %v5365, 1.0
        %v5554 = vadd.f32 %v5367, 1.0
        %v5555 = vadd.f32 %v5369, 1.0
        %v5556 = vadd.f32 %v5371, 1.0
        %v5557 = vadd.f32 %v5373, 1.0
        %v5558 = vadd.f32 %v5375, 1.0
        %v5559 = vadd.f32 %v5377, 1.0
        %v5560 = vadd.f32 %v5379, 1.0
        %v5561 = vadd.f32 %v5381, 1.0
        %v5562 = vadd.f32 %v5383, 1.0
        %v5563 = vadd.f32 %v5385, 1.0
        %v5564 = vadd.f32 %v5387, 1.0
        %v5565 = vadd.f32 %v5389, 1.0
        %v5566 = vadd.f32 %v5391, 1.0
        %v5567 = vadd.f32 %v5393, 1.0
        %v5568 = vadd.f32 %v5395, 1.0
        %v5569 = vadd.f32 %v5397, 1.0
        %v5570 = vadd.f32 %v5399, 1.0
        %v5571 = vadd.f32 %v5401, 1.0
        %v5572 = vadd.f32 %v5403, 1.0
        %v5573 = vadd.f32 %v5405, 1.0
        %v5574 = vadd.f32 %v5407, 1.0
        %v5575 = vadd.f32 %v5409, 1.0
        %v5576 = vadd.f32 %v5411, 1.0
        %v5577 = vadd.f32 %v5413, 1.0
        %v5578 = vadd.f32 %v5415, 1.0
        %v5579 = vadd.f32 %v5417, 1.0
        %v5580 = vadd.f32 %v5419, 1.0
        %v5581 = vadd.f32 %v5421, 1.0
        %v5582 = vadd.f32 %v5423, 1.0
        %v5583 = vadd.f32 %v5425, 1.0
        %v5584 = vadd.f32 %v5427, 1.0
        %v5585 = vadd.f32 %v5429, 1.0
        %v5586 = vadd.f32 %v5431, 1.0
        %v5587 = vadd.f32 %v5433, 1.0
        %v5588 = vadd.f32 %v5435, 1.0
        %v5589 = vadd.f32 %v5437, 1.0
        %v5590 = vadd.f32 %v5439, 1.0
        %v5591 = vadd.f32 %v5441, 1.0
        %v5592 = vadd.f32 %v5443, 1.0
        %v5593 = vadd.f32 %v5445, 1.0
        %v5594 = vadd.f32 %v5447, 1.0
        %v5595 = vadd.f32 %v5449, 1.0
        %v5596 = vadd.f32 %v5451, 1.0
        %v5597 = vadd.f32 %v5453, 1.0
        %v5598 = vadd.f32 %v5455, 1.0
        %v5599 = vadd.f32 %v5457, 1.0
        %v5600 = vadd.f32 %v5459, 1.0
        %v5601 = vadd.f32 %v5461, 1.0
        %v5602 = vadd.f32 %v5463, 1.0
        %v5603 = vadd.f32 %v5465, 1.0
        %v5604 = vadd.f32 %v5467, 1.0
        %v5605 = vadd.f32 %v5469, 1.0
        %v5606 = vadd.f32 %v5471, 1.0
        %v5607 = vadd.f32 %v5473, 1.0
        %v5608 = vadd.f32 %v5475, 1.0
        %v5609 = vadd.f32 %v5477, 1.0
        %v5610 = vadd.f32 %v5479, 1.0
        %v5611 = vadd.f32 %v5481, 1.0
        %v5612 = vadd.f32 %v5483, 1.0
        %v5613 = vadd.f32 %v5485, 1.0
        %v5614 = vrcp.pop %v5486
        %v5615 = vmul.f32 %v5486, %v5614
        %v5616 = vsub.f32 1.0, %v5615
        %v5617 = vmul.f32 %v5614, %v5616
        %v5618 = vadd.f32 %v5614, %v5617
        %vm5619 = vweird.f32 %v5486
        %vm5620 = vweird.f32 %v5614
        %vm5621 = vmor %vm5619, %vm5620
        %v5622 = vsel %vm5621, %v5614, %v5618
        %v5623 = vand.u32 2147483647, %v5486
        %vm5624 = vcmp.eq.f32.partialorder %v5623, 8.507059e+37
        %v5625 = vand.u32 %v5486, 2147483648
        %v5626 = vor.u32 1.1754944e-38, %v5625
        %v5627 = vsel %vm5624, %v5626, %v5622
        %v5628 = vmul.f32 1.0, %v5627
        %v5629 = vrcp.pop %v5487
        %v5630 = vmul.f32 %v5487, %v5629
        %v5631 = vsub.f32 1.0, %v5630
        %v5632 = vmul.f32 %v5629, %v5631
        %v5633 = vadd.f32 %v5629, %v5632
        %vm5634 = vweird.f32 %v5487
        %vm5635 = vweird.f32 %v5629
        %vm5636 = vmor %vm5634, %vm5635
        %v5637 = vsel %vm5636, %v5629, %v5633
        %v5638 = vand.u32 2147483647, %v5487
        %vm5639 = vcmp.eq.f32.partialorder %v5638, 8.507059e+37
        %v5640 = vand.u32 %v5487, 2147483648
        %v5641 = vor.u32 1.1754944e-38, %v5640
        %v5642 = vsel %vm5639, %v5641, %v5637
        %v5643 = vmul.f32 1.0, %v5642
        %v5644 = vrcp.pop %v5488
        %v5645 = vmul.f32 %v5488, %v5644
        %v5646 = vsub.f32 1.0, %v5645
        %v5647 = vmul.f32 %v5644, %v5646
        %v5648 = vadd.f32 %v5644, %v5647
        %vm5649 = vweird.f32 %v5488
        %vm5650 = vweird.f32 %v5644
        %vm5651 = vmor %vm5649, %vm5650
        %v5652 = vsel %vm5651, %v5644, %v5648
        %v5653 = vand.u32 2147483647, %v5488
        %vm5654 = vcmp.eq.f32.partialorder %v5653, 8.507059e+37
        %v5655 = vand.u32 %v5488, 2147483648
        %v5656 = vor.u32 1.1754944e-38, %v5655
        %v5657 = vsel %vm5654, %v5656, %v5652
        %v5658 = vmul.f32 1.0, %v5657
        %v5659 = vrcp.pop %v5489
        %v5660 = vmul.f32 %v5489, %v5659
        %v5661 = vsub.f32 1.0, %v5660
        %v5662 = vmul.f32 %v5659, %v5661
        %v5663 = vadd.f32 %v5659, %v5662
        %vm5664 = vweird.f32 %v5489
        %vm5665 = vweird.f32 %v5659
        %vm5666 = vmor %vm5664, %vm5665
        %v5667 = vsel %vm5666, %v5659, %v5663
        %v5668 = vand.u32 2147483647, %v5489
        %vm5669 = vcmp.eq.f32.partialorder %v5668, 8.507059e+37
        %v5670 = vand.u32 %v5489, 2147483648
        %v5671 = vor.u32 1.1754944e-38, %v5670
        %v5672 = vsel %vm5669, %v5671, %v5667
        %v5673 = vmul.f32 1.0, %v5672
        %v5674 = vrcp.pop %v5490
        %v5675 = vmul.f32 %v5490, %v5674
        %v5676 = vsub.f32 1.0, %v5675
        %v5677 = vmul.f32 %v5674, %v5676
        %v5678 = vadd.f32 %v5674, %v5677
        %vm5679 = vweird.f32 %v5490
        %vm5680 = vweird.f32 %v5674
        %vm5681 = vmor %vm5679, %vm5680
        %v5682 = vsel %vm5681, %v5674, %v5678
        %v5683 = vand.u32 2147483647, %v5490
        %vm5684 = vcmp.eq.f32.partialorder %v5683, 8.507059e+37
        %v5685 = vand.u32 %v5490, 2147483648
        %v5686 = vor.u32 1.1754944e-38, %v5685
        %v5687 = vsel %vm5684, %v5686, %v5682
        %v5688 = vmul.f32 1.0, %v5687
        %v5689 = vrcp.pop %v5491
        %v5690 = vmul.f32 %v5491, %v5689
        %v5691 = vsub.f32 1.0, %v5690
        %v5692 = vmul.f32 %v5689, %v5691
        %v5693 = vadd.f32 %v5689, %v5692
        %vm5694 = vweird.f32 %v5491
        %vm5695 = vweird.f32 %v5689
        %vm5696 = vmor %vm5694, %vm5695
        %v5697 = vsel %vm5696, %v5689, %v5693
        %v5698 = vand.u32 2147483647, %v5491
        %vm5699 = vcmp.eq.f32.partialorder %v5698, 8.507059e+37
        %v5700 = vand.u32 %v5491, 2147483648
        %v5701 = vor.u32 1.1754944e-38, %v5700
        %v5702 = vsel %vm5699, %v5701, %v5697
        %v5703 = vmul.f32 1.0, %v5702
        %v5704 = vrcp.pop %v5492
        %v5705 = vmul.f32 %v5492, %v5704
        %v5706 = vsub.f32 1.0, %v5705
        %v5707 = vmul.f32 %v5704, %v5706
        %v5708 = vadd.f32 %v5704, %v5707
        %vm5709 = vweird.f32 %v5492
        %vm5710 = vweird.f32 %v5704
        %vm5711 = vmor %vm5709, %vm5710
        %v5712 = vsel %vm5711, %v5704, %v5708
        %v5713 = vand.u32 2147483647, %v5492
        %vm5714 = vcmp.eq.f32.partialorder %v5713, 8.507059e+37
        %v5715 = vand.u32 %v5492, 2147483648
        %v5716 = vor.u32 1.1754944e-38, %v5715
        %v5717 = vsel %vm5714, %v5716, %v5712
        %v5718 = vmul.f32 1.0, %v5717
        %v5719 = vrcp.pop %v5493
        %v5720 = vmul.f32 %v5493, %v5719
        %v5721 = vsub.f32 1.0, %v5720
        %v5722 = vmul.f32 %v5719, %v5721
        %v5723 = vadd.f32 %v5719, %v5722
        %vm5724 = vweird.f32 %v5493
        %vm5725 = vweird.f32 %v5719
        %vm5726 = vmor %vm5724, %vm5725
        %v5727 = vsel %vm5726, %v5719, %v5723
        %v5728 = vand.u32 2147483647, %v5493
        %vm5729 = vcmp.eq.f32.partialorder %v5728, 8.507059e+37
        %v5730 = vand.u32 %v5493, 2147483648
        %v5731 = vor.u32 1.1754944e-38, %v5730
        %v5732 = vsel %vm5729, %v5731, %v5727
        %v5733 = vmul.f32 1.0, %v5732
        %v5734 = vrcp.pop %v5494
        %v5735 = vmul.f32 %v5494, %v5734
        %v5736 = vsub.f32 1.0, %v5735
        %v5737 = vmul.f32 %v5734, %v5736
        %v5738 = vadd.f32 %v5734, %v5737
        %vm5739 = vweird.f32 %v5494
        %vm5740 = vweird.f32 %v5734
        %vm5741 = vmor %vm5739, %vm5740
        %v5742 = vsel %vm5741, %v5734, %v5738
        %v5743 = vand.u32 2147483647, %v5494
        %vm5744 = vcmp.eq.f32.partialorder %v5743, 8.507059e+37
        %v5745 = vand.u32 %v5494, 2147483648
        %v5746 = vor.u32 1.1754944e-38, %v5745
        %v5747 = vsel %vm5744, %v5746, %v5742
        %v5748 = vmul.f32 1.0, %v5747
        %v5749 = vrcp.pop %v5495
        %v5750 = vmul.f32 %v5495, %v5749
        %v5751 = vsub.f32 1.0, %v5750
        %v5752 = vmul.f32 %v5749, %v5751
        %v5753 = vadd.f32 %v5749, %v5752
        %vm5754 = vweird.f32 %v5495
        %vm5755 = vweird.f32 %v5749
        %vm5756 = vmor %vm5754, %vm5755
        %v5757 = vsel %vm5756, %v5749, %v5753
        %v5758 = vand.u32 2147483647, %v5495
        %vm5759 = vcmp.eq.f32.partialorder %v5758, 8.507059e+37
        %v5760 = vand.u32 %v5495, 2147483648
        %v5761 = vor.u32 1.1754944e-38, %v5760
        %v5762 = vsel %vm5759, %v5761, %v5757
        %v5763 = vmul.f32 1.0, %v5762
        %v5764 = vrcp.pop %v5496
        %v5765 = vmul.f32 %v5496, %v5764
        %v5766 = vsub.f32 1.0, %v5765
        %v5767 = vmul.f32 %v5764, %v5766
        %v5768 = vadd.f32 %v5764, %v5767
        %vm5769 = vweird.f32 %v5496
        %vm5770 = vweird.f32 %v5764
        %vm5771 = vmor %vm5769, %vm5770
        %v5772 = vsel %vm5771, %v5764, %v5768
        %v5773 = vand.u32 2147483647, %v5496
        %vm5774 = vcmp.eq.f32.partialorder %v5773, 8.507059e+37
        %v5775 = vand.u32 %v5496, 2147483648
        %v5776 = vor.u32 1.1754944e-38, %v5775
        %v5777 = vsel %vm5774, %v5776, %v5772
        %v5778 = vmul.f32 1.0, %v5777
        %v5779 = vrcp.pop %v5497
        %v5780 = vmul.f32 %v5497, %v5779
        %v5781 = vsub.f32 1.0, %v5780
        %v5782 = vmul.f32 %v5779, %v5781
        %v5783 = vadd.f32 %v5779, %v5782
        %vm5784 = vweird.f32 %v5497
        %vm5785 = vweird.f32 %v5779
        %vm5786 = vmor %vm5784, %vm5785
        %v5787 = vsel %vm5786, %v5779, %v5783
        %v5788 = vand.u32 2147483647, %v5497
        %vm5789 = vcmp.eq.f32.partialorder %v5788, 8.507059e+37
        %v5790 = vand.u32 %v5497, 2147483648
        %v5791 = vor.u32 1.1754944e-38, %v5790
        %v5792 = vsel %vm5789, %v5791, %v5787
        %v5793 = vmul.f32 1.0, %v5792
        %v5794 = vrcp.pop %v5498
        %v5795 = vmul.f32 %v5498, %v5794
        %v5796 = vsub.f32 1.0, %v5795
        %v5797 = vmul.f32 %v5794, %v5796
        %v5798 = vadd.f32 %v5794, %v5797
        %vm5799 = vweird.f32 %v5498
        %vm5800 = vweird.f32 %v5794
        %vm5801 = vmor %vm5799, %vm5800
        %v5802 = vsel %vm5801, %v5794, %v5798
        %v5803 = vand.u32 2147483647, %v5498
        %vm5804 = vcmp.eq.f32.partialorder %v5803, 8.507059e+37
        %v5805 = vand.u32 %v5498, 2147483648
        %v5806 = vor.u32 1.1754944e-38, %v5805
        %v5807 = vsel %vm5804, %v5806, %v5802
        %v5808 = vmul.f32 1.0, %v5807
        %v5809 = vrcp.pop %v5499
        %v5810 = vmul.f32 %v5499, %v5809
        %v5811 = vsub.f32 1.0, %v5810
        %v5812 = vmul.f32 %v5809, %v5811
        %v5813 = vadd.f32 %v5809, %v5812
        %vm5814 = vweird.f32 %v5499
        %vm5815 = vweird.f32 %v5809
        %vm5816 = vmor %vm5814, %vm5815
        %v5817 = vsel %vm5816, %v5809, %v5813
        %v5818 = vand.u32 2147483647, %v5499
        %vm5819 = vcmp.eq.f32.partialorder %v5818, 8.507059e+37
        %v5820 = vand.u32 %v5499, 2147483648
        %v5821 = vor.u32 1.1754944e-38, %v5820
        %v5822 = vsel %vm5819, %v5821, %v5817
        %v5823 = vmul.f32 1.0, %v5822
        %v5824 = vrcp.pop %v5500
        %v5825 = vmul.f32 %v5500, %v5824
        %v5826 = vsub.f32 1.0, %v5825
        %v5827 = vmul.f32 %v5824, %v5826
        %v5828 = vadd.f32 %v5824, %v5827
        %vm5829 = vweird.f32 %v5500
        %vm5830 = vweird.f32 %v5824
        %vm5831 = vmor %vm5829, %vm5830
        %v5832 = vsel %vm5831, %v5824, %v5828
        %v5833 = vand.u32 2147483647, %v5500
        %vm5834 = vcmp.eq.f32.partialorder %v5833, 8.507059e+37
        %v5835 = vand.u32 %v5500, 2147483648
        %v5836 = vor.u32 1.1754944e-38, %v5835
        %v5837 = vsel %vm5834, %v5836, %v5832
        %v5838 = vmul.f32 1.0, %v5837
        %v5839 = vrcp.pop %v5501
        %v5840 = vmul.f32 %v5501, %v5839
        %v5841 = vsub.f32 1.0, %v5840
        %v5842 = vmul.f32 %v5839, %v5841
        %v5843 = vadd.f32 %v5839, %v5842
        %vm5844 = vweird.f32 %v5501
        %vm5845 = vweird.f32 %v5839
        %vm5846 = vmor %vm5844, %vm5845
        %v5847 = vsel %vm5846, %v5839, %v5843
        %v5848 = vand.u32 2147483647, %v5501
        %vm5849 = vcmp.eq.f32.partialorder %v5848, 8.507059e+37
        %v5850 = vand.u32 %v5501, 2147483648
        %v5851 = vor.u32 1.1754944e-38, %v5850
        %v5852 = vsel %vm5849, %v5851, %v5847
        %v5853 = vmul.f32 1.0, %v5852
        %v5854 = vrcp.pop %v5502
        %v5855 = vmul.f32 %v5502, %v5854
        %v5856 = vsub.f32 1.0, %v5855
        %v5857 = vmul.f32 %v5854, %v5856
        %v5858 = vadd.f32 %v5854, %v5857
        %vm5859 = vweird.f32 %v5502
        %vm5860 = vweird.f32 %v5854
        %vm5861 = vmor %vm5859, %vm5860
        %v5862 = vsel %vm5861, %v5854, %v5858
        %v5863 = vand.u32 2147483647, %v5502
        %vm5864 = vcmp.eq.f32.partialorder %v5863, 8.507059e+37
        %v5865 = vand.u32 %v5502, 2147483648
        %v5866 = vor.u32 1.1754944e-38, %v5865
        %v5867 = vsel %vm5864, %v5866, %v5862
        %v5868 = vmul.f32 1.0, %v5867
        %v5869 = vrcp.pop %v5503
        %v5870 = vmul.f32 %v5503, %v5869
        %v5871 = vsub.f32 1.0, %v5870
        %v5872 = vmul.f32 %v5869, %v5871
        %v5873 = vadd.f32 %v5869, %v5872
        %vm5874 = vweird.f32 %v5503
        %vm5875 = vweird.f32 %v5869
        %vm5876 = vmor %vm5874, %vm5875
        %v5877 = vsel %vm5876, %v5869, %v5873
        %v5878 = vand.u32 2147483647, %v5503
        %vm5879 = vcmp.eq.f32.partialorder %v5878, 8.507059e+37
        %v5880 = vand.u32 %v5503, 2147483648
        %v5881 = vor.u32 1.1754944e-38, %v5880
        %v5882 = vsel %vm5879, %v5881, %v5877
        %v5883 = vmul.f32 1.0, %v5882
        %v5884 = vrcp.pop %v5504
        %v5885 = vmul.f32 %v5504, %v5884
        %v5886 = vsub.f32 1.0, %v5885
        %v5887 = vmul.f32 %v5884, %v5886
        %v5888 = vadd.f32 %v5884, %v5887
        %vm5889 = vweird.f32 %v5504
        %vm5890 = vweird.f32 %v5884
        %vm5891 = vmor %vm5889, %vm5890
        %v5892 = vsel %vm5891, %v5884, %v5888
        %v5893 = vand.u32 2147483647, %v5504
        %vm5894 = vcmp.eq.f32.partialorder %v5893, 8.507059e+37
        %v5895 = vand.u32 %v5504, 2147483648
        %v5896 = vor.u32 1.1754944e-38, %v5895
        %v5897 = vsel %vm5894, %v5896, %v5892
        %v5898 = vmul.f32 1.0, %v5897
        %v5899 = vrcp.pop %v5505
        %v5900 = vmul.f32 %v5505, %v5899
        %v5901 = vsub.f32 1.0, %v5900
        %v5902 = vmul.f32 %v5899, %v5901
        %v5903 = vadd.f32 %v5899, %v5902
        %vm5904 = vweird.f32 %v5505
        %vm5905 = vweird.f32 %v5899
        %vm5906 = vmor %vm5904, %vm5905
        %v5907 = vsel %vm5906, %v5899, %v5903
        %v5908 = vand.u32 2147483647, %v5505
        %vm5909 = vcmp.eq.f32.partialorder %v5908, 8.507059e+37
        %v5910 = vand.u32 %v5505, 2147483648
        %v5911 = vor.u32 1.1754944e-38, %v5910
        %v5912 = vsel %vm5909, %v5911, %v5907
        %v5913 = vmul.f32 1.0, %v5912
        %v5914 = vrcp.pop %v5506
        %v5915 = vmul.f32 %v5506, %v5914
        %v5916 = vsub.f32 1.0, %v5915
        %v5917 = vmul.f32 %v5914, %v5916
        %v5918 = vadd.f32 %v5914, %v5917
        %vm5919 = vweird.f32 %v5506
        %vm5920 = vweird.f32 %v5914
        %vm5921 = vmor %vm5919, %vm5920
        %v5922 = vsel %vm5921, %v5914, %v5918
        %v5923 = vand.u32 2147483647, %v5506
        %vm5924 = vcmp.eq.f32.partialorder %v5923, 8.507059e+37
        %v5925 = vand.u32 %v5506, 2147483648
        %v5926 = vor.u32 1.1754944e-38, %v5925
        %v5927 = vsel %vm5924, %v5926, %v5922
        %v5928 = vmul.f32 1.0, %v5927
        %v5929 = vrcp.pop %v5507
        %v5930 = vmul.f32 %v5507, %v5929
        %v5931 = vsub.f32 1.0, %v5930
        %v5932 = vmul.f32 %v5929, %v5931
        %v5933 = vadd.f32 %v5929, %v5932
        %vm5934 = vweird.f32 %v5507
        %vm5935 = vweird.f32 %v5929
        %vm5936 = vmor %vm5934, %vm5935
        %v5937 = vsel %vm5936, %v5929, %v5933
        %v5938 = vand.u32 2147483647, %v5507
        %vm5939 = vcmp.eq.f32.partialorder %v5938, 8.507059e+37
        %v5940 = vand.u32 %v5507, 2147483648
        %v5941 = vor.u32 1.1754944e-38, %v5940
        %v5942 = vsel %vm5939, %v5941, %v5937
        %v5943 = vmul.f32 1.0, %v5942
        %v5944 = vrcp.pop %v5508
        %v5945 = vmul.f32 %v5508, %v5944
        %v5946 = vsub.f32 1.0, %v5945
        %v5947 = vmul.f32 %v5944, %v5946
        %v5948 = vadd.f32 %v5944, %v5947
        %vm5949 = vweird.f32 %v5508
        %vm5950 = vweird.f32 %v5944
        %vm5951 = vmor %vm5949, %vm5950
        %v5952 = vsel %vm5951, %v5944, %v5948
        %v5953 = vand.u32 2147483647, %v5508
        %vm5954 = vcmp.eq.f32.partialorder %v5953, 8.507059e+37
        %v5955 = vand.u32 %v5508, 2147483648
        %v5956 = vor.u32 1.1754944e-38, %v5955
        %v5957 = vsel %vm5954, %v5956, %v5952
        %v5958 = vmul.f32 1.0, %v5957
        %v5959 = vrcp.pop %v5509
        %v5960 = vmul.f32 %v5509, %v5959
        %v5961 = vsub.f32 1.0, %v5960
        %v5962 = vmul.f32 %v5959, %v5961
        %v5963 = vadd.f32 %v5959, %v5962
        %vm5964 = vweird.f32 %v5509
        %vm5965 = vweird.f32 %v5959
        %vm5966 = vmor %vm5964, %vm5965
        %v5967 = vsel %vm5966, %v5959, %v5963
        %v5968 = vand.u32 2147483647, %v5509
        %vm5969 = vcmp.eq.f32.partialorder %v5968, 8.507059e+37
        %v5970 = vand.u32 %v5509, 2147483648
        %v5971 = vor.u32 1.1754944e-38, %v5970
        %v5972 = vsel %vm5969, %v5971, %v5967
        %v5973 = vmul.f32 1.0, %v5972
        %v5974 = vrcp.pop %v5510
        %v5975 = vmul.f32 %v5510, %v5974
        %v5976 = vsub.f32 1.0, %v5975
        %v5977 = vmul.f32 %v5974, %v5976
        %v5978 = vadd.f32 %v5974, %v5977
        %vm5979 = vweird.f32 %v5510
        %vm5980 = vweird.f32 %v5974
        %vm5981 = vmor %vm5979, %vm5980
        %v5982 = vsel %vm5981, %v5974, %v5978
        %v5983 = vand.u32 2147483647, %v5510
        %vm5984 = vcmp.eq.f32.partialorder %v5983, 8.507059e+37
        %v5985 = vand.u32 %v5510, 2147483648
        %v5986 = vor.u32 1.1754944e-38, %v5985
        %v5987 = vsel %vm5984, %v5986, %v5982
        %v5988 = vmul.f32 1.0, %v5987
        %v5989 = vrcp.pop %v5511
        %v5990 = vmul.f32 %v5511, %v5989
        %v5991 = vsub.f32 1.0, %v5990
        %v5992 = vmul.f32 %v5989, %v5991
        %v5993 = vadd.f32 %v5989, %v5992
        %vm5994 = vweird.f32 %v5511
        %vm5995 = vweird.f32 %v5989
        %vm5996 = vmor %vm5994, %vm5995
        %v5997 = vsel %vm5996, %v5989, %v5993
        %v5998 = vand.u32 2147483647, %v5511
        %vm5999 = vcmp.eq.f32.partialorder %v5998, 8.507059e+37
        %v6000 = vand.u32 %v5511, 2147483648
        %v6001 = vor.u32 1.1754944e-38, %v6000
        %v6002 = vsel %vm5999, %v6001, %v5997
        %v6003 = vmul.f32 1.0, %v6002
        %v6004 = vrcp.pop %v5512
        %v6005 = vmul.f32 %v5512, %v6004
        %v6006 = vsub.f32 1.0, %v6005
        %v6007 = vmul.f32 %v6004, %v6006
        %v6008 = vadd.f32 %v6004, %v6007
        %vm6009 = vweird.f32 %v5512
        %vm6010 = vweird.f32 %v6004
        %vm6011 = vmor %vm6009, %vm6010
        %v6012 = vsel %vm6011, %v6004, %v6008
        %v6013 = vand.u32 2147483647, %v5512
        %vm6014 = vcmp.eq.f32.partialorder %v6013, 8.507059e+37
        %v6015 = vand.u32 %v5512, 2147483648
        %v6016 = vor.u32 1.1754944e-38, %v6015
        %v6017 = vsel %vm6014, %v6016, %v6012
        %v6018 = vmul.f32 1.0, %v6017
        %v6019 = vrcp.pop %v5513
        %v6020 = vmul.f32 %v5513, %v6019
        %v6021 = vsub.f32 1.0, %v6020
        %v6022 = vmul.f32 %v6019, %v6021
        %v6023 = vadd.f32 %v6019, %v6022
        %vm6024 = vweird.f32 %v5513
        %vm6025 = vweird.f32 %v6019
        %vm6026 = vmor %vm6024, %vm6025
        %v6027 = vsel %vm6026, %v6019, %v6023
        %v6028 = vand.u32 2147483647, %v5513
        %vm6029 = vcmp.eq.f32.partialorder %v6028, 8.507059e+37
        %v6030 = vand.u32 %v5513, 2147483648
        %v6031 = vor.u32 1.1754944e-38, %v6030
        %v6032 = vsel %vm6029, %v6031, %v6027
        %v6033 = vmul.f32 1.0, %v6032
        %v6034 = vrcp.pop %v5514
        %v6035 = vmul.f32 %v5514, %v6034
        %v6036 = vsub.f32 1.0, %v6035
        %v6037 = vmul.f32 %v6034, %v6036
        %v6038 = vadd.f32 %v6034, %v6037
        %vm6039 = vweird.f32 %v5514
        %vm6040 = vweird.f32 %v6034
        %vm6041 = vmor %vm6039, %vm6040
        %v6042 = vsel %vm6041, %v6034, %v6038
        %v6043 = vand.u32 2147483647, %v5514
        %vm6044 = vcmp.eq.f32.partialorder %v6043, 8.507059e+37
        %v6045 = vand.u32 %v5514, 2147483648
        %v6046 = vor.u32 1.1754944e-38, %v6045
        %v6047 = vsel %vm6044, %v6046, %v6042
        %v6048 = vmul.f32 1.0, %v6047
        %v6049 = vrcp.pop %v5515
        %v6050 = vmul.f32 %v5515, %v6049
        %v6051 = vsub.f32 1.0, %v6050
        %v6052 = vmul.f32 %v6049, %v6051
        %v6053 = vadd.f32 %v6049, %v6052
        %vm6054 = vweird.f32 %v5515
        %vm6055 = vweird.f32 %v6049
        %vm6056 = vmor %vm6054, %vm6055
        %v6057 = vsel %vm6056, %v6049, %v6053
        %v6058 = vand.u32 2147483647, %v5515
        %vm6059 = vcmp.eq.f32.partialorder %v6058, 8.507059e+37
        %v6060 = vand.u32 %v5515, 2147483648
        %v6061 = vor.u32 1.1754944e-38, %v6060
        %v6062 = vsel %vm6059, %v6061, %v6057
        %v6063 = vmul.f32 1.0, %v6062
        %v6064 = vrcp.pop %v5516
        %v6065 = vmul.f32 %v5516, %v6064
        %v6066 = vsub.f32 1.0, %v6065
        %v6067 = vmul.f32 %v6064, %v6066
        %v6068 = vadd.f32 %v6064, %v6067
        %vm6069 = vweird.f32 %v5516
        %vm6070 = vweird.f32 %v6064
        %vm6071 = vmor %vm6069, %vm6070
        %v6072 = vsel %vm6071, %v6064, %v6068
        %v6073 = vand.u32 2147483647, %v5516
        %vm6074 = vcmp.eq.f32.partialorder %v6073, 8.507059e+37
        %v6075 = vand.u32 %v5516, 2147483648
        %v6076 = vor.u32 1.1754944e-38, %v6075
        %v6077 = vsel %vm6074, %v6076, %v6072
        %v6078 = vmul.f32 1.0, %v6077
        %v6079 = vrcp.pop %v5517
        %v6080 = vmul.f32 %v5517, %v6079
        %v6081 = vsub.f32 1.0, %v6080
        %v6082 = vmul.f32 %v6079, %v6081
        %v6083 = vadd.f32 %v6079, %v6082
        %vm6084 = vweird.f32 %v5517
        %vm6085 = vweird.f32 %v6079
        %vm6086 = vmor %vm6084, %vm6085
        %v6087 = vsel %vm6086, %v6079, %v6083
        %v6088 = vand.u32 2147483647, %v5517
        %vm6089 = vcmp.eq.f32.partialorder %v6088, 8.507059e+37
        %v6090 = vand.u32 %v5517, 2147483648
        %v6091 = vor.u32 1.1754944e-38, %v6090
        %v6092 = vsel %vm6089, %v6091, %v6087
        %v6093 = vmul.f32 1.0, %v6092
        %v6094 = vrcp.pop %v5518
        %v6095 = vmul.f32 %v5518, %v6094
        %v6096 = vsub.f32 1.0, %v6095
        %v6097 = vmul.f32 %v6094, %v6096
        %v6098 = vadd.f32 %v6094, %v6097
        %vm6099 = vweird.f32 %v5518
        %vm6100 = vweird.f32 %v6094
        %vm6101 = vmor %vm6099, %vm6100
        %v6102 = vsel %vm6101, %v6094, %v6098
        %v6103 = vand.u32 2147483647, %v5518
        %vm6104 = vcmp.eq.f32.partialorder %v6103, 8.507059e+37
        %v6105 = vand.u32 %v5518, 2147483648
        %v6106 = vor.u32 1.1754944e-38, %v6105
        %v6107 = vsel %vm6104, %v6106, %v6102
        %v6108 = vmul.f32 1.0, %v6107
        %v6109 = vrcp.pop %v5519
        %v6110 = vmul.f32 %v5519, %v6109
        %v6111 = vsub.f32 1.0, %v6110
        %v6112 = vmul.f32 %v6109, %v6111
        %v6113 = vadd.f32 %v6109, %v6112
        %vm6114 = vweird.f32 %v5519
        %vm6115 = vweird.f32 %v6109
        %vm6116 = vmor %vm6114, %vm6115
        %v6117 = vsel %vm6116, %v6109, %v6113
        %v6118 = vand.u32 2147483647, %v5519
        %vm6119 = vcmp.eq.f32.partialorder %v6118, 8.507059e+37
        %v6120 = vand.u32 %v5519, 2147483648
        %v6121 = vor.u32 1.1754944e-38, %v6120
        %v6122 = vsel %vm6119, %v6121, %v6117
        %v6123 = vmul.f32 1.0, %v6122
        %v6124 = vrcp.pop %v5520
        %v6125 = vmul.f32 %v5520, %v6124
        %v6126 = vsub.f32 1.0, %v6125
        %v6127 = vmul.f32 %v6124, %v6126
        %v6128 = vadd.f32 %v6124, %v6127
        %vm6129 = vweird.f32 %v5520
        %vm6130 = vweird.f32 %v6124
        %vm6131 = vmor %vm6129, %vm6130
        %v6132 = vsel %vm6131, %v6124, %v6128
        %v6133 = vand.u32 2147483647, %v5520
        %vm6134 = vcmp.eq.f32.partialorder %v6133, 8.507059e+37
        %v6135 = vand.u32 %v5520, 2147483648
        %v6136 = vor.u32 1.1754944e-38, %v6135
        %v6137 = vsel %vm6134, %v6136, %v6132
        %v6138 = vmul.f32 1.0, %v6137
        %v6139 = vrcp.pop %v5521
        %v6140 = vmul.f32 %v5521, %v6139
        %v6141 = vsub.f32 1.0, %v6140
        %v6142 = vmul.f32 %v6139, %v6141
        %v6143 = vadd.f32 %v6139, %v6142
        %vm6144 = vweird.f32 %v5521
        %vm6145 = vweird.f32 %v6139
        %vm6146 = vmor %vm6144, %vm6145
        %v6147 = vsel %vm6146, %v6139, %v6143
        %v6148 = vand.u32 2147483647, %v5521
        %vm6149 = vcmp.eq.f32.partialorder %v6148, 8.507059e+37
        %v6150 = vand.u32 %v5521, 2147483648
        %v6151 = vor.u32 1.1754944e-38, %v6150
        %v6152 = vsel %vm6149, %v6151, %v6147
        %v6153 = vmul.f32 1.0, %v6152
        %v6154 = vrcp.pop %v5522
        %v6155 = vmul.f32 %v5522, %v6154
        %v6156 = vsub.f32 1.0, %v6155
        %v6157 = vmul.f32 %v6154, %v6156
        %v6158 = vadd.f32 %v6154, %v6157
        %vm6159 = vweird.f32 %v5522
        %vm6160 = vweird.f32 %v6154
        %vm6161 = vmor %vm6159, %vm6160
        %v6162 = vsel %vm6161, %v6154, %v6158
        %v6163 = vand.u32 2147483647, %v5522
        %vm6164 = vcmp.eq.f32.partialorder %v6163, 8.507059e+37
        %v6165 = vand.u32 %v5522, 2147483648
        %v6166 = vor.u32 1.1754944e-38, %v6165
        %v6167 = vsel %vm6164, %v6166, %v6162
        %v6168 = vmul.f32 1.0, %v6167
        %v6169 = vrcp.pop %v5523
        %v6170 = vmul.f32 %v5523, %v6169
        %v6171 = vsub.f32 1.0, %v6170
        %v6172 = vmul.f32 %v6169, %v6171
        %v6173 = vadd.f32 %v6169, %v6172
        %vm6174 = vweird.f32 %v5523
        %vm6175 = vweird.f32 %v6169
        %vm6176 = vmor %vm6174, %vm6175
        %v6177 = vsel %vm6176, %v6169, %v6173
        %v6178 = vand.u32 2147483647, %v5523
        %vm6179 = vcmp.eq.f32.partialorder %v6178, 8.507059e+37
        %v6180 = vand.u32 %v5523, 2147483648
        %v6181 = vor.u32 1.1754944e-38, %v6180
        %v6182 = vsel %vm6179, %v6181, %v6177
        %v6183 = vmul.f32 1.0, %v6182
        %v6184 = vrcp.pop %v5524
        %v6185 = vmul.f32 %v5524, %v6184
        %v6186 = vsub.f32 1.0, %v6185
        %v6187 = vmul.f32 %v6184, %v6186
        %v6188 = vadd.f32 %v6184, %v6187
        %vm6189 = vweird.f32 %v5524
        %vm6190 = vweird.f32 %v6184
        %vm6191 = vmor %vm6189, %vm6190
        %v6192 = vsel %vm6191, %v6184, %v6188
        %v6193 = vand.u32 2147483647, %v5524
        %vm6194 = vcmp.eq.f32.partialorder %v6193, 8.507059e+37
        %v6195 = vand.u32 %v5524, 2147483648
        %v6196 = vor.u32 1.1754944e-38, %v6195
        %v6197 = vsel %vm6194, %v6196, %v6192
        %v6198 = vmul.f32 1.0, %v6197
        %v6199 = vrcp.pop %v5525
        %v6200 = vmul.f32 %v5525, %v6199
        %v6201 = vsub.f32 1.0, %v6200
        %v6202 = vmul.f32 %v6199, %v6201
        %v6203 = vadd.f32 %v6199, %v6202
        %vm6204 = vweird.f32 %v5525
        %vm6205 = vweird.f32 %v6199
        %vm6206 = vmor %vm6204, %vm6205
        %v6207 = vsel %vm6206, %v6199, %v6203
        %v6208 = vand.u32 2147483647, %v5525
        %vm6209 = vcmp.eq.f32.partialorder %v6208, 8.507059e+37
        %v6210 = vand.u32 %v5525, 2147483648
        %v6211 = vor.u32 1.1754944e-38, %v6210
        %v6212 = vsel %vm6209, %v6211, %v6207
        %v6213 = vmul.f32 1.0, %v6212
        %v6214 = vrcp.pop %v5526
        %v6215 = vmul.f32 %v5526, %v6214
        %v6216 = vsub.f32 1.0, %v6215
        %v6217 = vmul.f32 %v6214, %v6216
        %v6218 = vadd.f32 %v6214, %v6217
        %vm6219 = vweird.f32 %v5526
        %vm6220 = vweird.f32 %v6214
        %vm6221 = vmor %vm6219, %vm6220
        %v6222 = vsel %vm6221, %v6214, %v6218
        %v6223 = vand.u32 2147483647, %v5526
        %vm6224 = vcmp.eq.f32.partialorder %v6223, 8.507059e+37
        %v6225 = vand.u32 %v5526, 2147483648
        %v6226 = vor.u32 1.1754944e-38, %v6225
        %v6227 = vsel %vm6224, %v6226, %v6222
        %v6228 = vmul.f32 1.0, %v6227
        %v6229 = vrcp.pop %v5527
        %v6230 = vmul.f32 %v5527, %v6229
        %v6231 = vsub.f32 1.0, %v6230
        %v6232 = vmul.f32 %v6229, %v6231
        %v6233 = vadd.f32 %v6229, %v6232
        %vm6234 = vweird.f32 %v5527
        %vm6235 = vweird.f32 %v6229
        %vm6236 = vmor %vm6234, %vm6235
        %v6237 = vsel %vm6236, %v6229, %v6233
        %v6238 = vand.u32 2147483647, %v5527
        %vm6239 = vcmp.eq.f32.partialorder %v6238, 8.507059e+37
        %v6240 = vand.u32 %v5527, 2147483648
        %v6241 = vor.u32 1.1754944e-38, %v6240
        %v6242 = vsel %vm6239, %v6241, %v6237
        %v6243 = vmul.f32 1.0, %v6242
        %v6244 = vrcp.pop %v5528
        %v6245 = vmul.f32 %v5528, %v6244
        %v6246 = vsub.f32 1.0, %v6245
        %v6247 = vmul.f32 %v6244, %v6246
        %v6248 = vadd.f32 %v6244, %v6247
        %vm6249 = vweird.f32 %v5528
        %vm6250 = vweird.f32 %v6244
        %vm6251 = vmor %vm6249, %vm6250
        %v6252 = vsel %vm6251, %v6244, %v6248
        %v6253 = vand.u32 2147483647, %v5528
        %vm6254 = vcmp.eq.f32.partialorder %v6253, 8.507059e+37
        %v6255 = vand.u32 %v5528, 2147483648
        %v6256 = vor.u32 1.1754944e-38, %v6255
        %v6257 = vsel %vm6254, %v6256, %v6252
        %v6258 = vmul.f32 1.0, %v6257
        %v6259 = vrcp.pop %v5529
        %v6260 = vmul.f32 %v5529, %v6259
        %v6261 = vsub.f32 1.0, %v6260
        %v6262 = vmul.f32 %v6259, %v6261
        %v6263 = vadd.f32 %v6259, %v6262
        %vm6264 = vweird.f32 %v5529
        %vm6265 = vweird.f32 %v6259
        %vm6266 = vmor %vm6264, %vm6265
        %v6267 = vsel %vm6266, %v6259, %v6263
        %v6268 = vand.u32 2147483647, %v5529
        %vm6269 = vcmp.eq.f32.partialorder %v6268, 8.507059e+37
        %v6270 = vand.u32 %v5529, 2147483648
        %v6271 = vor.u32 1.1754944e-38, %v6270
        %v6272 = vsel %vm6269, %v6271, %v6267
        %v6273 = vmul.f32 1.0, %v6272
        %v6274 = vrcp.pop %v5530
        %v6275 = vmul.f32 %v5530, %v6274
        %v6276 = vsub.f32 1.0, %v6275
        %v6277 = vmul.f32 %v6274, %v6276
        %v6278 = vadd.f32 %v6274, %v6277
        %vm6279 = vweird.f32 %v5530
        %vm6280 = vweird.f32 %v6274
        %vm6281 = vmor %vm6279, %vm6280
        %v6282 = vsel %vm6281, %v6274, %v6278
        %v6283 = vand.u32 2147483647, %v5530
        %vm6284 = vcmp.eq.f32.partialorder %v6283, 8.507059e+37
        %v6285 = vand.u32 %v5530, 2147483648
        %v6286 = vor.u32 1.1754944e-38, %v6285
        %v6287 = vsel %vm6284, %v6286, %v6282
        %v6288 = vmul.f32 1.0, %v6287
        %v6289 = vrcp.pop %v5531
        %v6290 = vmul.f32 %v5531, %v6289
        %v6291 = vsub.f32 1.0, %v6290
        %v6292 = vmul.f32 %v6289, %v6291
        %v6293 = vadd.f32 %v6289, %v6292
        %vm6294 = vweird.f32 %v5531
        %vm6295 = vweird.f32 %v6289
        %vm6296 = vmor %vm6294, %vm6295
        %v6297 = vsel %vm6296, %v6289, %v6293
        %v6298 = vand.u32 2147483647, %v5531
        %vm6299 = vcmp.eq.f32.partialorder %v6298, 8.507059e+37
        %v6300 = vand.u32 %v5531, 2147483648
        %v6301 = vor.u32 1.1754944e-38, %v6300
        %v6302 = vsel %vm6299, %v6301, %v6297
        %v6303 = vmul.f32 1.0, %v6302
        %v6304 = vrcp.pop %v5532
        %v6305 = vmul.f32 %v5532, %v6304
        %v6306 = vsub.f32 1.0, %v6305
        %v6307 = vmul.f32 %v6304, %v6306
        %v6308 = vadd.f32 %v6304, %v6307
        %vm6309 = vweird.f32 %v5532
        %vm6310 = vweird.f32 %v6304
        %vm6311 = vmor %vm6309, %vm6310
        %v6312 = vsel %vm6311, %v6304, %v6308
        %v6313 = vand.u32 2147483647, %v5532
        %vm6314 = vcmp.eq.f32.partialorder %v6313, 8.507059e+37
        %v6315 = vand.u32 %v5532, 2147483648
        %v6316 = vor.u32 1.1754944e-38, %v6315
        %v6317 = vsel %vm6314, %v6316, %v6312
        %v6318 = vmul.f32 1.0, %v6317
        %v6319 = vrcp.pop %v5533
        %v6320 = vmul.f32 %v5533, %v6319
        %v6321 = vsub.f32 1.0, %v6320
        %v6322 = vmul.f32 %v6319, %v6321
        %v6323 = vadd.f32 %v6319, %v6322
        %vm6324 = vweird.f32 %v5533
        %vm6325 = vweird.f32 %v6319
        %vm6326 = vmor %vm6324, %vm6325
        %v6327 = vsel %vm6326, %v6319, %v6323
        %v6328 = vand.u32 2147483647, %v5533
        %vm6329 = vcmp.eq.f32.partialorder %v6328, 8.507059e+37
        %v6330 = vand.u32 %v5533, 2147483648
        %v6331 = vor.u32 1.1754944e-38, %v6330
        %v6332 = vsel %vm6329, %v6331, %v6327
        %v6333 = vmul.f32 1.0, %v6332
        %v6334 = vrcp.pop %v5534
        %v6335 = vmul.f32 %v5534, %v6334
        %v6336 = vsub.f32 1.0, %v6335
        %v6337 = vmul.f32 %v6334, %v6336
        %v6338 = vadd.f32 %v6334, %v6337
        %vm6339 = vweird.f32 %v5534
        %vm6340 = vweird.f32 %v6334
        %vm6341 = vmor %vm6339, %vm6340
        %v6342 = vsel %vm6341, %v6334, %v6338
        %v6343 = vand.u32 2147483647, %v5534
        %vm6344 = vcmp.eq.f32.partialorder %v6343, 8.507059e+37
        %v6345 = vand.u32 %v5534, 2147483648
        %v6346 = vor.u32 1.1754944e-38, %v6345
        %v6347 = vsel %vm6344, %v6346, %v6342
        %v6348 = vmul.f32 1.0, %v6347
        %v6349 = vrcp.pop %v5535
        %v6350 = vmul.f32 %v5535, %v6349
        %v6351 = vsub.f32 1.0, %v6350
        %v6352 = vmul.f32 %v6349, %v6351
        %v6353 = vadd.f32 %v6349, %v6352
        %vm6354 = vweird.f32 %v5535
        %vm6355 = vweird.f32 %v6349
        %vm6356 = vmor %vm6354, %vm6355
        %v6357 = vsel %vm6356, %v6349, %v6353
        %v6358 = vand.u32 2147483647, %v5535
        %vm6359 = vcmp.eq.f32.partialorder %v6358, 8.507059e+37
        %v6360 = vand.u32 %v5535, 2147483648
        %v6361 = vor.u32 1.1754944e-38, %v6360
        %v6362 = vsel %vm6359, %v6361, %v6357
        %v6363 = vmul.f32 1.0, %v6362
        %v6364 = vrcp.pop %v5536
        %v6365 = vmul.f32 %v5536, %v6364
        %v6366 = vsub.f32 1.0, %v6365
        %v6367 = vmul.f32 %v6364, %v6366
        %v6368 = vadd.f32 %v6364, %v6367
        %vm6369 = vweird.f32 %v5536
        %vm6370 = vweird.f32 %v6364
        %vm6371 = vmor %vm6369, %vm6370
        %v6372 = vsel %vm6371, %v6364, %v6368
        %v6373 = vand.u32 2147483647, %v5536
        %vm6374 = vcmp.eq.f32.partialorder %v6373, 8.507059e+37
        %v6375 = vand.u32 %v5536, 2147483648
        %v6376 = vor.u32 1.1754944e-38, %v6375
        %v6377 = vsel %vm6374, %v6376, %v6372
        %v6378 = vmul.f32 1.0, %v6377
        %v6379 = vrcp.pop %v5537
        %v6380 = vmul.f32 %v5537, %v6379
        %v6381 = vsub.f32 1.0, %v6380
        %v6382 = vmul.f32 %v6379, %v6381
        %v6383 = vadd.f32 %v6379, %v6382
        %vm6384 = vweird.f32 %v5537
        %vm6385 = vweird.f32 %v6379
        %vm6386 = vmor %vm6384, %vm6385
        %v6387 = vsel %vm6386, %v6379, %v6383
        %v6388 = vand.u32 2147483647, %v5537
        %vm6389 = vcmp.eq.f32.partialorder %v6388, 8.507059e+37
        %v6390 = vand.u32 %v5537, 2147483648
        %v6391 = vor.u32 1.1754944e-38, %v6390
        %v6392 = vsel %vm6389, %v6391, %v6387
        %v6393 = vmul.f32 1.0, %v6392
        %v6394 = vrcp.pop %v5538
        %v6395 = vmul.f32 %v5538, %v6394
        %v6396 = vsub.f32 1.0, %v6395
        %v6397 = vmul.f32 %v6394, %v6396
        %v6398 = vadd.f32 %v6394, %v6397
        %vm6399 = vweird.f32 %v5538
        %vm6400 = vweird.f32 %v6394
        %vm6401 = vmor %vm6399, %vm6400
        %v6402 = vsel %vm6401, %v6394, %v6398
        %v6403 = vand.u32 2147483647, %v5538
        %vm6404 = vcmp.eq.f32.partialorder %v6403, 8.507059e+37
        %v6405 = vand.u32 %v5538, 2147483648
        %v6406 = vor.u32 1.1754944e-38, %v6405
        %v6407 = vsel %vm6404, %v6406, %v6402
        %v6408 = vmul.f32 1.0, %v6407
        %v6409 = vrcp.pop %v5539
        %v6410 = vmul.f32 %v5539, %v6409
        %v6411 = vsub.f32 1.0, %v6410
        %v6412 = vmul.f32 %v6409, %v6411
        %v6413 = vadd.f32 %v6409, %v6412
        %vm6414 = vweird.f32 %v5539
        %vm6415 = vweird.f32 %v6409
        %vm6416 = vmor %vm6414, %vm6415
        %v6417 = vsel %vm6416, %v6409, %v6413
        %v6418 = vand.u32 2147483647, %v5539
        %vm6419 = vcmp.eq.f32.partialorder %v6418, 8.507059e+37
        %v6420 = vand.u32 %v5539, 2147483648
        %v6421 = vor.u32 1.1754944e-38, %v6420
        %v6422 = vsel %vm6419, %v6421, %v6417
        %v6423 = vmul.f32 1.0, %v6422
        %v6424 = vrcp.pop %v5540
        %v6425 = vmul.f32 %v5540, %v6424
        %v6426 = vsub.f32 1.0, %v6425
        %v6427 = vmul.f32 %v6424, %v6426
        %v6428 = vadd.f32 %v6424, %v6427
        %vm6429 = vweird.f32 %v5540
        %vm6430 = vweird.f32 %v6424
        %vm6431 = vmor %vm6429, %vm6430
        %v6432 = vsel %vm6431, %v6424, %v6428
        %v6433 = vand.u32 2147483647, %v5540
        %vm6434 = vcmp.eq.f32.partialorder %v6433, 8.507059e+37
        %v6435 = vand.u32 %v5540, 2147483648
        %v6436 = vor.u32 1.1754944e-38, %v6435
        %v6437 = vsel %vm6434, %v6436, %v6432
        %v6438 = vmul.f32 1.0, %v6437
        %v6439 = vrcp.pop %v5541
        %v6440 = vmul.f32 %v5541, %v6439
        %v6441 = vsub.f32 1.0, %v6440
        %v6442 = vmul.f32 %v6439, %v6441
        %v6443 = vadd.f32 %v6439, %v6442
        %vm6444 = vweird.f32 %v5541
        %vm6445 = vweird.f32 %v6439
        %vm6446 = vmor %vm6444, %vm6445
        %v6447 = vsel %vm6446, %v6439, %v6443
        %v6448 = vand.u32 2147483647, %v5541
        %vm6449 = vcmp.eq.f32.partialorder %v6448, 8.507059e+37
        %v6450 = vand.u32 %v5541, 2147483648
        %v6451 = vor.u32 1.1754944e-38, %v6450
        %v6452 = vsel %vm6449, %v6451, %v6447
        %v6453 = vmul.f32 1.0, %v6452
        %v6454 = vrcp.pop %v5542
        %v6455 = vmul.f32 %v5542, %v6454
        %v6456 = vsub.f32 1.0, %v6455
        %v6457 = vmul.f32 %v6454, %v6456
        %v6458 = vadd.f32 %v6454, %v6457
        %vm6459 = vweird.f32 %v5542
        %vm6460 = vweird.f32 %v6454
        %vm6461 = vmor %vm6459, %vm6460
        %v6462 = vsel %vm6461, %v6454, %v6458
        %v6463 = vand.u32 2147483647, %v5542
        %vm6464 = vcmp.eq.f32.partialorder %v6463, 8.507059e+37
        %v6465 = vand.u32 %v5542, 2147483648
        %v6466 = vor.u32 1.1754944e-38, %v6465
        %v6467 = vsel %vm6464, %v6466, %v6462
        %v6468 = vmul.f32 1.0, %v6467
        %v6469 = vrcp.pop %v5543
        %v6470 = vmul.f32 %v5543, %v6469
        %v6471 = vsub.f32 1.0, %v6470
        %v6472 = vmul.f32 %v6469, %v6471
        %v6473 = vadd.f32 %v6469, %v6472
        %vm6474 = vweird.f32 %v5543
        %vm6475 = vweird.f32 %v6469
        %vm6476 = vmor %vm6474, %vm6475
        %v6477 = vsel %vm6476, %v6469, %v6473
        %v6478 = vand.u32 2147483647, %v5543
        %vm6479 = vcmp.eq.f32.partialorder %v6478, 8.507059e+37
        %v6480 = vand.u32 %v5543, 2147483648
        %v6481 = vor.u32 1.1754944e-38, %v6480
        %v6482 = vsel %vm6479, %v6481, %v6477
        %v6483 = vmul.f32 1.0, %v6482
        %v6484 = vrcp.pop %v5544
        %v6485 = vmul.f32 %v5544, %v6484
        %v6486 = vsub.f32 1.0, %v6485
        %v6487 = vmul.f32 %v6484, %v6486
        %v6488 = vadd.f32 %v6484, %v6487
        %vm6489 = vweird.f32 %v5544
        %vm6490 = vweird.f32 %v6484
        %vm6491 = vmor %vm6489, %vm6490
        %v6492 = vsel %vm6491, %v6484, %v6488
        %v6493 = vand.u32 2147483647, %v5544
        %vm6494 = vcmp.eq.f32.partialorder %v6493, 8.507059e+37
        %v6495 = vand.u32 %v5544, 2147483648
        %v6496 = vor.u32 1.1754944e-38, %v6495
        %v6497 = vsel %vm6494, %v6496, %v6492
        %v6498 = vmul.f32 1.0, %v6497
        %v6499 = vrcp.pop %v5545
        %v6500 = vmul.f32 %v5545, %v6499
        %v6501 = vsub.f32 1.0, %v6500
        %v6502 = vmul.f32 %v6499, %v6501
        %v6503 = vadd.f32 %v6499, %v6502
        %vm6504 = vweird.f32 %v5545
        %vm6505 = vweird.f32 %v6499
        %vm6506 = vmor %vm6504, %vm6505
        %v6507 = vsel %vm6506, %v6499, %v6503
        %v6508 = vand.u32 2147483647, %v5545
        %vm6509 = vcmp.eq.f32.partialorder %v6508, 8.507059e+37
        %v6510 = vand.u32 %v5545, 2147483648
        %v6511 = vor.u32 1.1754944e-38, %v6510
        %v6512 = vsel %vm6509, %v6511, %v6507
        %v6513 = vmul.f32 1.0, %v6512
        %v6514 = vrcp.pop %v5546
        %v6515 = vmul.f32 %v5546, %v6514
        %v6516 = vsub.f32 1.0, %v6515
        %v6517 = vmul.f32 %v6514, %v6516
        %v6518 = vadd.f32 %v6514, %v6517
        %vm6519 = vweird.f32 %v5546
        %vm6520 = vweird.f32 %v6514
        %vm6521 = vmor %vm6519, %vm6520
        %v6522 = vsel %vm6521, %v6514, %v6518
        %v6523 = vand.u32 2147483647, %v5546
        %vm6524 = vcmp.eq.f32.partialorder %v6523, 8.507059e+37
        %v6525 = vand.u32 %v5546, 2147483648
        %v6526 = vor.u32 1.1754944e-38, %v6525
        %v6527 = vsel %vm6524, %v6526, %v6522
        %v6528 = vmul.f32 1.0, %v6527
        %v6529 = vrcp.pop %v5547
        %v6530 = vmul.f32 %v5547, %v6529
        %v6531 = vsub.f32 1.0, %v6530
        %v6532 = vmul.f32 %v6529, %v6531
        %v6533 = vadd.f32 %v6529, %v6532
        %vm6534 = vweird.f32 %v5547
        %vm6535 = vweird.f32 %v6529
        %vm6536 = vmor %vm6534, %vm6535
        %v6537 = vsel %vm6536, %v6529, %v6533
        %v6538 = vand.u32 2147483647, %v5547
        %vm6539 = vcmp.eq.f32.partialorder %v6538, 8.507059e+37
        %v6540 = vand.u32 %v5547, 2147483648
        %v6541 = vor.u32 1.1754944e-38, %v6540
        %v6542 = vsel %vm6539, %v6541, %v6537
        %v6543 = vmul.f32 1.0, %v6542
        %v6544 = vrcp.pop %v5548
        %v6545 = vmul.f32 %v5548, %v6544
        %v6546 = vsub.f32 1.0, %v6545
        %v6547 = vmul.f32 %v6544, %v6546
        %v6548 = vadd.f32 %v6544, %v6547
        %vm6549 = vweird.f32 %v5548
        %vm6550 = vweird.f32 %v6544
        %vm6551 = vmor %vm6549, %vm6550
        %v6552 = vsel %vm6551, %v6544, %v6548
        %v6553 = vand.u32 2147483647, %v5548
        %vm6554 = vcmp.eq.f32.partialorder %v6553, 8.507059e+37
        %v6555 = vand.u32 %v5548, 2147483648
        %v6556 = vor.u32 1.1754944e-38, %v6555
        %v6557 = vsel %vm6554, %v6556, %v6552
        %v6558 = vmul.f32 1.0, %v6557
        %v6559 = vrcp.pop %v5549
        %v6560 = vmul.f32 %v5549, %v6559
        %v6561 = vsub.f32 1.0, %v6560
        %v6562 = vmul.f32 %v6559, %v6561
        %v6563 = vadd.f32 %v6559, %v6562
        %vm6564 = vweird.f32 %v5549
        %vm6565 = vweird.f32 %v6559
        %vm6566 = vmor %vm6564, %vm6565
        %v6567 = vsel %vm6566, %v6559, %v6563
        %v6568 = vand.u32 2147483647, %v5549
        %vm6569 = vcmp.eq.f32.partialorder %v6568, 8.507059e+37
        %v6570 = vand.u32 %v5549, 2147483648
        %v6571 = vor.u32 1.1754944e-38, %v6570
        %v6572 = vsel %vm6569, %v6571, %v6567
        %v6573 = vmul.f32 1.0, %v6572
        %v6574 = vrcp.pop %v5550
        %v6575 = vmul.f32 %v5550, %v6574
        %v6576 = vsub.f32 1.0, %v6575
        %v6577 = vmul.f32 %v6574, %v6576
        %v6578 = vadd.f32 %v6574, %v6577
        %vm6579 = vweird.f32 %v5550
        %vm6580 = vweird.f32 %v6574
        %vm6581 = vmor %vm6579, %vm6580
        %v6582 = vsel %vm6581, %v6574, %v6578
        %v6583 = vand.u32 2147483647, %v5550
        %vm6584 = vcmp.eq.f32.partialorder %v6583, 8.507059e+37
        %v6585 = vand.u32 %v5550, 2147483648
        %v6586 = vor.u32 1.1754944e-38, %v6585
        %v6587 = vsel %vm6584, %v6586, %v6582
        %v6588 = vmul.f32 1.0, %v6587
        %v6589 = vrcp.pop %v5551
        %v6590 = vmul.f32 %v5551, %v6589
        %v6591 = vsub.f32 1.0, %v6590
        %v6592 = vmul.f32 %v6589, %v6591
        %v6593 = vadd.f32 %v6589, %v6592
        %vm6594 = vweird.f32 %v5551
        %vm6595 = vweird.f32 %v6589
        %vm6596 = vmor %vm6594, %vm6595
        %v6597 = vsel %vm6596, %v6589, %v6593
        %v6598 = vand.u32 2147483647, %v5551
        %vm6599 = vcmp.eq.f32.partialorder %v6598, 8.507059e+37
        %v6600 = vand.u32 %v5551, 2147483648
        %v6601 = vor.u32 1.1754944e-38, %v6600
        %v6602 = vsel %vm6599, %v6601, %v6597
        %v6603 = vmul.f32 1.0, %v6602
        %v6604 = vrcp.pop %v5552
        %v6605 = vmul.f32 %v5552, %v6604
        %v6606 = vsub.f32 1.0, %v6605
        %v6607 = vmul.f32 %v6604, %v6606
        %v6608 = vadd.f32 %v6604, %v6607
        %vm6609 = vweird.f32 %v5552
        %vm6610 = vweird.f32 %v6604
        %vm6611 = vmor %vm6609, %vm6610
        %v6612 = vsel %vm6611, %v6604, %v6608
        %v6613 = vand.u32 2147483647, %v5552
        %vm6614 = vcmp.eq.f32.partialorder %v6613, 8.507059e+37
        %v6615 = vand.u32 %v5552, 2147483648
        %v6616 = vor.u32 1.1754944e-38, %v6615
        %v6617 = vsel %vm6614, %v6616, %v6612
        %v6618 = vmul.f32 1.0, %v6617
        %v6619 = vrcp.pop %v5553
        %v6620 = vmul.f32 %v5553, %v6619
        %v6621 = vsub.f32 1.0, %v6620
        %v6622 = vmul.f32 %v6619, %v6621
        %v6623 = vadd.f32 %v6619, %v6622
        %vm6624 = vweird.f32 %v5553
        %vm6625 = vweird.f32 %v6619
        %vm6626 = vmor %vm6624, %vm6625
        %v6627 = vsel %vm6626, %v6619, %v6623
        %v6628 = vand.u32 2147483647, %v5553
        %vm6629 = vcmp.eq.f32.partialorder %v6628, 8.507059e+37
        %v6630 = vand.u32 %v5553, 2147483648
        %v6631 = vor.u32 1.1754944e-38, %v6630
        %v6632 = vsel %vm6629, %v6631, %v6627
        %v6633 = vmul.f32 1.0, %v6632
        %v6634 = vrcp.pop %v5554
        %v6635 = vmul.f32 %v5554, %v6634
        %v6636 = vsub.f32 1.0, %v6635
        %v6637 = vmul.f32 %v6634, %v6636
        %v6638 = vadd.f32 %v6634, %v6637
        %vm6639 = vweird.f32 %v5554
        %vm6640 = vweird.f32 %v6634
        %vm6641 = vmor %vm6639, %vm6640
        %v6642 = vsel %vm6641, %v6634, %v6638
        %v6643 = vand.u32 2147483647, %v5554
        %vm6644 = vcmp.eq.f32.partialorder %v6643, 8.507059e+37
        %v6645 = vand.u32 %v5554, 2147483648
        %v6646 = vor.u32 1.1754944e-38, %v6645
        %v6647 = vsel %vm6644, %v6646, %v6642
        %v6648 = vmul.f32 1.0, %v6647
        %v6649 = vrcp.pop %v5555
        %v6650 = vmul.f32 %v5555, %v6649
        %v6651 = vsub.f32 1.0, %v6650
        %v6652 = vmul.f32 %v6649, %v6651
        %v6653 = vadd.f32 %v6649, %v6652
        %vm6654 = vweird.f32 %v5555
        %vm6655 = vweird.f32 %v6649
        %vm6656 = vmor %vm6654, %vm6655
        %v6657 = vsel %vm6656, %v6649, %v6653
        %v6658 = vand.u32 2147483647, %v5555
        %vm6659 = vcmp.eq.f32.partialorder %v6658, 8.507059e+37
        %v6660 = vand.u32 %v5555, 2147483648
        %v6661 = vor.u32 1.1754944e-38, %v6660
        %v6662 = vsel %vm6659, %v6661, %v6657
        %v6663 = vmul.f32 1.0, %v6662
        %v6664 = vrcp.pop %v5556
        %v6665 = vmul.f32 %v5556, %v6664
        %v6666 = vsub.f32 1.0, %v6665
        %v6667 = vmul.f32 %v6664, %v6666
        %v6668 = vadd.f32 %v6664, %v6667
        %vm6669 = vweird.f32 %v5556
        %vm6670 = vweird.f32 %v6664
        %vm6671 = vmor %vm6669, %vm6670
        %v6672 = vsel %vm6671, %v6664, %v6668
        %v6673 = vand.u32 2147483647, %v5556
        %vm6674 = vcmp.eq.f32.partialorder %v6673, 8.507059e+37
        %v6675 = vand.u32 %v5556, 2147483648
        %v6676 = vor.u32 1.1754944e-38, %v6675
        %v6677 = vsel %vm6674, %v6676, %v6672
        %v6678 = vmul.f32 1.0, %v6677
        %v6679 = vrcp.pop %v5557
        %v6680 = vmul.f32 %v5557, %v6679
        %v6681 = vsub.f32 1.0, %v6680
        %v6682 = vmul.f32 %v6679, %v6681
        %v6683 = vadd.f32 %v6679, %v6682
        %vm6684 = vweird.f32 %v5557
        %vm6685 = vweird.f32 %v6679
        %vm6686 = vmor %vm6684, %vm6685
        %v6687 = vsel %vm6686, %v6679, %v6683
        %v6688 = vand.u32 2147483647, %v5557
        %vm6689 = vcmp.eq.f32.partialorder %v6688, 8.507059e+37
        %v6690 = vand.u32 %v5557, 2147483648
        %v6691 = vor.u32 1.1754944e-38, %v6690
        %v6692 = vsel %vm6689, %v6691, %v6687
        %v6693 = vmul.f32 1.0, %v6692
        %v6694 = vrcp.pop %v5558
        %v6695 = vmul.f32 %v5558, %v6694
        %v6696 = vsub.f32 1.0, %v6695
        %v6697 = vmul.f32 %v6694, %v6696
        %v6698 = vadd.f32 %v6694, %v6697
        %vm6699 = vweird.f32 %v5558
        %vm6700 = vweird.f32 %v6694
        %vm6701 = vmor %vm6699, %vm6700
        %v6702 = vsel %vm6701, %v6694, %v6698
        %v6703 = vand.u32 2147483647, %v5558
        %vm6704 = vcmp.eq.f32.partialorder %v6703, 8.507059e+37
        %v6705 = vand.u32 %v5558, 2147483648
        %v6706 = vor.u32 1.1754944e-38, %v6705
        %v6707 = vsel %vm6704, %v6706, %v6702
        %v6708 = vmul.f32 1.0, %v6707
        %v6709 = vrcp.pop %v5559
        %v6710 = vmul.f32 %v5559, %v6709
        %v6711 = vsub.f32 1.0, %v6710
        %v6712 = vmul.f32 %v6709, %v6711
        %v6713 = vadd.f32 %v6709, %v6712
        %vm6714 = vweird.f32 %v5559
        %vm6715 = vweird.f32 %v6709
        %vm6716 = vmor %vm6714, %vm6715
        %v6717 = vsel %vm6716, %v6709, %v6713
        %v6718 = vand.u32 2147483647, %v5559
        %vm6719 = vcmp.eq.f32.partialorder %v6718, 8.507059e+37
        %v6720 = vand.u32 %v5559, 2147483648
        %v6721 = vor.u32 1.1754944e-38, %v6720
        %v6722 = vsel %vm6719, %v6721, %v6717
        %v6723 = vmul.f32 1.0, %v6722
        %v6724 = vrcp.pop %v5560
        %v6725 = vmul.f32 %v5560, %v6724
        %v6726 = vsub.f32 1.0, %v6725
        %v6727 = vmul.f32 %v6724, %v6726
        %v6728 = vadd.f32 %v6724, %v6727
        %vm6729 = vweird.f32 %v5560
        %vm6730 = vweird.f32 %v6724
        %vm6731 = vmor %vm6729, %vm6730
        %v6732 = vsel %vm6731, %v6724, %v6728
        %v6733 = vand.u32 2147483647, %v5560
        %vm6734 = vcmp.eq.f32.partialorder %v6733, 8.507059e+37
        %v6735 = vand.u32 %v5560, 2147483648
        %v6736 = vor.u32 1.1754944e-38, %v6735
        %v6737 = vsel %vm6734, %v6736, %v6732
        %v6738 = vmul.f32 1.0, %v6737
        %v6739 = vrcp.pop %v5561
        %v6740 = vmul.f32 %v5561, %v6739
        %v6741 = vsub.f32 1.0, %v6740
        %v6742 = vmul.f32 %v6739, %v6741
        %v6743 = vadd.f32 %v6739, %v6742
        %vm6744 = vweird.f32 %v5561
        %vm6745 = vweird.f32 %v6739
        %vm6746 = vmor %vm6744, %vm6745
        %v6747 = vsel %vm6746, %v6739, %v6743
        %v6748 = vand.u32 2147483647, %v5561
        %vm6749 = vcmp.eq.f32.partialorder %v6748, 8.507059e+37
        %v6750 = vand.u32 %v5561, 2147483648
        %v6751 = vor.u32 1.1754944e-38, %v6750
        %v6752 = vsel %vm6749, %v6751, %v6747
        %v6753 = vmul.f32 1.0, %v6752
        %v6754 = vrcp.pop %v5562
        %v6755 = vmul.f32 %v5562, %v6754
        %v6756 = vsub.f32 1.0, %v6755
        %v6757 = vmul.f32 %v6754, %v6756
        %v6758 = vadd.f32 %v6754, %v6757
        %vm6759 = vweird.f32 %v5562
        %vm6760 = vweird.f32 %v6754
        %vm6761 = vmor %vm6759, %vm6760
        %v6762 = vsel %vm6761, %v6754, %v6758
        %v6763 = vand.u32 2147483647, %v5562
        %vm6764 = vcmp.eq.f32.partialorder %v6763, 8.507059e+37
        %v6765 = vand.u32 %v5562, 2147483648
        %v6766 = vor.u32 1.1754944e-38, %v6765
        %v6767 = vsel %vm6764, %v6766, %v6762
        %v6768 = vmul.f32 1.0, %v6767
        %v6769 = vrcp.pop %v5563
        %v6770 = vmul.f32 %v5563, %v6769
        %v6771 = vsub.f32 1.0, %v6770
        %v6772 = vmul.f32 %v6769, %v6771
        %v6773 = vadd.f32 %v6769, %v6772
        %vm6774 = vweird.f32 %v5563
        %vm6775 = vweird.f32 %v6769
        %vm6776 = vmor %vm6774, %vm6775
        %v6777 = vsel %vm6776, %v6769, %v6773
        %v6778 = vand.u32 2147483647, %v5563
        %vm6779 = vcmp.eq.f32.partialorder %v6778, 8.507059e+37
        %v6780 = vand.u32 %v5563, 2147483648
        %v6781 = vor.u32 1.1754944e-38, %v6780
        %v6782 = vsel %vm6779, %v6781, %v6777
        %v6783 = vmul.f32 1.0, %v6782
        %v6784 = vrcp.pop %v5564
        %v6785 = vmul.f32 %v5564, %v6784
        %v6786 = vsub.f32 1.0, %v6785
        %v6787 = vmul.f32 %v6784, %v6786
        %v6788 = vadd.f32 %v6784, %v6787
        %vm6789 = vweird.f32 %v5564
        %vm6790 = vweird.f32 %v6784
        %vm6791 = vmor %vm6789, %vm6790
        %v6792 = vsel %vm6791, %v6784, %v6788
        %v6793 = vand.u32 2147483647, %v5564
        %vm6794 = vcmp.eq.f32.partialorder %v6793, 8.507059e+37
        %v6795 = vand.u32 %v5564, 2147483648
        %v6796 = vor.u32 1.1754944e-38, %v6795
        %v6797 = vsel %vm6794, %v6796, %v6792
        %v6798 = vmul.f32 1.0, %v6797
        %v6799 = vrcp.pop %v5565
        %v6800 = vmul.f32 %v5565, %v6799
        %v6801 = vsub.f32 1.0, %v6800
        %v6802 = vmul.f32 %v6799, %v6801
        %v6803 = vadd.f32 %v6799, %v6802
        %vm6804 = vweird.f32 %v5565
        %vm6805 = vweird.f32 %v6799
        %vm6806 = vmor %vm6804, %vm6805
        %v6807 = vsel %vm6806, %v6799, %v6803
        %v6808 = vand.u32 2147483647, %v5565
        %vm6809 = vcmp.eq.f32.partialorder %v6808, 8.507059e+37
        %v6810 = vand.u32 %v5565, 2147483648
        %v6811 = vor.u32 1.1754944e-38, %v6810
        %v6812 = vsel %vm6809, %v6811, %v6807
        %v6813 = vmul.f32 1.0, %v6812
        %v6814 = vrcp.pop %v5566
        %v6815 = vmul.f32 %v5566, %v6814
        %v6816 = vsub.f32 1.0, %v6815
        %v6817 = vmul.f32 %v6814, %v6816
        %v6818 = vadd.f32 %v6814, %v6817
        %vm6819 = vweird.f32 %v5566
        %vm6820 = vweird.f32 %v6814
        %vm6821 = vmor %vm6819, %vm6820
        %v6822 = vsel %vm6821, %v6814, %v6818
        %v6823 = vand.u32 2147483647, %v5566
        %vm6824 = vcmp.eq.f32.partialorder %v6823, 8.507059e+37
        %v6825 = vand.u32 %v5566, 2147483648
        %v6826 = vor.u32 1.1754944e-38, %v6825
        %v6827 = vsel %vm6824, %v6826, %v6822
        %v6828 = vmul.f32 1.0, %v6827
        %v6829 = vrcp.pop %v5567
        %v6830 = vmul.f32 %v5567, %v6829
        %v6831 = vsub.f32 1.0, %v6830
        %v6832 = vmul.f32 %v6829, %v6831
        %v6833 = vadd.f32 %v6829, %v6832
        %vm6834 = vweird.f32 %v5567
        %vm6835 = vweird.f32 %v6829
        %vm6836 = vmor %vm6834, %vm6835
        %v6837 = vsel %vm6836, %v6829, %v6833
        %v6838 = vand.u32 2147483647, %v5567
        %vm6839 = vcmp.eq.f32.partialorder %v6838, 8.507059e+37
        %v6840 = vand.u32 %v5567, 2147483648
        %v6841 = vor.u32 1.1754944e-38, %v6840
        %v6842 = vsel %vm6839, %v6841, %v6837
        %v6843 = vmul.f32 1.0, %v6842
        %v6844 = vrcp.pop %v5568
        %v6845 = vmul.f32 %v5568, %v6844
        %v6846 = vsub.f32 1.0, %v6845
        %v6847 = vmul.f32 %v6844, %v6846
        %v6848 = vadd.f32 %v6844, %v6847
        %vm6849 = vweird.f32 %v5568
        %vm6850 = vweird.f32 %v6844
        %vm6851 = vmor %vm6849, %vm6850
        %v6852 = vsel %vm6851, %v6844, %v6848
        %v6853 = vand.u32 2147483647, %v5568
        %vm6854 = vcmp.eq.f32.partialorder %v6853, 8.507059e+37
        %v6855 = vand.u32 %v5568, 2147483648
        %v6856 = vor.u32 1.1754944e-38, %v6855
        %v6857 = vsel %vm6854, %v6856, %v6852
        %v6858 = vmul.f32 1.0, %v6857
        %v6859 = vrcp.pop %v5569
        %v6860 = vmul.f32 %v5569, %v6859
        %v6861 = vsub.f32 1.0, %v6860
        %v6862 = vmul.f32 %v6859, %v6861
        %v6863 = vadd.f32 %v6859, %v6862
        %vm6864 = vweird.f32 %v5569
        %vm6865 = vweird.f32 %v6859
        %vm6866 = vmor %vm6864, %vm6865
        %v6867 = vsel %vm6866, %v6859, %v6863
        %v6868 = vand.u32 2147483647, %v5569
        %vm6869 = vcmp.eq.f32.partialorder %v6868, 8.507059e+37
        %v6870 = vand.u32 %v5569, 2147483648
        %v6871 = vor.u32 1.1754944e-38, %v6870
        %v6872 = vsel %vm6869, %v6871, %v6867
        %v6873 = vmul.f32 1.0, %v6872
        %v6874 = vrcp.pop %v5570
        %v6875 = vmul.f32 %v5570, %v6874
        %v6876 = vsub.f32 1.0, %v6875
        %v6877 = vmul.f32 %v6874, %v6876
        %v6878 = vadd.f32 %v6874, %v6877
        %vm6879 = vweird.f32 %v5570
        %vm6880 = vweird.f32 %v6874
        %vm6881 = vmor %vm6879, %vm6880
        %v6882 = vsel %vm6881, %v6874, %v6878
        %v6883 = vand.u32 2147483647, %v5570
        %vm6884 = vcmp.eq.f32.partialorder %v6883, 8.507059e+37
        %v6885 = vand.u32 %v5570, 2147483648
        %v6886 = vor.u32 1.1754944e-38, %v6885
        %v6887 = vsel %vm6884, %v6886, %v6882
        %v6888 = vmul.f32 1.0, %v6887
        %v6889 = vrcp.pop %v5571
        %v6890 = vmul.f32 %v5571, %v6889
        %v6891 = vsub.f32 1.0, %v6890
        %v6892 = vmul.f32 %v6889, %v6891
        %v6893 = vadd.f32 %v6889, %v6892
        %vm6894 = vweird.f32 %v5571
        %vm6895 = vweird.f32 %v6889
        %vm6896 = vmor %vm6894, %vm6895
        %v6897 = vsel %vm6896, %v6889, %v6893
        %v6898 = vand.u32 2147483647, %v5571
        %vm6899 = vcmp.eq.f32.partialorder %v6898, 8.507059e+37
        %v6900 = vand.u32 %v5571, 2147483648
        %v6901 = vor.u32 1.1754944e-38, %v6900
        %v6902 = vsel %vm6899, %v6901, %v6897
        %v6903 = vmul.f32 1.0, %v6902
        %v6904 = vrcp.pop %v5572
        %v6905 = vmul.f32 %v5572, %v6904
        %v6906 = vsub.f32 1.0, %v6905
        %v6907 = vmul.f32 %v6904, %v6906
        %v6908 = vadd.f32 %v6904, %v6907
        %vm6909 = vweird.f32 %v5572
        %vm6910 = vweird.f32 %v6904
        %vm6911 = vmor %vm6909, %vm6910
        %v6912 = vsel %vm6911, %v6904, %v6908
        %v6913 = vand.u32 2147483647, %v5572
        %vm6914 = vcmp.eq.f32.partialorder %v6913, 8.507059e+37
        %v6915 = vand.u32 %v5572, 2147483648
        %v6916 = vor.u32 1.1754944e-38, %v6915
        %v6917 = vsel %vm6914, %v6916, %v6912
        %v6918 = vmul.f32 1.0, %v6917
        %v6919 = vrcp.pop %v5573
        %v6920 = vmul.f32 %v5573, %v6919
        %v6921 = vsub.f32 1.0, %v6920
        %v6922 = vmul.f32 %v6919, %v6921
        %v6923 = vadd.f32 %v6919, %v6922
        %vm6924 = vweird.f32 %v5573
        %vm6925 = vweird.f32 %v6919
        %vm6926 = vmor %vm6924, %vm6925
        %v6927 = vsel %vm6926, %v6919, %v6923
        %v6928 = vand.u32 2147483647, %v5573
        %vm6929 = vcmp.eq.f32.partialorder %v6928, 8.507059e+37
        %v6930 = vand.u32 %v5573, 2147483648
        %v6931 = vor.u32 1.1754944e-38, %v6930
        %v6932 = vsel %vm6929, %v6931, %v6927
        %v6933 = vmul.f32 1.0, %v6932
        %v6934 = vrcp.pop %v5574
        %v6935 = vmul.f32 %v5574, %v6934
        %v6936 = vsub.f32 1.0, %v6935
        %v6937 = vmul.f32 %v6934, %v6936
        %v6938 = vadd.f32 %v6934, %v6937
        %vm6939 = vweird.f32 %v5574
        %vm6940 = vweird.f32 %v6934
        %vm6941 = vmor %vm6939, %vm6940
        %v6942 = vsel %vm6941, %v6934, %v6938
        %v6943 = vand.u32 2147483647, %v5574
        %vm6944 = vcmp.eq.f32.partialorder %v6943, 8.507059e+37
        %v6945 = vand.u32 %v5574, 2147483648
        %v6946 = vor.u32 1.1754944e-38, %v6945
        %v6947 = vsel %vm6944, %v6946, %v6942
        %v6948 = vmul.f32 1.0, %v6947
        %v6949 = vrcp.pop %v5575
        %v6950 = vmul.f32 %v5575, %v6949
        %v6951 = vsub.f32 1.0, %v6950
        %v6952 = vmul.f32 %v6949, %v6951
        %v6953 = vadd.f32 %v6949, %v6952
        %vm6954 = vweird.f32 %v5575
        %vm6955 = vweird.f32 %v6949
        %vm6956 = vmor %vm6954, %vm6955
        %v6957 = vsel %vm6956, %v6949, %v6953
        %v6958 = vand.u32 2147483647, %v5575
        %vm6959 = vcmp.eq.f32.partialorder %v6958, 8.507059e+37
        %v6960 = vand.u32 %v5575, 2147483648
        %v6961 = vor.u32 1.1754944e-38, %v6960
        %v6962 = vsel %vm6959, %v6961, %v6957
        %v6963 = vmul.f32 1.0, %v6962
        %v6964 = vrcp.pop %v5576
        %v6965 = vmul.f32 %v5576, %v6964
        %v6966 = vsub.f32 1.0, %v6965
        %v6967 = vmul.f32 %v6964, %v6966
        %v6968 = vadd.f32 %v6964, %v6967
        %vm6969 = vweird.f32 %v5576
        %vm6970 = vweird.f32 %v6964
        %vm6971 = vmor %vm6969, %vm6970
        %v6972 = vsel %vm6971, %v6964, %v6968
        %v6973 = vand.u32 2147483647, %v5576
        %vm6974 = vcmp.eq.f32.partialorder %v6973, 8.507059e+37
        %v6975 = vand.u32 %v5576, 2147483648
        %v6976 = vor.u32 1.1754944e-38, %v6975
        %v6977 = vsel %vm6974, %v6976, %v6972
        %v6978 = vmul.f32 1.0, %v6977
        %v6979 = vrcp.pop %v5577
        %v6980 = vmul.f32 %v5577, %v6979
        %v6981 = vsub.f32 1.0, %v6980
        %v6982 = vmul.f32 %v6979, %v6981
        %v6983 = vadd.f32 %v6979, %v6982
        %vm6984 = vweird.f32 %v5577
        %vm6985 = vweird.f32 %v6979
        %vm6986 = vmor %vm6984, %vm6985
        %v6987 = vsel %vm6986, %v6979, %v6983
        %v6988 = vand.u32 2147483647, %v5577
        %vm6989 = vcmp.eq.f32.partialorder %v6988, 8.507059e+37
        %v6990 = vand.u32 %v5577, 2147483648
        %v6991 = vor.u32 1.1754944e-38, %v6990
        %v6992 = vsel %vm6989, %v6991, %v6987
        %v6993 = vmul.f32 1.0, %v6992
        %v6994 = vrcp.pop %v5578
        %v6995 = vmul.f32 %v5578, %v6994
        %v6996 = vsub.f32 1.0, %v6995
        %v6997 = vmul.f32 %v6994, %v6996
        %v6998 = vadd.f32 %v6994, %v6997
        %vm6999 = vweird.f32 %v5578
        %vm7000 = vweird.f32 %v6994
        %vm7001 = vmor %vm6999, %vm7000
        %v7002 = vsel %vm7001, %v6994, %v6998
        %v7003 = vand.u32 2147483647, %v5578
        %vm7004 = vcmp.eq.f32.partialorder %v7003, 8.507059e+37
        %v7005 = vand.u32 %v5578, 2147483648
        %v7006 = vor.u32 1.1754944e-38, %v7005
        %v7007 = vsel %vm7004, %v7006, %v7002
        %v7008 = vmul.f32 1.0, %v7007
        %v7009 = vrcp.pop %v5579
        %v7010 = vmul.f32 %v5579, %v7009
        %v7011 = vsub.f32 1.0, %v7010
        %v7012 = vmul.f32 %v7009, %v7011
        %v7013 = vadd.f32 %v7009, %v7012
        %vm7014 = vweird.f32 %v5579
        %vm7015 = vweird.f32 %v7009
        %vm7016 = vmor %vm7014, %vm7015
        %v7017 = vsel %vm7016, %v7009, %v7013
        %v7018 = vand.u32 2147483647, %v5579
        %vm7019 = vcmp.eq.f32.partialorder %v7018, 8.507059e+37
        %v7020 = vand.u32 %v5579, 2147483648
        %v7021 = vor.u32 1.1754944e-38, %v7020
        %v7022 = vsel %vm7019, %v7021, %v7017
        %v7023 = vmul.f32 1.0, %v7022
        %v7024 = vrcp.pop %v5580
        %v7025 = vmul.f32 %v5580, %v7024
        %v7026 = vsub.f32 1.0, %v7025
        %v7027 = vmul.f32 %v7024, %v7026
        %v7028 = vadd.f32 %v7024, %v7027
        %vm7029 = vweird.f32 %v5580
        %vm7030 = vweird.f32 %v7024
        %vm7031 = vmor %vm7029, %vm7030
        %v7032 = vsel %vm7031, %v7024, %v7028
        %v7033 = vand.u32 2147483647, %v5580
        %vm7034 = vcmp.eq.f32.partialorder %v7033, 8.507059e+37
        %v7035 = vand.u32 %v5580, 2147483648
        %v7036 = vor.u32 1.1754944e-38, %v7035
        %v7037 = vsel %vm7034, %v7036, %v7032
        %v7038 = vmul.f32 1.0, %v7037
        %v7039 = vrcp.pop %v5581
        %v7040 = vmul.f32 %v5581, %v7039
        %v7041 = vsub.f32 1.0, %v7040
        %v7042 = vmul.f32 %v7039, %v7041
        %v7043 = vadd.f32 %v7039, %v7042
        %vm7044 = vweird.f32 %v5581
        %vm7045 = vweird.f32 %v7039
        %vm7046 = vmor %vm7044, %vm7045
        %v7047 = vsel %vm7046, %v7039, %v7043
        %v7048 = vand.u32 2147483647, %v5581
        %vm7049 = vcmp.eq.f32.partialorder %v7048, 8.507059e+37
        %v7050 = vand.u32 %v5581, 2147483648
        %v7051 = vor.u32 1.1754944e-38, %v7050
        %v7052 = vsel %vm7049, %v7051, %v7047
        %v7053 = vmul.f32 1.0, %v7052
        %v7054 = vrcp.pop %v5582
        %v7055 = vmul.f32 %v5582, %v7054
        %v7056 = vsub.f32 1.0, %v7055
        %v7057 = vmul.f32 %v7054, %v7056
        %v7058 = vadd.f32 %v7054, %v7057
        %vm7059 = vweird.f32 %v5582
        %vm7060 = vweird.f32 %v7054
        %vm7061 = vmor %vm7059, %vm7060
        %v7062 = vsel %vm7061, %v7054, %v7058
        %v7063 = vand.u32 2147483647, %v5582
        %vm7064 = vcmp.eq.f32.partialorder %v7063, 8.507059e+37
        %v7065 = vand.u32 %v5582, 2147483648
        %v7066 = vor.u32 1.1754944e-38, %v7065
        %v7067 = vsel %vm7064, %v7066, %v7062
        %v7068 = vmul.f32 1.0, %v7067
        %v7069 = vrcp.pop %v5583
        %v7070 = vmul.f32 %v5583, %v7069
        %v7071 = vsub.f32 1.0, %v7070
        %v7072 = vmul.f32 %v7069, %v7071
        %v7073 = vadd.f32 %v7069, %v7072
        %vm7074 = vweird.f32 %v5583
        %vm7075 = vweird.f32 %v7069
        %vm7076 = vmor %vm7074, %vm7075
        %v7077 = vsel %vm7076, %v7069, %v7073
        %v7078 = vand.u32 2147483647, %v5583
        %vm7079 = vcmp.eq.f32.partialorder %v7078, 8.507059e+37
        %v7080 = vand.u32 %v5583, 2147483648
        %v7081 = vor.u32 1.1754944e-38, %v7080
        %v7082 = vsel %vm7079, %v7081, %v7077
        %v7083 = vmul.f32 1.0, %v7082
        %v7084 = vrcp.pop %v5584
        %v7085 = vmul.f32 %v5584, %v7084
        %v7086 = vsub.f32 1.0, %v7085
        %v7087 = vmul.f32 %v7084, %v7086
        %v7088 = vadd.f32 %v7084, %v7087
        %vm7089 = vweird.f32 %v5584
        %vm7090 = vweird.f32 %v7084
        %vm7091 = vmor %vm7089, %vm7090
        %v7092 = vsel %vm7091, %v7084, %v7088
        %v7093 = vand.u32 2147483647, %v5584
        %vm7094 = vcmp.eq.f32.partialorder %v7093, 8.507059e+37
        %v7095 = vand.u32 %v5584, 2147483648
        %v7096 = vor.u32 1.1754944e-38, %v7095
        %v7097 = vsel %vm7094, %v7096, %v7092
        %v7098 = vmul.f32 1.0, %v7097
        %v7099 = vrcp.pop %v5585
        %v7100 = vmul.f32 %v5585, %v7099
        %v7101 = vsub.f32 1.0, %v7100
        %v7102 = vmul.f32 %v7099, %v7101
        %v7103 = vadd.f32 %v7099, %v7102
        %vm7104 = vweird.f32 %v5585
        %vm7105 = vweird.f32 %v7099
        %vm7106 = vmor %vm7104, %vm7105
        %v7107 = vsel %vm7106, %v7099, %v7103
        %v7108 = vand.u32 2147483647, %v5585
        %vm7109 = vcmp.eq.f32.partialorder %v7108, 8.507059e+37
        %v7110 = vand.u32 %v5585, 2147483648
        %v7111 = vor.u32 1.1754944e-38, %v7110
        %v7112 = vsel %vm7109, %v7111, %v7107
        %v7113 = vmul.f32 1.0, %v7112
        %v7114 = vrcp.pop %v5586
        %v7115 = vmul.f32 %v5586, %v7114
        %v7116 = vsub.f32 1.0, %v7115
        %v7117 = vmul.f32 %v7114, %v7116
        %v7118 = vadd.f32 %v7114, %v7117
        %vm7119 = vweird.f32 %v5586
        %vm7120 = vweird.f32 %v7114
        %vm7121 = vmor %vm7119, %vm7120
        %v7122 = vsel %vm7121, %v7114, %v7118
        %v7123 = vand.u32 2147483647, %v5586
        %vm7124 = vcmp.eq.f32.partialorder %v7123, 8.507059e+37
        %v7125 = vand.u32 %v5586, 2147483648
        %v7126 = vor.u32 1.1754944e-38, %v7125
        %v7127 = vsel %vm7124, %v7126, %v7122
        %v7128 = vmul.f32 1.0, %v7127
        %v7129 = vrcp.pop %v5587
        %v7130 = vmul.f32 %v5587, %v7129
        %v7131 = vsub.f32 1.0, %v7130
        %v7132 = vmul.f32 %v7129, %v7131
        %v7133 = vadd.f32 %v7129, %v7132
        %vm7134 = vweird.f32 %v5587
        %vm7135 = vweird.f32 %v7129
        %vm7136 = vmor %vm7134, %vm7135
        %v7137 = vsel %vm7136, %v7129, %v7133
        %v7138 = vand.u32 2147483647, %v5587
        %vm7139 = vcmp.eq.f32.partialorder %v7138, 8.507059e+37
        %v7140 = vand.u32 %v5587, 2147483648
        %v7141 = vor.u32 1.1754944e-38, %v7140
        %v7142 = vsel %vm7139, %v7141, %v7137
        %v7143 = vmul.f32 1.0, %v7142
        %v7144 = vrcp.pop %v5588
        %v7145 = vmul.f32 %v5588, %v7144
        %v7146 = vsub.f32 1.0, %v7145
        %v7147 = vmul.f32 %v7144, %v7146
        %v7148 = vadd.f32 %v7144, %v7147
        %vm7149 = vweird.f32 %v5588
        %vm7150 = vweird.f32 %v7144
        %vm7151 = vmor %vm7149, %vm7150
        %v7152 = vsel %vm7151, %v7144, %v7148
        %v7153 = vand.u32 2147483647, %v5588
        %vm7154 = vcmp.eq.f32.partialorder %v7153, 8.507059e+37
        %v7155 = vand.u32 %v5588, 2147483648
        %v7156 = vor.u32 1.1754944e-38, %v7155
        %v7157 = vsel %vm7154, %v7156, %v7152
        %v7158 = vmul.f32 1.0, %v7157
        %v7159 = vrcp.pop %v5589
        %v7160 = vmul.f32 %v5589, %v7159
        %v7161 = vsub.f32 1.0, %v7160
        %v7162 = vmul.f32 %v7159, %v7161
        %v7163 = vadd.f32 %v7159, %v7162
        %vm7164 = vweird.f32 %v5589
        %vm7165 = vweird.f32 %v7159
        %vm7166 = vmor %vm7164, %vm7165
        %v7167 = vsel %vm7166, %v7159, %v7163
        %v7168 = vand.u32 2147483647, %v5589
        %vm7169 = vcmp.eq.f32.partialorder %v7168, 8.507059e+37
        %v7170 = vand.u32 %v5589, 2147483648
        %v7171 = vor.u32 1.1754944e-38, %v7170
        %v7172 = vsel %vm7169, %v7171, %v7167
        %v7173 = vmul.f32 1.0, %v7172
        %v7174 = vrcp.pop %v5590
        %v7175 = vmul.f32 %v5590, %v7174
        %v7176 = vsub.f32 1.0, %v7175
        %v7177 = vmul.f32 %v7174, %v7176
        %v7178 = vadd.f32 %v7174, %v7177
        %vm7179 = vweird.f32 %v5590
        %vm7180 = vweird.f32 %v7174
        %vm7181 = vmor %vm7179, %vm7180
        %v7182 = vsel %vm7181, %v7174, %v7178
        %v7183 = vand.u32 2147483647, %v5590
        %vm7184 = vcmp.eq.f32.partialorder %v7183, 8.507059e+37
        %v7185 = vand.u32 %v5590, 2147483648
        %v7186 = vor.u32 1.1754944e-38, %v7185
        %v7187 = vsel %vm7184, %v7186, %v7182
        %v7188 = vmul.f32 1.0, %v7187
        %v7189 = vrcp.pop %v5591
        %v7190 = vmul.f32 %v5591, %v7189
        %v7191 = vsub.f32 1.0, %v7190
        %v7192 = vmul.f32 %v7189, %v7191
        %v7193 = vadd.f32 %v7189, %v7192
        %vm7194 = vweird.f32 %v5591
        %vm7195 = vweird.f32 %v7189
        %vm7196 = vmor %vm7194, %vm7195
        %v7197 = vsel %vm7196, %v7189, %v7193
        %v7198 = vand.u32 2147483647, %v5591
        %vm7199 = vcmp.eq.f32.partialorder %v7198, 8.507059e+37
        %v7200 = vand.u32 %v5591, 2147483648
        %v7201 = vor.u32 1.1754944e-38, %v7200
        %v7202 = vsel %vm7199, %v7201, %v7197
        %v7203 = vmul.f32 1.0, %v7202
        %v7204 = vrcp.pop %v5592
        %v7205 = vmul.f32 %v5592, %v7204
        %v7206 = vsub.f32 1.0, %v7205
        %v7207 = vmul.f32 %v7204, %v7206
        %v7208 = vadd.f32 %v7204, %v7207
        %vm7209 = vweird.f32 %v5592
        %vm7210 = vweird.f32 %v7204
        %vm7211 = vmor %vm7209, %vm7210
        %v7212 = vsel %vm7211, %v7204, %v7208
        %v7213 = vand.u32 2147483647, %v5592
        %vm7214 = vcmp.eq.f32.partialorder %v7213, 8.507059e+37
        %v7215 = vand.u32 %v5592, 2147483648
        %v7216 = vor.u32 1.1754944e-38, %v7215
        %v7217 = vsel %vm7214, %v7216, %v7212
        %v7218 = vmul.f32 1.0, %v7217
        %v7219 = vrcp.pop %v5593
        %v7220 = vmul.f32 %v5593, %v7219
        %v7221 = vsub.f32 1.0, %v7220
        %v7222 = vmul.f32 %v7219, %v7221
        %v7223 = vadd.f32 %v7219, %v7222
        %vm7224 = vweird.f32 %v5593
        %vm7225 = vweird.f32 %v7219
        %vm7226 = vmor %vm7224, %vm7225
        %v7227 = vsel %vm7226, %v7219, %v7223
        %v7228 = vand.u32 2147483647, %v5593
        %vm7229 = vcmp.eq.f32.partialorder %v7228, 8.507059e+37
        %v7230 = vand.u32 %v5593, 2147483648
        %v7231 = vor.u32 1.1754944e-38, %v7230
        %v7232 = vsel %vm7229, %v7231, %v7227
        %v7233 = vmul.f32 1.0, %v7232
        %v7234 = vrcp.pop %v5594
        %v7235 = vmul.f32 %v5594, %v7234
        %v7236 = vsub.f32 1.0, %v7235
        %v7237 = vmul.f32 %v7234, %v7236
        %v7238 = vadd.f32 %v7234, %v7237
        %vm7239 = vweird.f32 %v5594
        %vm7240 = vweird.f32 %v7234
        %vm7241 = vmor %vm7239, %vm7240
        %v7242 = vsel %vm7241, %v7234, %v7238
        %v7243 = vand.u32 2147483647, %v5594
        %vm7244 = vcmp.eq.f32.partialorder %v7243, 8.507059e+37
        %v7245 = vand.u32 %v5594, 2147483648
        %v7246 = vor.u32 1.1754944e-38, %v7245
        %v7247 = vsel %vm7244, %v7246, %v7242
        %v7248 = vmul.f32 1.0, %v7247
        %v7249 = vrcp.pop %v5595
        %v7250 = vmul.f32 %v5595, %v7249
        %v7251 = vsub.f32 1.0, %v7250
        %v7252 = vmul.f32 %v7249, %v7251
        %v7253 = vadd.f32 %v7249, %v7252
        %vm7254 = vweird.f32 %v5595
        %vm7255 = vweird.f32 %v7249
        %vm7256 = vmor %vm7254, %vm7255
        %v7257 = vsel %vm7256, %v7249, %v7253
        %v7258 = vand.u32 2147483647, %v5595
        %vm7259 = vcmp.eq.f32.partialorder %v7258, 8.507059e+37
        %v7260 = vand.u32 %v5595, 2147483648
        %v7261 = vor.u32 1.1754944e-38, %v7260
        %v7262 = vsel %vm7259, %v7261, %v7257
        %v7263 = vmul.f32 1.0, %v7262
        %v7264 = vrcp.pop %v5596
        %v7265 = vmul.f32 %v5596, %v7264
        %v7266 = vsub.f32 1.0, %v7265
        %v7267 = vmul.f32 %v7264, %v7266
        %v7268 = vadd.f32 %v7264, %v7267
        %vm7269 = vweird.f32 %v5596
        %vm7270 = vweird.f32 %v7264
        %vm7271 = vmor %vm7269, %vm7270
        %v7272 = vsel %vm7271, %v7264, %v7268
        %v7273 = vand.u32 2147483647, %v5596
        %vm7274 = vcmp.eq.f32.partialorder %v7273, 8.507059e+37
        %v7275 = vand.u32 %v5596, 2147483648
        %v7276 = vor.u32 1.1754944e-38, %v7275
        %v7277 = vsel %vm7274, %v7276, %v7272
        %v7278 = vmul.f32 1.0, %v7277
        %v7279 = vrcp.pop %v5597
        %v7280 = vmul.f32 %v5597, %v7279
        %v7281 = vsub.f32 1.0, %v7280
        %v7282 = vmul.f32 %v7279, %v7281
        %v7283 = vadd.f32 %v7279, %v7282
        %vm7284 = vweird.f32 %v5597
        %vm7285 = vweird.f32 %v7279
        %vm7286 = vmor %vm7284, %vm7285
        %v7287 = vsel %vm7286, %v7279, %v7283
        %v7288 = vand.u32 2147483647, %v5597
        %vm7289 = vcmp.eq.f32.partialorder %v7288, 8.507059e+37
        %v7290 = vand.u32 %v5597, 2147483648
        %v7291 = vor.u32 1.1754944e-38, %v7290
        %v7292 = vsel %vm7289, %v7291, %v7287
        %v7293 = vmul.f32 1.0, %v7292
        %v7294 = vrcp.pop %v5598
        %v7295 = vmul.f32 %v5598, %v7294
        %v7296 = vsub.f32 1.0, %v7295
        %v7297 = vmul.f32 %v7294, %v7296
        %v7298 = vadd.f32 %v7294, %v7297
        %vm7299 = vweird.f32 %v5598
        %vm7300 = vweird.f32 %v7294
        %vm7301 = vmor %vm7299, %vm7300
        %v7302 = vsel %vm7301, %v7294, %v7298
        %v7303 = vand.u32 2147483647, %v5598
        %vm7304 = vcmp.eq.f32.partialorder %v7303, 8.507059e+37
        %v7305 = vand.u32 %v5598, 2147483648
        %v7306 = vor.u32 1.1754944e-38, %v7305
        %v7307 = vsel %vm7304, %v7306, %v7302
        %v7308 = vmul.f32 1.0, %v7307
        %v7309 = vrcp.pop %v5599
        %v7310 = vmul.f32 %v5599, %v7309
        %v7311 = vsub.f32 1.0, %v7310
        %v7312 = vmul.f32 %v7309, %v7311
        %v7313 = vadd.f32 %v7309, %v7312
        %vm7314 = vweird.f32 %v5599
        %vm7315 = vweird.f32 %v7309
        %vm7316 = vmor %vm7314, %vm7315
        %v7317 = vsel %vm7316, %v7309, %v7313
        %v7318 = vand.u32 2147483647, %v5599
        %vm7319 = vcmp.eq.f32.partialorder %v7318, 8.507059e+37
        %v7320 = vand.u32 %v5599, 2147483648
        %v7321 = vor.u32 1.1754944e-38, %v7320
        %v7322 = vsel %vm7319, %v7321, %v7317
        %v7323 = vmul.f32 1.0, %v7322
        %v7324 = vrcp.pop %v5600
        %v7325 = vmul.f32 %v5600, %v7324
        %v7326 = vsub.f32 1.0, %v7325
        %v7327 = vmul.f32 %v7324, %v7326
        %v7328 = vadd.f32 %v7324, %v7327
        %vm7329 = vweird.f32 %v5600
        %vm7330 = vweird.f32 %v7324
        %vm7331 = vmor %vm7329, %vm7330
        %v7332 = vsel %vm7331, %v7324, %v7328
        %v7333 = vand.u32 2147483647, %v5600
        %vm7334 = vcmp.eq.f32.partialorder %v7333, 8.507059e+37
        %v7335 = vand.u32 %v5600, 2147483648
        %v7336 = vor.u32 1.1754944e-38, %v7335
        %v7337 = vsel %vm7334, %v7336, %v7332
        %v7338 = vmul.f32 1.0, %v7337
        %v7339 = vrcp.pop %v5601
        %v7340 = vmul.f32 %v5601, %v7339
        %v7341 = vsub.f32 1.0, %v7340
        %v7342 = vmul.f32 %v7339, %v7341
        %v7343 = vadd.f32 %v7339, %v7342
        %vm7344 = vweird.f32 %v5601
        %vm7345 = vweird.f32 %v7339
        %vm7346 = vmor %vm7344, %vm7345
        %v7347 = vsel %vm7346, %v7339, %v7343
        %v7348 = vand.u32 2147483647, %v5601
        %vm7349 = vcmp.eq.f32.partialorder %v7348, 8.507059e+37
        %v7350 = vand.u32 %v5601, 2147483648
        %v7351 = vor.u32 1.1754944e-38, %v7350
        %v7352 = vsel %vm7349, %v7351, %v7347
        %v7353 = vmul.f32 1.0, %v7352
        %v7354 = vrcp.pop %v5602
        %v7355 = vmul.f32 %v5602, %v7354
        %v7356 = vsub.f32 1.0, %v7355
        %v7357 = vmul.f32 %v7354, %v7356
        %v7358 = vadd.f32 %v7354, %v7357
        %vm7359 = vweird.f32 %v5602
        %vm7360 = vweird.f32 %v7354
        %vm7361 = vmor %vm7359, %vm7360
        %v7362 = vsel %vm7361, %v7354, %v7358
        %v7363 = vand.u32 2147483647, %v5602
        %vm7364 = vcmp.eq.f32.partialorder %v7363, 8.507059e+37
        %v7365 = vand.u32 %v5602, 2147483648
        %v7366 = vor.u32 1.1754944e-38, %v7365
        %v7367 = vsel %vm7364, %v7366, %v7362
        %v7368 = vmul.f32 1.0, %v7367
        %v7369 = vrcp.pop %v5603
        %v7370 = vmul.f32 %v5603, %v7369
        %v7371 = vsub.f32 1.0, %v7370
        %v7372 = vmul.f32 %v7369, %v7371
        %v7373 = vadd.f32 %v7369, %v7372
        %vm7374 = vweird.f32 %v5603
        %vm7375 = vweird.f32 %v7369
        %vm7376 = vmor %vm7374, %vm7375
        %v7377 = vsel %vm7376, %v7369, %v7373
        %v7378 = vand.u32 2147483647, %v5603
        %vm7379 = vcmp.eq.f32.partialorder %v7378, 8.507059e+37
        %v7380 = vand.u32 %v5603, 2147483648
        %v7381 = vor.u32 1.1754944e-38, %v7380
        %v7382 = vsel %vm7379, %v7381, %v7377
        %v7383 = vmul.f32 1.0, %v7382
        %v7384 = vrcp.pop %v5604
        %v7385 = vmul.f32 %v5604, %v7384
        %v7386 = vsub.f32 1.0, %v7385
        %v7387 = vmul.f32 %v7384, %v7386
        %v7388 = vadd.f32 %v7384, %v7387
        %vm7389 = vweird.f32 %v5604
        %vm7390 = vweird.f32 %v7384
        %vm7391 = vmor %vm7389, %vm7390
        %v7392 = vsel %vm7391, %v7384, %v7388
        %v7393 = vand.u32 2147483647, %v5604
        %vm7394 = vcmp.eq.f32.partialorder %v7393, 8.507059e+37
        %v7395 = vand.u32 %v5604, 2147483648
        %v7396 = vor.u32 1.1754944e-38, %v7395
        %v7397 = vsel %vm7394, %v7396, %v7392
        %v7398 = vmul.f32 1.0, %v7397
        %v7399 = vrcp.pop %v5605
        %v7400 = vmul.f32 %v5605, %v7399
        %v7401 = vsub.f32 1.0, %v7400
        %v7402 = vmul.f32 %v7399, %v7401
        %v7403 = vadd.f32 %v7399, %v7402
        %vm7404 = vweird.f32 %v5605
        %vm7405 = vweird.f32 %v7399
        %vm7406 = vmor %vm7404, %vm7405
        %v7407 = vsel %vm7406, %v7399, %v7403
        %v7408 = vand.u32 2147483647, %v5605
        %vm7409 = vcmp.eq.f32.partialorder %v7408, 8.507059e+37
        %v7410 = vand.u32 %v5605, 2147483648
        %v7411 = vor.u32 1.1754944e-38, %v7410
        %v7412 = vsel %vm7409, %v7411, %v7407
        %v7413 = vmul.f32 1.0, %v7412
        %v7414 = vrcp.pop %v5606
        %v7415 = vmul.f32 %v5606, %v7414
        %v7416 = vsub.f32 1.0, %v7415
        %v7417 = vmul.f32 %v7414, %v7416
        %v7418 = vadd.f32 %v7414, %v7417
        %vm7419 = vweird.f32 %v5606
        %vm7420 = vweird.f32 %v7414
        %vm7421 = vmor %vm7419, %vm7420
        %v7422 = vsel %vm7421, %v7414, %v7418
        %v7423 = vand.u32 2147483647, %v5606
        %vm7424 = vcmp.eq.f32.partialorder %v7423, 8.507059e+37
        %v7425 = vand.u32 %v5606, 2147483648
        %v7426 = vor.u32 1.1754944e-38, %v7425
        %v7427 = vsel %vm7424, %v7426, %v7422
        %v7428 = vmul.f32 1.0, %v7427
        %v7429 = vrcp.pop %v5607
        %v7430 = vmul.f32 %v5607, %v7429
        %v7431 = vsub.f32 1.0, %v7430
        %v7432 = vmul.f32 %v7429, %v7431
        %v7433 = vadd.f32 %v7429, %v7432
        %vm7434 = vweird.f32 %v5607
        %vm7435 = vweird.f32 %v7429
        %vm7436 = vmor %vm7434, %vm7435
        %v7437 = vsel %vm7436, %v7429, %v7433
        %v7438 = vand.u32 2147483647, %v5607
        %vm7439 = vcmp.eq.f32.partialorder %v7438, 8.507059e+37
        %v7440 = vand.u32 %v5607, 2147483648
        %v7441 = vor.u32 1.1754944e-38, %v7440
        %v7442 = vsel %vm7439, %v7441, %v7437
        %v7443 = vmul.f32 1.0, %v7442
        %v7444 = vrcp.pop %v5608
        %v7445 = vmul.f32 %v5608, %v7444
        %v7446 = vsub.f32 1.0, %v7445
        %v7447 = vmul.f32 %v7444, %v7446
        %v7448 = vadd.f32 %v7444, %v7447
        %vm7449 = vweird.f32 %v5608
        %vm7450 = vweird.f32 %v7444
        %vm7451 = vmor %vm7449, %vm7450
        %v7452 = vsel %vm7451, %v7444, %v7448
        %v7453 = vand.u32 2147483647, %v5608
        %vm7454 = vcmp.eq.f32.partialorder %v7453, 8.507059e+37
        %v7455 = vand.u32 %v5608, 2147483648
        %v7456 = vor.u32 1.1754944e-38, %v7455
        %v7457 = vsel %vm7454, %v7456, %v7452
        %v7458 = vmul.f32 1.0, %v7457
        %v7459 = vrcp.pop %v5609
        %v7460 = vmul.f32 %v5609, %v7459
        %v7461 = vsub.f32 1.0, %v7460
        %v7462 = vmul.f32 %v7459, %v7461
        %v7463 = vadd.f32 %v7459, %v7462
        %vm7464 = vweird.f32 %v5609
        %vm7465 = vweird.f32 %v7459
        %vm7466 = vmor %vm7464, %vm7465
        %v7467 = vsel %vm7466, %v7459, %v7463
        %v7468 = vand.u32 2147483647, %v5609
        %vm7469 = vcmp.eq.f32.partialorder %v7468, 8.507059e+37
        %v7470 = vand.u32 %v5609, 2147483648
        %v7471 = vor.u32 1.1754944e-38, %v7470
        %v7472 = vsel %vm7469, %v7471, %v7467
        %v7473 = vmul.f32 1.0, %v7472
        %v7474 = vrcp.pop %v5610
        %v7475 = vmul.f32 %v5610, %v7474
        %v7476 = vsub.f32 1.0, %v7475
        %v7477 = vmul.f32 %v7474, %v7476
        %v7478 = vadd.f32 %v7474, %v7477
        %vm7479 = vweird.f32 %v5610
        %vm7480 = vweird.f32 %v7474
        %vm7481 = vmor %vm7479, %vm7480
        %v7482 = vsel %vm7481, %v7474, %v7478
        %v7483 = vand.u32 2147483647, %v5610
        %vm7484 = vcmp.eq.f32.partialorder %v7483, 8.507059e+37
        %v7485 = vand.u32 %v5610, 2147483648
        %v7486 = vor.u32 1.1754944e-38, %v7485
        %v7487 = vsel %vm7484, %v7486, %v7482
        %v7488 = vmul.f32 1.0, %v7487
        %v7489 = vrcp.pop %v5611
        %v7490 = vmul.f32 %v5611, %v7489
        %v7491 = vsub.f32 1.0, %v7490
        %v7492 = vmul.f32 %v7489, %v7491
        %v7493 = vadd.f32 %v7489, %v7492
        %vm7494 = vweird.f32 %v5611
        %vm7495 = vweird.f32 %v7489
        %vm7496 = vmor %vm7494, %vm7495
        %v7497 = vsel %vm7496, %v7489, %v7493
        %v7498 = vand.u32 2147483647, %v5611
        %vm7499 = vcmp.eq.f32.partialorder %v7498, 8.507059e+37
        %v7500 = vand.u32 %v5611, 2147483648
        %v7501 = vor.u32 1.1754944e-38, %v7500
        %v7502 = vsel %vm7499, %v7501, %v7497
        %v7503 = vmul.f32 1.0, %v7502
        %v7504 = vrcp.pop %v5612
        %v7505 = vmul.f32 %v5612, %v7504
        %v7506 = vsub.f32 1.0, %v7505
        %v7507 = vmul.f32 %v7504, %v7506
        %v7508 = vadd.f32 %v7504, %v7507
        %vm7509 = vweird.f32 %v5612
        %vm7510 = vweird.f32 %v7504
        %vm7511 = vmor %vm7509, %vm7510
        %v7512 = vsel %vm7511, %v7504, %v7508
        %v7513 = vand.u32 2147483647, %v5612
        %vm7514 = vcmp.eq.f32.partialorder %v7513, 8.507059e+37
        %v7515 = vand.u32 %v5612, 2147483648
        %v7516 = vor.u32 1.1754944e-38, %v7515
        %v7517 = vsel %vm7514, %v7516, %v7512
        %v7518 = vmul.f32 1.0, %v7517
        %v7519 = vrcp.pop %v5613
        %v7520 = vmul.f32 %v5613, %v7519
        %v7521 = vsub.f32 1.0, %v7520
        %v7522 = vmul.f32 %v7519, %v7521
        %v7523 = vadd.f32 %v7519, %v7522
        %vm7524 = vweird.f32 %v5613
        %vm7525 = vweird.f32 %v7519
        %vm7526 = vmor %vm7524, %vm7525
        %v7527 = vsel %vm7526, %v7519, %v7523
        %v7528 = vand.u32 2147483647, %v5613
        %vm7529 = vcmp.eq.f32.partialorder %v7528, 8.507059e+37
        %v7530 = vand.u32 %v5613, 2147483648
        %v7531 = vor.u32 1.1754944e-38, %v7530
        %v7532 = vsel %vm7529, %v7531, %v7527
        %v7533 = vmul.f32 1.0, %v7532
        %v7534 = vld [vmem:[%s4] sm:$0xff]
        %v7535 = vld [vmem:[%s4 + $0x8] sm:$0xff]
        %v7536 = vmul.f32 %v7534, %v4302
        %v7537 = vmul.f32 %v7535, %v4305
        %v7538 = vmul.f32 %v7534, %v4308
        %v7539 = vmul.f32 %v7535, %v4311
        %v7540 = vmul.f32 %v7534, %v4314
        %v7541 = vmul.f32 %v7535, %v4317
        %v7542 = vmul.f32 %v7534, %v4320
        %v7543 = vmul.f32 %v7535, %v4323
        %v7544 = vmul.f32 %v7534, %v4326
        %v7545 = vmul.f32 %v7535, %v4329
        %v7546 = vmul.f32 %v7534, %v4332
        %v7547 = vmul.f32 %v7535, %v4335
        %v7548 = vmul.f32 %v7534, %v4338
        %v7549 = vmul.f32 %v7535, %v4341
        %v7550 = vmul.f32 %v7534, %v4344
        %v7551 = vmul.f32 %v7535, %v4347
        %v7552 = vmul.f32 %v7534, %v4350
        %v7553 = vmul.f32 %v7535, %v4353
        %v7554 = vmul.f32 %v7534, %v4356
        %v7555 = vmul.f32 %v7535, %v4359
        %v7556 = vmul.f32 %v7534, %v4362
        %v7557 = vmul.f32 %v7535, %v4365
        %v7558 = vmul.f32 %v7534, %v4368
        %v7559 = vmul.f32 %v7535, %v4371
        %v7560 = vmul.f32 %v7534, %v4374
        %v7561 = vmul.f32 %v7535, %v4377
        %v7562 = vmul.f32 %v7534, %v4380
        %v7563 = vmul.f32 %v7535, %v4383
        %v7564 = vmul.f32 %v7534, %v4386
        %v7565 = vmul.f32 %v7535, %v4389
        %v7566 = vmul.f32 %v7534, %v4392
        %v7567 = vmul.f32 %v7535, %v4395
        %v7568 = vmul.f32 %v7534, %v4398
        %v7569 = vmul.f32 %v7535, %v4401
        %v7570 = vmul.f32 %v7534, %v4404
        %v7571 = vmul.f32 %v7535, %v4407
        %v7572 = vmul.f32 %v7534, %v4410
        %v7573 = vmul.f32 %v7535, %v4413
        %v7574 = vmul.f32 %v7534, %v4416
        %v7575 = vmul.f32 %v7535, %v4419
        %v7576 = vmul.f32 %v7534, %v4422
        %v7577 = vmul.f32 %v7535, %v4425
        %v7578 = vmul.f32 %v7534, %v4428
        %v7579 = vmul.f32 %v7535, %v4431
        %v7580 = vmul.f32 %v7534, %v4434
        %v7581 = vmul.f32 %v7535, %v4437
        %v7582 = vmul.f32 %v7534, %v4440
        %v7583 = vmul.f32 %v7535, %v4443
        %v7584 = vmul.f32 %v7534, %v4446
        %v7585 = vmul.f32 %v7535, %v4449
        %v7586 = vmul.f32 %v7534, %v4452
        %v7587 = vmul.f32 %v7535, %v4455
        %v7588 = vmul.f32 %v7534, %v4458
        %v7589 = vmul.f32 %v7535, %v4461
        %v7590 = vmul.f32 %v7534, %v4464
        %v7591 = vmul.f32 %v7535, %v4467
        %v7592 = vmul.f32 %v7534, %v4470
        %v7593 = vmul.f32 %v7535, %v4473
        %v7594 = vmul.f32 %v7534, %v4476
        %v7595 = vmul.f32 %v7535, %v4479
        %v7596 = vmul.f32 %v7534, %v4482
        %v7597 = vmul.f32 %v7535, %v4485
        %v7598 = vmul.f32 %v7534, %v4488
        %v7599 = vmul.f32 %v7535, %v4491
        %v7600 = vmul.f32 %v7534, %v4494
        %v7601 = vmul.f32 %v7535, %v4497
        %v7602 = vmul.f32 %v7534, %v4500
        %v7603 = vmul.f32 %v7535, %v4503
        %v7604 = vmul.f32 %v7534, %v4506
        %v7605 = vmul.f32 %v7535, %v4509
        %v7606 = vmul.f32 %v7534, %v4512
        %v7607 = vmul.f32 %v7535, %v4515
        %v7608 = vmul.f32 %v7534, %v4518
        %v7609 = vmul.f32 %v7535, %v4521
        %v7610 = vmul.f32 %v7534, %v4524
        %v7611 = vmul.f32 %v7535, %v4527
        %v7612 = vmul.f32 %v7534, %v4530
        %v7613 = vmul.f32 %v7535, %v4533
        %v7614 = vmul.f32 %v7534, %v4536
        %v7615 = vmul.f32 %v7535, %v4539
        %v7616 = vmul.f32 %v7534, %v4542
        %v7617 = vmul.f32 %v7535, %v4545
        %v7618 = vmul.f32 %v7534, %v4548
        %v7619 = vmul.f32 %v7535, %v4551
        %v7620 = vmul.f32 %v7534, %v4554
        %v7621 = vmul.f32 %v7535, %v4557
        %v7622 = vmul.f32 %v7534, %v4560
        %v7623 = vmul.f32 %v7535, %v4563
        %v7624 = vmul.f32 %v7534, %v4566
        %v7625 = vmul.f32 %v7535, %v4569
        %v7626 = vmul.f32 %v7534, %v4572
        %v7627 = vmul.f32 %v7535, %v4575
        %v7628 = vmul.f32 %v7534, %v4578
        %v7629 = vmul.f32 %v7535, %v4581
        %v7630 = vmul.f32 %v7534, %v4584
        %v7631 = vmul.f32 %v7535, %v4587
        %v7632 = vmul.f32 %v7534, %v4590
        %v7633 = vmul.f32 %v7535, %v4593
        %v7634 = vmul.f32 %v7534, %v4596
        %v7635 = vmul.f32 %v7535, %v4599
        %v7636 = vmul.f32 %v7534, %v4602
        %v7637 = vmul.f32 %v7535, %v4605
        %v7638 = vmul.f32 %v7534, %v4608
        %v7639 = vmul.f32 %v7535, %v4611
        %v7640 = vmul.f32 %v7534, %v4614
        %v7641 = vmul.f32 %v7535, %v4617
        %v7642 = vmul.f32 %v7534, %v4620
        %v7643 = vmul.f32 %v7535, %v4623
        %v7644 = vmul.f32 %v7534, %v4626
        %v7645 = vmul.f32 %v7535, %v4629
        %v7646 = vmul.f32 %v7534, %v4632
        %v7647 = vmul.f32 %v7535, %v4635
        %v7648 = vmul.f32 %v7534, %v4638
        %v7649 = vmul.f32 %v7535, %v4641
        %v7650 = vmul.f32 %v7534, %v4644
        %v7651 = vmul.f32 %v7535, %v4647
        %v7652 = vmul.f32 %v7534, %v4650
        %v7653 = vmul.f32 %v7535, %v4653
        %v7654 = vmul.f32 %v7534, %v4656
        %v7655 = vmul.f32 %v7535, %v4659
        %v7656 = vmul.f32 %v7534, %v4662
        %v7657 = vmul.f32 %v7535, %v4665
        %v7658 = vmul.f32 %v7534, %v4668
        %v7659 = vmul.f32 %v7535, %v4671
        %v7660 = vmul.f32 %v7534, %v4674
        %v7661 = vmul.f32 %v7535, %v4677
        %v7662 = vmul.f32 %v7534, %v4680
        %v7663 = vmul.f32 %v7535, %v4683
        %v7664 = vadd.f32 %v7536, %v7537
        %v7665 = vrot.slane %v7664, 4
        %v7666 = vadd.f32 %v7664, %v7665
        %v7667 = vrot.slane %v7666, 2
        %v7668 = vadd.f32 %v7666, %v7667
        %v7669 = vrot.slane %v7668, 1
        %v7670 = vadd.f32 %v7668, %v7669
        %v7671 = vadd.f32 %v7538, %v7539
        %v7672 = vrot.slane %v7671, 4
        %v7673 = vadd.f32 %v7671, %v7672
        %v7674 = vrot.slane %v7673, 2
        %v7675 = vadd.f32 %v7673, %v7674
        %v7676 = vrot.slane %v7675, 1
        %v7677 = vadd.f32 %v7675, %v7676
        %v7678 = vadd.f32 %v7540, %v7541
        %v7679 = vrot.slane %v7678, 4
        %v7680 = vadd.f32 %v7678, %v7679
        %v7681 = vrot.slane %v7680, 2
        %v7682 = vadd.f32 %v7680, %v7681
        %v7683 = vrot.slane %v7682, 1
        %v7684 = vadd.f32 %v7682, %v7683
        %v7685 = vadd.f32 %v7542, %v7543
        %v7686 = vrot.slane %v7685, 4
        %v7687 = vadd.f32 %v7685, %v7686
        %v7688 = vrot.slane %v7687, 2
        %v7689 = vadd.f32 %v7687, %v7688
        %v7690 = vrot.slane %v7689, 1
        %v7691 = vadd.f32 %v7689, %v7690
        %v7692 = vadd.f32 %v7544, %v7545
        %v7693 = vrot.slane %v7692, 4
        %v7694 = vadd.f32 %v7692, %v7693
        %v7695 = vrot.slane %v7694, 2
        %v7696 = vadd.f32 %v7694, %v7695
        %v7697 = vrot.slane %v7696, 1
        %v7698 = vadd.f32 %v7696, %v7697
        %v7699 = vadd.f32 %v7546, %v7547
        %v7700 = vrot.slane %v7699, 4
        %v7701 = vadd.f32 %v7699, %v7700
        %v7702 = vrot.slane %v7701, 2
        %v7703 = vadd.f32 %v7701, %v7702
        %v7704 = vrot.slane %v7703, 1
        %v7705 = vadd.f32 %v7703, %v7704
        %v7706 = vadd.f32 %v7548, %v7549
        %v7707 = vrot.slane %v7706, 4
        %v7708 = vadd.f32 %v7706, %v7707
        %v7709 = vrot.slane %v7708, 2
        %v7710 = vadd.f32 %v7708, %v7709
        %v7711 = vrot.slane %v7710, 1
        %v7712 = vadd.f32 %v7710, %v7711
        %v7713 = vadd.f32 %v7550, %v7551
        %v7714 = vrot.slane %v7713, 4
        %v7715 = vadd.f32 %v7713, %v7714
        %v7716 = vrot.slane %v7715, 2
        %v7717 = vadd.f32 %v7715, %v7716
        %v7718 = vrot.slane %v7717, 1
        %v7719 = vadd.f32 %v7717, %v7718
        %v7720 = vadd.f32 %v7552, %v7553
        %v7721 = vrot.slane %v7720, 4
        %v7722 = vadd.f32 %v7720, %v7721
        %v7723 = vrot.slane %v7722, 2
        %v7724 = vadd.f32 %v7722, %v7723
        %v7725 = vrot.slane %v7724, 1
        %v7726 = vadd.f32 %v7724, %v7725
        %v7727 = vadd.f32 %v7554, %v7555
        %v7728 = vrot.slane %v7727, 4
        %v7729 = vadd.f32 %v7727, %v7728
        %v7730 = vrot.slane %v7729, 2
        %v7731 = vadd.f32 %v7729, %v7730
        %v7732 = vrot.slane %v7731, 1
        %v7733 = vadd.f32 %v7731, %v7732
        %v7734 = vadd.f32 %v7556, %v7557
        %v7735 = vrot.slane %v7734, 4
        %v7736 = vadd.f32 %v7734, %v7735
        %v7737 = vrot.slane %v7736, 2
        %v7738 = vadd.f32 %v7736, %v7737
        %v7739 = vrot.slane %v7738, 1
        %v7740 = vadd.f32 %v7738, %v7739
        %v7741 = vadd.f32 %v7558, %v7559
        %v7742 = vrot.slane %v7741, 4
        %v7743 = vadd.f32 %v7741, %v7742
        %v7744 = vrot.slane %v7743, 2
        %v7745 = vadd.f32 %v7743, %v7744
        %v7746 = vrot.slane %v7745, 1
        %v7747 = vadd.f32 %v7745, %v7746
        %v7748 = vadd.f32 %v7560, %v7561
        %v7749 = vrot.slane %v7748, 4
        %v7750 = vadd.f32 %v7748, %v7749
        %v7751 = vrot.slane %v7750, 2
        %v7752 = vadd.f32 %v7750, %v7751
        %v7753 = vrot.slane %v7752, 1
        %v7754 = vadd.f32 %v7752, %v7753
        %v7755 = vadd.f32 %v7562, %v7563
        %v7756 = vrot.slane %v7755, 4
        %v7757 = vadd.f32 %v7755, %v7756
        %v7758 = vrot.slane %v7757, 2
        %v7759 = vadd.f32 %v7757, %v7758
        %v7760 = vrot.slane %v7759, 1
        %v7761 = vadd.f32 %v7759, %v7760
        %v7762 = vadd.f32 %v7564, %v7565
        %v7763 = vrot.slane %v7762, 4
        %v7764 = vadd.f32 %v7762, %v7763
        %v7765 = vrot.slane %v7764, 2
        %v7766 = vadd.f32 %v7764, %v7765
        %v7767 = vrot.slane %v7766, 1
        %v7768 = vadd.f32 %v7766, %v7767
        %v7769 = vadd.f32 %v7566, %v7567
        %v7770 = vrot.slane %v7769, 4
        %v7771 = vadd.f32 %v7769, %v7770
        %v7772 = vrot.slane %v7771, 2
        %v7773 = vadd.f32 %v7771, %v7772
        %v7774 = vrot.slane %v7773, 1
        %v7775 = vadd.f32 %v7773, %v7774
        %v7776 = vadd.f32 %v7568, %v7569
        %v7777 = vrot.slane %v7776, 4
        %v7778 = vadd.f32 %v7776, %v7777
        %v7779 = vrot.slane %v7778, 2
        %v7780 = vadd.f32 %v7778, %v7779
        %v7781 = vrot.slane %v7780, 1
        %v7782 = vadd.f32 %v7780, %v7781
        %v7783 = vadd.f32 %v7570, %v7571
        %v7784 = vrot.slane %v7783, 4
        %v7785 = vadd.f32 %v7783, %v7784
        %v7786 = vrot.slane %v7785, 2
        %v7787 = vadd.f32 %v7785, %v7786
        %v7788 = vrot.slane %v7787, 1
        %v7789 = vadd.f32 %v7787, %v7788
        %v7790 = vadd.f32 %v7572, %v7573
        %v7791 = vrot.slane %v7790, 4
        %v7792 = vadd.f32 %v7790, %v7791
        %v7793 = vrot.slane %v7792, 2
        %v7794 = vadd.f32 %v7792, %v7793
        %v7795 = vrot.slane %v7794, 1
        %v7796 = vadd.f32 %v7794, %v7795
        %v7797 = vadd.f32 %v7574, %v7575
        %v7798 = vrot.slane %v7797, 4
        %v7799 = vadd.f32 %v7797, %v7798
        %v7800 = vrot.slane %v7799, 2
        %v7801 = vadd.f32 %v7799, %v7800
        %v7802 = vrot.slane %v7801, 1
        %v7803 = vadd.f32 %v7801, %v7802
        %v7804 = vadd.f32 %v7576, %v7577
        %v7805 = vrot.slane %v7804, 4
        %v7806 = vadd.f32 %v7804, %v7805
        %v7807 = vrot.slane %v7806, 2
        %v7808 = vadd.f32 %v7806, %v7807
        %v7809 = vrot.slane %v7808, 1
        %v7810 = vadd.f32 %v7808, %v7809
        %v7811 = vadd.f32 %v7578, %v7579
        %v7812 = vrot.slane %v7811, 4
        %v7813 = vadd.f32 %v7811, %v7812
        %v7814 = vrot.slane %v7813, 2
        %v7815 = vadd.f32 %v7813, %v7814
        %v7816 = vrot.slane %v7815, 1
        %v7817 = vadd.f32 %v7815, %v7816
        %v7818 = vadd.f32 %v7580, %v7581
        %v7819 = vrot.slane %v7818, 4
        %v7820 = vadd.f32 %v7818, %v7819
        %v7821 = vrot.slane %v7820, 2
        %v7822 = vadd.f32 %v7820, %v7821
        %v7823 = vrot.slane %v7822, 1
        %v7824 = vadd.f32 %v7822, %v7823
        %v7825 = vadd.f32 %v7582, %v7583
        %v7826 = vrot.slane %v7825, 4
        %v7827 = vadd.f32 %v7825, %v7826
        %v7828 = vrot.slane %v7827, 2
        %v7829 = vadd.f32 %v7827, %v7828
        %v7830 = vrot.slane %v7829, 1
        %v7831 = vadd.f32 %v7829, %v7830
        %v7832 = vadd.f32 %v7584, %v7585
        %v7833 = vrot.slane %v7832, 4
        %v7834 = vadd.f32 %v7832, %v7833
        %v7835 = vrot.slane %v7834, 2
        %v7836 = vadd.f32 %v7834, %v7835
        %v7837 = vrot.slane %v7836, 1
        %v7838 = vadd.f32 %v7836, %v7837
        %v7839 = vadd.f32 %v7586, %v7587
        %v7840 = vrot.slane %v7839, 4
        %v7841 = vadd.f32 %v7839, %v7840
        %v7842 = vrot.slane %v7841, 2
        %v7843 = vadd.f32 %v7841, %v7842
        %v7844 = vrot.slane %v7843, 1
        %v7845 = vadd.f32 %v7843, %v7844
        %v7846 = vadd.f32 %v7588, %v7589
        %v7847 = vrot.slane %v7846, 4
        %v7848 = vadd.f32 %v7846, %v7847
        %v7849 = vrot.slane %v7848, 2
        %v7850 = vadd.f32 %v7848, %v7849
        %v7851 = vrot.slane %v7850, 1
        %v7852 = vadd.f32 %v7850, %v7851
        %v7853 = vadd.f32 %v7590, %v7591
        %v7854 = vrot.slane %v7853, 4
        %v7855 = vadd.f32 %v7853, %v7854
        %v7856 = vrot.slane %v7855, 2
        %v7857 = vadd.f32 %v7855, %v7856
        %v7858 = vrot.slane %v7857, 1
        %v7859 = vadd.f32 %v7857, %v7858
        %v7860 = vadd.f32 %v7592, %v7593
        %v7861 = vrot.slane %v7860, 4
        %v7862 = vadd.f32 %v7860, %v7861
        %v7863 = vrot.slane %v7862, 2
        %v7864 = vadd.f32 %v7862, %v7863
        %v7865 = vrot.slane %v7864, 1
        %v7866 = vadd.f32 %v7864, %v7865
        %v7867 = vadd.f32 %v7594, %v7595
        %v7868 = vrot.slane %v7867, 4
        %v7869 = vadd.f32 %v7867, %v7868
        %v7870 = vrot.slane %v7869, 2
        %v7871 = vadd.f32 %v7869, %v7870
        %v7872 = vrot.slane %v7871, 1
        %v7873 = vadd.f32 %v7871, %v7872
        %v7874 = vadd.f32 %v7596, %v7597
        %v7875 = vrot.slane %v7874, 4
        %v7876 = vadd.f32 %v7874, %v7875
        %v7877 = vrot.slane %v7876, 2
        %v7878 = vadd.f32 %v7876, %v7877
        %v7879 = vrot.slane %v7878, 1
        %v7880 = vadd.f32 %v7878, %v7879
        %v7881 = vadd.f32 %v7598, %v7599
        %v7882 = vrot.slane %v7881, 4
        %v7883 = vadd.f32 %v7881, %v7882
        %v7884 = vrot.slane %v7883, 2
        %v7885 = vadd.f32 %v7883, %v7884
        %v7886 = vrot.slane %v7885, 1
        %v7887 = vadd.f32 %v7885, %v7886
        %v7888 = vadd.f32 %v7600, %v7601
        %v7889 = vrot.slane %v7888, 4
        %v7890 = vadd.f32 %v7888, %v7889
        %v7891 = vrot.slane %v7890, 2
        %v7892 = vadd.f32 %v7890, %v7891
        %v7893 = vrot.slane %v7892, 1
        %v7894 = vadd.f32 %v7892, %v7893
        %v7895 = vadd.f32 %v7602, %v7603
        %v7896 = vrot.slane %v7895, 4
        %v7897 = vadd.f32 %v7895, %v7896
        %v7898 = vrot.slane %v7897, 2
        %v7899 = vadd.f32 %v7897, %v7898
        %v7900 = vrot.slane %v7899, 1
        %v7901 = vadd.f32 %v7899, %v7900
        %v7902 = vadd.f32 %v7604, %v7605
        %v7903 = vrot.slane %v7902, 4
        %v7904 = vadd.f32 %v7902, %v7903
        %v7905 = vrot.slane %v7904, 2
        %v7906 = vadd.f32 %v7904, %v7905
        %v7907 = vrot.slane %v7906, 1
        %v7908 = vadd.f32 %v7906, %v7907
        %v7909 = vadd.f32 %v7606, %v7607
        %v7910 = vrot.slane %v7909, 4
        %v7911 = vadd.f32 %v7909, %v7910
        %v7912 = vrot.slane %v7911, 2
        %v7913 = vadd.f32 %v7911, %v7912
        %v7914 = vrot.slane %v7913, 1
        %v7915 = vadd.f32 %v7913, %v7914
        %v7916 = vadd.f32 %v7608, %v7609
        %v7917 = vrot.slane %v7916, 4
        %v7918 = vadd.f32 %v7916, %v7917
        %v7919 = vrot.slane %v7918, 2
        %v7920 = vadd.f32 %v7918, %v7919
        %v7921 = vrot.slane %v7920, 1
        %v7922 = vadd.f32 %v7920, %v7921
        %v7923 = vadd.f32 %v7610, %v7611
        %v7924 = vrot.slane %v7923, 4
        %v7925 = vadd.f32 %v7923, %v7924
        %v7926 = vrot.slane %v7925, 2
        %v7927 = vadd.f32 %v7925, %v7926
        %v7928 = vrot.slane %v7927, 1
        %v7929 = vadd.f32 %v7927, %v7928
        %v7930 = vadd.f32 %v7612, %v7613
        %v7931 = vrot.slane %v7930, 4
        %v7932 = vadd.f32 %v7930, %v7931
        %v7933 = vrot.slane %v7932, 2
        %v7934 = vadd.f32 %v7932, %v7933
        %v7935 = vrot.slane %v7934, 1
        %v7936 = vadd.f32 %v7934, %v7935
        %v7937 = vadd.f32 %v7614, %v7615
        %v7938 = vrot.slane %v7937, 4
        %v7939 = vadd.f32 %v7937, %v7938
        %v7940 = vrot.slane %v7939, 2
        %v7941 = vadd.f32 %v7939, %v7940
        %v7942 = vrot.slane %v7941, 1
        %v7943 = vadd.f32 %v7941, %v7942
        %v7944 = vadd.f32 %v7616, %v7617
        %v7945 = vrot.slane %v7944, 4
        %v7946 = vadd.f32 %v7944, %v7945
        %v7947 = vrot.slane %v7946, 2
        %v7948 = vadd.f32 %v7946, %v7947
        %v7949 = vrot.slane %v7948, 1
        %v7950 = vadd.f32 %v7948, %v7949
        %v7951 = vadd.f32 %v7618, %v7619
        %v7952 = vrot.slane %v7951, 4
        %v7953 = vadd.f32 %v7951, %v7952
        %v7954 = vrot.slane %v7953, 2
        %v7955 = vadd.f32 %v7953, %v7954
        %v7956 = vrot.slane %v7955, 1
        %v7957 = vadd.f32 %v7955, %v7956
        %v7958 = vadd.f32 %v7620, %v7621
        %v7959 = vrot.slane %v7958, 4
        %v7960 = vadd.f32 %v7958, %v7959
        %v7961 = vrot.slane %v7960, 2
        %v7962 = vadd.f32 %v7960, %v7961
        %v7963 = vrot.slane %v7962, 1
        %v7964 = vadd.f32 %v7962, %v7963
        %v7965 = vadd.f32 %v7622, %v7623
        %v7966 = vrot.slane %v7965, 4
        %v7967 = vadd.f32 %v7965, %v7966
        %v7968 = vrot.slane %v7967, 2
        %v7969 = vadd.f32 %v7967, %v7968
        %v7970 = vrot.slane %v7969, 1
        %v7971 = vadd.f32 %v7969, %v7970
        %v7972 = vadd.f32 %v7624, %v7625
        %v7973 = vrot.slane %v7972, 4
        %v7974 = vadd.f32 %v7972, %v7973
        %v7975 = vrot.slane %v7974, 2
        %v7976 = vadd.f32 %v7974, %v7975
        %v7977 = vrot.slane %v7976, 1
        %v7978 = vadd.f32 %v7976, %v7977
        %v7979 = vadd.f32 %v7626, %v7627
        %v7980 = vrot.slane %v7979, 4
        %v7981 = vadd.f32 %v7979, %v7980
        %v7982 = vrot.slane %v7981, 2
        %v7983 = vadd.f32 %v7981, %v7982
        %v7984 = vrot.slane %v7983, 1
        %v7985 = vadd.f32 %v7983, %v7984
        %v7986 = vadd.f32 %v7628, %v7629
        %v7987 = vrot.slane %v7986, 4
        %v7988 = vadd.f32 %v7986, %v7987
        %v7989 = vrot.slane %v7988, 2
        %v7990 = vadd.f32 %v7988, %v7989
        %v7991 = vrot.slane %v7990, 1
        %v7992 = vadd.f32 %v7990, %v7991
        %v7993 = vadd.f32 %v7630, %v7631
        %v7994 = vrot.slane %v7993, 4
        %v7995 = vadd.f32 %v7993, %v7994
        %v7996 = vrot.slane %v7995, 2
        %v7997 = vadd.f32 %v7995, %v7996
        %v7998 = vrot.slane %v7997, 1
        %v7999 = vadd.f32 %v7997, %v7998
        %v8000 = vadd.f32 %v7632, %v7633
        %v8001 = vrot.slane %v8000, 4
        %v8002 = vadd.f32 %v8000, %v8001
        %v8003 = vrot.slane %v8002, 2
        %v8004 = vadd.f32 %v8002, %v8003
        %v8005 = vrot.slane %v8004, 1
        %v8006 = vadd.f32 %v8004, %v8005
        %v8007 = vadd.f32 %v7634, %v7635
        %v8008 = vrot.slane %v8007, 4
        %v8009 = vadd.f32 %v8007, %v8008
        %v8010 = vrot.slane %v8009, 2
        %v8011 = vadd.f32 %v8009, %v8010
        %v8012 = vrot.slane %v8011, 1
        %v8013 = vadd.f32 %v8011, %v8012
        %v8014 = vadd.f32 %v7636, %v7637
        %v8015 = vrot.slane %v8014, 4
        %v8016 = vadd.f32 %v8014, %v8015
        %v8017 = vrot.slane %v8016, 2
        %v8018 = vadd.f32 %v8016, %v8017
        %v8019 = vrot.slane %v8018, 1
        %v8020 = vadd.f32 %v8018, %v8019
        %v8021 = vadd.f32 %v7638, %v7639
        %v8022 = vrot.slane %v8021, 4
        %v8023 = vadd.f32 %v8021, %v8022
        %v8024 = vrot.slane %v8023, 2
        %v8025 = vadd.f32 %v8023, %v8024
        %v8026 = vrot.slane %v8025, 1
        %v8027 = vadd.f32 %v8025, %v8026
        %v8028 = vadd.f32 %v7640, %v7641
        %v8029 = vrot.slane %v8028, 4
        %v8030 = vadd.f32 %v8028, %v8029
        %v8031 = vrot.slane %v8030, 2
        %v8032 = vadd.f32 %v8030, %v8031
        %v8033 = vrot.slane %v8032, 1
        %v8034 = vadd.f32 %v8032, %v8033
        %v8035 = vadd.f32 %v7642, %v7643
        %v8036 = vrot.slane %v8035, 4
        %v8037 = vadd.f32 %v8035, %v8036
        %v8038 = vrot.slane %v8037, 2
        %v8039 = vadd.f32 %v8037, %v8038
        %v8040 = vrot.slane %v8039, 1
        %v8041 = vadd.f32 %v8039, %v8040
        %v8042 = vadd.f32 %v7644, %v7645
        %v8043 = vrot.slane %v8042, 4
        %v8044 = vadd.f32 %v8042, %v8043
        %v8045 = vrot.slane %v8044, 2
        %v8046 = vadd.f32 %v8044, %v8045
        %v8047 = vrot.slane %v8046, 1
        %v8048 = vadd.f32 %v8046, %v8047
        %v8049 = vadd.f32 %v7646, %v7647
        %v8050 = vrot.slane %v8049, 4
        %v8051 = vadd.f32 %v8049, %v8050
        %v8052 = vrot.slane %v8051, 2
        %v8053 = vadd.f32 %v8051, %v8052
        %v8054 = vrot.slane %v8053, 1
        %v8055 = vadd.f32 %v8053, %v8054
        %v8056 = vadd.f32 %v7648, %v7649
        %v8057 = vrot.slane %v8056, 4
        %v8058 = vadd.f32 %v8056, %v8057
        %v8059 = vrot.slane %v8058, 2
        %v8060 = vadd.f32 %v8058, %v8059
        %v8061 = vrot.slane %v8060, 1
        %v8062 = vadd.f32 %v8060, %v8061
        %v8063 = vadd.f32 %v7650, %v7651
        %v8064 = vrot.slane %v8063, 4
        %v8065 = vadd.f32 %v8063, %v8064
        %v8066 = vrot.slane %v8065, 2
        %v8067 = vadd.f32 %v8065, %v8066
        %v8068 = vrot.slane %v8067, 1
        %v8069 = vadd.f32 %v8067, %v8068
        %v8070 = vadd.f32 %v7652, %v7653
        %v8071 = vrot.slane %v8070, 4
        %v8072 = vadd.f32 %v8070, %v8071
        %v8073 = vrot.slane %v8072, 2
        %v8074 = vadd.f32 %v8072, %v8073
        %v8075 = vrot.slane %v8074, 1
        %v8076 = vadd.f32 %v8074, %v8075
        %v8077 = vadd.f32 %v7654, %v7655
        %v8078 = vrot.slane %v8077, 4
        %v8079 = vadd.f32 %v8077, %v8078
        %v8080 = vrot.slane %v8079, 2
        %v8081 = vadd.f32 %v8079, %v8080
        %v8082 = vrot.slane %v8081, 1
        %v8083 = vadd.f32 %v8081, %v8082
        %v8084 = vadd.f32 %v7656, %v7657
        %v8085 = vrot.slane %v8084, 4
        %v8086 = vadd.f32 %v8084, %v8085
        %v8087 = vrot.slane %v8086, 2
        %v8088 = vadd.f32 %v8086, %v8087
        %v8089 = vrot.slane %v8088, 1
        %v8090 = vadd.f32 %v8088, %v8089
        %v8091 = vadd.f32 %v7658, %v7659
        %v8092 = vrot.slane %v8091, 4
        %v8093 = vadd.f32 %v8091, %v8092
        %v8094 = vrot.slane %v8093, 2
        %v8095 = vadd.f32 %v8093, %v8094
        %v8096 = vrot.slane %v8095, 1
        %v8097 = vadd.f32 %v8095, %v8096
        %v8098 = vadd.f32 %v7660, %v7661
        %v8099 = vrot.slane %v8098, 4
        %v8100 = vadd.f32 %v8098, %v8099
        %v8101 = vrot.slane %v8100, 2
        %v8102 = vadd.f32 %v8100, %v8101
        %v8103 = vrot.slane %v8102, 1
        %v8104 = vadd.f32 %v8102, %v8103
        %v8105 = vadd.f32 %v7662, %v7663
        %v8106 = vrot.slane %v8105, 4
        %v8107 = vadd.f32 %v8105, %v8106
        %v8108 = vrot.slane %v8107, 2
        %v8109 = vadd.f32 %v8107, %v8108
        %v8110 = vrot.slane %v8109, 1
        %v8111 = vadd.f32 %v8109, %v8110
        %v8112 = vld [vmem:[#allocation10] sm:$0xff]
        %v8113 = vld [vmem:[#allocation10 + $0x8] sm:$0xff]
        %v8114 = vld [vmem:[#allocation10 + $0x10] sm:$0xff]
        %v8115 = vld [vmem:[#allocation10 + $0x18] sm:$0xff]
        %v8116 = vld [vmem:[#allocation10 + $0x20] sm:$0xff]
        %v8117 = vld [vmem:[#allocation10 + $0x28] sm:$0xff]
        %v8118 = vld [vmem:[#allocation10 + $0x30] sm:$0xff]
        %v8119 = vld [vmem:[#allocation10 + $0x38] sm:$0xff]
        %v8120 = vld [vmem:[#allocation10 + $0x40] sm:$0xff]
        %v8121 = vld [vmem:[#allocation10 + $0x48] sm:$0xff]
        %v8122 = vld [vmem:[#allocation10 + $0x50] sm:$0xff]
        %v8123 = vld [vmem:[#allocation10 + $0x58] sm:$0xff]
        %v8124 = vld [vmem:[#allocation10 + $0x60] sm:$0xff]
        %v8125 = vld [vmem:[#allocation10 + $0x68] sm:$0xff]
        %v8126 = vld [vmem:[#allocation10 + $0x70] sm:$0xff]
        %v8127 = vld [vmem:[#allocation10 + $0x78] sm:$0xff]
        %v8128 = vld [vmem:[%s9] sm:$0x1]
        %v8130 = vperm.slane %v8128, 0
        %vm8196 = vcmask 1041409
        %v8197 = vsel %vm8196, %v7677, %v7670
        %vm8198 = vcmask 1042434
        %v8199 = vsel %vm8198, %v7684, %v8197
        %vm8200 = vcmask 1043459
        %v8201 = vsel %vm8200, %v7691, %v8199
        %vm8202 = vcmask 1044484
        %v8203 = vsel %vm8202, %v7698, %v8201
        %vm8204 = vcmask 1045509
        %v8205 = vsel %vm8204, %v7705, %v8203
        %vm8206 = vcmask 1046534
        %v8207 = vsel %vm8206, %v7712, %v8205
        %vm8208 = vcmask 1047559
        %v8209 = vsel %vm8208, %v7719, %v8207
        %v8210 = vsel %vm8196, %v7733, %v7726
        %v8211 = vsel %vm8198, %v7740, %v8210
        %v8212 = vsel %vm8200, %v7747, %v8211
        %v8213 = vsel %vm8202, %v7754, %v8212
        %v8214 = vsel %vm8204, %v7761, %v8213
        %v8215 = vsel %vm8206, %v7768, %v8214
        %v8216 = vsel %vm8208, %v7775, %v8215
        %v8217 = vsel %vm8196, %v7789, %v7782
        %v8218 = vsel %vm8198, %v7796, %v8217
        %v8219 = vsel %vm8200, %v7803, %v8218
        %v8220 = vsel %vm8202, %v7810, %v8219
        %v8221 = vsel %vm8204, %v7817, %v8220
        %v8222 = vsel %vm8206, %v7824, %v8221
        %v8223 = vsel %vm8208, %v7831, %v8222
        %v8224 = vsel %vm8196, %v7845, %v7838
        %v8225 = vsel %vm8198, %v7852, %v8224
        %v8226 = vsel %vm8200, %v7859, %v8225
        %v8227 = vsel %vm8202, %v7866, %v8226
        %v8228 = vsel %vm8204, %v7873, %v8227
        %v8229 = vsel %vm8206, %v7880, %v8228
        %v8230 = vsel %vm8208, %v7887, %v8229
        %v8231 = vsel %vm8196, %v7901, %v7894
        %v8232 = vsel %vm8198, %v7908, %v8231
        %v8233 = vsel %vm8200, %v7915, %v8232
        %v8234 = vsel %vm8202, %v7922, %v8233
        %v8235 = vsel %vm8204, %v7929, %v8234
        %v8236 = vsel %vm8206, %v7936, %v8235
        %v8237 = vsel %vm8208, %v7943, %v8236
        %v8238 = vsel %vm8196, %v7957, %v7950
        %v8239 = vsel %vm8198, %v7964, %v8238
        %v8240 = vsel %vm8200, %v7971, %v8239
        %v8241 = vsel %vm8202, %v7978, %v8240
        %v8242 = vsel %vm8204, %v7985, %v8241
        %v8243 = vsel %vm8206, %v7992, %v8242
        %v8244 = vsel %vm8208, %v7999, %v8243
        %v8245 = vsel %vm8196, %v8013, %v8006
        %v8246 = vsel %vm8198, %v8020, %v8245
        %v8247 = vsel %vm8200, %v8027, %v8246
        %v8248 = vsel %vm8202, %v8034, %v8247
        %v8249 = vsel %vm8204, %v8041, %v8248
        %v8250 = vsel %vm8206, %v8048, %v8249
        %v8251 = vsel %vm8208, %v8055, %v8250
        %v8252 = vsel %vm8196, %v8069, %v8062
        %v8253 = vsel %vm8198, %v8076, %v8252
        %v8254 = vsel %vm8200, %v8083, %v8253
        %v8255 = vsel %vm8202, %v8090, %v8254
        %v8256 = vsel %vm8204, %v8097, %v8255
        %v8257 = vsel %vm8206, %v8104, %v8256
        %v8258 = vsel %vm8208, %v8111, %v8257
        %8267 = vmatpush.msra.mxu0 %v8127
        %8268 = vmatpush.msra.mxu0 %v8126
        %8269 = vmatpush.msra.mxu0 %v8125
        %8270 = vmatpush.msra.mxu0 %v8124
        %8271 = vmatpush.msra.mxu0 %v8123
        %8272 = vmatpush.msra.mxu0 %v8122
        %8273 = vmatpush.msra.mxu0 %v8121
        %8274 = vmatpush.msra.mxu0 %v8120
        %8275 = vmatpush.msra.mxu0 %v8119
        %8276 = vmatpush.msra.mxu0 %v8118
        %8277 = vmatpush.msra.mxu0 %v8117
        %8278 = vmatpush.msra.mxu0 %v8116
        %8279 = vmatpush.msra.mxu0 %v8115
        %8280 = vmatpush.msra.mxu0 %v8114
        %8281 = vmatpush.msra.mxu0 %v8113
        %8282 = vmatpush.msra.mxu0 %v8112
        %8283 = vmatmul.f32.gmra.mxu0 %v8209
        %v8284 = vpop.f32.mrf.mxu0
        %v8285 = vadd.f32 %v8130, %v8284
        %8286 = vmatmul.f32.gmra.mxu0 %v8216
        %v8287 = vpop.f32.mrf.mxu0
        %v8288 = vadd.f32 %v8130, %v8287
        %8289 = vmatmul.f32.gmra.mxu0 %v8223
        %v8290 = vpop.f32.mrf.mxu0
        %v8291 = vadd.f32 %v8130, %v8290
        %8292 = vmatmul.f32.gmra.mxu0 %v8230
        %v8293 = vpop.f32.mrf.mxu0
        %v8294 = vadd.f32 %v8130, %v8293
        %8295 = vmatmul.f32.gmra.mxu0 %v8237
        %v8296 = vpop.f32.mrf.mxu0
        %v8297 = vadd.f32 %v8130, %v8296
        %8298 = vmatmul.f32.gmra.mxu0 %v8244
        %v8299 = vpop.f32.mrf.mxu0
        %v8300 = vadd.f32 %v8130, %v8299
        %8301 = vmatmul.f32.gmra.mxu0 %v8251
        %v8302 = vpop.f32.mrf.mxu0
        %v8303 = vadd.f32 %v8130, %v8302
        %8304 = vmatmul.f32.gmra.mxu0 %v8258
        %v8305 = vpop.f32.mrf.mxu0
        %v8306 = vadd.f32 %v8130, %v8305
        %8307 = vdwg.mxu0
        %v8316 = vrot.slane %v8285, 1
        %v8317 = vrot.slane %v8285, 2
        %v8318 = vrot.slane %v8285, 3
        %v8319 = vrot.slane %v8285, 4
        %v8320 = vrot.slane %v8285, 5
        %v8321 = vrot.slane %v8285, 6
        %v8322 = vrot.slane %v8285, 7
        %v8323 = vrot.slane %v8288, 1
        %v8324 = vrot.slane %v8288, 2
        %v8325 = vrot.slane %v8288, 3
        %v8326 = vrot.slane %v8288, 4
        %v8327 = vrot.slane %v8288, 5
        %v8328 = vrot.slane %v8288, 6
        %v8329 = vrot.slane %v8288, 7
        %v8330 = vrot.slane %v8291, 1
        %v8331 = vrot.slane %v8291, 2
        %v8332 = vrot.slane %v8291, 3
        %v8333 = vrot.slane %v8291, 4
        %v8334 = vrot.slane %v8291, 5
        %v8335 = vrot.slane %v8291, 6
        %v8336 = vrot.slane %v8291, 7
        %v8337 = vrot.slane %v8294, 1
        %v8338 = vrot.slane %v8294, 2
        %v8339 = vrot.slane %v8294, 3
        %v8340 = vrot.slane %v8294, 4
        %v8341 = vrot.slane %v8294, 5
        %v8342 = vrot.slane %v8294, 6
        %v8343 = vrot.slane %v8294, 7
        %v8344 = vrot.slane %v8297, 1
        %v8345 = vrot.slane %v8297, 2
        %v8346 = vrot.slane %v8297, 3
        %v8347 = vrot.slane %v8297, 4
        %v8348 = vrot.slane %v8297, 5
        %v8349 = vrot.slane %v8297, 6
        %v8350 = vrot.slane %v8297, 7
        %v8351 = vrot.slane %v8300, 1
        %v8352 = vrot.slane %v8300, 2
        %v8353 = vrot.slane %v8300, 3
        %v8354 = vrot.slane %v8300, 4
        %v8355 = vrot.slane %v8300, 5
        %v8356 = vrot.slane %v8300, 6
        %v8357 = vrot.slane %v8300, 7
        %v8358 = vrot.slane %v8303, 1
        %v8359 = vrot.slane %v8303, 2
        %v8360 = vrot.slane %v8303, 3
        %v8361 = vrot.slane %v8303, 4
        %v8362 = vrot.slane %v8303, 5
        %v8363 = vrot.slane %v8303, 6
        %v8364 = vrot.slane %v8303, 7
        %v8365 = vrot.slane %v8306, 1
        %v8366 = vrot.slane %v8306, 2
        %v8367 = vrot.slane %v8306, 3
        %v8368 = vrot.slane %v8306, 4
        %v8369 = vrot.slane %v8306, 5
        %v8370 = vrot.slane %v8306, 6
        %v8371 = vrot.slane %v8306, 7
        %v8372 = vperm.slane %v8285, 0
        %v8373 = vperm.slane %v8316, 0
        %v8374 = vperm.slane %v8317, 0
        %v8375 = vperm.slane %v8318, 0
        %v8376 = vperm.slane %v8319, 0
        %v8377 = vperm.slane %v8320, 0
        %v8378 = vperm.slane %v8321, 0
        %v8379 = vperm.slane %v8322, 0
        %v8380 = vperm.slane %v8288, 0
        %v8381 = vperm.slane %v8323, 0
        %v8382 = vperm.slane %v8324, 0
        %v8383 = vperm.slane %v8325, 0
        %v8384 = vperm.slane %v8326, 0
        %v8385 = vperm.slane %v8327, 0
        %v8386 = vperm.slane %v8328, 0
        %v8387 = vperm.slane %v8329, 0
        %v8388 = vperm.slane %v8291, 0
        %v8389 = vperm.slane %v8330, 0
        %v8390 = vperm.slane %v8331, 0
        %v8391 = vperm.slane %v8332, 0
        %v8392 = vperm.slane %v8333, 0
        %v8393 = vperm.slane %v8334, 0
        %v8394 = vperm.slane %v8335, 0
        %v8395 = vperm.slane %v8336, 0
        %v8396 = vperm.slane %v8294, 0
        %v8397 = vperm.slane %v8337, 0
        %v8398 = vperm.slane %v8338, 0
        %v8399 = vperm.slane %v8339, 0
        %v8400 = vperm.slane %v8340, 0
        %v8401 = vperm.slane %v8341, 0
        %v8402 = vperm.slane %v8342, 0
        %v8403 = vperm.slane %v8343, 0
        %v8404 = vperm.slane %v8297, 0
        %v8405 = vperm.slane %v8344, 0
        %v8406 = vperm.slane %v8345, 0
        %v8407 = vperm.slane %v8346, 0
        %v8408 = vperm.slane %v8347, 0
        %v8409 = vperm.slane %v8348, 0
        %v8410 = vperm.slane %v8349, 0
        %v8411 = vperm.slane %v8350, 0
        %v8412 = vperm.slane %v8300, 0
        %v8413 = vperm.slane %v8351, 0
        %v8414 = vperm.slane %v8352, 0
        %v8415 = vperm.slane %v8353, 0
        %v8416 = vperm.slane %v8354, 0
        %v8417 = vperm.slane %v8355, 0
        %v8418 = vperm.slane %v8356, 0
        %v8419 = vperm.slane %v8357, 0
        %v8420 = vperm.slane %v8303, 0
        %v8421 = vperm.slane %v8358, 0
        %v8422 = vperm.slane %v8359, 0
        %v8423 = vperm.slane %v8360, 0
        %v8424 = vperm.slane %v8361, 0
        %v8425 = vperm.slane %v8362, 0
        %v8426 = vperm.slane %v8363, 0
        %v8427 = vperm.slane %v8364, 0
        %v8428 = vperm.slane %v8306, 0
        %v8429 = vperm.slane %v8365, 0
        %v8430 = vperm.slane %v8366, 0
        %v8431 = vperm.slane %v8367, 0
        %v8432 = vperm.slane %v8368, 0
        %v8433 = vperm.slane %v8369, 0
        %v8434 = vperm.slane %v8370, 0
        %v8435 = vperm.slane %v8371, 0
        %v8500 = vmul.f32 %v5628, %v8372
        %v8501 = vmul.f32 %v5643, %v8372
        %v8502 = vmul.f32 %v5658, %v8373
        %v8503 = vmul.f32 %v5673, %v8373
        %v8504 = vmul.f32 %v5688, %v8374
        %v8505 = vmul.f32 %v5703, %v8374
        %v8506 = vmul.f32 %v5718, %v8375
        %v8507 = vmul.f32 %v5733, %v8375
        %v8508 = vmul.f32 %v5748, %v8376
        %v8509 = vmul.f32 %v5763, %v8376
        %v8510 = vmul.f32 %v5778, %v8377
        %v8511 = vmul.f32 %v5793, %v8377
        %v8512 = vmul.f32 %v5808, %v8378
        %v8513 = vmul.f32 %v5823, %v8378
        %v8514 = vmul.f32 %v5838, %v8379
        %v8515 = vmul.f32 %v5853, %v8379
        %v8516 = vmul.f32 %v5868, %v8380
        %v8517 = vmul.f32 %v5883, %v8380
        %v8518 = vmul.f32 %v5898, %v8381
        %v8519 = vmul.f32 %v5913, %v8381
        %v8520 = vmul.f32 %v5928, %v8382
        %v8521 = vmul.f32 %v5943, %v8382
        %v8522 = vmul.f32 %v5958, %v8383
        %v8523 = vmul.f32 %v5973, %v8383
        %v8524 = vmul.f32 %v5988, %v8384
        %v8525 = vmul.f32 %v6003, %v8384
        %v8526 = vmul.f32 %v6018, %v8385
        %v8527 = vmul.f32 %v6033, %v8385
        %v8528 = vmul.f32 %v6048, %v8386
        %v8529 = vmul.f32 %v6063, %v8386
        %v8530 = vmul.f32 %v6078, %v8387
        %v8531 = vmul.f32 %v6093, %v8387
        %v8532 = vmul.f32 %v6108, %v8388
        %v8533 = vmul.f32 %v6123, %v8388
        %v8534 = vmul.f32 %v6138, %v8389
        %v8535 = vmul.f32 %v6153, %v8389
        %v8536 = vmul.f32 %v6168, %v8390
        %v8537 = vmul.f32 %v6183, %v8390
        %v8538 = vmul.f32 %v6198, %v8391
        %v8539 = vmul.f32 %v6213, %v8391
        %v8540 = vmul.f32 %v6228, %v8392
        %v8541 = vmul.f32 %v6243, %v8392
        %v8542 = vmul.f32 %v6258, %v8393
        %v8543 = vmul.f32 %v6273, %v8393
        %v8544 = vmul.f32 %v6288, %v8394
        %v8545 = vmul.f32 %v6303, %v8394
        %v8546 = vmul.f32 %v6318, %v8395
        %v8547 = vmul.f32 %v6333, %v8395
        %v8548 = vmul.f32 %v6348, %v8396
        %v8549 = vmul.f32 %v6363, %v8396
        %v8550 = vmul.f32 %v6378, %v8397
        %v8551 = vmul.f32 %v6393, %v8397
        %v8552 = vmul.f32 %v6408, %v8398
        %v8553 = vmul.f32 %v6423, %v8398
        %v8554 = vmul.f32 %v6438, %v8399
        %v8555 = vmul.f32 %v6453, %v8399
        %v8556 = vmul.f32 %v6468, %v8400
        %v8557 = vmul.f32 %v6483, %v8400
        %v8558 = vmul.f32 %v6498, %v8401
        %v8559 = vmul.f32 %v6513, %v8401
        %v8560 = vmul.f32 %v6528, %v8402
        %v8561 = vmul.f32 %v6543, %v8402
        %v8562 = vmul.f32 %v6558, %v8403
        %v8563 = vmul.f32 %v6573, %v8403
        %v8564 = vmul.f32 %v6588, %v8404
        %v8565 = vmul.f32 %v6603, %v8404
        %v8566 = vmul.f32 %v6618, %v8405
        %v8567 = vmul.f32 %v6633, %v8405
        %v8568 = vmul.f32 %v6648, %v8406
        %v8569 = vmul.f32 %v6663, %v8406
        %v8570 = vmul.f32 %v6678, %v8407
        %v8571 = vmul.f32 %v6693, %v8407
        %v8572 = vmul.f32 %v6708, %v8408
        %v8573 = vmul.f32 %v6723, %v8408
        %v8574 = vmul.f32 %v6738, %v8409
        %v8575 = vmul.f32 %v6753, %v8409
        %v8576 = vmul.f32 %v6768, %v8410
        %v8577 = vmul.f32 %v6783, %v8410
        %v8578 = vmul.f32 %v6798, %v8411
        %v8579 = vmul.f32 %v6813, %v8411
        %v8580 = vmul.f32 %v6828, %v8412
        %v8581 = vmul.f32 %v6843, %v8412
        %v8582 = vmul.f32 %v6858, %v8413
        %v8583 = vmul.f32 %v6873, %v8413
        %v8584 = vmul.f32 %v6888, %v8414
        %v8585 = vmul.f32 %v6903, %v8414
        %v8586 = vmul.f32 %v6918, %v8415
        %v8587 = vmul.f32 %v6933, %v8415
        %v8588 = vmul.f32 %v6948, %v8416
        %v8589 = vmul.f32 %v6963, %v8416
        %v8590 = vmul.f32 %v6978, %v8417
        %v8591 = vmul.f32 %v6993, %v8417
        %v8592 = vmul.f32 %v7008, %v8418
        %v8593 = vmul.f32 %v7023, %v8418
        %v8594 = vmul.f32 %v7038, %v8419
        %v8595 = vmul.f32 %v7053, %v8419
        %v8596 = vmul.f32 %v7068, %v8420
        %v8597 = vmul.f32 %v7083, %v8420
        %v8598 = vmul.f32 %v7098, %v8421
        %v8599 = vmul.f32 %v7113, %v8421
        %v8600 = vmul.f32 %v7128, %v8422
        %v8601 = vmul.f32 %v7143, %v8422
        %v8602 = vmul.f32 %v7158, %v8423
        %v8603 = vmul.f32 %v7173, %v8423
        %v8604 = vmul.f32 %v7188, %v8424
        %v8605 = vmul.f32 %v7203, %v8424
        %v8606 = vmul.f32 %v7218, %v8425
        %v8607 = vmul.f32 %v7233, %v8425
        %v8608 = vmul.f32 %v7248, %v8426
        %v8609 = vmul.f32 %v7263, %v8426
        %v8610 = vmul.f32 %v7278, %v8427
        %v8611 = vmul.f32 %v7293, %v8427
        %v8612 = vmul.f32 %v7308, %v8428
        %v8613 = vmul.f32 %v7323, %v8428
        %v8614 = vmul.f32 %v7338, %v8429
        %v8615 = vmul.f32 %v7353, %v8429
        %v8616 = vmul.f32 %v7368, %v8430
        %v8617 = vmul.f32 %v7383, %v8430
        %v8618 = vmul.f32 %v7398, %v8431
        %v8619 = vmul.f32 %v7413, %v8431
        %v8620 = vmul.f32 %v7428, %v8432
        %v8621 = vmul.f32 %v7443, %v8432
        %v8622 = vmul.f32 %v7458, %v8433
        %v8623 = vmul.f32 %v7473, %v8433
        %v8624 = vmul.f32 %v7488, %v8434
        %v8625 = vmul.f32 %v7503, %v8434
        %v8626 = vmul.f32 %v7518, %v8435
        %v8627 = vmul.f32 %v7533, %v8435
        %8628 = vst [vmem:[%s504] sm:$0xff] %v8500
        %8629 = vst [vmem:[%s504 + $0x8] sm:$0xff] %v8501
        %8630 = vst [vmem:[%s504 + $0x10] sm:$0xff] %v8502
        %8631 = vst [vmem:[%s504 + $0x18] sm:$0xff] %v8503
        %8632 = vst [vmem:[%s504 + $0x20] sm:$0xff] %v8504
        %8633 = vst [vmem:[%s504 + $0x28] sm:$0xff] %v8505
        %8634 = vst [vmem:[%s504 + $0x30] sm:$0xff] %v8506
        %8635 = vst [vmem:[%s504 + $0x38] sm:$0xff] %v8507
        %8636 = vst [vmem:[%s504 + $0x40] sm:$0xff] %v8508
        %8637 = vst [vmem:[%s504 + $0x48] sm:$0xff] %v8509
        %8638 = vst [vmem:[%s504 + $0x50] sm:$0xff] %v8510
        %8639 = vst [vmem:[%s504 + $0x58] sm:$0xff] %v8511
        %8640 = vst [vmem:[%s504 + $0x60] sm:$0xff] %v8512
        %8641 = vst [vmem:[%s504 + $0x68] sm:$0xff] %v8513
        %8642 = vst [vmem:[%s504 + $0x70] sm:$0xff] %v8514
        %8643 = vst [vmem:[%s504 + $0x78] sm:$0xff] %v8515
        %8644 = vst [vmem:[%s504 + $0x80] sm:$0xff] %v8516
        %8645 = vst [vmem:[%s504 + $0x88] sm:$0xff] %v8517
        %8646 = vst [vmem:[%s504 + $0x90] sm:$0xff] %v8518
        %8647 = vst [vmem:[%s504 + $0x98] sm:$0xff] %v8519
        %8648 = vst [vmem:[%s504 + $0xa0] sm:$0xff] %v8520
        %8649 = vst [vmem:[%s504 + $0xa8] sm:$0xff] %v8521
        %8650 = vst [vmem:[%s504 + $0xb0] sm:$0xff] %v8522
        %8651 = vst [vmem:[%s504 + $0xb8] sm:$0xff] %v8523
        %8652 = vst [vmem:[%s504 + $0xc0] sm:$0xff] %v8524
        %8653 = vst [vmem:[%s504 + $0xc8] sm:$0xff] %v8525
        %8654 = vst [vmem:[%s504 + $0xd0] sm:$0xff] %v8526
        %8655 = vst [vmem:[%s504 + $0xd8] sm:$0xff] %v8527
        %8656 = vst [vmem:[%s504 + $0xe0] sm:$0xff] %v8528
        %8657 = vst [vmem:[%s504 + $0xe8] sm:$0xff] %v8529
        %8658 = vst [vmem:[%s504 + $0xf0] sm:$0xff] %v8530
        %8659 = vst [vmem:[%s504 + $0xf8] sm:$0xff] %v8531
        %8660 = vst [vmem:[%s504 + $0x100] sm:$0xff] %v8532
        %8661 = vst [vmem:[%s504 + $0x108] sm:$0xff] %v8533
        %8662 = vst [vmem:[%s504 + $0x110] sm:$0xff] %v8534
        %8663 = vst [vmem:[%s504 + $0x118] sm:$0xff] %v8535
        %8664 = vst [vmem:[%s504 + $0x120] sm:$0xff] %v8536
        %8665 = vst [vmem:[%s504 + $0x128] sm:$0xff] %v8537
        %8666 = vst [vmem:[%s504 + $0x130] sm:$0xff] %v8538
        %8667 = vst [vmem:[%s504 + $0x138] sm:$0xff] %v8539
        %8668 = vst [vmem:[%s504 + $0x140] sm:$0xff] %v8540
        %8669 = vst [vmem:[%s504 + $0x148] sm:$0xff] %v8541
        %8670 = vst [vmem:[%s504 + $0x150] sm:$0xff] %v8542
        %8671 = vst [vmem:[%s504 + $0x158] sm:$0xff] %v8543
        %8672 = vst [vmem:[%s504 + $0x160] sm:$0xff] %v8544
        %8673 = vst [vmem:[%s504 + $0x168] sm:$0xff] %v8545
        %8674 = vst [vmem:[%s504 + $0x170] sm:$0xff] %v8546
        %8675 = vst [vmem:[%s504 + $0x178] sm:$0xff] %v8547
        %8676 = vst [vmem:[%s504 + $0x180] sm:$0xff] %v8548
        %8677 = vst [vmem:[%s504 + $0x188] sm:$0xff] %v8549
        %8678 = vst [vmem:[%s504 + $0x190] sm:$0xff] %v8550
        %8679 = vst [vmem:[%s504 + $0x198] sm:$0xff] %v8551
        %8680 = vst [vmem:[%s504 + $0x1a0] sm:$0xff] %v8552
        %8681 = vst [vmem:[%s504 + $0x1a8] sm:$0xff] %v8553
        %8682 = vst [vmem:[%s504 + $0x1b0] sm:$0xff] %v8554
        %8683 = vst [vmem:[%s504 + $0x1b8] sm:$0xff] %v8555
        %8684 = vst [vmem:[%s504 + $0x1c0] sm:$0xff] %v8556
        %8685 = vst [vmem:[%s504 + $0x1c8] sm:$0xff] %v8557
        %8686 = vst [vmem:[%s504 + $0x1d0] sm:$0xff] %v8558
        %8687 = vst [vmem:[%s504 + $0x1d8] sm:$0xff] %v8559
        %8688 = vst [vmem:[%s504 + $0x1e0] sm:$0xff] %v8560
        %8689 = vst [vmem:[%s504 + $0x1e8] sm:$0xff] %v8561
        %8690 = vst [vmem:[%s504 + $0x1f0] sm:$0xff] %v8562
        %8691 = vst [vmem:[%s504 + $0x1f8] sm:$0xff] %v8563
        %8692 = vst [vmem:[%s504 + $0x200] sm:$0xff] %v8564
        %8693 = vst [vmem:[%s504 + $0x208] sm:$0xff] %v8565
        %8694 = vst [vmem:[%s504 + $0x210] sm:$0xff] %v8566
        %8695 = vst [vmem:[%s504 + $0x218] sm:$0xff] %v8567
        %8696 = vst [vmem:[%s504 + $0x220] sm:$0xff] %v8568
        %8697 = vst [vmem:[%s504 + $0x228] sm:$0xff] %v8569
        %8698 = vst [vmem:[%s504 + $0x230] sm:$0xff] %v8570
        %8699 = vst [vmem:[%s504 + $0x238] sm:$0xff] %v8571
        %8700 = vst [vmem:[%s504 + $0x240] sm:$0xff] %v8572
        %8701 = vst [vmem:[%s504 + $0x248] sm:$0xff] %v8573
        %8702 = vst [vmem:[%s504 + $0x250] sm:$0xff] %v8574
        %8703 = vst [vmem:[%s504 + $0x258] sm:$0xff] %v8575
        %8704 = vst [vmem:[%s504 + $0x260] sm:$0xff] %v8576
        %8705 = vst [vmem:[%s504 + $0x268] sm:$0xff] %v8577
        %8706 = vst [vmem:[%s504 + $0x270] sm:$0xff] %v8578
        %8707 = vst [vmem:[%s504 + $0x278] sm:$0xff] %v8579
        %8708 = vst [vmem:[%s504 + $0x280] sm:$0xff] %v8580
        %8709 = vst [vmem:[%s504 + $0x288] sm:$0xff] %v8581
        %8710 = vst [vmem:[%s504 + $0x290] sm:$0xff] %v8582
        %8711 = vst [vmem:[%s504 + $0x298] sm:$0xff] %v8583
        %8712 = vst [vmem:[%s504 + $0x2a0] sm:$0xff] %v8584
        %8713 = vst [vmem:[%s504 + $0x2a8] sm:$0xff] %v8585
        %8714 = vst [vmem:[%s504 + $0x2b0] sm:$0xff] %v8586
        %8715 = vst [vmem:[%s504 + $0x2b8] sm:$0xff] %v8587
        %8716 = vst [vmem:[%s504 + $0x2c0] sm:$0xff] %v8588
        %8717 = vst [vmem:[%s504 + $0x2c8] sm:$0xff] %v8589
        %8718 = vst [vmem:[%s504 + $0x2d0] sm:$0xff] %v8590
        %8719 = vst [vmem:[%s504 + $0x2d8] sm:$0xff] %v8591
        %8720 = vst [vmem:[%s504 + $0x2e0] sm:$0xff] %v8592
        %8721 = vst [vmem:[%s504 + $0x2e8] sm:$0xff] %v8593
        %8722 = vst [vmem:[%s504 + $0x2f0] sm:$0xff] %v8594
        %8723 = vst [vmem:[%s504 + $0x2f8] sm:$0xff] %v8595
        %8724 = vst [vmem:[%s504 + $0x300] sm:$0xff] %v8596
        %8725 = vst [vmem:[%s504 + $0x308] sm:$0xff] %v8597
        %8726 = vst [vmem:[%s504 + $0x310] sm:$0xff] %v8598
        %8727 = vst [vmem:[%s504 + $0x318] sm:$0xff] %v8599
        %8728 = vst [vmem:[%s504 + $0x320] sm:$0xff] %v8600
        %8729 = vst [vmem:[%s504 + $0x328] sm:$0xff] %v8601
        %8730 = vst [vmem:[%s504 + $0x330] sm:$0xff] %v8602
        %8731 = vst [vmem:[%s504 + $0x338] sm:$0xff] %v8603
        %8732 = vst [vmem:[%s504 + $0x340] sm:$0xff] %v8604
        %8733 = vst [vmem:[%s504 + $0x348] sm:$0xff] %v8605
        %8734 = vst [vmem:[%s504 + $0x350] sm:$0xff] %v8606
        %8735 = vst [vmem:[%s504 + $0x358] sm:$0xff] %v8607
        %8736 = vst [vmem:[%s504 + $0x360] sm:$0xff] %v8608
        %8737 = vst [vmem:[%s504 + $0x368] sm:$0xff] %v8609
        %8738 = vst [vmem:[%s504 + $0x370] sm:$0xff] %v8610
        %8739 = vst [vmem:[%s504 + $0x378] sm:$0xff] %v8611
        %8740 = vst [vmem:[%s504 + $0x380] sm:$0xff] %v8612
        %8741 = vst [vmem:[%s504 + $0x388] sm:$0xff] %v8613
        %8742 = vst [vmem:[%s504 + $0x390] sm:$0xff] %v8614
        %8743 = vst [vmem:[%s504 + $0x398] sm:$0xff] %v8615
        %8744 = vst [vmem:[%s504 + $0x3a0] sm:$0xff] %v8616
        %8745 = vst [vmem:[%s504 + $0x3a8] sm:$0xff] %v8617
        %8746 = vst [vmem:[%s504 + $0x3b0] sm:$0xff] %v8618
        %8747 = vst [vmem:[%s504 + $0x3b8] sm:$0xff] %v8619
        %8748 = vst [vmem:[%s504 + $0x3c0] sm:$0xff] %v8620
        %8749 = vst [vmem:[%s504 + $0x3c8] sm:$0xff] %v8621
        %8750 = vst [vmem:[%s504 + $0x3d0] sm:$0xff] %v8622
        %8751 = vst [vmem:[%s504 + $0x3d8] sm:$0xff] %v8623
        %8752 = vst [vmem:[%s504 + $0x3e0] sm:$0xff] %v8624
        %8753 = vst [vmem:[%s504 + $0x3e8] sm:$0xff] %v8625
        %8754 = vst [vmem:[%s504 + $0x3f0] sm:$0xff] %v8626
        %8755 = vst [vmem:[%s504 + $0x3f8] sm:$0xff] %v8627
        %v8756 = vld [vmem:[#allocation5] sm:$0xff]
        %v8757 = vld [vmem:[#allocation5 + $0x8] sm:$0xff]
        %v8758 = vld [vmem:[#allocation5 + $0x10] sm:$0xff]
        %v8759 = vld [vmem:[#allocation5 + $0x18] sm:$0xff]
        %v8760 = vld [vmem:[#allocation5 + $0x20] sm:$0xff]
        %v8761 = vld [vmem:[#allocation5 + $0x28] sm:$0xff]
        %v8762 = vld [vmem:[#allocation5 + $0x30] sm:$0xff]
        %v8763 = vld [vmem:[#allocation5 + $0x38] sm:$0xff]
        %v8764 = vld [vmem:[#allocation5 + $0x40] sm:$0xff]
        %v8765 = vld [vmem:[#allocation5 + $0x48] sm:$0xff]
        %v8766 = vld [vmem:[#allocation5 + $0x50] sm:$0xff]
        %v8767 = vld [vmem:[#allocation5 + $0x58] sm:$0xff]
        %v8768 = vld [vmem:[#allocation5 + $0x60] sm:$0xff]
        %v8769 = vld [vmem:[#allocation5 + $0x68] sm:$0xff]
        %v8770 = vld [vmem:[#allocation5 + $0x70] sm:$0xff]
        %v8771 = vld [vmem:[#allocation5 + $0x78] sm:$0xff]
        %v8836 = vrot.slane %v4141, 7
        %v8837 = vrot.slane %v4143, 6
        %v8838 = vsel %vm8196, %v8837, %v8836
        %v8839 = vrot.slane %v4145, 5
        %v8840 = vsel %vm8198, %v8839, %v8838
        %v8841 = vrot.slane %v4147, 4
        %v8842 = vsel %vm8200, %v8841, %v8840
        %v8843 = vrot.slane %v4149, 3
        %v8844 = vsel %vm8202, %v8843, %v8842
        %v8845 = vrot.slane %v4151, 2
        %v8846 = vsel %vm8204, %v8845, %v8844
        %v8847 = vrot.slane %v4153, 1
        %v8848 = vsel %vm8206, %v8847, %v8846
        %v8849 = vsel %vm8208, %v4155, %v8848
        %v8850 = vrot.slane %v4157, 7
        %v8851 = vrot.slane %v4159, 6
        %v8852 = vsel %vm8196, %v8851, %v8850
        %v8853 = vrot.slane %v4161, 5
        %v8854 = vsel %vm8198, %v8853, %v8852
        %v8855 = vrot.slane %v4163, 4
        %v8856 = vsel %vm8200, %v8855, %v8854
        %v8857 = vrot.slane %v4165, 3
        %v8858 = vsel %vm8202, %v8857, %v8856
        %v8859 = vrot.slane %v4167, 2
        %v8860 = vsel %vm8204, %v8859, %v8858
        %v8861 = vrot.slane %v4169, 1
        %v8862 = vsel %vm8206, %v8861, %v8860
        %v8863 = vsel %vm8208, %v4171, %v8862
        %v8864 = vrot.slane %v4173, 7
        %v8865 = vrot.slane %v4175, 6
        %v8866 = vsel %vm8196, %v8865, %v8864
        %v8867 = vrot.slane %v4177, 5
        %v8868 = vsel %vm8198, %v8867, %v8866
        %v8869 = vrot.slane %v4179, 4
        %v8870 = vsel %vm8200, %v8869, %v8868
        %v8871 = vrot.slane %v4181, 3
        %v8872 = vsel %vm8202, %v8871, %v8870
        %v8873 = vrot.slane %v4183, 2
        %v8874 = vsel %vm8204, %v8873, %v8872
        %v8875 = vrot.slane %v4185, 1
        %v8876 = vsel %vm8206, %v8875, %v8874
        %v8877 = vsel %vm8208, %v4187, %v8876
        %v8878 = vrot.slane %v4189, 7
        %v8879 = vrot.slane %v4191, 6
        %v8880 = vsel %vm8196, %v8879, %v8878
        %v8881 = vrot.slane %v4193, 5
        %v8882 = vsel %vm8198, %v8881, %v8880
        %v8883 = vrot.slane %v4195, 4
        %v8884 = vsel %vm8200, %v8883, %v8882
        %v8885 = vrot.slane %v4197, 3
        %v8886 = vsel %vm8202, %v8885, %v8884
        %v8887 = vrot.slane %v4199, 2
        %v8888 = vsel %vm8204, %v8887, %v8886
        %v8889 = vrot.slane %v4201, 1
        %v8890 = vsel %vm8206, %v8889, %v8888
        %v8891 = vsel %vm8208, %v4203, %v8890
        %v8892 = vrot.slane %v4205, 7
        %v8893 = vrot.slane %v4207, 6
        %v8894 = vsel %vm8196, %v8893, %v8892
        %v8895 = vrot.slane %v4209, 5
        %v8896 = vsel %vm8198, %v8895, %v8894
        %v8897 = vrot.slane %v4211, 4
        %v8898 = vsel %vm8200, %v8897, %v8896
        %v8899 = vrot.slane %v4213, 3
        %v8900 = vsel %vm8202, %v8899, %v8898
        %v8901 = vrot.slane %v4215, 2
        %v8902 = vsel %vm8204, %v8901, %v8900
        %v8903 = vrot.slane %v4217, 1
        %v8904 = vsel %vm8206, %v8903, %v8902
        %v8905 = vsel %vm8208, %v4219, %v8904
        %v8906 = vrot.slane %v4221, 7
        %v8907 = vrot.slane %v4223, 6
        %v8908 = vsel %vm8196, %v8907, %v8906
        %v8909 = vrot.slane %v4225, 5
        %v8910 = vsel %vm8198, %v8909, %v8908
        %v8911 = vrot.slane %v4227, 4
        %v8912 = vsel %vm8200, %v8911, %v8910
        %v8913 = vrot.slane %v4229, 3
        %v8914 = vsel %vm8202, %v8913, %v8912
        %v8915 = vrot.slane %v4231, 2
        %v8916 = vsel %vm8204, %v8915, %v8914
        %v8917 = vrot.slane %v4233, 1
        %v8918 = vsel %vm8206, %v8917, %v8916
        %v8919 = vsel %vm8208, %v4235, %v8918
        %v8920 = vrot.slane %v4237, 7
        %v8921 = vrot.slane %v4239, 6
        %v8922 = vsel %vm8196, %v8921, %v8920
        %v8923 = vrot.slane %v4241, 5
        %v8924 = vsel %vm8198, %v8923, %v8922
        %v8925 = vrot.slane %v4243, 4
        %v8926 = vsel %vm8200, %v8925, %v8924
        %v8927 = vrot.slane %v4245, 3
        %v8928 = vsel %vm8202, %v8927, %v8926
        %v8929 = vrot.slane %v4247, 2
        %v8930 = vsel %vm8204, %v8929, %v8928
        %v8931 = vrot.slane %v4249, 1
        %v8932 = vsel %vm8206, %v8931, %v8930
        %v8933 = vsel %vm8208, %v4251, %v8932
        %v8934 = vrot.slane %v4253, 7
        %v8935 = vrot.slane %v4255, 6
        %v8936 = vsel %vm8196, %v8935, %v8934
        %v8937 = vrot.slane %v4257, 5
        %v8938 = vsel %vm8198, %v8937, %v8936
        %v8939 = vrot.slane %v4259, 4
        %v8940 = vsel %vm8200, %v8939, %v8938
        %v8941 = vrot.slane %v4261, 3
        %v8942 = vsel %vm8202, %v8941, %v8940
        %v8943 = vrot.slane %v4263, 2
        %v8944 = vsel %vm8204, %v8943, %v8942
        %v8945 = vrot.slane %v4265, 1
        %v8946 = vsel %vm8206, %v8945, %v8944
        %v8947 = vsel %vm8208, %v4267, %v8946
        %8956 = vmatpush.msra.mxu0 %v8771
        %8957 = vmatpush.msra.mxu0 %v8770
        %8958 = vmatpush.msra.mxu0 %v8769
        %8959 = vmatpush.msra.mxu0 %v8768
        %8960 = vmatpush.msra.mxu0 %v8767
        %8961 = vmatpush.msra.mxu0 %v8766
        %8962 = vmatpush.msra.mxu0 %v8765
        %8963 = vmatpush.msra.mxu0 %v8764
        %8964 = vmatpush.msra.mxu0 %v8763
        %8965 = vmatpush.msra.mxu0 %v8762
        %8966 = vmatpush.msra.mxu0 %v8761
        %8967 = vmatpush.msra.mxu0 %v8760
        %8968 = vmatpush.msra.mxu0 %v8759
        %8969 = vmatpush.msra.mxu0 %v8758
        %8970 = vmatpush.msra.mxu0 %v8757
        %8971 = vmatpush.msra.mxu0 %v8756
        %8972 = vmatmul.f32.gmra.mxu0 %v8849
        %v8973 = vpop.f32.mrf.mxu0
        %v8974 = vadd.f32 0.0, %v8973
        %8975 = vmatmul.f32.gmra.mxu0 %v8863
        %v8976 = vpop.f32.mrf.mxu0
        %v8977 = vadd.f32 0.0, %v8976
        %8978 = vmatmul.f32.gmra.mxu0 %v8877
        %v8979 = vpop.f32.mrf.mxu0
        %v8980 = vadd.f32 0.0, %v8979
        %8981 = vmatmul.f32.gmra.mxu0 %v8891
        %v8982 = vpop.f32.mrf.mxu0
        %v8983 = vadd.f32 0.0, %v8982
        %8984 = vmatmul.f32.gmra.mxu0 %v8905
        %v8985 = vpop.f32.mrf.mxu0
        %v8986 = vadd.f32 0.0, %v8985
        %8987 = vmatmul.f32.gmra.mxu0 %v8919
        %v8988 = vpop.f32.mrf.mxu0
        %v8989 = vadd.f32 0.0, %v8988
        %8990 = vmatmul.f32.gmra.mxu0 %v8933
        %v8991 = vpop.f32.mrf.mxu0
        %v8992 = vadd.f32 0.0, %v8991
        %8993 = vmatmul.f32.gmra.mxu0 %v8947
        %v8994 = vpop.f32.mrf.mxu0
        %v8995 = vadd.f32 0.0, %v8994
        %8996 = vdwg.mxu0
        %8997 = vst [vmem:[%s511] sm:$0xff] %v8974
        %8998 = vst [vmem:[%s511 + $0x8] sm:$0xff] %v8977
        %8999 = vst [vmem:[%s511 + $0x10] sm:$0xff] %v8980
        %9000 = vst [vmem:[%s511 + $0x18] sm:$0xff] %v8983
        %9001 = vst [vmem:[%s511 + $0x20] sm:$0xff] %v8986
        %9002 = vst [vmem:[%s511 + $0x28] sm:$0xff] %v8989
        %9003 = vst [vmem:[%s511 + $0x30] sm:$0xff] %v8992
        %9004 = vst [vmem:[%s511 + $0x38] sm:$0xff] %v8995
        %v9069 = vrot.slane %v4311, 7
        %v9070 = vrot.slane %v4317, 6
        %v9071 = vsel %vm8196, %v9070, %v9069
        %v9072 = vrot.slane %v4323, 5
        %v9073 = vsel %vm8198, %v9072, %v9071
        %v9074 = vrot.slane %v4329, 4
        %v9075 = vsel %vm8200, %v9074, %v9073
        %v9076 = vrot.slane %v4335, 3
        %v9077 = vsel %vm8202, %v9076, %v9075
        %v9078 = vrot.slane %v4341, 2
        %v9079 = vsel %vm8204, %v9078, %v9077
        %v9080 = vrot.slane %v4347, 1
        %v9081 = vsel %vm8206, %v9080, %v9079
        %v9082 = vsel %vm8208, %v4353, %v9081
        %v9083 = vrot.slane %v4359, 7
        %v9084 = vrot.slane %v4365, 6
        %v9085 = vsel %vm8196, %v9084, %v9083
        %v9086 = vrot.slane %v4371, 5
        %v9087 = vsel %vm8198, %v9086, %v9085
        %v9088 = vrot.slane %v4377, 4
        %v9089 = vsel %vm8200, %v9088, %v9087
        %v9090 = vrot.slane %v4383, 3
        %v9091 = vsel %vm8202, %v9090, %v9089
        %v9092 = vrot.slane %v4389, 2
        %v9093 = vsel %vm8204, %v9092, %v9091
        %v9094 = vrot.slane %v4395, 1
        %v9095 = vsel %vm8206, %v9094, %v9093
        %v9096 = vsel %vm8208, %v4401, %v9095
        %v9097 = vrot.slane %v4407, 7
        %v9098 = vrot.slane %v4413, 6
        %v9099 = vsel %vm8196, %v9098, %v9097
        %v9100 = vrot.slane %v4419, 5
        %v9101 = vsel %vm8198, %v9100, %v9099
        %v9102 = vrot.slane %v4425, 4
        %v9103 = vsel %vm8200, %v9102, %v9101
        %v9104 = vrot.slane %v4431, 3
        %v9105 = vsel %vm8202, %v9104, %v9103
        %v9106 = vrot.slane %v4437, 2
        %v9107 = vsel %vm8204, %v9106, %v9105
        %v9108 = vrot.slane %v4443, 1
        %v9109 = vsel %vm8206, %v9108, %v9107
        %v9110 = vsel %vm8208, %v4449, %v9109
        %v9111 = vrot.slane %v4455, 7
        %v9112 = vrot.slane %v4461, 6
        %v9113 = vsel %vm8196, %v9112, %v9111
        %v9114 = vrot.slane %v4467, 5
        %v9115 = vsel %vm8198, %v9114, %v9113
        %v9116 = vrot.slane %v4473, 4
        %v9117 = vsel %vm8200, %v9116, %v9115
        %v9118 = vrot.slane %v4479, 3
        %v9119 = vsel %vm8202, %v9118, %v9117
        %v9120 = vrot.slane %v4485, 2
        %v9121 = vsel %vm8204, %v9120, %v9119
        %v9122 = vrot.slane %v4491, 1
        %v9123 = vsel %vm8206, %v9122, %v9121
        %v9124 = vsel %vm8208, %v4497, %v9123
        %v9125 = vrot.slane %v4503, 7
        %v9126 = vrot.slane %v4509, 6
        %v9127 = vsel %vm8196, %v9126, %v9125
        %v9128 = vrot.slane %v4515, 5
        %v9129 = vsel %vm8198, %v9128, %v9127
        %v9130 = vrot.slane %v4521, 4
        %v9131 = vsel %vm8200, %v9130, %v9129
        %v9132 = vrot.slane %v4527, 3
        %v9133 = vsel %vm8202, %v9132, %v9131
        %v9134 = vrot.slane %v4533, 2
        %v9135 = vsel %vm8204, %v9134, %v9133
        %v9136 = vrot.slane %v4539, 1
        %v9137 = vsel %vm8206, %v9136, %v9135
        %v9138 = vsel %vm8208, %v4545, %v9137
        %v9139 = vrot.slane %v4551, 7
        %v9140 = vrot.slane %v4557, 6
        %v9141 = vsel %vm8196, %v9140, %v9139
        %v9142 = vrot.slane %v4563, 5
        %v9143 = vsel %vm8198, %v9142, %v9141
        %v9144 = vrot.slane %v4569, 4
        %v9145 = vsel %vm8200, %v9144, %v9143
        %v9146 = vrot.slane %v4575, 3
        %v9147 = vsel %vm8202, %v9146, %v9145
        %v9148 = vrot.slane %v4581, 2
        %v9149 = vsel %vm8204, %v9148, %v9147
        %v9150 = vrot.slane %v4587, 1
        %v9151 = vsel %vm8206, %v9150, %v9149
        %v9152 = vsel %vm8208, %v4593, %v9151
        %v9153 = vrot.slane %v4599, 7
        %v9154 = vrot.slane %v4605, 6
        %v9155 = vsel %vm8196, %v9154, %v9153
        %v9156 = vrot.slane %v4611, 5
        %v9157 = vsel %vm8198, %v9156, %v9155
        %v9158 = vrot.slane %v4617, 4
        %v9159 = vsel %vm8200, %v9158, %v9157
        %v9160 = vrot.slane %v4623, 3
        %v9161 = vsel %vm8202, %v9160, %v9159
        %v9162 = vrot.slane %v4629, 2
        %v9163 = vsel %vm8204, %v9162, %v9161
        %v9164 = vrot.slane %v4635, 1
        %v9165 = vsel %vm8206, %v9164, %v9163
        %v9166 = vsel %vm8208, %v4641, %v9165
        %v9167 = vrot.slane %v4647, 7
        %v9168 = vrot.slane %v4653, 6
        %v9169 = vsel %vm8196, %v9168, %v9167
        %v9170 = vrot.slane %v4659, 5
        %v9171 = vsel %vm8198, %v9170, %v9169
        %v9172 = vrot.slane %v4665, 4
        %v9173 = vsel %vm8200, %v9172, %v9171
        %v9174 = vrot.slane %v4671, 3
        %v9175 = vsel %vm8202, %v9174, %v9173
        %v9176 = vrot.slane %v4677, 2
        %v9177 = vsel %vm8204, %v9176, %v9175
        %v9178 = vrot.slane %v4683, 1
        %v9179 = vsel %vm8206, %v9178, %v9177
        %9189 = vst [vmem:[%s518 - $0x7] sm:$0x80] %v4305
        %9190 = vst [vmem:[%s518 + $0x1] sm:$0xff] %v9082
        %9191 = vst [vmem:[%s518 + $0x9] sm:$0xff] %v9096
        %9192 = vst [vmem:[%s518 + $0x11] sm:$0xff] %v9110
        %9193 = vst [vmem:[%s518 + $0x19] sm:$0xff] %v9124
        %9194 = vst [vmem:[%s518 + $0x21] sm:$0xff] %v9138
        %9195 = vst [vmem:[%s518 + $0x29] sm:$0xff] %v9152
        %9196 = vst [vmem:[%s518 + $0x31] sm:$0xff] %v9166
        %9197 = vst [vmem:[%s518 + $0x39] sm:$0x7f] %v9179
        %s9198 = sand.u32 %s258, 1
        %s9199 = scalar_lea.sflag [#allocation4], %s9198
        %s9200 = sand.u32 %s258, 1
        %s9201 = smul.addr %s9200, 1024
        %s9202 = scalar_lea.vmem [#allocation11], %s9201
        %s9203 = sand.u32 %s35, 1
        %s9204 = scalar_lea.sflag [#allocation13], %s9203
        %s9205 = sand.u32 %s284, 1
        %s9206 = smul.addr %s9205, 64
        %s9207 = scalar_lea.vmem [#allocation12], %s9206
        %s9208 = sand.u32 %s35, 1
        %s9209 = scalar_lea.sflag [#allocation13], %s9208
        %s9210 = sand.u32 %s310, 1
        %s9211 = smul.addr %s9210, 64
        %s9212 = scalar_lea.vmem [#allocation14], %s9211
        // Predicated region
        $region81: #{rwkv_time_first.1} parent=59 // pred_check
          %p9213 = pneg %p268
        $region82: #{rwkv_time_first.1} parent=59 // pred_check_branch
          %9215 = sbr.rel (%p9213) target = $region84
        $region83: #{rwkv_time_first.1} parent=59 // pred_region
          %s9216 = smul.u32 64, %s35
          %9218 = vsyncadd %s9199, 0
          %s9219 = smul.addr %s9216, 2
          %s9220 = smul.addr %s9219, 8
          %s9221 = scalar_lea.hbm %s10, %s9220
          %s9222 = sshll.u32 %s9202, 4
          %s9223 = int_to_ptr.vmem [resolvable:$true] %s9222
          %s9224 = sshll.u32 %s9221, 4
          %s9225 = int_to_ptr.hbm [resolvable:$true] %s9224
          %9230 = dma.vmem_to_hbm [thread:$0]  %s9223, 16384, %s9225, %s9199, 128, 128, 8
        $region84: #{rwkv_time_first.1} parent=59 // pred_fallthru
          _
        // Predicated region
        $region85: #{rwkv_time_first.1} parent=59 // pred_check
          %p9231 = pneg %p294
        $region86: #{rwkv_time_first.1} parent=59 // pred_check_branch
          %9233 = sbr.rel (%p9231) target = $region88
        $region87: #{rwkv_time_first.1} parent=59 // pred_region
          %s9234 = smul.u32 8, %s35
          %9236 = vsyncadd %s9204, 0
          %s9237 = smul.addr %s9234, 8
          %s9238 = scalar_lea.hbm %s11, %s9237
          %s9239 = sshll.u32 %s9207, 4
          %s9240 = int_to_ptr.vmem [resolvable:$true] %s9239
          %s9241 = sshll.u32 %s9238, 4
          %s9242 = int_to_ptr.hbm [resolvable:$true] %s9241
          %9247 = dma.vmem_to_hbm [thread:$0]  %s9240, 1024, %s9242, %s9204, 128, 128, 8
        $region88: #{rwkv_time_first.1} parent=59 // pred_fallthru
          _
        // Predicated region
        $region89: #{rwkv_time_first.1} parent=59 // pred_check
          %p9248 = pneg %p320
        $region90: #{rwkv_time_first.1} parent=59 // pred_check_branch
          %9250 = sbr.rel (%p9248) target = $region92
        $region91: #{rwkv_time_first.1} parent=59 // pred_region
          %s9251 = smul.u32 8, %s35
          %9253 = vsyncadd %s9209, 0
          %s9254 = smul.addr %s9251, 8
          %s9255 = scalar_lea.hbm %s12, %s9254
          %s9256 = sshll.u32 %s9212, 4
          %s9257 = int_to_ptr.vmem [resolvable:$true] %s9256
          %s9258 = sshll.u32 %s9255, 4
          %s9259 = int_to_ptr.hbm [resolvable:$true] %s9258
          %9264 = dma.vmem_to_hbm [thread:$0]  %s9257, 1024, %s9259, %s9209, 128, 128, 8
        $region92: #{rwkv_time_first.1} parent=59 // pred_fallthru
          _
      $region60: #{rwkv_time_first.1} parent=5 // pred_fallthru
        _
      %p9265 = scmp.le.s32.totalorder 2, %s30
      // Predicated region
      $region93: #{rwkv_time_first.1} parent=5 // pred_check
        %p9266 = pneg %p9265
      $region94: #{rwkv_time_first.1} parent=5 // pred_check_branch
        %9268 = sbr.rel (%p9266) target = $region96
      $region95: #{rwkv_time_first.1} parent=5 // pred_region
        %s9269 = ssub.s32 %s30, 2
        // Predicated region
        $region97: #{rwkv_time_first.1} parent=95 // pred_check
          %p9270 = pneg %p274
        $region98: #{rwkv_time_first.1} parent=95 // pred_check_branch
          %9272 = sbr.rel (%p9270) target = $region100
        $region99: #{rwkv_time_first.1} parent=95 // pred_region
          %s9273 = sand.u32 %s259, 1
          %s9274 = scalar_lea.sflag [#allocation4], %s9273
          %s9275 = sand.u32 %s259, 1
          %s9276 = smul.addr %s9275, 1024
          %s9277 = scalar_lea.vmem [#allocation11], %s9276
          %9279 = dma.done %s9274, 16384
        $region100: #{rwkv_time_first.1} parent=95 // pred_fallthru
          _
        // Predicated region
        $region101: #{rwkv_time_first.1} parent=95 // pred_check
          %p9280 = pneg %p300
        $region102: #{rwkv_time_first.1} parent=95 // pred_check_branch
          %9282 = sbr.rel (%p9280) target = $region104
        $region103: #{rwkv_time_first.1} parent=95 // pred_region
          %s9283 = sand.u32 %s36, 1
          %s9284 = scalar_lea.sflag [#allocation13], %s9283
          %s9285 = sand.u32 %s285, 1
          %s9286 = smul.addr %s9285, 64
          %s9287 = scalar_lea.vmem [#allocation12], %s9286
          %9289 = dma.done %s9284, 1024
        $region104: #{rwkv_time_first.1} parent=95 // pred_fallthru
          _
        // Predicated region
        $region105: #{rwkv_time_first.1} parent=95 // pred_check
          %p9290 = pneg %p326
        $region106: #{rwkv_time_first.1} parent=95 // pred_check_branch
          %9292 = sbr.rel (%p9290) target = $region108
        $region107: #{rwkv_time_first.1} parent=95 // pred_region
          %s9293 = sand.u32 %s36, 1
          %s9294 = scalar_lea.sflag [#allocation13], %s9293
          %s9295 = sand.u32 %s311, 1
          %s9296 = smul.addr %s9295, 64
          %s9297 = scalar_lea.vmem [#allocation14], %s9296
          %9299 = dma.done %s9294, 1024
        $region108: #{rwkv_time_first.1} parent=95 // pred_fallthru
          _
      $region96: #{rwkv_time_first.1} parent=5 // pred_fallthru
        _
    $region6: #{rwkv_time_first.1} parent=1 // loop_footer
      %s34 = sadd.s32 1, %s30
    $region7: #{rwkv_time_first.1} parent=1 // loop_footer_branch
      %29 = sbr.rel target = $region3
    $region8: #{rwkv_time_first.1} parent=1 // loop_exit
      _
    %9300 = vsyncpa [#allocation3], 1
    %s9301 = scalar_lea.sflag [#allocation3], 1
    %9302 = vsyncpa %s9301, 1
    %9303 = vsyncpa [#allocation6], 1
    %9304 = vsyncpa [#allocation9], 1
    %9305 = vsyncpa [#allocation4], 1
    %s9306 = scalar_lea.sflag [#allocation4], 1
    %9307 = vsyncpa %s9306, 1
    %9308 = vsyncpa [#allocation13], 1
    %s9309 = scalar_lea.sflag [#allocation13], 1
    %9310 = vsyncpa %s9309, 1

</llo_original>
